<compile_context>
chip_gen: v5e
topology: v5e:2x2
jax: 0.10.0
libtpu: 0.0.40
codegen_flags: <defaults>
</compile_context>

<pallas_src>
import jax
import jax.numpy as jnp
from jax.experimental import pallas as pl
from jax.experimental.pallas import tpu as pltpu


# ----------------------------------------------------------------------------
# exact-form GELU (erf via A&S 7.1.26 polynomial; only abs/exp/mul/where used)
# ----------------------------------------------------------------------------
_SQRT_HALF = 0.7071067811865476


def _erf(x):
    a1, a2, a3, a4, a5 = (0.254829592, -0.284496736, 1.421413741,
                          -1.453152027, 1.061405429)
    p = 0.3275911
    ax = jnp.abs(x)
    t = 1.0 / (1.0 + p * ax)
    poly = t * (a1 + t * (a2 + t * (a3 + t * (a4 + t * a5))))
    e = 1.0 - poly * jnp.exp(-ax * ax)
    return jnp.where(x < 0, -e, e)


def _gelu(x):
    return 0.5 * x * (1.0 + _erf(x * _SQRT_HALF))


# ----------------------------------------------------------------------------
# Conv1d + BatchNorm(eval, folded) + GELU (+ optional MaxPool1d(2, 2)) kernel
# ----------------------------------------------------------------------------
def _make_conv_kernel(K, L_out, pool, cin1):
    def kernel(x_ref, w_ref, scale_ref, shift_ref, o_ref):
        if cin1:
            # Cin == 1: K broadcasted VPU multiply-adds (no contraction-1 MXU
            # outer products).  TODO(synk): lane-dense layout for this case.
            acc = x_ref[0:L_out, :] * w_ref[0:1, :]
            for k in range(1, K):
                acc = acc + x_ref[k:k + L_out, :] * w_ref[k:k + 1, :]
        else:
            # K accumulated bf16 MXU dots (contraction = Cin); f32 accumulator.
            # No f32 round-trip, no lane concatenate.
            acc = jnp.dot(x_ref[0:L_out, :], w_ref[0],
                          preferred_element_type=jnp.float32)
            for k in range(1, K):
                acc = acc + jnp.dot(x_ref[k:k + L_out, :], w_ref[k],
                                    preferred_element_type=jnp.float32)
        y = _gelu(acc * scale_ref[...] + shift_ref[...])      # folded BN + GELU
        if pool:                                              # MaxPool1d(2, 2)
            c = y.shape[-1]
            y = jnp.max(y.reshape(L_out // 2, 2, c), axis=1)
        o_ref[...] = y.astype(o_ref.dtype)
    return kernel


def conv_bn_gelu(x, p, *, padding, pool, cout_pad=128, eps=1e-5):
    """x: (B, L, Cin) channels-last.  Returns (B, L_fin, cout_pad) bf16."""
    B, L, Cin = x.shape
    K, Cin_real, Cout_real = p["w"].shape
    if pool:
        assert L % 2 == 0

    # fold conv bias + eval-mode BN into per-channel scale/shift, zero-padded
    # to 128 lanes (padded output channels stay exactly zero).
    scale = p["gamma"] / jnp.sqrt(p["var"] + eps)
    shift = scale * (p["b"] - p["mean"]) + p["beta"]
    scale_p = jnp.zeros((1, cout_pad), jnp.float32).at[0, :Cout_real].set(scale)
    shift_p = jnp.zeros((1, cout_pad), jnp.float32).at[0, :Cout_real].set(shift)

    cin1 = Cin == 1
    if cin1:
        w = jnp.zeros((K, cout_pad), jnp.float32).at[:, :Cout_real].set(p["w"][:, 0, :])
        w_spec = pl.BlockSpec((K, cout_pad), lambda b: (0, 0))
    else:
        w = (jnp.zeros((K, Cin, cout_pad), jnp.bfloat16)
             .at[:, :Cin_real, :Cout_real].set(p["w"].astype(jnp.bfloat16)))
        w_spec = pl.BlockSpec((K, Cin, cout_pad), lambda b: (0, 0, 0))

    # TODO(synk): drop the wrapper-side pad (extra HBM copy) in favor of an
    #             in-kernel zero halo once the conv is L-tiled.
    xp = jnp.pad(x, ((0, 0), (padding, padding), (0, 0)))
    Lp = L + 2 * padding
    L_out = L                                   # stride 1, 'same' padding
    L_fin = L // 2 if pool else L

    return pl.pallas_call(
        _make_conv_kernel(K, L_out, pool, cin1),
        out_shape=jax.ShapeDtypeStruct((B, L_fin, cout_pad), jnp.bfloat16),
        grid=(B,),
        in_specs=[
            pl.BlockSpec((None, Lp, Cin), lambda b: (b, 0, 0)),
            w_spec,
            pl.BlockSpec((1, cout_pad), lambda b: (0, 0)),
            pl.BlockSpec((1, cout_pad), lambda b: (0, 0)),
        ],
        out_specs=pl.BlockSpec((None, L_fin, cout_pad), lambda b: (b, 0, 0)),
        compiler_params=pltpu.CompilerParams(dimension_semantics=("parallel",)),
    )(xp, w, scale_p, shift_p)


# ----------------------------------------------------------------------------
# Bidirectional LSTM (PyTorch gate order i, f, g, o), fused directions,
# grid over time chunks (state carried in VMEM scratch across chunks)
# ----------------------------------------------------------------------------
def _make_bilstm_kernel(B, TC, H, nparts):
    G = 4 * H

    def kernel(*refs):
        xf_refs = refs[0:nparts]
        xr_refs = refs[nparts:2 * nparts]
        wihf_ref, wihr_ref, whh_ref, bf_ref, br_ref = refs[2 * nparts:2 * nparts + 5]
        of_ref, or_ref = refs[2 * nparts + 5:2 * nparts + 7]
        hh_s, cf_s, cr_s, gxf_s, gxr_s = refs[2 * nparts + 7:]

        step = pl.program_id(0)

        @pl.when(step == 0)
        def _():
            hh_s[...] = jnp.zeros_like(hh_s)
            cf_s[...] = jnp.zeros_like(cf_s)
            cr_s[...] = jnp.zeros_like(cr_s)

        def input_proj(x_refs, wih_ref, b_ref, gx_s):
            # Hoisted x @ W_ih for the whole chunk (one MXU pass, 2*H-deep
            # contraction for lstm2 thanks to the in-kernel lane concat).
            xs = [r[...] for r in x_refs]
            x = xs[0] if len(xs) == 1 else jnp.concatenate(xs, axis=-1)
            w = wih_ref[...]
            bias = b_ref[...]                                  # (1, 4H)
            if TC % 16 == 0:
                # flatten: single matmul with M = B*TC (bf16 tile aligned)
                g = jnp.dot(x.reshape(B * TC, x.shape[-1]), w,
                            preferred_element_type=jnp.float32)
                gx_s[...] = g.reshape(B, TC, G) + bias
            else:
                for b in range(B):
                    gx_s[b] = jnp.dot(x[b], w,
                                      preferred_element_type=jnp.float32) + bias

        input_proj(xf_refs, wihf_ref, bf_ref, gxf_s)
        input_proj(xr_refs, wihr_ref, br_ref, gxr_s)

        whh = whh_ref[...]                      # (2H, 8H) block-diag, bf16
        hh = hh_s[...]                          # (B, 2H) = [h_f | h_r]
        c_f = cf_s[...]
        c_r = cr_s[...]

        def gates(g, c):
            i_g = jax.nn.sigmoid(g[:, 0 * H:1 * H])
            f_g = jax.nn.sigmoid(g[:, 1 * H:2 * H])
            g_g = jnp.tanh(g[:, 2 * H:3 * H])
            o_g = jax.nn.sigmoid(g[:, 3 * H:4 * H])
            c_new = f_g * c + i_g * g_g
            h_new = o_g * jnp.tanh(c_new)
            return h_new, c_new

        for i in range(TC):                     # unrolled recurrence
            j = TC - 1 - i                      # reverse direction walks back
            # single fused MXU matmul for both directions (256-deep on v6e/v7x)
            g8 = jnp.dot(hh.astype(jnp.bfloat16), whh,
                         preferred_element_type=jnp.float32)   # (B, 8H)
            gf = gxf_s[:, i, :] + g8[:, :G]
            gr = gxr_s[:, j, :] + g8[:, G:]
            h_f, c_f = gates(gf, c_f)
            h_r, c_r = gates(gr, c_r)
            of_ref[:, i, :] = h_f.astype(of_ref.dtype)
            or_ref[:, j, :] = h_r.astype(or_ref.dtype)
            hh = jnp.concatenate([h_f, h_r], axis=-1)

        hh_s[...] = hh
        cf_s[...] = c_f
        cr_s[...] = c_r

    return kernel


def _chunk_size(T, max_tc=32):
    # chunk length must be a multiple of 8 sublanes or equal to T
    if T <= max_tc:
        return T
    best = None
    for tc in range(8, max_tc + 1, 8):
        if T % tc == 0:
            best = tc
    # TODO(synk): if T has no multiple-of-8 divisor <= max_tc, the whole
    #             sequence goes in one chunk (VMEM risk for very long T).
    return best if best is not None else T


def bilstm(x_parts, p):
    """Bidirectional LSTM layer.

    x_parts: list of (B, T, C_i) bf16 arrays whose channel concatenation is the
             layer input (previous layer's fwd/rev halves never get concatenated
             in HBM -- they are lane-concatenated inside the kernel).
    Returns (out_fwd, out_rev), each (B, T, H) bf16.
    """
    B, T, _ = x_parts[0].shape
    H = p["whh_f"].shape[0]
    G = 4 * H
    nparts = len(x_parts)
    TC = _chunk_size(T)
    nc = T // TC

    # block-diagonal fused W_hh: rows [h_f | h_r], cols [fwd gates | rev gates]
    whh_fused = (jnp.zeros((2 * H, 2 * G), jnp.bfloat16)
                 .at[:H, :G].set(p["whh_f"].astype(jnp.bfloat16))
                 .at[H:, G:].set(p["whh_r"].astype(jnp.bfloat16)))

    fwd_map = lambda c: (0, c, 0)
    rev_map = lambda c: (0, nc - 1 - c, 0)
    const2 = lambda c: (0, 0)

    in_specs = (
        [pl.BlockSpec((B, TC, xp.shape[-1]), fwd_map) for xp in x_parts]
        + [pl.BlockSpec((B, TC, xp.shape[-1]), rev_map) for xp in x_parts]
        + [pl.BlockSpec(p["wih_f"].shape, const2),
           pl.BlockSpec(p["wih_r"].shape, const2),
           pl.BlockSpec(whh_fused.shape, const2),
           pl.BlockSpec(p["b_f"].shape, const2),
           pl.BlockSpec(p["b_r"].shape, const2)]
    )

    out_f, out_r = pl.pallas_call(
        _make_bilstm_kernel(B, TC, H, nparts),
        out_shape=(jax.ShapeDtypeStruct((B, T, H), jnp.bfloat16),
                   jax.ShapeDtypeStruct((B, T, H), jnp.bfloat16)),
        grid=(nc,),
        in_specs=in_specs,
        out_specs=(pl.BlockSpec((B, TC, H), fwd_map),
                   pl.BlockSpec((B, TC, H), rev_map)),
        scratch_shapes=[
            pltpu.VMEM((B, 2 * H), jnp.float32),     # hh = [h_f | h_r]
            pltpu.VMEM((B, H), jnp.float32),         # c_f
            pltpu.VMEM((B, H), jnp.float32),         # c_r
            pltpu.VMEM((B, TC, G), jnp.float32),     # gx fwd (hoisted proj)
            pltpu.VMEM((B, TC, G), jnp.float32),     # gx rev
        ],
        compiler_params=pltpu.CompilerParams(dimension_semantics=("arbitrary",)),
    )(*(list(x_parts) + list(x_parts)
        + [p["wih_f"], p["wih_r"], whh_fused, p["b_f"], p["b_r"]]))
    return out_f, out_r


# ----------------------------------------------------------------------------
# Dense(256 -> 1) + ReLU + ConvTranspose1d(1, 1, 4, stride 4) head kernel
# (dense done as VPU multiply + lane reduction; no N=1 MXU matmul)
# ----------------------------------------------------------------------------
def _make_head_kernel(nparts):
    def kernel(*refs):
        x_refs = refs[0:nparts]
        wd_refs = refs[nparts:2 * nparts]
        bd_ref, wu_ref, bu_ref = refs[2 * nparts:2 * nparts + 3]
        o_ref = refs[2 * nparts + 3]
        acc = None
        for x_r, wd_r in zip(x_refs, wd_refs):
            s = jnp.sum(x_r[...].astype(jnp.float32) * wd_r[...],
                        axis=-1, keepdims=True)                # (T, 1)
            acc = s if acc is None else acc + s
        d = jnp.maximum(acc + bd_ref[...], 0.0)                # Linear + ReLU
        # stride == kernel ConvTranspose1d: out[4t + k] = d[t] * w[k] + b
        o_ref[...] = (d * wu_ref[...] + bu_ref[...]).astype(o_ref.dtype)
    return kernel


def dense_head(x_parts, wd_parts, bd, wu, bu):
    """Returns (B, T, 4) f32 (row t holds the 4 upsampled outputs of step t)."""
    B, T, _ = x_parts[0].shape
    nparts = len(x_parts)
    const = lambda b: (0, 0)
    return pl.pallas_call(
        _make_head_kernel(nparts),
        out_shape=jax.ShapeDtypeStruct((B, T, 4), jnp.float32),
        grid=(B,),
        in_specs=([pl.BlockSpec((None, T, xp.shape[-1]), lambda b: (b, 0, 0))
                   for xp in x_parts]
                  + [pl.BlockSpec(w.shape, const) for w in wd_parts]
                  + [pl.BlockSpec(bd.shape, const),
                     pl.BlockSpec(wu.shape, const),
                     pl.BlockSpec(bu.shape, const)]),
        out_specs=pl.BlockSpec((None, T, 4), lambda b: (b, 0, 0)),
        compiler_params=pltpu.CompilerParams(dimension_semantics=("parallel",)),
    )(*(list(x_parts) + list(wd_parts) + [bd, wu, bu]))


# ----------------------------------------------------------------------------
# Full forward pass (matches CRNN.forward: GELU after each conv BN, ReLU head)
# ----------------------------------------------------------------------------
def crnn_forward(x, params):
    # x: (B, 2, L) NCL like PyTorch; channel 0 is dropped by x[:, 1:, :]
    B = x.shape[0]
    x = x[:, 1:, :]                                     # (B, 1, L)
    x = jnp.transpose(x, (0, 2, 1))                     # (B, L, 1) channels-last
    x = conv_bn_gelu(x, params["conv1"], padding=2, pool=False)  # (B, L,   128) [60 real]
    x = conv_bn_gelu(x, params["conv2"], padding=1, pool=True)   # (B, L/2, 128) [80 real]
    x = conv_bn_gelu(x, params["conv3"], padding=1, pool=True)   # (B, T=L/4, 128)
    f1, r1 = bilstm([x], params["lstm1"])               # 2 x (B, T, rnn_hidden)
    f2, r2 = bilstm([f1, r1], params["lstm2"])          # 2 x (B, T, 128)
    out = dense_head([f2, r2], [params["wd_f"], params["wd_r"]],
                     params["bd"], params["wu"], params["bu"])   # (B, T, 4)
    T = out.shape[1]
    return out.reshape(B, T * 4)                        # (B, L)   (single reshape)


# ----------------------------------------------------------------------------
# Deterministic synthetic parameters (shapes per CRNN.__init__)
# ----------------------------------------------------------------------------
def init_params(key, rnn_hidden=128, num_class=1):
    assert num_class == 1, "ConvTranspose1d(1, 1, 4, 4) head assumes num_class == 1"
    keys = iter(jax.random.split(key, 64))

    def nrm(shape, scale=0.1):
        return (scale * jax.random.normal(next(keys), shape)).astype(jnp.float32)

    def conv_bn(cin, cout, k):
        return dict(w=nrm((k, cin, cout)), b=nrm((cout,)),
                    gamma=1.0 + nrm((cout,)), beta=nrm((cout,)),
                    mean=nrm((cout,)), var=1.0 + jnp.abs(nrm((cout,))))

    def lstm(cin, h):
        # W_ih / W_hh stored transposed ((cin, 4h) / (h, 4h)); b = b_ih + b_hh.
        return dict(wih_f=nrm((cin, 4 * h)).astype(jnp.bfloat16),
                    whh_f=nrm((h, 4 * h)).astype(jnp.bfloat16),
                    b_f=nrm((1, 4 * h)),
                    wih_r=nrm((cin, 4 * h)).astype(jnp.bfloat16),
                    whh_r=nrm((h, 4 * h)).astype(jnp.bfloat16),
                    b_r=nrm((1, 4 * h)))

    return dict(
        conv1=conv_bn(1, 60, 5),
        conv2=conv_bn(60, 80, 3),
        conv3=conv_bn(80, 128, 3),
        lstm1=lstm(128, rnn_hidden),
        lstm2=lstm(2 * rnn_hidden, 128),
        wd_f=nrm((1, 128)), wd_r=nrm((1, 128)),    # Linear(2*128 -> 1), split halves
        bd=nrm((1, 1)),
        wu=nrm((1, 4)),                            # ConvTranspose1d(1, 1, 4, 4) weight
        bu=nrm((1, 1)),
    )


if __name__ == "__main__":
    key = jax.random.PRNGKey(0)
    kx, kp = jax.random.split(key)
    B, L = 2, 16                                   # L must be divisible by 4
    x = jax.random.normal(kx, (B, 2, L), dtype=jnp.float32)   # NCL, 2 channels
    params = init_params(kp, rnn_hidden=128, num_class=1)

    fwd = jax.jit(crnn_forward)
    out = jax.block_until_ready(fwd(x, params))

    assert out.shape == (B, L), out.shape
    assert bool(jnp.all(jnp.isfinite(out)))
    print("KERNEL_OK")
</pallas_src>

<mosaic_0001>
module attributes {stable_mosaic.version = 11 : i64} {
  func.func @kernel(%arg0: i32, %arg1: memref<1x20x1xf32, #tpu.memory_space<vmem>>, %arg2: memref<5x128xf32, #tpu.memory_space<vmem>>, %arg3: memref<1x128xf32, #tpu.memory_space<vmem>>, %arg4: memref<1x128xf32, #tpu.memory_space<vmem>>, %arg5: memref<1x16x128xbf16, #tpu.memory_space<vmem>>) attributes {dimension_semantics = [#tpu.dimension_semantics<parallel>], iteration_bounds = array<i64: 2>, scalar_prefetch = 0 : i64, scratch_operands = 0 : i64, tpu.core_type = #tpu.core_type<tc>, window_params = [{transform_indices = @transform_0, window_bounds = array<i64: 1, 20, 1>}, {pipeline_mode = #tpu.pipeline_mode<synchronous>, transform_indices = @transform_1, window_bounds = array<i64: 5, 128>}, {pipeline_mode = #tpu.pipeline_mode<synchronous>, transform_indices = @transform_2, window_bounds = array<i64: 1, 128>}, {pipeline_mode = #tpu.pipeline_mode<synchronous>, transform_indices = @transform_3, window_bounds = array<i64: 1, 128>}, {transform_indices = @transform_4, window_bounds = array<i64: 1, 16, 128>}]} {
    %c0 = arith.constant 0 : index
    %c0_0 = arith.constant 0 : index
    %c0_1 = arith.constant 0 : index
    %0 = vector.load %arg1[%c0, %c0_0, %c0_1] : memref<1x20x1xf32, #tpu.memory_space<vmem>>, vector<1x16x1xf32>
    %1 = vector.shape_cast %0 : vector<1x16x1xf32> to vector<16x1xf32>
    %c0_2 = arith.constant 0 : index
    %c0_3 = arith.constant 0 : index
    %2 = vector.load %arg2[%c0_2, %c0_3] : memref<5x128xf32, #tpu.memory_space<vmem>>, vector<1x128xf32>
    %3 = vector.broadcast %1 : vector<16x1xf32> to vector<16x128xf32>
    %4 = vector.broadcast %2 : vector<1x128xf32> to vector<16x128xf32>
    %5 = arith.mulf %3, %4 : vector<16x128xf32>
    %c0_4 = arith.constant 0 : index
    %c1 = arith.constant 1 : index
    %c0_5 = arith.constant 0 : index
    %6 = vector.load %arg1[%c0_4, %c1, %c0_5] : memref<1x20x1xf32, #tpu.memory_space<vmem>>, vector<1x16x1xf32>
    %7 = vector.shape_cast %6 : vector<1x16x1xf32> to vector<16x1xf32>
    %c1_6 = arith.constant 1 : index
    %c0_7 = arith.constant 0 : index
    %8 = vector.load %arg2[%c1_6, %c0_7] : memref<5x128xf32, #tpu.memory_space<vmem>>, vector<1x128xf32>
    %9 = vector.broadcast %7 : vector<16x1xf32> to vector<16x128xf32>
    %10 = vector.broadcast %8 : vector<1x128xf32> to vector<16x128xf32>
    %11 = arith.mulf %9, %10 : vector<16x128xf32>
    %12 = arith.addf %5, %11 : vector<16x128xf32>
    %c0_8 = arith.constant 0 : index
    %c2 = arith.constant 2 : index
    %c0_9 = arith.constant 0 : index
    %13 = vector.load %arg1[%c0_8, %c2, %c0_9] : memref<1x20x1xf32, #tpu.memory_space<vmem>>, vector<1x16x1xf32>
    %14 = vector.shape_cast %13 : vector<1x16x1xf32> to vector<16x1xf32>
    %c2_10 = arith.constant 2 : index
    %c0_11 = arith.constant 0 : index
    %15 = vector.load %arg2[%c2_10, %c0_11] : memref<5x128xf32, #tpu.memory_space<vmem>>, vector<1x128xf32>
    %16 = vector.broadcast %14 : vector<16x1xf32> to vector<16x128xf32>
    %17 = vector.broadcast %15 : vector<1x128xf32> to vector<16x128xf32>
    %18 = arith.mulf %16, %17 : vector<16x128xf32>
    %19 = arith.addf %12, %18 : vector<16x128xf32>
    %c0_12 = arith.constant 0 : index
    %c3 = arith.constant 3 : index
    %c0_13 = arith.constant 0 : index
    %20 = vector.load %arg1[%c0_12, %c3, %c0_13] : memref<1x20x1xf32, #tpu.memory_space<vmem>>, vector<1x16x1xf32>
    %21 = vector.shape_cast %20 : vector<1x16x1xf32> to vector<16x1xf32>
    %c3_14 = arith.constant 3 : index
    %c0_15 = arith.constant 0 : index
    %22 = vector.load %arg2[%c3_14, %c0_15] : memref<5x128xf32, #tpu.memory_space<vmem>>, vector<1x128xf32>
    %23 = vector.broadcast %21 : vector<16x1xf32> to vector<16x128xf32>
    %24 = vector.broadcast %22 : vector<1x128xf32> to vector<16x128xf32>
    %25 = arith.mulf %23, %24 : vector<16x128xf32>
    %26 = arith.addf %19, %25 : vector<16x128xf32>
    %c0_16 = arith.constant 0 : index
    %c4 = arith.constant 4 : index
    %c0_17 = arith.constant 0 : index
    %27 = vector.load %arg1[%c0_16, %c4, %c0_17] : memref<1x20x1xf32, #tpu.memory_space<vmem>>, vector<1x16x1xf32>
    %28 = vector.shape_cast %27 : vector<1x16x1xf32> to vector<16x1xf32>
    %c4_18 = arith.constant 4 : index
    %c0_19 = arith.constant 0 : index
    %29 = vector.load %arg2[%c4_18, %c0_19] : memref<5x128xf32, #tpu.memory_space<vmem>>, vector<1x128xf32>
    %30 = vector.broadcast %28 : vector<16x1xf32> to vector<16x128xf32>
    %31 = vector.broadcast %29 : vector<1x128xf32> to vector<16x128xf32>
    %32 = arith.mulf %30, %31 : vector<16x128xf32>
    %33 = arith.addf %26, %32 : vector<16x128xf32>
    %c0_20 = arith.constant 0 : index
    %c0_21 = arith.constant 0 : index
    %34 = vector.load %arg3[%c0_20, %c0_21] : memref<1x128xf32, #tpu.memory_space<vmem>>, vector<1x128xf32>
    %35 = vector.broadcast %34 : vector<1x128xf32> to vector<16x128xf32>
    %36 = arith.mulf %33, %35 : vector<16x128xf32>
    %c0_22 = arith.constant 0 : index
    %c0_23 = arith.constant 0 : index
    %37 = vector.load %arg4[%c0_22, %c0_23] : memref<1x128xf32, #tpu.memory_space<vmem>>, vector<1x128xf32>
    %38 = vector.broadcast %37 : vector<1x128xf32> to vector<16x128xf32>
    %39 = arith.addf %36, %38 : vector<16x128xf32>
    %cst = arith.constant 5.000000e-01 : f32
    %40 = vector.broadcast %cst : f32 to vector<16x128xf32>
    %41 = arith.mulf %40, %39 : vector<16x128xf32>
    %cst_24 = arith.constant 0.707106769 : f32
    %42 = vector.broadcast %cst_24 : f32 to vector<16x128xf32>
    %43 = arith.mulf %39, %42 : vector<16x128xf32>
    %44 = math.absf %43 : vector<16x128xf32>
    %cst_25 = arith.constant 0.327591091 : f32
    %45 = vector.broadcast %cst_25 : f32 to vector<16x128xf32>
    %46 = arith.mulf %45, %44 : vector<16x128xf32>
    %cst_26 = arith.constant 1.000000e+00 : f32
    %47 = vector.broadcast %cst_26 : f32 to vector<16x128xf32>
    %48 = arith.addf %47, %46 : vector<16x128xf32>
    %cst_27 = arith.constant 1.000000e+00 : f32
    %49 = vector.broadcast %cst_27 : f32 to vector<16x128xf32>
    %50 = arith.divf %49, %48 : vector<16x128xf32>
    %cst_28 = arith.constant 1.06140542 : f32
    %51 = vector.broadcast %cst_28 : f32 to vector<16x128xf32>
    %52 = arith.mulf %50, %51 : vector<16x128xf32>
    %cst_29 = arith.constant -1.45315206 : f32
    %53 = vector.broadcast %cst_29 : f32 to vector<16x128xf32>
    %54 = arith.addf %53, %52 : vector<16x128xf32>
    %55 = arith.mulf %50, %54 : vector<16x128xf32>
    %cst_30 = arith.constant 1.42141378 : f32
    %56 = vector.broadcast %cst_30 : f32 to vector<16x128xf32>
    %57 = arith.addf %56, %55 : vector<16x128xf32>
    %58 = arith.mulf %50, %57 : vector<16x128xf32>
    %cst_31 = arith.constant -0.284496725 : f32
    %59 = vector.broadcast %cst_31 : f32 to vector<16x128xf32>
    %60 = arith.addf %59, %58 : vector<16x128xf32>
    %61 = arith.mulf %50, %60 : vector<16x128xf32>
    %cst_32 = arith.constant 0.254829586 : f32
    %62 = vector.broadcast %cst_32 : f32 to vector<16x128xf32>
    %63 = arith.addf %62, %61 : vector<16x128xf32>
    %64 = arith.mulf %50, %63 : vector<16x128xf32>
    %cst_33 = arith.constant 0.000000e+00 : f32
    %65 = vector.broadcast %cst_33 : f32 to vector<16x128xf32>
    %66 = arith.subf %65, %44 : vector<16x128xf32>
    %67 = arith.mulf %66, %44 : vector<16x128xf32>
    %68 = math.exp %67 : vector<16x128xf32>
    %69 = arith.mulf %64, %68 : vector<16x128xf32>
    %cst_34 = arith.constant 1.000000e+00 : f32
    %70 = vector.broadcast %cst_34 : f32 to vector<16x128xf32>
    %71 = arith.subf %70, %69 : vector<16x128xf32>
    %cst_35 = arith.constant 0.000000e+00 : f32
    %72 = vector.broadcast %cst_35 : f32 to vector<16x128xf32>
    %73 = arith.cmpf olt, %43, %72 : vector<16x128xf32>
    %cst_36 = arith.constant 0.000000e+00 : f32
    %74 = vector.broadcast %cst_36 : f32 to vector<16x128xf32>
    %75 = arith.subf %74, %71 : vector<16x128xf32>
    %76 = arith.select %73, %75, %71 : vector<16x128xi1>, vector<16x128xf32>
    %cst_37 = arith.constant 1.000000e+00 : f32
    %77 = vector.broadcast %cst_37 : f32 to vector<16x128xf32>
    %78 = arith.addf %77, %76 : vector<16x128xf32>
    %79 = arith.mulf %41, %78 : vector<16x128xf32>
    %80 = arith.truncf %79 : vector<16x128xf32> to vector<16x128xbf16>
    %c0_38 = arith.constant 0 : index
    %c0_39 = arith.constant 0 : index
    %c0_40 = arith.constant 0 : index
    %81 = vector.load %arg5[%c0_38, %c0_39, %c0_40] : memref<1x16x128xbf16, #tpu.memory_space<vmem>>, vector<1x16x128xbf16>
    %82 = vector.shape_cast %81 : vector<1x16x128xbf16> to vector<16x128xbf16>
    %83 = vector.shape_cast %80 : vector<16x128xbf16> to vector<1x16x128xbf16>
    tpu.vector_store %arg5[%c0_38, %c0_39, %c0_40], %83 {strides = array<i32>} : memref<1x16x128xbf16, #tpu.memory_space<vmem>>, vector<1x16x128xbf16>,
    return
  }
  func.func @transform_0(%arg0: i32) -> (i32, i32, i32) {
    %c0_i32 = arith.constant 0 : i32
    %c0_i32_0 = arith.constant 0 : i32
    %c0_i32_1 = arith.constant 0 : i32
    return %arg0, %c0_i32, %c0_i32_0 : i32, i32, i32
  }
  func.func @transform_1(%arg0: i32) -> (i32, i32) {
    %c0_i32 = arith.constant 0 : i32
    %c0_i32_0 = arith.constant 0 : i32
    %c0_i32_1 = arith.constant 0 : i32
    return %c0_i32, %c0_i32_0 : i32, i32
  }
  func.func @transform_2(%arg0: i32) -> (i32, i32) {
    %c0_i32 = arith.constant 0 : i32
    %c0_i32_0 = arith.constant 0 : i32
    %c0_i32_1 = arith.constant 0 : i32
    return %c0_i32, %c0_i32_0 : i32, i32
  }
  func.func @transform_3(%arg0: i32) -> (i32, i32) {
    %c0_i32 = arith.constant 0 : i32
    %c0_i32_0 = arith.constant 0 : i32
    %c0_i32_1 = arith.constant 0 : i32
    return %c0_i32, %c0_i32_0 : i32, i32
  }
  func.func @transform_4(%arg0: i32) -> (i32, i32, i32) {
    %c0_i32 = arith.constant 0 : i32
    %c0_i32_0 = arith.constant 0 : i32
    %c0_i32_1 = arith.constant 0 : i32
    return %arg0, %c0_i32, %c0_i32_0 : i32, i32, i32
  }
}

module attributes {stable_mosaic.version = 11 : i64} {
  func.func @kernel(%arg0: i32, %arg1: memref<1x18x128xbf16, #tpu.memory_space<vmem>>, %arg2: memref<3x128x128xbf16, #tpu.memory_space<vmem>>, %arg3: memref<1x128xf32, #tpu.memory_space<vmem>>, %arg4: memref<1x128xf32, #tpu.memory_space<vmem>>, %arg5: memref<1x8x128xbf16, #tpu.memory_space<vmem>>) attributes {dimension_semantics = [#tpu.dimension_semantics<parallel>], iteration_bounds = array<i64: 2>, scalar_prefetch = 0 : i64, scratch_operands = 0 : i64, tpu.core_type = #tpu.core_type<tc>, window_params = [{transform_indices = @transform_0, window_bounds = array<i64: 1, 18, 128>}, {pipeline_mode = #tpu.pipeline_mode<synchronous>, transform_indices = @transform_1, window_bounds = array<i64: 3, 128, 128>}, {pipeline_mode = #tpu.pipeline_mode<synchronous>, transform_indices = @transform_2, window_bounds = array<i64: 1, 128>}, {pipeline_mode = #tpu.pipeline_mode<synchronous>, transform_indices = @transform_3, window_bounds = array<i64: 1, 128>}, {transform_indices = @transform_4, window_bounds = array<i64: 1, 8, 128>}]} {
    %c0 = arith.constant 0 : index
    %c0_0 = arith.constant 0 : index
    %c0_1 = arith.constant 0 : index
    %0 = vector.load %arg1[%c0, %c0_0, %c0_1] : memref<1x18x128xbf16, #tpu.memory_space<vmem>>, vector<1x16x128xbf16>
    %1 = vector.shape_cast %0 : vector<1x16x128xbf16> to vector<16x128xbf16>
    %c0_2 = arith.constant 0 : index
    %c0_3 = arith.constant 0 : index
    %c0_4 = arith.constant 0 : index
    %2 = vector.load %arg2[%c0_2, %c0_3, %c0_4] : memref<3x128x128xbf16, #tpu.memory_space<vmem>>, vector<1x128x128xbf16>
    %3 = vector.shape_cast %2 : vector<1x128x128xbf16> to vector<128x128xbf16>
    %cst = arith.constant dense<0.000000e+00> : vector<16x128xf32>
    %4 = tpu.matmul %1, %3, %cst {dimension_numbers = #tpu.dot_dimension_numbers<[1], [0], [0], [1], [0, 0, 1, 1], [], []>} : vector<16x128xbf16>, vector<128x128xbf16>, vector<16x128xf32> -> vector<16x128xf32>
    %c0_5 = arith.constant 0 : index
    %c1 = arith.constant 1 : index
    %c0_6 = arith.constant 0 : index
    %5 = vector.load %arg1[%c0_5, %c1, %c0_6] : memref<1x18x128xbf16, #tpu.memory_space<vmem>>, vector<1x16x128xbf16>
    %6 = vector.shape_cast %5 : vector<1x16x128xbf16> to vector<16x128xbf16>
    %c1_7 = arith.constant 1 : index
    %c0_8 = arith.constant 0 : index
    %c0_9 = arith.constant 0 : index
    %7 = vector.load %arg2[%c1_7, %c0_8, %c0_9] : memref<3x128x128xbf16, #tpu.memory_space<vmem>>, vector<1x128x128xbf16>
    %8 = vector.shape_cast %7 : vector<1x128x128xbf16> to vector<128x128xbf16>
    %cst_10 = arith.constant dense<0.000000e+00> : vector<16x128xf32>
    %9 = tpu.matmul %6, %8, %cst_10 {dimension_numbers = #tpu.dot_dimension_numbers<[1], [0], [0], [1], [0, 0, 1, 1], [], []>} : vector<16x128xbf16>, vector<128x128xbf16>, vector<16x128xf32> -> vector<16x128xf32>
    %10 = arith.addf %4, %9 : vector<16x128xf32>
    %c0_11 = arith.constant 0 : index
    %c2 = arith.constant 2 : index
    %c0_12 = arith.constant 0 : index
    %11 = vector.load %arg1[%c0_11, %c2, %c0_12] : memref<1x18x128xbf16, #tpu.memory_space<vmem>>, vector<1x16x128xbf16>
    %12 = vector.shape_cast %11 : vector<1x16x128xbf16> to vector<16x128xbf16>
    %c2_13 = arith.constant 2 : index
    %c0_14 = arith.constant 0 : index
    %c0_15 = arith.constant 0 : index
    %13 = vector.load %arg2[%c2_13, %c0_14, %c0_15] : memref<3x128x128xbf16, #tpu.memory_space<vmem>>, vector<1x128x128xbf16>
    %14 = vector.shape_cast %13 : vector<1x128x128xbf16> to vector<128x128xbf16>
    %cst_16 = arith.constant dense<0.000000e+00> : vector<16x128xf32>
    %15 = tpu.matmul %12, %14, %cst_16 {dimension_numbers = #tpu.dot_dimension_numbers<[1], [0], [0], [1], [0, 0, 1, 1], [], []>} : vector<16x128xbf16>, vector<128x128xbf16>, vector<16x128xf32> -> vector<16x128xf32>
    %16 = arith.addf %10, %15 : vector<16x128xf32>
    %c0_17 = arith.constant 0 : index
    %c0_18 = arith.constant 0 : index
    %17 = vector.load %arg3[%c0_17, %c0_18] : memref<1x128xf32, #tpu.memory_space<vmem>>, vector<1x128xf32>
    %18 = vector.broadcast %17 : vector<1x128xf32> to vector<16x128xf32>
    %19 = arith.mulf %16, %18 : vector<16x128xf32>
    %c0_19 = arith.constant 0 : index
    %c0_20 = arith.constant 0 : index
    %20 = vector.load %arg4[%c0_19, %c0_20] : memref<1x128xf32, #tpu.memory_space<vmem>>, vector<1x128xf32>
    %21 = vector.broadcast %20 : vector<1x128xf32> to vector<16x128xf32>
    %22 = arith.addf %19, %21 : vector<16x128xf32>
    %cst_21 = arith.constant 5.000000e-01 : f32
    %23 = vector.broadcast %cst_21 : f32 to vector<16x128xf32>
    %24 = arith.mulf %23, %22 : vector<16x128xf32>
    %cst_22 = arith.constant 0.707106769 : f32
    %25 = vector.broadcast %cst_22 : f32 to vector<16x128xf32>
    %26 = arith.mulf %22, %25 : vector<16x128xf32>
    %27 = math.absf %26 : vector<16x128xf32>
    %cst_23 = arith.constant 0.327591091 : f32
    %28 = vector.broadcast %cst_23 : f32 to vector<16x128xf32>
    %29 = arith.mulf %28, %27 : vector<16x128xf32>
    %cst_24 = arith.constant 1.000000e+00 : f32
    %30 = vector.broadcast %cst_24 : f32 to vector<16x128xf32>
    %31 = arith.addf %30, %29 : vector<16x128xf32>
    %cst_25 = arith.constant 1.000000e+00 : f32
    %32 = vector.broadcast %cst_25 : f32 to vector<16x128xf32>
    %33 = arith.divf %32, %31 : vector<16x128xf32>
    %cst_26 = arith.constant 1.06140542 : f32
    %34 = vector.broadcast %cst_26 : f32 to vector<16x128xf32>
    %35 = arith.mulf %33, %34 : vector<16x128xf32>
    %cst_27 = arith.constant -1.45315206 : f32
    %36 = vector.broadcast %cst_27 : f32 to vector<16x128xf32>
    %37 = arith.addf %36, %35 : vector<16x128xf32>
    %38 = arith.mulf %33, %37 : vector<16x128xf32>
    %cst_28 = arith.constant 1.42141378 : f32
    %39 = vector.broadcast %cst_28 : f32 to vector<16x128xf32>
    %40 = arith.addf %39, %38 : vector<16x128xf32>
    %41 = arith.mulf %33, %40 : vector<16x128xf32>
    %cst_29 = arith.constant -0.284496725 : f32
    %42 = vector.broadcast %cst_29 : f32 to vector<16x128xf32>
    %43 = arith.addf %42, %41 : vector<16x128xf32>
    %44 = arith.mulf %33, %43 : vector<16x128xf32>
    %cst_30 = arith.constant 0.254829586 : f32
    %45 = vector.broadcast %cst_30 : f32 to vector<16x128xf32>
    %46 = arith.addf %45, %44 : vector<16x128xf32>
    %47 = arith.mulf %33, %46 : vector<16x128xf32>
    %cst_31 = arith.constant 0.000000e+00 : f32
    %48 = vector.broadcast %cst_31 : f32 to vector<16x128xf32>
    %49 = arith.subf %48, %27 : vector<16x128xf32>
    %50 = arith.mulf %49, %27 : vector<16x128xf32>
    %51 = math.exp %50 : vector<16x128xf32>
    %52 = arith.mulf %47, %51 : vector<16x128xf32>
    %cst_32 = arith.constant 1.000000e+00 : f32
    %53 = vector.broadcast %cst_32 : f32 to vector<16x128xf32>
    %54 = arith.subf %53, %52 : vector<16x128xf32>
    %cst_33 = arith.constant 0.000000e+00 : f32
    %55 = vector.broadcast %cst_33 : f32 to vector<16x128xf32>
    %56 = arith.cmpf olt, %26, %55 : vector<16x128xf32>
    %cst_34 = arith.constant 0.000000e+00 : f32
    %57 = vector.broadcast %cst_34 : f32 to vector<16x128xf32>
    %58 = arith.subf %57, %54 : vector<16x128xf32>
    %59 = arith.select %56, %58, %54 : vector<16x128xi1>, vector<16x128xf32>
    %cst_35 = arith.constant 1.000000e+00 : f32
    %60 = vector.broadcast %cst_35 : f32 to vector<16x128xf32>
    %61 = arith.addf %60, %59 : vector<16x128xf32>
    %62 = arith.mulf %24, %61 : vector<16x128xf32>
    %63 = vector.shape_cast %62 : vector<16x128xf32> to vector<8x2x128xf32>
    %cst_36 = arith.constant dense<0xFF800000> : vector<8x128xf32>
    %64 = vector.multi_reduction <maximumf>, %63, %cst_36 [1] : vector<8x2x128xf32> to vector<8x128xf32>
    %65 = arith.truncf %64 : vector<8x128xf32> to vector<8x128xbf16>
    %c0_37 = arith.constant 0 : index
    %c0_38 = arith.constant 0 : index
    %c0_39 = arith.constant 0 : index
    %66 = vector.load %arg5[%c0_37, %c0_38, %c0_39] : memref<1x8x128xbf16, #tpu.memory_space<vmem>>, vector<1x8x128xbf16>
    %67 = vector.shape_cast %66 : vector<1x8x128xbf16> to vector<8x128xbf16>
    %68 = vector.shape_cast %65 : vector<8x128xbf16> to vector<1x8x128xbf16>
    tpu.vector_store %arg5[%c0_37, %c0_38, %c0_39], %68 {strides = array<i32>} : memref<1x8x128xbf16, #tpu.memory_space<vmem>>, vector<1x8x128xbf16>,
    return
  }
  func.func @transform_0(%arg0: i32) -> (i32, i32, i32) {
    %c0_i32 = arith.constant 0 : i32
    %c0_i32_0 = arith.constant 0 : i32
    %c0_i32_1 = arith.constant 0 : i32
    return %arg0, %c0_i32, %c0_i32_0 : i32, i32, i32
  }
  func.func @transform_1(%arg0: i32) -> (i32, i32, i32) {
    %c0_i32 = arith.constant 0 : i32
    %c0_i32_0 = arith.constant 0 : i32
    %c0_i32_1 = arith.constant 0 : i32
    %c0_i32_2 = arith.constant 0 : i32
    return %c0_i32, %c0_i32_0, %c0_i32_1 : i32, i32, i32
  }
  func.func @transform_2(%arg0: i32) -> (i32, i32) {
    %c0_i32 = arith.constant 0 : i32
    %c0_i32_0 = arith.constant 0 : i32
    %c0_i32_1 = arith.constant 0 : i32
    return %c0_i32, %c0_i32_0 : i32, i32
  }
  func.func @transform_3(%arg0: i32) -> (i32, i32) {
    %c0_i32 = arith.constant 0 : i32
    %c0_i32_0 = arith.constant 0 : i32
    %c0_i32_1 = arith.constant 0 : i32
    return %c0_i32, %c0_i32_0 : i32, i32
  }
  func.func @transform_4(%arg0: i32) -> (i32, i32, i32) {
    %c0_i32 = arith.constant 0 : i32
    %c0_i32_0 = arith.constant 0 : i32
    %c0_i32_1 = arith.constant 0 : i32
    return %arg0, %c0_i32, %c0_i32_0 : i32, i32, i32
  }
}

module attributes {stable_mosaic.version = 11 : i64} {
  func.func @kernel(%arg0: i32, %arg1: memref<1x10x128xbf16, #tpu.memory_space<vmem>>, %arg2: memref<3x128x128xbf16, #tpu.memory_space<vmem>>, %arg3: memref<1x128xf32, #tpu.memory_space<vmem>>, %arg4: memref<1x128xf32, #tpu.memory_space<vmem>>, %arg5: memref<1x4x128xbf16, #tpu.memory_space<vmem>>) attributes {dimension_semantics = [#tpu.dimension_semantics<parallel>], iteration_bounds = array<i64: 2>, scalar_prefetch = 0 : i64, scratch_operands = 0 : i64, tpu.core_type = #tpu.core_type<tc>, window_params = [{transform_indices = @transform_0, window_bounds = array<i64: 1, 10, 128>}, {pipeline_mode = #tpu.pipeline_mode<synchronous>, transform_indices = @transform_1, window_bounds = array<i64: 3, 128, 128>}, {pipeline_mode = #tpu.pipeline_mode<synchronous>, transform_indices = @transform_2, window_bounds = array<i64: 1, 128>}, {pipeline_mode = #tpu.pipeline_mode<synchronous>, transform_indices = @transform_3, window_bounds = array<i64: 1, 128>}, {transform_indices = @transform_4, window_bounds = array<i64: 1, 4, 128>}]} {
    %c0 = arith.constant 0 : index
    %c0_0 = arith.constant 0 : index
    %c0_1 = arith.constant 0 : index
    %0 = vector.load %arg1[%c0, %c0_0, %c0_1] : memref<1x10x128xbf16, #tpu.memory_space<vmem>>, vector<1x8x128xbf16>
    %1 = vector.shape_cast %0 : vector<1x8x128xbf16> to vector<8x128xbf16>
    %c0_2 = arith.constant 0 : index
    %c0_3 = arith.constant 0 : index
    %c0_4 = arith.constant 0 : index
    %2 = vector.load %arg2[%c0_2, %c0_3, %c0_4] : memref<3x128x128xbf16, #tpu.memory_space<vmem>>, vector<1x128x128xbf16>
    %3 = vector.shape_cast %2 : vector<1x128x128xbf16> to vector<128x128xbf16>
    %cst = arith.constant dense<0.000000e+00> : vector<8x128xf32>
    %4 = tpu.matmul %1, %3, %cst {dimension_numbers = #tpu.dot_dimension_numbers<[1], [0], [0], [1], [0, 0, 1, 1], [], []>} : vector<8x128xbf16>, vector<128x128xbf16>, vector<8x128xf32> -> vector<8x128xf32>
    %c0_5 = arith.constant 0 : index
    %c1 = arith.constant 1 : index
    %c0_6 = arith.constant 0 : index
    %5 = vector.load %arg1[%c0_5, %c1, %c0_6] : memref<1x10x128xbf16, #tpu.memory_space<vmem>>, vector<1x8x128xbf16>
    %6 = vector.shape_cast %5 : vector<1x8x128xbf16> to vector<8x128xbf16>
    %c1_7 = arith.constant 1 : index
    %c0_8 = arith.constant 0 : index
    %c0_9 = arith.constant 0 : index
    %7 = vector.load %arg2[%c1_7, %c0_8, %c0_9] : memref<3x128x128xbf16, #tpu.memory_space<vmem>>, vector<1x128x128xbf16>
    %8 = vector.shape_cast %7 : vector<1x128x128xbf16> to vector<128x128xbf16>
    %cst_10 = arith.constant dense<0.000000e+00> : vector<8x128xf32>
    %9 = tpu.matmul %6, %8, %cst_10 {dimension_numbers = #tpu.dot_dimension_numbers<[1], [0], [0], [1], [0, 0, 1, 1], [], []>} : vector<8x128xbf16>, vector<128x128xbf16>, vector<8x128xf32> -> vector<8x128xf32>
    %10 = arith.addf %4, %9 : vector<8x128xf32>
    %c0_11 = arith.constant 0 : index
    %c2 = arith.constant 2 : index
    %c0_12 = arith.constant 0 : index
    %11 = vector.load %arg1[%c0_11, %c2, %c0_12] : memref<1x10x128xbf16, #tpu.memory_space<vmem>>, vector<1x8x128xbf16>
    %12 = vector.shape_cast %11 : vector<1x8x128xbf16> to vector<8x128xbf16>
    %c2_13 = arith.constant 2 : index
    %c0_14 = arith.constant 0 : index
    %c0_15 = arith.constant 0 : index
    %13 = vector.load %arg2[%c2_13, %c0_14, %c0_15] : memref<3x128x128xbf16, #tpu.memory_space<vmem>>, vector<1x128x128xbf16>
    %14 = vector.shape_cast %13 : vector<1x128x128xbf16> to vector<128x128xbf16>
    %cst_16 = arith.constant dense<0.000000e+00> : vector<8x128xf32>
    %15 = tpu.matmul %12, %14, %cst_16 {dimension_numbers = #tpu.dot_dimension_numbers<[1], [0], [0], [1], [0, 0, 1, 1], [], []>} : vector<8x128xbf16>, vector<128x128xbf16>, vector<8x128xf32> -> vector<8x128xf32>
    %16 = arith.addf %10, %15 : vector<8x128xf32>
    %c0_17 = arith.constant 0 : index
    %c0_18 = arith.constant 0 : index
    %17 = vector.load %arg3[%c0_17, %c0_18] : memref<1x128xf32, #tpu.memory_space<vmem>>, vector<1x128xf32>
    %18 = vector.broadcast %17 : vector<1x128xf32> to vector<8x128xf32>
    %19 = arith.mulf %16, %18 : vector<8x128xf32>
    %c0_19 = arith.constant 0 : index
    %c0_20 = arith.constant 0 : index
    %20 = vector.load %arg4[%c0_19, %c0_20] : memref<1x128xf32, #tpu.memory_space<vmem>>, vector<1x128xf32>
    %21 = vector.broadcast %20 : vector<1x128xf32> to vector<8x128xf32>
    %22 = arith.addf %19, %21 : vector<8x128xf32>
    %cst_21 = arith.constant 5.000000e-01 : f32
    %23 = vector.broadcast %cst_21 : f32 to vector<8x128xf32>
    %24 = arith.mulf %23, %22 : vector<8x128xf32>
    %cst_22 = arith.constant 0.707106769 : f32
    %25 = vector.broadcast %cst_22 : f32 to vector<8x128xf32>
    %26 = arith.mulf %22, %25 : vector<8x128xf32>
    %27 = math.absf %26 : vector<8x128xf32>
    %cst_23 = arith.constant 0.327591091 : f32
    %28 = vector.broadcast %cst_23 : f32 to vector<8x128xf32>
    %29 = arith.mulf %28, %27 : vector<8x128xf32>
    %cst_24 = arith.constant 1.000000e+00 : f32
    %30 = vector.broadcast %cst_24 : f32 to vector<8x128xf32>
    %31 = arith.addf %30, %29 : vector<8x128xf32>
    %cst_25 = arith.constant 1.000000e+00 : f32
    %32 = vector.broadcast %cst_25 : f32 to vector<8x128xf32>
    %33 = arith.divf %32, %31 : vector<8x128xf32>
    %cst_26 = arith.constant 1.06140542 : f32
    %34 = vector.broadcast %cst_26 : f32 to vector<8x128xf32>
    %35 = arith.mulf %33, %34 : vector<8x128xf32>
    %cst_27 = arith.constant -1.45315206 : f32
    %36 = vector.broadcast %cst_27 : f32 to vector<8x128xf32>
    %37 = arith.addf %36, %35 : vector<8x128xf32>
    %38 = arith.mulf %33, %37 : vector<8x128xf32>
    %cst_28 = arith.constant 1.42141378 : f32
    %39 = vector.broadcast %cst_28 : f32 to vector<8x128xf32>
    %40 = arith.addf %39, %38 : vector<8x128xf32>
    %41 = arith.mulf %33, %40 : vector<8x128xf32>
    %cst_29 = arith.constant -0.284496725 : f32
    %42 = vector.broadcast %cst_29 : f32 to vector<8x128xf32>
    %43 = arith.addf %42, %41 : vector<8x128xf32>
    %44 = arith.mulf %33, %43 : vector<8x128xf32>
    %cst_30 = arith.constant 0.254829586 : f32
    %45 = vector.broadcast %cst_30 : f32 to vector<8x128xf32>
    %46 = arith.addf %45, %44 : vector<8x128xf32>
    %47 = arith.mulf %33, %46 : vector<8x128xf32>
    %cst_31 = arith.constant 0.000000e+00 : f32
    %48 = vector.broadcast %cst_31 : f32 to vector<8x128xf32>
    %49 = arith.subf %48, %27 : vector<8x128xf32>
    %50 = arith.mulf %49, %27 : vector<8x128xf32>
    %51 = math.exp %50 : vector<8x128xf32>
    %52 = arith.mulf %47, %51 : vector<8x128xf32>
    %cst_32 = arith.constant 1.000000e+00 : f32
    %53 = vector.broadcast %cst_32 : f32 to vector<8x128xf32>
    %54 = arith.subf %53, %52 : vector<8x128xf32>
    %cst_33 = arith.constant 0.000000e+00 : f32
    %55 = vector.broadcast %cst_33 : f32 to vector<8x128xf32>
    %56 = arith.cmpf olt, %26, %55 : vector<8x128xf32>
    %cst_34 = arith.constant 0.000000e+00 : f32
    %57 = vector.broadcast %cst_34 : f32 to vector<8x128xf32>
    %58 = arith.subf %57, %54 : vector<8x128xf32>
    %59 = arith.select %56, %58, %54 : vector<8x128xi1>, vector<8x128xf32>
    %cst_35 = arith.constant 1.000000e+00 : f32
    %60 = vector.broadcast %cst_35 : f32 to vector<8x128xf32>
    %61 = arith.addf %60, %59 : vector<8x128xf32>
    %62 = arith.mulf %24, %61 : vector<8x128xf32>
    %63 = vector.shape_cast %62 : vector<8x128xf32> to vector<4x2x128xf32>
    %cst_36 = arith.constant dense<0xFF800000> : vector<4x128xf32>
    %64 = vector.multi_reduction <maximumf>, %63, %cst_36 [1] : vector<4x2x128xf32> to vector<4x128xf32>
    %65 = arith.truncf %64 : vector<4x128xf32> to vector<4x128xbf16>
    %c0_37 = arith.constant 0 : index
    %c0_38 = arith.constant 0 : index
    %c0_39 = arith.constant 0 : index
    %66 = vector.load %arg5[%c0_37, %c0_38, %c0_39] : memref<1x4x128xbf16, #tpu.memory_space<vmem>>, vector<1x4x128xbf16>
    %67 = vector.shape_cast %66 : vector<1x4x128xbf16> to vector<4x128xbf16>
    %68 = vector.shape_cast %65 : vector<4x128xbf16> to vector<1x4x128xbf16>
    tpu.vector_store %arg5[%c0_37, %c0_38, %c0_39], %68 {strides = array<i32>} : memref<1x4x128xbf16, #tpu.memory_space<vmem>>, vector<1x4x128xbf16>,
    return
  }
  func.func @transform_0(%arg0: i32) -> (i32, i32, i32) {
    %c0_i32 = arith.constant 0 : i32
    %c0_i32_0 = arith.constant 0 : i32
    %c0_i32_1 = arith.constant 0 : i32
    return %arg0, %c0_i32, %c0_i32_0 : i32, i32, i32
  }
  func.func @transform_1(%arg0: i32) -> (i32, i32, i32) {
    %c0_i32 = arith.constant 0 : i32
    %c0_i32_0 = arith.constant 0 : i32
    %c0_i32_1 = arith.constant 0 : i32
    %c0_i32_2 = arith.constant 0 : i32
    return %c0_i32, %c0_i32_0, %c0_i32_1 : i32, i32, i32
  }
  func.func @transform_2(%arg0: i32) -> (i32, i32) {
    %c0_i32 = arith.constant 0 : i32
    %c0_i32_0 = arith.constant 0 : i32
    %c0_i32_1 = arith.constant 0 : i32
    return %c0_i32, %c0_i32_0 : i32, i32
  }
  func.func @transform_3(%arg0: i32) -> (i32, i32) {
    %c0_i32 = arith.constant 0 : i32
    %c0_i32_0 = arith.constant 0 : i32
    %c0_i32_1 = arith.constant 0 : i32
    return %c0_i32, %c0_i32_0 : i32, i32
  }
  func.func @transform_4(%arg0: i32) -> (i32, i32, i32) {
    %c0_i32 = arith.constant 0 : i32
    %c0_i32_0 = arith.constant 0 : i32
    %c0_i32_1 = arith.constant 0 : i32
    return %arg0, %c0_i32, %c0_i32_0 : i32, i32, i32
  }
}

module attributes {stable_mosaic.version = 11 : i64} {
  func.func @kernel(%arg0: i32, %arg1: memref<2x4x128xbf16, #tpu.memory_space<vmem>>, %arg2: memref<2x4x128xbf16, #tpu.memory_space<vmem>>, %arg3: memref<128x512xbf16, #tpu.memory_space<vmem>>, %arg4: memref<128x512xbf16, #tpu.memory_space<vmem>>, %arg5: memref<256x1024xbf16, #tpu.memory_space<vmem>>, %arg6: memref<1x512xf32, #tpu.memory_space<vmem>>, %arg7: memref<1x512xf32, #tpu.memory_space<vmem>>, %arg8: memref<2x4x128xbf16, #tpu.memory_space<vmem>>, %arg9: memref<2x4x128xbf16, #tpu.memory_space<vmem>>, %arg10: memref<2x256xf32, #tpu.memory_space<vmem>>, %arg11: memref<2x128xf32, #tpu.memory_space<vmem>>, %arg12: memref<2x128xf32, #tpu.memory_space<vmem>>, %arg13: memref<2x4x512xf32, #tpu.memory_space<vmem>>, %arg14: memref<2x4x512xf32, #tpu.memory_space<vmem>>) attributes {dimension_semantics = [#tpu.dimension_semantics<arbitrary>], iteration_bounds = array<i64: 1>, scalar_prefetch = 0 : i64, scratch_operands = 5 : i64, tpu.core_type = #tpu.core_type<tc>, window_params = [{transform_indices = @transform_0, window_bounds = array<i64: 2, 4, 128>}, {transform_indices = @transform_1, window_bounds = array<i64: 2, 4, 128>}, {pipeline_mode = #tpu.pipeline_mode<synchronous>, transform_indices = @transform_2, window_bounds = array<i64: 128, 512>}, {pipeline_mode = #tpu.pipeline_mode<synchronous>, transform_indices = @transform_3, window_bounds = array<i64: 128, 512>}, {pipeline_mode = #tpu.pipeline_mode<synchronous>, transform_indices = @transform_4, window_bounds = array<i64: 256, 1024>}, {pipeline_mode = #tpu.pipeline_mode<synchronous>, transform_indices = @transform_5, window_bounds = array<i64: 1, 512>}, {pipeline_mode = #tpu.pipeline_mode<synchronous>, transform_indices = @transform_6, window_bounds = array<i64: 1, 512>}, {transform_indices = @transform_7, window_bounds = array<i64: 2, 4, 128>}, {transform_indices = @transform_8, window_bounds = array<i64: 2, 4, 128>}]} {
    %c0_i32 = arith.constant 0 : i32
    %0 = arith.cmpi eq, %arg0, %c0_i32 : i32
    %1 = arith.extui %0 : i1 to i32
    %c0_i32_0 = arith.constant 0 : i32
    %2 = arith.cmpi ne, %1, %c0_i32_0 : i32
    scf.if %2 {
      %cst_116 = arith.constant 0.000000e+00 : f32
      %324 = vector.broadcast %cst_116 : f32 to vector<2x256xf32>
      %c0_117 = arith.constant 0 : index
      %c0_118 = arith.constant 0 : index
      %325 = vector.load %arg10[%c0_117, %c0_118] : memref<2x256xf32, #tpu.memory_space<vmem>>, vector<2x256xf32>
      tpu.vector_store %arg10[%c0_117, %c0_118], %324 {strides = array<i32>} : memref<2x256xf32, #tpu.memory_space<vmem>>, vector<2x256xf32>,
      %cst_119 = arith.constant 0.000000e+00 : f32
      %326 = vector.broadcast %cst_119 : f32 to vector<2x128xf32>
      %c0_120 = arith.constant 0 : index
      %c0_121 = arith.constant 0 : index
      %327 = vector.load %arg11[%c0_120, %c0_121] : memref<2x128xf32, #tpu.memory_space<vmem>>, vector<2x128xf32>
      tpu.vector_store %arg11[%c0_120, %c0_121], %326 {strides = array<i32>} : memref<2x128xf32, #tpu.memory_space<vmem>>, vector<2x128xf32>,
      %cst_122 = arith.constant 0.000000e+00 : f32
      %328 = vector.broadcast %cst_122 : f32 to vector<2x128xf32>
      %c0_123 = arith.constant 0 : index
      %c0_124 = arith.constant 0 : index
      %329 = vector.load %arg12[%c0_123, %c0_124] : memref<2x128xf32, #tpu.memory_space<vmem>>, vector<2x128xf32>
      tpu.vector_store %arg12[%c0_123, %c0_124], %328 {strides = array<i32>} : memref<2x128xf32, #tpu.memory_space<vmem>>, vector<2x128xf32>,
    } else {
    }
    %c0 = arith.constant 0 : index
    %c0_1 = arith.constant 0 : index
    %c0_2 = arith.constant 0 : index
    %3 = vector.load %arg1[%c0, %c0_1, %c0_2] : memref<2x4x128xbf16, #tpu.memory_space<vmem>>, vector<2x4x128xbf16>
    %c0_3 = arith.constant 0 : index
    %c0_4 = arith.constant 0 : index
    %4 = vector.load %arg3[%c0_3, %c0_4] : memref<128x512xbf16, #tpu.memory_space<vmem>>, vector<128x512xbf16>
    %c0_5 = arith.constant 0 : index
    %c0_6 = arith.constant 0 : index
    %5 = vector.load %arg6[%c0_5, %c0_6] : memref<1x512xf32, #tpu.memory_space<vmem>>, vector<1x512xf32>
    %6 = vector.extract_strided_slice %3 {offsets = [0, 0, 0], sizes = [1, 4, 128], strides = [1, 1, 1]} : vector<2x4x128xbf16> to vector<1x4x128xbf16>
    %7 = vector.shape_cast %6 : vector<1x4x128xbf16> to vector<4x128xbf16>
    %cst = arith.constant dense<0.000000e+00> : vector<4x512xf32>
    %8 = tpu.matmul %7, %4, %cst {dimension_numbers = #tpu.dot_dimension_numbers<[1], [0], [0], [1], [0, 0, 1, 1], [], []>} : vector<4x128xbf16>, vector<128x512xbf16>, vector<4x512xf32> -> vector<4x512xf32>
    %9 = vector.broadcast %5 : vector<1x512xf32> to vector<4x512xf32>
    %10 = arith.addf %8, %9 : vector<4x512xf32>
    %c0_7 = arith.constant 0 : index
    %c0_8 = arith.constant 0 : index
    %c0_9 = arith.constant 0 : index
    %11 = vector.load %arg13[%c0_7, %c0_8, %c0_9] : memref<2x4x512xf32, #tpu.memory_space<vmem>>, vector<1x4x512xf32>
    %12 = vector.shape_cast %11 : vector<1x4x512xf32> to vector<4x512xf32>
    %13 = vector.shape_cast %10 : vector<4x512xf32> to vector<1x4x512xf32>
    tpu.vector_store %arg13[%c0_7, %c0_8, %c0_9], %13 {strides = array<i32>} : memref<2x4x512xf32, #tpu.memory_space<vmem>>, vector<1x4x512xf32>,
    %14 = vector.extract_strided_slice %3 {offsets = [1, 0, 0], sizes = [1, 4, 128], strides = [1, 1, 1]} : vector<2x4x128xbf16> to vector<1x4x128xbf16>
    %15 = vector.shape_cast %14 : vector<1x4x128xbf16> to vector<4x128xbf16>
    %cst_10 = arith.constant dense<0.000000e+00> : vector<4x512xf32>
    %16 = tpu.matmul %15, %4, %cst_10 {dimension_numbers = #tpu.dot_dimension_numbers<[1], [0], [0], [1], [0, 0, 1, 1], [], []>} : vector<4x128xbf16>, vector<128x512xbf16>, vector<4x512xf32> -> vector<4x512xf32>
    %17 = vector.broadcast %5 : vector<1x512xf32> to vector<4x512xf32>
    %18 = arith.addf %16, %17 : vector<4x512xf32>
    %c1 = arith.constant 1 : index
    %c0_11 = arith.constant 0 : index
    %c0_12 = arith.constant 0 : index
    %19 = vector.load %arg13[%c1, %c0_11, %c0_12] : memref<2x4x512xf32, #tpu.memory_space<vmem>>, vector<1x4x512xf32>
    %20 = vector.shape_cast %19 : vector<1x4x512xf32> to vector<4x512xf32>
    %21 = vector.shape_cast %18 : vector<4x512xf32> to vector<1x4x512xf32>
    tpu.vector_store %arg13[%c1, %c0_11, %c0_12], %21 {strides = array<i32>} : memref<2x4x512xf32, #tpu.memory_space<vmem>>, vector<1x4x512xf32>,
    %c0_13 = arith.constant 0 : index
    %c0_14 = arith.constant 0 : index
    %c0_15 = arith.constant 0 : index
    %22 = vector.load %arg2[%c0_13, %c0_14, %c0_15] : memref<2x4x128xbf16, #tpu.memory_space<vmem>>, vector<2x4x128xbf16>
    %c0_16 = arith.constant 0 : index
    %c0_17 = arith.constant 0 : index
    %23 = vector.load %arg4[%c0_16, %c0_17] : memref<128x512xbf16, #tpu.memory_space<vmem>>, vector<128x512xbf16>
    %c0_18 = arith.constant 0 : index
    %c0_19 = arith.constant 0 : index
    %24 = vector.load %arg7[%c0_18, %c0_19] : memref<1x512xf32, #tpu.memory_space<vmem>>, vector<1x512xf32>
    %25 = vector.extract_strided_slice %22 {offsets = [0, 0, 0], sizes = [1, 4, 128], strides = [1, 1, 1]} : vector<2x4x128xbf16> to vector<1x4x128xbf16>
    %26 = vector.shape_cast %25 : vector<1x4x128xbf16> to vector<4x128xbf16>
    %cst_20 = arith.constant dense<0.000000e+00> : vector<4x512xf32>
    %27 = tpu.matmul %26, %23, %cst_20 {dimension_numbers = #tpu.dot_dimension_numbers<[1], [0], [0], [1], [0, 0, 1, 1], [], []>} : vector<4x128xbf16>, vector<128x512xbf16>, vector<4x512xf32> -> vector<4x512xf32>
    %28 = vector.broadcast %24 : vector<1x512xf32> to vector<4x512xf32>
    %29 = arith.addf %27, %28 : vector<4x512xf32>
    %c0_21 = arith.constant 0 : index
    %c0_22 = arith.constant 0 : index
    %c0_23 = arith.constant 0 : index
    %30 = vector.load %arg14[%c0_21, %c0_22, %c0_23] : memref<2x4x512xf32, #tpu.memory_space<vmem>>, vector<1x4x512xf32>
    %31 = vector.shape_cast %30 : vector<1x4x512xf32> to vector<4x512xf32>
    %32 = vector.shape_cast %29 : vector<4x512xf32> to vector<1x4x512xf32>
    tpu.vector_store %arg14[%c0_21, %c0_22, %c0_23], %32 {strides = array<i32>} : memref<2x4x512xf32, #tpu.memory_space<vmem>>, vector<1x4x512xf32>,
    %33 = vector.extract_strided_slice %22 {offsets = [1, 0, 0], sizes = [1, 4, 128], strides = [1, 1, 1]} : vector<2x4x128xbf16> to vector<1x4x128xbf16>
    %34 = vector.shape_cast %33 : vector<1x4x128xbf16> to vector<4x128xbf16>
    %cst_24 = arith.constant dense<0.000000e+00> : vector<4x512xf32>
    %35 = tpu.matmul %34, %23, %cst_24 {dimension_numbers = #tpu.dot_dimension_numbers<[1], [0], [0], [1], [0, 0, 1, 1], [], []>} : vector<4x128xbf16>, vector<128x512xbf16>, vector<4x512xf32> -> vector<4x512xf32>
    %36 = vector.broadcast %24 : vector<1x512xf32> to vector<4x512xf32>
    %37 = arith.addf %35, %36 : vector<4x512xf32>
    %c1_25 = arith.constant 1 : index
    %c0_26 = arith.constant 0 : index
    %c0_27 = arith.constant 0 : index
    %38 = vector.load %arg14[%c1_25, %c0_26, %c0_27] : memref<2x4x512xf32, #tpu.memory_space<vmem>>, vector<1x4x512xf32>
    %39 = vector.shape_cast %38 : vector<1x4x512xf32> to vector<4x512xf32>
    %40 = vector.shape_cast %37 : vector<4x512xf32> to vector<1x4x512xf32>
    tpu.vector_store %arg14[%c1_25, %c0_26, %c0_27], %40 {strides = array<i32>} : memref<2x4x512xf32, #tpu.memory_space<vmem>>, vector<1x4x512xf32>,
    %c0_28 = arith.constant 0 : index
    %c0_29 = arith.constant 0 : index
    %41 = vector.load %arg5[%c0_28, %c0_29] : memref<256x1024xbf16, #tpu.memory_space<vmem>>, vector<256x1024xbf16>
    %c0_30 = arith.constant 0 : index
    %c0_31 = arith.constant 0 : index
    %42 = vector.load %arg10[%c0_30, %c0_31] : memref<2x256xf32, #tpu.memory_space<vmem>>, vector<2x256xf32>
    %c0_32 = arith.constant 0 : index
    %c0_33 = arith.constant 0 : index
    %43 = vector.load %arg11[%c0_32, %c0_33] : memref<2x128xf32, #tpu.memory_space<vmem>>, vector<2x128xf32>
    %c0_34 = arith.constant 0 : index
    %c0_35 = arith.constant 0 : index
    %44 = vector.load %arg12[%c0_34, %c0_35] : memref<2x128xf32, #tpu.memory_space<vmem>>, vector<2x128xf32>
    %45 = arith.truncf %42 : vector<2x256xf32> to vector<2x256xbf16>
    %cst_36 = arith.constant dense<0.000000e+00> : vector<2x1024xf32>
    %46 = tpu.matmul %45, %41, %cst_36 {dimension_numbers = #tpu.dot_dimension_numbers<[1], [0], [0], [1], [0, 0, 1, 1], [], []>} : vector<2x256xbf16>, vector<256x1024xbf16>, vector<2x1024xf32> -> vector<2x1024xf32>
    %c0_37 = arith.constant 0 : index
    %c0_38 = arith.constant 0 : index
    %c0_39 = arith.constant 0 : index
    %47 = vector.load %arg13[%c0_37, %c0_38, %c0_39] : memref<2x4x512xf32, #tpu.memory_space<vmem>>, vector<2x1x512xf32>
    %48 = vector.shape_cast %47 : vector<2x1x512xf32> to vector<2x512xf32>
    %49 = vector.extract_strided_slice %46 {offsets = [0, 0], sizes = [2, 512], strides = [1, 1]} : vector<2x1024xf32> to vector<2x512xf32>
    %50 = arith.addf %48, %49 : vector<2x512xf32>
    %c0_40 = arith.constant 0 : index
    %c3 = arith.constant 3 : index
    %c0_41 = arith.constant 0 : index
    %51 = vector.load %arg14[%c0_40, %c3, %c0_41] : memref<2x4x512xf32, #tpu.memory_space<vmem>>, vector<2x1x512xf32>
    %52 = vector.shape_cast %51 : vector<2x1x512xf32> to vector<2x512xf32>
    %53 = vector.extract_strided_slice %46 {offsets = [0, 512], sizes = [2, 512], strides = [1, 1]} : vector<2x1024xf32> to vector<2x512xf32>
    %54 = arith.addf %52, %53 : vector<2x512xf32>
    %55 = vector.extract_strided_slice %50 {offsets = [0, 0], sizes = [2, 128], strides = [1, 1]} : vector<2x512xf32> to vector<2x128xf32>
    %56 = arith.negf %55 : vector<2x128xf32>
    %57 = math.exp %56 : vector<2x128xf32>
    %cst_42 = arith.constant 1.000000e+00 : f32
    %58 = vector.broadcast %cst_42 : f32 to vector<2x128xf32>
    %59 = arith.addf %58, %57 : vector<2x128xf32>
    %60 = arith.divf %58, %59 : vector<2x128xf32>
    %61 = vector.extract_strided_slice %50 {offsets = [0, 128], sizes = [2, 128], strides = [1, 1]} : vector<2x512xf32> to vector<2x128xf32>
    %62 = arith.negf %61 : vector<2x128xf32>
    %63 = math.exp %62 : vector<2x128xf32>
    %cst_43 = arith.constant 1.000000e+00 : f32
    %64 = vector.broadcast %cst_43 : f32 to vector<2x128xf32>
    %65 = arith.addf %64, %63 : vector<2x128xf32>
    %66 = arith.divf %64, %65 : vector<2x128xf32>
    %67 = vector.extract_strided_slice %50 {offsets = [0, 256], sizes = [2, 128], strides = [1, 1]} : vector<2x512xf32> to vector<2x128xf32>
    %68 = math.tanh %67 : vector<2x128xf32>
    %69 = vector.extract_strided_slice %50 {offsets = [0, 384], sizes = [2, 128], strides = [1, 1]} : vector<2x512xf32> to vector<2x128xf32>
    %70 = arith.negf %69 : vector<2x128xf32>
    %71 = math.exp %70 : vector<2x128xf32>
    %cst_44 = arith.constant 1.000000e+00 : f32
    %72 = vector.broadcast %cst_44 : f32 to vector<2x128xf32>
    %73 = arith.addf %72, %71 : vector<2x128xf32>
    %74 = arith.divf %72, %73 : vector<2x128xf32>
    %75 = arith.mulf %66, %43 : vector<2x128xf32>
    %76 = arith.mulf %60, %68 : vector<2x128xf32>
    %77 = arith.addf %75, %76 : vector<2x128xf32>
    %78 = math.tanh %77 : vector<2x128xf32>
    %79 = arith.mulf %74, %78 : vector<2x128xf32>
    %80 = vector.extract_strided_slice %54 {offsets = [0, 0], sizes = [2, 128], strides = [1, 1]} : vector<2x512xf32> to vector<2x128xf32>
    %81 = arith.negf %80 : vector<2x128xf32>
    %82 = math.exp %81 : vector<2x128xf32>
    %cst_45 = arith.constant 1.000000e+00 : f32
    %83 = vector.broadcast %cst_45 : f32 to vector<2x128xf32>
    %84 = arith.addf %83, %82 : vector<2x128xf32>
    %85 = arith.divf %83, %84 : vector<2x128xf32>
    %86 = vector.extract_strided_slice %54 {offsets = [0, 128], sizes = [2, 128], strides = [1, 1]} : vector<2x512xf32> to vector<2x128xf32>
    %87 = arith.negf %86 : vector<2x128xf32>
    %88 = math.exp %87 : vector<2x128xf32>
    %cst_46 = arith.constant 1.000000e+00 : f32
    %89 = vector.broadcast %cst_46 : f32 to vector<2x128xf32>
    %90 = arith.addf %89, %88 : vector<2x128xf32>
    %91 = arith.divf %89, %90 : vector<2x128xf32>
    %92 = vector.extract_strided_slice %54 {offsets = [0, 256], sizes = [2, 128], strides = [1, 1]} : vector<2x512xf32> to vector<2x128xf32>
    %93 = math.tanh %92 : vector<2x128xf32>
    %94 = vector.extract_strided_slice %54 {offsets = [0, 384], sizes = [2, 128], strides = [1, 1]} : vector<2x512xf32> to vector<2x128xf32>
    %95 = arith.negf %94 : vector<2x128xf32>
    %96 = math.exp %95 : vector<2x128xf32>
    %cst_47 = arith.constant 1.000000e+00 : f32
    %97 = vector.broadcast %cst_47 : f32 to vector<2x128xf32>
    %98 = arith.addf %97, %96 : vector<2x128xf32>
    %99 = arith.divf %97, %98 : vector<2x128xf32>
    %100 = arith.mulf %91, %44 : vector<2x128xf32>
    %101 = arith.mulf %85, %93 : vector<2x128xf32>
    %102 = arith.addf %100, %101 : vector<2x128xf32>
    %103 = math.tanh %102 : vector<2x128xf32>
    %104 = arith.mulf %99, %103 : vector<2x128xf32>
    %105 = arith.truncf %79 : vector<2x128xf32> to vector<2x128xbf16>
    %c0_48 = arith.constant 0 : index
    %c0_49 = arith.constant 0 : index
    %c0_50 = arith.constant 0 : index
    %106 = vector.load %arg8[%c0_48, %c0_49, %c0_50] : memref<2x4x128xbf16, #tpu.memory_space<vmem>>, vector<2x1x128xbf16>
    %107 = vector.shape_cast %106 : vector<2x1x128xbf16> to vector<2x128xbf16>
    %108 = vector.shape_cast %105 : vector<2x128xbf16> to vector<2x1x128xbf16>
    tpu.vector_store %arg8[%c0_48, %c0_49, %c0_50], %108 {strides = array<i32>} : memref<2x4x128xbf16, #tpu.memory_space<vmem>>, vector<2x1x128xbf16>,
    %109 = arith.truncf %104 : vector<2x128xf32> to vector<2x128xbf16>
    %c0_51 = arith.constant 0 : index
    %c3_52 = arith.constant 3 : index
    %c0_53 = arith.constant 0 : index
    %110 = vector.load %arg9[%c0_51, %c3_52, %c0_53] : memref<2x4x128xbf16, #tpu.memory_space<vmem>>, vector<2x1x128xbf16>
    %111 = vector.shape_cast %110 : vector<2x1x128xbf16> to vector<2x128xbf16>
    %112 = vector.shape_cast %109 : vector<2x128xbf16> to vector<2x1x128xbf16>
    tpu.vector_store %arg9[%c0_51, %c3_52, %c0_53], %112 {strides = array<i32>} : memref<2x4x128xbf16, #tpu.memory_space<vmem>>, vector<2x1x128xbf16>,
    %113 = tpu.concatenate %79, %104 in 1 : vector<2x128xf32>, vector<2x128xf32> -> vector<2x256xf32>
    %114 = arith.truncf %113 : vector<2x256xf32> to vector<2x256xbf16>
    %cst_54 = arith.constant dense<0.000000e+00> : vector<2x1024xf32>
    %115 = tpu.matmul %114, %41, %cst_54 {dimension_numbers = #tpu.dot_dimension_numbers<[1], [0], [0], [1], [0, 0, 1, 1], [], []>} : vector<2x256xbf16>, vector<256x1024xbf16>, vector<2x1024xf32> -> vector<2x1024xf32>
    %c0_55 = arith.constant 0 : index
    %c1_56 = arith.constant 1 : index
    %c0_57 = arith.constant 0 : index
    %116 = vector.load %arg13[%c0_55, %c1_56, %c0_57] : memref<2x4x512xf32, #tpu.memory_space<vmem>>, vector<2x1x512xf32>
    %117 = vector.shape_cast %116 : vector<2x1x512xf32> to vector<2x512xf32>
    %118 = vector.extract_strided_slice %115 {offsets = [0, 0], sizes = [2, 512], strides = [1, 1]} : vector<2x1024xf32> to vector<2x512xf32>
    %119 = arith.addf %117, %118 : vector<2x512xf32>
    %c0_58 = arith.constant 0 : index
    %c2 = arith.constant 2 : index
    %c0_59 = arith.constant 0 : index
    %120 = vector.load %arg14[%c0_58, %c2, %c0_59] : memref<2x4x512xf32, #tpu.memory_space<vmem>>, vector<2x1x512xf32>
    %121 = vector.shape_cast %120 : vector<2x1x512xf32> to vector<2x512xf32>
    %122 = vector.extract_strided_slice %115 {offsets = [0, 512], sizes = [2, 512], strides = [1, 1]} : vector<2x1024xf32> to vector<2x512xf32>
    %123 = arith.addf %121, %122 : vector<2x512xf32>
    %124 = vector.extract_strided_slice %119 {offsets = [0, 0], sizes = [2, 128], strides = [1, 1]} : vector<2x512xf32> to vector<2x128xf32>
    %125 = arith.negf %124 : vector<2x128xf32>
    %126 = math.exp %125 : vector<2x128xf32>
    %cst_60 = arith.constant 1.000000e+00 : f32
    %127 = vector.broadcast %cst_60 : f32 to vector<2x128xf32>
    %128 = arith.addf %127, %126 : vector<2x128xf32>
    %129 = arith.divf %127, %128 : vector<2x128xf32>
    %130 = vector.extract_strided_slice %119 {offsets = [0, 128], sizes = [2, 128], strides = [1, 1]} : vector<2x512xf32> to vector<2x128xf32>
    %131 = arith.negf %130 : vector<2x128xf32>
    %132 = math.exp %131 : vector<2x128xf32>
    %cst_61 = arith.constant 1.000000e+00 : f32
    %133 = vector.broadcast %cst_61 : f32 to vector<2x128xf32>
    %134 = arith.addf %133, %132 : vector<2x128xf32>
    %135 = arith.divf %133, %134 : vector<2x128xf32>
    %136 = vector.extract_strided_slice %119 {offsets = [0, 256], sizes = [2, 128], strides = [1, 1]} : vector<2x512xf32> to vector<2x128xf32>
    %137 = math.tanh %136 : vector<2x128xf32>
    %138 = vector.extract_strided_slice %119 {offsets = [0, 384], sizes = [2, 128], strides = [1, 1]} : vector<2x512xf32> to vector<2x128xf32>
    %139 = arith.negf %138 : vector<2x128xf32>
    %140 = math.exp %139 : vector<2x128xf32>
    %cst_62 = arith.constant 1.000000e+00 : f32
    %141 = vector.broadcast %cst_62 : f32 to vector<2x128xf32>
    %142 = arith.addf %141, %140 : vector<2x128xf32>
    %143 = arith.divf %141, %142 : vector<2x128xf32>
    %144 = arith.mulf %135, %77 : vector<2x128xf32>
    %145 = arith.mulf %129, %137 : vector<2x128xf32>
    %146 = arith.addf %144, %145 : vector<2x128xf32>
    %147 = math.tanh %146 : vector<2x128xf32>
    %148 = arith.mulf %143, %147 : vector<2x128xf32>
    %149 = vector.extract_strided_slice %123 {offsets = [0, 0], sizes = [2, 128], strides = [1, 1]} : vector<2x512xf32> to vector<2x128xf32>
    %150 = arith.negf %149 : vector<2x128xf32>
    %151 = math.exp %150 : vector<2x128xf32>
    %cst_63 = arith.constant 1.000000e+00 : f32
    %152 = vector.broadcast %cst_63 : f32 to vector<2x128xf32>
    %153 = arith.addf %152, %151 : vector<2x128xf32>
    %154 = arith.divf %152, %153 : vector<2x128xf32>
    %155 = vector.extract_strided_slice %123 {offsets = [0, 128], sizes = [2, 128], strides = [1, 1]} : vector<2x512xf32> to vector<2x128xf32>
    %156 = arith.negf %155 : vector<2x128xf32>
    %157 = math.exp %156 : vector<2x128xf32>
    %cst_64 = arith.constant 1.000000e+00 : f32
    %158 = vector.broadcast %cst_64 : f32 to vector<2x128xf32>
    %159 = arith.addf %158, %157 : vector<2x128xf32>
    %160 = arith.divf %158, %159 : vector<2x128xf32>
    %161 = vector.extract_strided_slice %123 {offsets = [0, 256], sizes = [2, 128], strides = [1, 1]} : vector<2x512xf32> to vector<2x128xf32>
    %162 = math.tanh %161 : vector<2x128xf32>
    %163 = vector.extract_strided_slice %123 {offsets = [0, 384], sizes = [2, 128], strides = [1, 1]} : vector<2x512xf32> to vector<2x128xf32>
    %164 = arith.negf %163 : vector<2x128xf32>
    %165 = math.exp %164 : vector<2x128xf32>
    %cst_65 = arith.constant 1.000000e+00 : f32
    %166 = vector.broadcast %cst_65 : f32 to vector<2x128xf32>
    %167 = arith.addf %166, %165 : vector<2x128xf32>
    %168 = arith.divf %166, %167 : vector<2x128xf32>
    %169 = arith.mulf %160, %102 : vector<2x128xf32>
    %170 = arith.mulf %154, %162 : vector<2x128xf32>
    %171 = arith.addf %169, %170 : vector<2x128xf32>
    %172 = math.tanh %171 : vector<2x128xf32>
    %173 = arith.mulf %168, %172 : vector<2x128xf32>
    %174 = arith.truncf %148 : vector<2x128xf32> to vector<2x128xbf16>
    %c0_66 = arith.constant 0 : index
    %c1_67 = arith.constant 1 : index
    %c0_68 = arith.constant 0 : index
    %175 = vector.load %arg8[%c0_66, %c1_67, %c0_68] : memref<2x4x128xbf16, #tpu.memory_space<vmem>>, vector<2x1x128xbf16>
    %176 = vector.shape_cast %175 : vector<2x1x128xbf16> to vector<2x128xbf16>
    %177 = vector.shape_cast %174 : vector<2x128xbf16> to vector<2x1x128xbf16>
    tpu.vector_store %arg8[%c0_66, %c1_67, %c0_68], %177 {strides = array<i32>} : memref<2x4x128xbf16, #tpu.memory_space<vmem>>, vector<2x1x128xbf16>,
    %178 = arith.truncf %173 : vector<2x128xf32> to vector<2x128xbf16>
    %c0_69 = arith.constant 0 : index
    %c2_70 = arith.constant 2 : index
    %c0_71 = arith.constant 0 : index
    %179 = vector.load %arg9[%c0_69, %c2_70, %c0_71] : memref<2x4x128xbf16, #tpu.memory_space<vmem>>, vector<2x1x128xbf16>
    %180 = vector.shape_cast %179 : vector<2x1x128xbf16> to vector<2x128xbf16>
    %181 = vector.shape_cast %178 : vector<2x128xbf16> to vector<2x1x128xbf16>
    tpu.vector_store %arg9[%c0_69, %c2_70, %c0_71], %181 {strides = array<i32>} : memref<2x4x128xbf16, #tpu.memory_space<vmem>>, vector<2x1x128xbf16>,
    %182 = tpu.concatenate %148, %173 in 1 : vector<2x128xf32>, vector<2x128xf32> -> vector<2x256xf32>
    %183 = arith.truncf %182 : vector<2x256xf32> to vector<2x256xbf16>
    %cst_72 = arith.constant dense<0.000000e+00> : vector<2x1024xf32>
    %184 = tpu.matmul %183, %41, %cst_72 {dimension_numbers = #tpu.dot_dimension_numbers<[1], [0], [0], [1], [0, 0, 1, 1], [], []>} : vector<2x256xbf16>, vector<256x1024xbf16>, vector<2x1024xf32> -> vector<2x1024xf32>
    %c0_73 = arith.constant 0 : index
    %c2_74 = arith.constant 2 : index
    %c0_75 = arith.constant 0 : index
    %185 = vector.load %arg13[%c0_73, %c2_74, %c0_75] : memref<2x4x512xf32, #tpu.memory_space<vmem>>, vector<2x1x512xf32>
    %186 = vector.shape_cast %185 : vector<2x1x512xf32> to vector<2x512xf32>
    %187 = vector.extract_strided_slice %184 {offsets = [0, 0], sizes = [2, 512], strides = [1, 1]} : vector<2x1024xf32> to vector<2x512xf32>
    %188 = arith.addf %186, %187 : vector<2x512xf32>
    %c0_76 = arith.constant 0 : index
    %c1_77 = arith.constant 1 : index
    %c0_78 = arith.constant 0 : index
    %189 = vector.load %arg14[%c0_76, %c1_77, %c0_78] : memref<2x4x512xf32, #tpu.memory_space<vmem>>, vector<2x1x512xf32>
    %190 = vector.shape_cast %189 : vector<2x1x512xf32> to vector<2x512xf32>
    %191 = vector.extract_strided_slice %184 {offsets = [0, 512], sizes = [2, 512], strides = [1, 1]} : vector<2x1024xf32> to vector<2x512xf32>
    %192 = arith.addf %190, %191 : vector<2x512xf32>
    %193 = vector.extract_strided_slice %188 {offsets = [0, 0], sizes = [2, 128], strides = [1, 1]} : vector<2x512xf32> to vector<2x128xf32>
    %194 = arith.negf %193 : vector<2x128xf32>
    %195 = math.exp %194 : vector<2x128xf32>
    %cst_79 = arith.constant 1.000000e+00 : f32
    %196 = vector.broadcast %cst_79 : f32 to vector<2x128xf32>
    %197 = arith.addf %196, %195 : vector<2x128xf32>
    %198 = arith.divf %196, %197 : vector<2x128xf32>
    %199 = vector.extract_strided_slice %188 {offsets = [0, 128], sizes = [2, 128], strides = [1, 1]} : vector<2x512xf32> to vector<2x128xf32>
    %200 = arith.negf %199 : vector<2x128xf32>
    %201 = math.exp %200 : vector<2x128xf32>
    %cst_80 = arith.constant 1.000000e+00 : f32
    %202 = vector.broadcast %cst_80 : f32 to vector<2x128xf32>
    %203 = arith.addf %202, %201 : vector<2x128xf32>
    %204 = arith.divf %202, %203 : vector<2x128xf32>
    %205 = vector.extract_strided_slice %188 {offsets = [0, 256], sizes = [2, 128], strides = [1, 1]} : vector<2x512xf32> to vector<2x128xf32>
    %206 = math.tanh %205 : vector<2x128xf32>
    %207 = vector.extract_strided_slice %188 {offsets = [0, 384], sizes = [2, 128], strides = [1, 1]} : vector<2x512xf32> to vector<2x128xf32>
    %208 = arith.negf %207 : vector<2x128xf32>
    %209 = math.exp %208 : vector<2x128xf32>
    %cst_81 = arith.constant 1.000000e+00 : f32
    %210 = vector.broadcast %cst_81 : f32 to vector<2x128xf32>
    %211 = arith.addf %210, %209 : vector<2x128xf32>
    %212 = arith.divf %210, %211 : vector<2x128xf32>
    %213 = arith.mulf %204, %146 : vector<2x128xf32>
    %214 = arith.mulf %198, %206 : vector<2x128xf32>
    %215 = arith.addf %213, %214 : vector<2x128xf32>
    %216 = math.tanh %215 : vector<2x128xf32>
    %217 = arith.mulf %212, %216 : vector<2x128xf32>
    %218 = vector.extract_strided_slice %192 {offsets = [0, 0], sizes = [2, 128], strides = [1, 1]} : vector<2x512xf32> to vector<2x128xf32>
    %219 = arith.negf %218 : vector<2x128xf32>
    %220 = math.exp %219 : vector<2x128xf32>
    %cst_82 = arith.constant 1.000000e+00 : f32
    %221 = vector.broadcast %cst_82 : f32 to vector<2x128xf32>
    %222 = arith.addf %221, %220 : vector<2x128xf32>
    %223 = arith.divf %221, %222 : vector<2x128xf32>
    %224 = vector.extract_strided_slice %192 {offsets = [0, 128], sizes = [2, 128], strides = [1, 1]} : vector<2x512xf32> to vector<2x128xf32>
    %225 = arith.negf %224 : vector<2x128xf32>
    %226 = math.exp %225 : vector<2x128xf32>
    %cst_83 = arith.constant 1.000000e+00 : f32
    %227 = vector.broadcast %cst_83 : f32 to vector<2x128xf32>
    %228 = arith.addf %227, %226 : vector<2x128xf32>
    %229 = arith.divf %227, %228 : vector<2x128xf32>
    %230 = vector.extract_strided_slice %192 {offsets = [0, 256], sizes = [2, 128], strides = [1, 1]} : vector<2x512xf32> to vector<2x128xf32>
    %231 = math.tanh %230 : vector<2x128xf32>
    %232 = vector.extract_strided_slice %192 {offsets = [0, 384], sizes = [2, 128], strides = [1, 1]} : vector<2x512xf32> to vector<2x128xf32>
    %233 = arith.negf %232 : vector<2x128xf32>
    %234 = math.exp %233 : vector<2x128xf32>
    %cst_84 = arith.constant 1.000000e+00 : f32
    %235 = vector.broadcast %cst_84 : f32 to vector<2x128xf32>
    %236 = arith.addf %235, %234 : vector<2x128xf32>
    %237 = arith.divf %235, %236 : vector<2x128xf32>
    %238 = arith.mulf %229, %171 : vector<2x128xf32>
    %239 = arith.mulf %223, %231 : vector<2x128xf32>
    %240 = arith.addf %238, %239 : vector<2x128xf32>
    %241 = math.tanh %240 : vector<2x128xf32>
    %242 = arith.mulf %237, %241 : vector<2x128xf32>
    %243 = arith.truncf %217 : vector<2x128xf32> to vector<2x128xbf16>
    %c0_85 = arith.constant 0 : index
    %c2_86 = arith.constant 2 : index
    %c0_87 = arith.constant 0 : index
    %244 = vector.load %arg8[%c0_85, %c2_86, %c0_87] : memref<2x4x128xbf16, #tpu.memory_space<vmem>>, vector<2x1x128xbf16>
    %245 = vector.shape_cast %244 : vector<2x1x128xbf16> to vector<2x128xbf16>
    %246 = vector.shape_cast %243 : vector<2x128xbf16> to vector<2x1x128xbf16>
    tpu.vector_store %arg8[%c0_85, %c2_86, %c0_87], %246 {strides = array<i32>} : memref<2x4x128xbf16, #tpu.memory_space<vmem>>, vector<2x1x128xbf16>,
    %247 = arith.truncf %242 : vector<2x128xf32> to vector<2x128xbf16>
    %c0_88 = arith.constant 0 : index
    %c1_89 = arith.constant 1 : index
    %c0_90 = arith.constant 0 : index
    %248 = vector.load %arg9[%c0_88, %c1_89, %c0_90] : memref<2x4x128xbf16, #tpu.memory_space<vmem>>, vector<2x1x128xbf16>
    %249 = vector.shape_cast %248 : vector<2x1x128xbf16> to vector<2x128xbf16>
    %250 = vector.shape_cast %247 : vector<2x128xbf16> to vector<2x1x128xbf16>
    tpu.vector_store %arg9[%c0_88, %c1_89, %c0_90], %250 {strides = array<i32>} : memref<2x4x128xbf16, #tpu.memory_space<vmem>>, vector<2x1x128xbf16>,
    %251 = tpu.concatenate %217, %242 in 1 : vector<2x128xf32>, vector<2x128xf32> -> vector<2x256xf32>
    %252 = arith.truncf %251 : vector<2x256xf32> to vector<2x256xbf16>
    %cst_91 = arith.constant dense<0.000000e+00> : vector<2x1024xf32>
    %253 = tpu.matmul %252, %41, %cst_91 {dimension_numbers = #tpu.dot_dimension_numbers<[1], [0], [0], [1], [0, 0, 1, 1], [], []>} : vector<2x256xbf16>, vector<256x1024xbf16>, vector<2x1024xf32> -> vector<2x1024xf32>
    %c0_92 = arith.constant 0 : index
    %c3_93 = arith.constant 3 : index
    %c0_94 = arith.constant 0 : index
    %254 = vector.load %arg13[%c0_92, %c3_93, %c0_94] : memref<2x4x512xf32, #tpu.memory_space<vmem>>, vector<2x1x512xf32>
    %255 = vector.shape_cast %254 : vector<2x1x512xf32> to vector<2x512xf32>
    %256 = vector.extract_strided_slice %253 {offsets = [0, 0], sizes = [2, 512], strides = [1, 1]} : vector<2x1024xf32> to vector<2x512xf32>
    %257 = arith.addf %255, %256 : vector<2x512xf32>
    %c0_95 = arith.constant 0 : index
    %c0_96 = arith.constant 0 : index
    %c0_97 = arith.constant 0 : index
    %258 = vector.load %arg14[%c0_95, %c0_96, %c0_97] : memref<2x4x512xf32, #tpu.memory_space<vmem>>, vector<2x1x512xf32>
    %259 = vector.shape_cast %258 : vector<2x1x512xf32> to vector<2x512xf32>
    %260 = vector.extract_strided_slice %253 {offsets = [0, 512], sizes = [2, 512], strides = [1, 1]} : vector<2x1024xf32> to vector<2x512xf32>
    %261 = arith.addf %259, %260 : vector<2x512xf32>
    %262 = vector.extract_strided_slice %257 {offsets = [0, 0], sizes = [2, 128], strides = [1, 1]} : vector<2x512xf32> to vector<2x128xf32>
    %263 = arith.negf %262 : vector<2x128xf32>
    %264 = math.exp %263 : vector<2x128xf32>
    %cst_98 = arith.constant 1.000000e+00 : f32
    %265 = vector.broadcast %cst_98 : f32 to vector<2x128xf32>
    %266 = arith.addf %265, %264 : vector<2x128xf32>
    %267 = arith.divf %265, %266 : vector<2x128xf32>
    %268 = vector.extract_strided_slice %257 {offsets = [0, 128], sizes = [2, 128], strides = [1, 1]} : vector<2x512xf32> to vector<2x128xf32>
    %269 = arith.negf %268 : vector<2x128xf32>
    %270 = math.exp %269 : vector<2x128xf32>
    %cst_99 = arith.constant 1.000000e+00 : f32
    %271 = vector.broadcast %cst_99 : f32 to vector<2x128xf32>
    %272 = arith.addf %271, %270 : vector<2x128xf32>
    %273 = arith.divf %271, %272 : vector<2x128xf32>
    %274 = vector.extract_strided_slice %257 {offsets = [0, 256], sizes = [2, 128], strides = [1, 1]} : vector<2x512xf32> to vector<2x128xf32>
    %275 = math.tanh %274 : vector<2x128xf32>
    %276 = vector.extract_strided_slice %257 {offsets = [0, 384], sizes = [2, 128], strides = [1, 1]} : vector<2x512xf32> to vector<2x128xf32>
    %277 = arith.negf %276 : vector<2x128xf32>
    %278 = math.exp %277 : vector<2x128xf32>
    %cst_100 = arith.constant 1.000000e+00 : f32
    %279 = vector.broadcast %cst_100 : f32 to vector<2x128xf32>
    %280 = arith.addf %279, %278 : vector<2x128xf32>
    %281 = arith.divf %279, %280 : vector<2x128xf32>
    %282 = arith.mulf %273, %215 : vector<2x128xf32>
    %283 = arith.mulf %267, %275 : vector<2x128xf32>
    %284 = arith.addf %282, %283 : vector<2x128xf32>
    %285 = math.tanh %284 : vector<2x128xf32>
    %286 = arith.mulf %281, %285 : vector<2x128xf32>
    %287 = vector.extract_strided_slice %261 {offsets = [0, 0], sizes = [2, 128], strides = [1, 1]} : vector<2x512xf32> to vector<2x128xf32>
    %288 = arith.negf %287 : vector<2x128xf32>
    %289 = math.exp %288 : vector<2x128xf32>
    %cst_101 = arith.constant 1.000000e+00 : f32
    %290 = vector.broadcast %cst_101 : f32 to vector<2x128xf32>
    %291 = arith.addf %290, %289 : vector<2x128xf32>
    %292 = arith.divf %290, %291 : vector<2x128xf32>
    %293 = vector.extract_strided_slice %261 {offsets = [0, 128], sizes = [2, 128], strides = [1, 1]} : vector<2x512xf32> to vector<2x128xf32>
    %294 = arith.negf %293 : vector<2x128xf32>
    %295 = math.exp %294 : vector<2x128xf32>
    %cst_102 = arith.constant 1.000000e+00 : f32
    %296 = vector.broadcast %cst_102 : f32 to vector<2x128xf32>
    %297 = arith.addf %296, %295 : vector<2x128xf32>
    %298 = arith.divf %296, %297 : vector<2x128xf32>
    %299 = vector.extract_strided_slice %261 {offsets = [0, 256], sizes = [2, 128], strides = [1, 1]} : vector<2x512xf32> to vector<2x128xf32>
    %300 = math.tanh %299 : vector<2x128xf32>
    %301 = vector.extract_strided_slice %261 {offsets = [0, 384], sizes = [2, 128], strides = [1, 1]} : vector<2x512xf32> to vector<2x128xf32>
    %302 = arith.negf %301 : vector<2x128xf32>
    %303 = math.exp %302 : vector<2x128xf32>
    %cst_103 = arith.constant 1.000000e+00 : f32
    %304 = vector.broadcast %cst_103 : f32 to vector<2x128xf32>
    %305 = arith.addf %304, %303 : vector<2x128xf32>
    %306 = arith.divf %304, %305 : vector<2x128xf32>
    %307 = arith.mulf %298, %240 : vector<2x128xf32>
    %308 = arith.mulf %292, %300 : vector<2x128xf32>
    %309 = arith.addf %307, %308 : vector<2x128xf32>
    %310 = math.tanh %309 : vector<2x128xf32>
    %311 = arith.mulf %306, %310 : vector<2x128xf32>
    %312 = arith.truncf %286 : vector<2x128xf32> to vector<2x128xbf16>
    %c0_104 = arith.constant 0 : index
    %c3_105 = arith.constant 3 : index
    %c0_106 = arith.constant 0 : index
    %313 = vector.load %arg8[%c0_104, %c3_105, %c0_106] : memref<2x4x128xbf16, #tpu.memory_space<vmem>>, vector<2x1x128xbf16>
    %314 = vector.shape_cast %313 : vector<2x1x128xbf16> to vector<2x128xbf16>
    %315 = vector.shape_cast %312 : vector<2x128xbf16> to vector<2x1x128xbf16>
    tpu.vector_store %arg8[%c0_104, %c3_105, %c0_106], %315 {strides = array<i32>} : memref<2x4x128xbf16, #tpu.memory_space<vmem>>, vector<2x1x128xbf16>,
    %316 = arith.truncf %311 : vector<2x128xf32> to vector<2x128xbf16>
    %c0_107 = arith.constant 0 : index
    %c0_108 = arith.constant 0 : index
    %c0_109 = arith.constant 0 : index
    %317 = vector.load %arg9[%c0_107, %c0_108, %c0_109] : memref<2x4x128xbf16, #tpu.memory_space<vmem>>, vector<2x1x128xbf16>
    %318 = vector.shape_cast %317 : vector<2x1x128xbf16> to vector<2x128xbf16>
    %319 = vector.shape_cast %316 : vector<2x128xbf16> to vector<2x1x128xbf16>
    tpu.vector_store %arg9[%c0_107, %c0_108, %c0_109], %319 {strides = array<i32>} : memref<2x4x128xbf16, #tpu.memory_space<vmem>>, vector<2x1x128xbf16>,
    %320 = tpu.concatenate %286, %311 in 1 : vector<2x128xf32>, vector<2x128xf32> -> vector<2x256xf32>
    %c0_110 = arith.constant 0 : index
    %c0_111 = arith.constant 0 : index
    %321 = vector.load %arg10[%c0_110, %c0_111] : memref<2x256xf32, #tpu.memory_space<vmem>>, vector<2x256xf32>
    tpu.vector_store %arg10[%c0_110, %c0_111], %320 {strides = array<i32>} : memref<2x256xf32, #tpu.memory_space<vmem>>, vector<2x256xf32>,
    %c0_112 = arith.constant 0 : index
    %c0_113 = arith.constant 0 : index
    %322 = vector.load %arg11[%c0_112, %c0_113] : memref<2x128xf32, #tpu.memory_space<vmem>>, vector<2x128xf32>
    tpu.vector_store %arg11[%c0_112, %c0_113], %284 {strides = array<i32>} : memref<2x128xf32, #tpu.memory_space<vmem>>, vector<2x128xf32>,
    %c0_114 = arith.constant 0 : index
    %c0_115 = arith.constant 0 : index
    %323 = vector.load %arg12[%c0_114, %c0_115] : memref<2x128xf32, #tpu.memory_space<vmem>>, vector<2x128xf32>
    tpu.vector_store %arg12[%c0_114, %c0_115], %309 {strides = array<i32>} : memref<2x128xf32, #tpu.memory_space<vmem>>, vector<2x128xf32>,
    return
  }
  func.func @transform_0(%arg0: i32) -> (i32, i32, i32) {
    %c0_i32 = arith.constant 0 : i32
    %c0_i32_0 = arith.constant 0 : i32
    %c0_i32_1 = arith.constant 0 : i32
    return %c0_i32, %arg0, %c0_i32_0 : i32, i32, i32
  }
  func.func @transform_1(%arg0: i32) -> (i32, i32, i32) {
    %c0_i32 = arith.constant 0 : i32
    %0 = arith.subi %c0_i32, %arg0 : i32
    %c0_i32_0 = arith.constant 0 : i32
    %c0_i32_1 = arith.constant 0 : i32
    %c0_i32_2 = arith.constant 0 : i32
    return %c0_i32_0, %0, %c0_i32_1 : i32, i32, i32
  }
  func.func @transform_2(%arg0: i32) -> (i32, i32) {
    %c0_i32 = arith.constant 0 : i32
    %c0_i32_0 = arith.constant 0 : i32
    %c0_i32_1 = arith.constant 0 : i32
    return %c0_i32, %c0_i32_0 : i32, i32
  }
  func.func @transform_3(%arg0: i32) -> (i32, i32) {
    %c0_i32 = arith.constant 0 : i32
    %c0_i32_0 = arith.constant 0 : i32
    %c0_i32_1 = arith.constant 0 : i32
    return %c0_i32, %c0_i32_0 : i32, i32
  }
  func.func @transform_4(%arg0: i32) -> (i32, i32) {
    %c0_i32 = arith.constant 0 : i32
    %c0_i32_0 = arith.constant 0 : i32
    %c0_i32_1 = arith.constant 0 : i32
    return %c0_i32, %c0_i32_0 : i32, i32
  }
  func.func @transform_5(%arg0: i32) -> (i32, i32) {
    %c0_i32 = arith.constant 0 : i32
    %c0_i32_0 = arith.constant 0 : i32
    %c0_i32_1 = arith.constant 0 : i32
    return %c0_i32, %c0_i32_0 : i32, i32
  }
  func.func @transform_6(%arg0: i32) -> (i32, i32) {
    %c0_i32 = arith.constant 0 : i32
    %c0_i32_0 = arith.constant 0 : i32
    %c0_i32_1 = arith.constant 0 : i32
    return %c0_i32, %c0_i32_0 : i32, i32
  }
  func.func @transform_7(%arg0: i32) -> (i32, i32, i32) {
    %c0_i32 = arith.constant 0 : i32
    %c0_i32_0 = arith.constant 0 : i32
    %c0_i32_1 = arith.constant 0 : i32
    return %c0_i32, %arg0, %c0_i32_0 : i32, i32, i32
  }
  func.func @transform_8(%arg0: i32) -> (i32, i32, i32) {
    %c0_i32 = arith.constant 0 : i32
    %0 = arith.subi %c0_i32, %arg0 : i32
    %c0_i32_0 = arith.constant 0 : i32
    %c0_i32_1 = arith.constant 0 : i32
    %c0_i32_2 = arith.constant 0 : i32
    return %c0_i32_0, %0, %c0_i32_1 : i32, i32, i32
  }
}

module attributes {stable_mosaic.version = 11 : i64} {
  func.func @kernel(%arg0: i32, %arg1: memref<2x4x128xbf16, #tpu.memory_space<vmem>>, %arg2: memref<2x4x128xbf16, #tpu.memory_space<vmem>>, %arg3: memref<2x4x128xbf16, #tpu.memory_space<vmem>>, %arg4: memref<2x4x128xbf16, #tpu.memory_space<vmem>>, %arg5: memref<256x512xbf16, #tpu.memory_space<vmem>>, %arg6: memref<256x512xbf16, #tpu.memory_space<vmem>>, %arg7: memref<256x1024xbf16, #tpu.memory_space<vmem>>, %arg8: memref<1x512xf32, #tpu.memory_space<vmem>>, %arg9: memref<1x512xf32, #tpu.memory_space<vmem>>, %arg10: memref<2x4x128xbf16, #tpu.memory_space<vmem>>, %arg11: memref<2x4x128xbf16, #tpu.memory_space<vmem>>, %arg12: memref<2x256xf32, #tpu.memory_space<vmem>>, %arg13: memref<2x128xf32, #tpu.memory_space<vmem>>, %arg14: memref<2x128xf32, #tpu.memory_space<vmem>>, %arg15: memref<2x4x512xf32, #tpu.memory_space<vmem>>, %arg16: memref<2x4x512xf32, #tpu.memory_space<vmem>>) attributes {dimension_semantics = [#tpu.dimension_semantics<arbitrary>], iteration_bounds = array<i64: 1>, scalar_prefetch = 0 : i64, scratch_operands = 5 : i64, tpu.core_type = #tpu.core_type<tc>, window_params = [{transform_indices = @transform_0, window_bounds = array<i64: 2, 4, 128>}, {transform_indices = @transform_1, window_bounds = array<i64: 2, 4, 128>}, {transform_indices = @transform_2, window_bounds = array<i64: 2, 4, 128>}, {transform_indices = @transform_3, window_bounds = array<i64: 2, 4, 128>}, {pipeline_mode = #tpu.pipeline_mode<synchronous>, transform_indices = @transform_4, window_bounds = array<i64: 256, 512>}, {pipeline_mode = #tpu.pipeline_mode<synchronous>, transform_indices = @transform_5, window_bounds = array<i64: 256, 512>}, {pipeline_mode = #tpu.pipeline_mode<synchronous>, transform_indices = @transform_6, window_bounds = array<i64: 256, 1024>}, {pipeline_mode = #tpu.pipeline_mode<synchronous>, transform_indices = @transform_7, window_bounds = array<i64: 1, 512>}, {pipeline_mode = #tpu.pipeline_mode<synchronous>, transform_indices = @transform_8, window_bounds = array<i64: 1, 512>}, {transform_indices = @transform_9, window_bounds = array<i64: 2, 4, 128>}, {transform_indices = @transform_10, window_bounds = array<i64: 2, 4, 128>}]} {
    %c0_i32 = arith.constant 0 : i32
    %0 = arith.cmpi eq, %arg0, %c0_i32 : i32
    %1 = arith.extui %0 : i1 to i32
    %c0_i32_0 = arith.constant 0 : i32
    %2 = arith.cmpi ne, %1, %c0_i32_0 : i32
    scf.if %2 {
      %cst_122 = arith.constant 0.000000e+00 : f32
      %328 = vector.broadcast %cst_122 : f32 to vector<2x256xf32>
      %c0_123 = arith.constant 0 : index
      %c0_124 = arith.constant 0 : index
      %329 = vector.load %arg12[%c0_123, %c0_124] : memref<2x256xf32, #tpu.memory_space<vmem>>, vector<2x256xf32>
      tpu.vector_store %arg12[%c0_123, %c0_124], %328 {strides = array<i32>} : memref<2x256xf32, #tpu.memory_space<vmem>>, vector<2x256xf32>,
      %cst_125 = arith.constant 0.000000e+00 : f32
      %330 = vector.broadcast %cst_125 : f32 to vector<2x128xf32>
      %c0_126 = arith.constant 0 : index
      %c0_127 = arith.constant 0 : index
      %331 = vector.load %arg13[%c0_126, %c0_127] : memref<2x128xf32, #tpu.memory_space<vmem>>, vector<2x128xf32>
      tpu.vector_store %arg13[%c0_126, %c0_127], %330 {strides = array<i32>} : memref<2x128xf32, #tpu.memory_space<vmem>>, vector<2x128xf32>,
      %cst_128 = arith.constant 0.000000e+00 : f32
      %332 = vector.broadcast %cst_128 : f32 to vector<2x128xf32>
      %c0_129 = arith.constant 0 : index
      %c0_130 = arith.constant 0 : index
      %333 = vector.load %arg14[%c0_129, %c0_130] : memref<2x128xf32, #tpu.memory_space<vmem>>, vector<2x128xf32>
      tpu.vector_store %arg14[%c0_129, %c0_130], %332 {strides = array<i32>} : memref<2x128xf32, #tpu.memory_space<vmem>>, vector<2x128xf32>,
    } else {
    }
    %c0 = arith.constant 0 : index
    %c0_1 = arith.constant 0 : index
    %c0_2 = arith.constant 0 : index
    %3 = vector.load %arg1[%c0, %c0_1, %c0_2] : memref<2x4x128xbf16, #tpu.memory_space<vmem>>, vector<2x4x128xbf16>
    %c0_3 = arith.constant 0 : index
    %c0_4 = arith.constant 0 : index
    %c0_5 = arith.constant 0 : index
    %4 = vector.load %arg2[%c0_3, %c0_4, %c0_5] : memref<2x4x128xbf16, #tpu.memory_space<vmem>>, vector<2x4x128xbf16>
    %5 = tpu.concatenate %3, %4 in 2 : vector<2x4x128xbf16>, vector<2x4x128xbf16> -> vector<2x4x256xbf16>
    %c0_6 = arith.constant 0 : index
    %c0_7 = arith.constant 0 : index
    %6 = vector.load %arg5[%c0_6, %c0_7] : memref<256x512xbf16, #tpu.memory_space<vmem>>, vector<256x512xbf16>
    %c0_8 = arith.constant 0 : index
    %c0_9 = arith.constant 0 : index
    %7 = vector.load %arg8[%c0_8, %c0_9] : memref<1x512xf32, #tpu.memory_space<vmem>>, vector<1x512xf32>
    %8 = vector.extract_strided_slice %5 {offsets = [0, 0, 0], sizes = [1, 4, 256], strides = [1, 1, 1]} : vector<2x4x256xbf16> to vector<1x4x256xbf16>
    %9 = vector.shape_cast %8 : vector<1x4x256xbf16> to vector<4x256xbf16>
    %cst = arith.constant dense<0.000000e+00> : vector<4x512xf32>
    %10 = tpu.matmul %9, %6, %cst {dimension_numbers = #tpu.dot_dimension_numbers<[1], [0], [0], [1], [0, 0, 1, 1], [], []>} : vector<4x256xbf16>, vector<256x512xbf16>, vector<4x512xf32> -> vector<4x512xf32>
    %11 = vector.broadcast %7 : vector<1x512xf32> to vector<4x512xf32>
    %12 = arith.addf %10, %11 : vector<4x512xf32>
    %c0_10 = arith.constant 0 : index
    %c0_11 = arith.constant 0 : index
    %c0_12 = arith.constant 0 : index
    %13 = vector.load %arg15[%c0_10, %c0_11, %c0_12] : memref<2x4x512xf32, #tpu.memory_space<vmem>>, vector<1x4x512xf32>
    %14 = vector.shape_cast %13 : vector<1x4x512xf32> to vector<4x512xf32>
    %15 = vector.shape_cast %12 : vector<4x512xf32> to vector<1x4x512xf32>
    tpu.vector_store %arg15[%c0_10, %c0_11, %c0_12], %15 {strides = array<i32>} : memref<2x4x512xf32, #tpu.memory_space<vmem>>, vector<1x4x512xf32>,
    %16 = vector.extract_strided_slice %5 {offsets = [1, 0, 0], sizes = [1, 4, 256], strides = [1, 1, 1]} : vector<2x4x256xbf16> to vector<1x4x256xbf16>
    %17 = vector.shape_cast %16 : vector<1x4x256xbf16> to vector<4x256xbf16>
    %cst_13 = arith.constant dense<0.000000e+00> : vector<4x512xf32>
    %18 = tpu.matmul %17, %6, %cst_13 {dimension_numbers = #tpu.dot_dimension_numbers<[1], [0], [0], [1], [0, 0, 1, 1], [], []>} : vector<4x256xbf16>, vector<256x512xbf16>, vector<4x512xf32> -> vector<4x512xf32>
    %19 = vector.broadcast %7 : vector<1x512xf32> to vector<4x512xf32>
    %20 = arith.addf %18, %19 : vector<4x512xf32>
    %c1 = arith.constant 1 : index
    %c0_14 = arith.constant 0 : index
    %c0_15 = arith.constant 0 : index
    %21 = vector.load %arg15[%c1, %c0_14, %c0_15] : memref<2x4x512xf32, #tpu.memory_space<vmem>>, vector<1x4x512xf32>
    %22 = vector.shape_cast %21 : vector<1x4x512xf32> to vector<4x512xf32>
    %23 = vector.shape_cast %20 : vector<4x512xf32> to vector<1x4x512xf32>
    tpu.vector_store %arg15[%c1, %c0_14, %c0_15], %23 {strides = array<i32>} : memref<2x4x512xf32, #tpu.memory_space<vmem>>, vector<1x4x512xf32>,
    %c0_16 = arith.constant 0 : index
    %c0_17 = arith.constant 0 : index
    %c0_18 = arith.constant 0 : index
    %24 = vector.load %arg3[%c0_16, %c0_17, %c0_18] : memref<2x4x128xbf16, #tpu.memory_space<vmem>>, vector<2x4x128xbf16>
    %c0_19 = arith.constant 0 : index
    %c0_20 = arith.constant 0 : index
    %c0_21 = arith.constant 0 : index
    %25 = vector.load %arg4[%c0_19, %c0_20, %c0_21] : memref<2x4x128xbf16, #tpu.memory_space<vmem>>, vector<2x4x128xbf16>
    %26 = tpu.concatenate %24, %25 in 2 : vector<2x4x128xbf16>, vector<2x4x128xbf16> -> vector<2x4x256xbf16>
    %c0_22 = arith.constant 0 : index
    %c0_23 = arith.constant 0 : index
    %27 = vector.load %arg6[%c0_22, %c0_23] : memref<256x512xbf16, #tpu.memory_space<vmem>>, vector<256x512xbf16>
    %c0_24 = arith.constant 0 : index
    %c0_25 = arith.constant 0 : index
    %28 = vector.load %arg9[%c0_24, %c0_25] : memref<1x512xf32, #tpu.memory_space<vmem>>, vector<1x512xf32>
    %29 = vector.extract_strided_slice %26 {offsets = [0, 0, 0], sizes = [1, 4, 256], strides = [1, 1, 1]} : vector<2x4x256xbf16> to vector<1x4x256xbf16>
    %30 = vector.shape_cast %29 : vector<1x4x256xbf16> to vector<4x256xbf16>
    %cst_26 = arith.constant dense<0.000000e+00> : vector<4x512xf32>
    %31 = tpu.matmul %30, %27, %cst_26 {dimension_numbers = #tpu.dot_dimension_numbers<[1], [0], [0], [1], [0, 0, 1, 1], [], []>} : vector<4x256xbf16>, vector<256x512xbf16>, vector<4x512xf32> -> vector<4x512xf32>
    %32 = vector.broadcast %28 : vector<1x512xf32> to vector<4x512xf32>
    %33 = arith.addf %31, %32 : vector<4x512xf32>
    %c0_27 = arith.constant 0 : index
    %c0_28 = arith.constant 0 : index
    %c0_29 = arith.constant 0 : index
    %34 = vector.load %arg16[%c0_27, %c0_28, %c0_29] : memref<2x4x512xf32, #tpu.memory_space<vmem>>, vector<1x4x512xf32>
    %35 = vector.shape_cast %34 : vector<1x4x512xf32> to vector<4x512xf32>
    %36 = vector.shape_cast %33 : vector<4x512xf32> to vector<1x4x512xf32>
    tpu.vector_store %arg16[%c0_27, %c0_28, %c0_29], %36 {strides = array<i32>} : memref<2x4x512xf32, #tpu.memory_space<vmem>>, vector<1x4x512xf32>,
    %37 = vector.extract_strided_slice %26 {offsets = [1, 0, 0], sizes = [1, 4, 256], strides = [1, 1, 1]} : vector<2x4x256xbf16> to vector<1x4x256xbf16>
    %38 = vector.shape_cast %37 : vector<1x4x256xbf16> to vector<4x256xbf16>
    %cst_30 = arith.constant dense<0.000000e+00> : vector<4x512xf32>
    %39 = tpu.matmul %38, %27, %cst_30 {dimension_numbers = #tpu.dot_dimension_numbers<[1], [0], [0], [1], [0, 0, 1, 1], [], []>} : vector<4x256xbf16>, vector<256x512xbf16>, vector<4x512xf32> -> vector<4x512xf32>
    %40 = vector.broadcast %28 : vector<1x512xf32> to vector<4x512xf32>
    %41 = arith.addf %39, %40 : vector<4x512xf32>
    %c1_31 = arith.constant 1 : index
    %c0_32 = arith.constant 0 : index
    %c0_33 = arith.constant 0 : index
    %42 = vector.load %arg16[%c1_31, %c0_32, %c0_33] : memref<2x4x512xf32, #tpu.memory_space<vmem>>, vector<1x4x512xf32>
    %43 = vector.shape_cast %42 : vector<1x4x512xf32> to vector<4x512xf32>
    %44 = vector.shape_cast %41 : vector<4x512xf32> to vector<1x4x512xf32>
    tpu.vector_store %arg16[%c1_31, %c0_32, %c0_33], %44 {strides = array<i32>} : memref<2x4x512xf32, #tpu.memory_space<vmem>>, vector<1x4x512xf32>,
    %c0_34 = arith.constant 0 : index
    %c0_35 = arith.constant 0 : index
    %45 = vector.load %arg7[%c0_34, %c0_35] : memref<256x1024xbf16, #tpu.memory_space<vmem>>, vector<256x1024xbf16>
    %c0_36 = arith.constant 0 : index
    %c0_37 = arith.constant 0 : index
    %46 = vector.load %arg12[%c0_36, %c0_37] : memref<2x256xf32, #tpu.memory_space<vmem>>, vector<2x256xf32>
    %c0_38 = arith.constant 0 : index
    %c0_39 = arith.constant 0 : index
    %47 = vector.load %arg13[%c0_38, %c0_39] : memref<2x128xf32, #tpu.memory_space<vmem>>, vector<2x128xf32>
    %c0_40 = arith.constant 0 : index
    %c0_41 = arith.constant 0 : index
    %48 = vector.load %arg14[%c0_40, %c0_41] : memref<2x128xf32, #tpu.memory_space<vmem>>, vector<2x128xf32>
    %49 = arith.truncf %46 : vector<2x256xf32> to vector<2x256xbf16>
    %cst_42 = arith.constant dense<0.000000e+00> : vector<2x1024xf32>
    %50 = tpu.matmul %49, %45, %cst_42 {dimension_numbers = #tpu.dot_dimension_numbers<[1], [0], [0], [1], [0, 0, 1, 1], [], []>} : vector<2x256xbf16>, vector<256x1024xbf16>, vector<2x1024xf32> -> vector<2x1024xf32>
    %c0_43 = arith.constant 0 : index
    %c0_44 = arith.constant 0 : index
    %c0_45 = arith.constant 0 : index
    %51 = vector.load %arg15[%c0_43, %c0_44, %c0_45] : memref<2x4x512xf32, #tpu.memory_space<vmem>>, vector<2x1x512xf32>
    %52 = vector.shape_cast %51 : vector<2x1x512xf32> to vector<2x512xf32>
    %53 = vector.extract_strided_slice %50 {offsets = [0, 0], sizes = [2, 512], strides = [1, 1]} : vector<2x1024xf32> to vector<2x512xf32>
    %54 = arith.addf %52, %53 : vector<2x512xf32>
    %c0_46 = arith.constant 0 : index
    %c3 = arith.constant 3 : index
    %c0_47 = arith.constant 0 : index
    %55 = vector.load %arg16[%c0_46, %c3, %c0_47] : memref<2x4x512xf32, #tpu.memory_space<vmem>>, vector<2x1x512xf32>
    %56 = vector.shape_cast %55 : vector<2x1x512xf32> to vector<2x512xf32>
    %57 = vector.extract_strided_slice %50 {offsets = [0, 512], sizes = [2, 512], strides = [1, 1]} : vector<2x1024xf32> to vector<2x512xf32>
    %58 = arith.addf %56, %57 : vector<2x512xf32>
    %59 = vector.extract_strided_slice %54 {offsets = [0, 0], sizes = [2, 128], strides = [1, 1]} : vector<2x512xf32> to vector<2x128xf32>
    %60 = arith.negf %59 : vector<2x128xf32>
    %61 = math.exp %60 : vector<2x128xf32>
    %cst_48 = arith.constant 1.000000e+00 : f32
    %62 = vector.broadcast %cst_48 : f32 to vector<2x128xf32>
    %63 = arith.addf %62, %61 : vector<2x128xf32>
    %64 = arith.divf %62, %63 : vector<2x128xf32>
    %65 = vector.extract_strided_slice %54 {offsets = [0, 128], sizes = [2, 128], strides = [1, 1]} : vector<2x512xf32> to vector<2x128xf32>
    %66 = arith.negf %65 : vector<2x128xf32>
    %67 = math.exp %66 : vector<2x128xf32>
    %cst_49 = arith.constant 1.000000e+00 : f32
    %68 = vector.broadcast %cst_49 : f32 to vector<2x128xf32>
    %69 = arith.addf %68, %67 : vector<2x128xf32>
    %70 = arith.divf %68, %69 : vector<2x128xf32>
    %71 = vector.extract_strided_slice %54 {offsets = [0, 256], sizes = [2, 128], strides = [1, 1]} : vector<2x512xf32> to vector<2x128xf32>
    %72 = math.tanh %71 : vector<2x128xf32>
    %73 = vector.extract_strided_slice %54 {offsets = [0, 384], sizes = [2, 128], strides = [1, 1]} : vector<2x512xf32> to vector<2x128xf32>
    %74 = arith.negf %73 : vector<2x128xf32>
    %75 = math.exp %74 : vector<2x128xf32>
    %cst_50 = arith.constant 1.000000e+00 : f32
    %76 = vector.broadcast %cst_50 : f32 to vector<2x128xf32>
    %77 = arith.addf %76, %75 : vector<2x128xf32>
    %78 = arith.divf %76, %77 : vector<2x128xf32>
    %79 = arith.mulf %70, %47 : vector<2x128xf32>
    %80 = arith.mulf %64, %72 : vector<2x128xf32>
    %81 = arith.addf %79, %80 : vector<2x128xf32>
    %82 = math.tanh %81 : vector<2x128xf32>
    %83 = arith.mulf %78, %82 : vector<2x128xf32>
    %84 = vector.extract_strided_slice %58 {offsets = [0, 0], sizes = [2, 128], strides = [1, 1]} : vector<2x512xf32> to vector<2x128xf32>
    %85 = arith.negf %84 : vector<2x128xf32>
    %86 = math.exp %85 : vector<2x128xf32>
    %cst_51 = arith.constant 1.000000e+00 : f32
    %87 = vector.broadcast %cst_51 : f32 to vector<2x128xf32>
    %88 = arith.addf %87, %86 : vector<2x128xf32>
    %89 = arith.divf %87, %88 : vector<2x128xf32>
    %90 = vector.extract_strided_slice %58 {offsets = [0, 128], sizes = [2, 128], strides = [1, 1]} : vector<2x512xf32> to vector<2x128xf32>
    %91 = arith.negf %90 : vector<2x128xf32>
    %92 = math.exp %91 : vector<2x128xf32>
    %cst_52 = arith.constant 1.000000e+00 : f32
    %93 = vector.broadcast %cst_52 : f32 to vector<2x128xf32>
    %94 = arith.addf %93, %92 : vector<2x128xf32>
    %95 = arith.divf %93, %94 : vector<2x128xf32>
    %96 = vector.extract_strided_slice %58 {offsets = [0, 256], sizes = [2, 128], strides = [1, 1]} : vector<2x512xf32> to vector<2x128xf32>
    %97 = math.tanh %96 : vector<2x128xf32>
    %98 = vector.extract_strided_slice %58 {offsets = [0, 384], sizes = [2, 128], strides = [1, 1]} : vector<2x512xf32> to vector<2x128xf32>
    %99 = arith.negf %98 : vector<2x128xf32>
    %100 = math.exp %99 : vector<2x128xf32>
    %cst_53 = arith.constant 1.000000e+00 : f32
    %101 = vector.broadcast %cst_53 : f32 to vector<2x128xf32>
    %102 = arith.addf %101, %100 : vector<2x128xf32>
    %103 = arith.divf %101, %102 : vector<2x128xf32>
    %104 = arith.mulf %95, %48 : vector<2x128xf32>
    %105 = arith.mulf %89, %97 : vector<2x128xf32>
    %106 = arith.addf %104, %105 : vector<2x128xf32>
    %107 = math.tanh %106 : vector<2x128xf32>
    %108 = arith.mulf %103, %107 : vector<2x128xf32>
    %109 = arith.truncf %83 : vector<2x128xf32> to vector<2x128xbf16>
    %c0_54 = arith.constant 0 : index
    %c0_55 = arith.constant 0 : index
    %c0_56 = arith.constant 0 : index
    %110 = vector.load %arg10[%c0_54, %c0_55, %c0_56] : memref<2x4x128xbf16, #tpu.memory_space<vmem>>, vector<2x1x128xbf16>
    %111 = vector.shape_cast %110 : vector<2x1x128xbf16> to vector<2x128xbf16>
    %112 = vector.shape_cast %109 : vector<2x128xbf16> to vector<2x1x128xbf16>
    tpu.vector_store %arg10[%c0_54, %c0_55, %c0_56], %112 {strides = array<i32>} : memref<2x4x128xbf16, #tpu.memory_space<vmem>>, vector<2x1x128xbf16>,
    %113 = arith.truncf %108 : vector<2x128xf32> to vector<2x128xbf16>
    %c0_57 = arith.constant 0 : index
    %c3_58 = arith.constant 3 : index
    %c0_59 = arith.constant 0 : index
    %114 = vector.load %arg11[%c0_57, %c3_58, %c0_59] : memref<2x4x128xbf16, #tpu.memory_space<vmem>>, vector<2x1x128xbf16>
    %115 = vector.shape_cast %114 : vector<2x1x128xbf16> to vector<2x128xbf16>
    %116 = vector.shape_cast %113 : vector<2x128xbf16> to vector<2x1x128xbf16>
    tpu.vector_store %arg11[%c0_57, %c3_58, %c0_59], %116 {strides = array<i32>} : memref<2x4x128xbf16, #tpu.memory_space<vmem>>, vector<2x1x128xbf16>,
    %117 = tpu.concatenate %83, %108 in 1 : vector<2x128xf32>, vector<2x128xf32> -> vector<2x256xf32>
    %118 = arith.truncf %117 : vector<2x256xf32> to vector<2x256xbf16>
    %cst_60 = arith.constant dense<0.000000e+00> : vector<2x1024xf32>
    %119 = tpu.matmul %118, %45, %cst_60 {dimension_numbers = #tpu.dot_dimension_numbers<[1], [0], [0], [1], [0, 0, 1, 1], [], []>} : vector<2x256xbf16>, vector<256x1024xbf16>, vector<2x1024xf32> -> vector<2x1024xf32>
    %c0_61 = arith.constant 0 : index
    %c1_62 = arith.constant 1 : index
    %c0_63 = arith.constant 0 : index
    %120 = vector.load %arg15[%c0_61, %c1_62, %c0_63] : memref<2x4x512xf32, #tpu.memory_space<vmem>>, vector<2x1x512xf32>
    %121 = vector.shape_cast %120 : vector<2x1x512xf32> to vector<2x512xf32>
    %122 = vector.extract_strided_slice %119 {offsets = [0, 0], sizes = [2, 512], strides = [1, 1]} : vector<2x1024xf32> to vector<2x512xf32>
    %123 = arith.addf %121, %122 : vector<2x512xf32>
    %c0_64 = arith.constant 0 : index
    %c2 = arith.constant 2 : index
    %c0_65 = arith.constant 0 : index
    %124 = vector.load %arg16[%c0_64, %c2, %c0_65] : memref<2x4x512xf32, #tpu.memory_space<vmem>>, vector<2x1x512xf32>
    %125 = vector.shape_cast %124 : vector<2x1x512xf32> to vector<2x512xf32>
    %126 = vector.extract_strided_slice %119 {offsets = [0, 512], sizes = [2, 512], strides = [1, 1]} : vector<2x1024xf32> to vector<2x512xf32>
    %127 = arith.addf %125, %126 : vector<2x512xf32>
    %128 = vector.extract_strided_slice %123 {offsets = [0, 0], sizes = [2, 128], strides = [1, 1]} : vector<2x512xf32> to vector<2x128xf32>
    %129 = arith.negf %128 : vector<2x128xf32>
    %130 = math.exp %129 : vector<2x128xf32>
    %cst_66 = arith.constant 1.000000e+00 : f32
    %131 = vector.broadcast %cst_66 : f32 to vector<2x128xf32>
    %132 = arith.addf %131, %130 : vector<2x128xf32>
    %133 = arith.divf %131, %132 : vector<2x128xf32>
    %134 = vector.extract_strided_slice %123 {offsets = [0, 128], sizes = [2, 128], strides = [1, 1]} : vector<2x512xf32> to vector<2x128xf32>
    %135 = arith.negf %134 : vector<2x128xf32>
    %136 = math.exp %135 : vector<2x128xf32>
    %cst_67 = arith.constant 1.000000e+00 : f32
    %137 = vector.broadcast %cst_67 : f32 to vector<2x128xf32>
    %138 = arith.addf %137, %136 : vector<2x128xf32>
    %139 = arith.divf %137, %138 : vector<2x128xf32>
    %140 = vector.extract_strided_slice %123 {offsets = [0, 256], sizes = [2, 128], strides = [1, 1]} : vector<2x512xf32> to vector<2x128xf32>
    %141 = math.tanh %140 : vector<2x128xf32>
    %142 = vector.extract_strided_slice %123 {offsets = [0, 384], sizes = [2, 128], strides = [1, 1]} : vector<2x512xf32> to vector<2x128xf32>
    %143 = arith.negf %142 : vector<2x128xf32>
    %144 = math.exp %143 : vector<2x128xf32>
    %cst_68 = arith.constant 1.000000e+00 : f32
    %145 = vector.broadcast %cst_68 : f32 to vector<2x128xf32>
    %146 = arith.addf %145, %144 : vector<2x128xf32>
    %147 = arith.divf %145, %146 : vector<2x128xf32>
    %148 = arith.mulf %139, %81 : vector<2x128xf32>
    %149 = arith.mulf %133, %141 : vector<2x128xf32>
    %150 = arith.addf %148, %149 : vector<2x128xf32>
    %151 = math.tanh %150 : vector<2x128xf32>
    %152 = arith.mulf %147, %151 : vector<2x128xf32>
    %153 = vector.extract_strided_slice %127 {offsets = [0, 0], sizes = [2, 128], strides = [1, 1]} : vector<2x512xf32> to vector<2x128xf32>
    %154 = arith.negf %153 : vector<2x128xf32>
    %155 = math.exp %154 : vector<2x128xf32>
    %cst_69 = arith.constant 1.000000e+00 : f32
    %156 = vector.broadcast %cst_69 : f32 to vector<2x128xf32>
    %157 = arith.addf %156, %155 : vector<2x128xf32>
    %158 = arith.divf %156, %157 : vector<2x128xf32>
    %159 = vector.extract_strided_slice %127 {offsets = [0, 128], sizes = [2, 128], strides = [1, 1]} : vector<2x512xf32> to vector<2x128xf32>
    %160 = arith.negf %159 : vector<2x128xf32>
    %161 = math.exp %160 : vector<2x128xf32>
    %cst_70 = arith.constant 1.000000e+00 : f32
    %162 = vector.broadcast %cst_70 : f32 to vector<2x128xf32>
    %163 = arith.addf %162, %161 : vector<2x128xf32>
    %164 = arith.divf %162, %163 : vector<2x128xf32>
    %165 = vector.extract_strided_slice %127 {offsets = [0, 256], sizes = [2, 128], strides = [1, 1]} : vector<2x512xf32> to vector<2x128xf32>
    %166 = math.tanh %165 : vector<2x128xf32>
    %167 = vector.extract_strided_slice %127 {offsets = [0, 384], sizes = [2, 128], strides = [1, 1]} : vector<2x512xf32> to vector<2x128xf32>
    %168 = arith.negf %167 : vector<2x128xf32>
    %169 = math.exp %168 : vector<2x128xf32>
    %cst_71 = arith.constant 1.000000e+00 : f32
    %170 = vector.broadcast %cst_71 : f32 to vector<2x128xf32>
    %171 = arith.addf %170, %169 : vector<2x128xf32>
    %172 = arith.divf %170, %171 : vector<2x128xf32>
    %173 = arith.mulf %164, %106 : vector<2x128xf32>
    %174 = arith.mulf %158, %166 : vector<2x128xf32>
    %175 = arith.addf %173, %174 : vector<2x128xf32>
    %176 = math.tanh %175 : vector<2x128xf32>
    %177 = arith.mulf %172, %176 : vector<2x128xf32>
    %178 = arith.truncf %152 : vector<2x128xf32> to vector<2x128xbf16>
    %c0_72 = arith.constant 0 : index
    %c1_73 = arith.constant 1 : index
    %c0_74 = arith.constant 0 : index
    %179 = vector.load %arg10[%c0_72, %c1_73, %c0_74] : memref<2x4x128xbf16, #tpu.memory_space<vmem>>, vector<2x1x128xbf16>
    %180 = vector.shape_cast %179 : vector<2x1x128xbf16> to vector<2x128xbf16>
    %181 = vector.shape_cast %178 : vector<2x128xbf16> to vector<2x1x128xbf16>
    tpu.vector_store %arg10[%c0_72, %c1_73, %c0_74], %181 {strides = array<i32>} : memref<2x4x128xbf16, #tpu.memory_space<vmem>>, vector<2x1x128xbf16>,
    %182 = arith.truncf %177 : vector<2x128xf32> to vector<2x128xbf16>
    %c0_75 = arith.constant 0 : index
    %c2_76 = arith.constant 2 : index
    %c0_77 = arith.constant 0 : index
    %183 = vector.load %arg11[%c0_75, %c2_76, %c0_77] : memref<2x4x128xbf16, #tpu.memory_space<vmem>>, vector<2x1x128xbf16>
    %184 = vector.shape_cast %183 : vector<2x1x128xbf16> to vector<2x128xbf16>
    %185 = vector.shape_cast %182 : vector<2x128xbf16> to vector<2x1x128xbf16>
    tpu.vector_store %arg11[%c0_75, %c2_76, %c0_77], %185 {strides = array<i32>} : memref<2x4x128xbf16, #tpu.memory_space<vmem>>, vector<2x1x128xbf16>,
    %186 = tpu.concatenate %152, %177 in 1 : vector<2x128xf32>, vector<2x128xf32> -> vector<2x256xf32>
    %187 = arith.truncf %186 : vector<2x256xf32> to vector<2x256xbf16>
    %cst_78 = arith.constant dense<0.000000e+00> : vector<2x1024xf32>
    %188 = tpu.matmul %187, %45, %cst_78 {dimension_numbers = #tpu.dot_dimension_numbers<[1], [0], [0], [1], [0, 0, 1, 1], [], []>} : vector<2x256xbf16>, vector<256x1024xbf16>, vector<2x1024xf32> -> vector<2x1024xf32>
    %c0_79 = arith.constant 0 : index
    %c2_80 = arith.constant 2 : index
    %c0_81 = arith.constant 0 : index
    %189 = vector.load %arg15[%c0_79, %c2_80, %c0_81] : memref<2x4x512xf32, #tpu.memory_space<vmem>>, vector<2x1x512xf32>
    %190 = vector.shape_cast %189 : vector<2x1x512xf32> to vector<2x512xf32>
    %191 = vector.extract_strided_slice %188 {offsets = [0, 0], sizes = [2, 512], strides = [1, 1]} : vector<2x1024xf32> to vector<2x512xf32>
    %192 = arith.addf %190, %191 : vector<2x512xf32>
    %c0_82 = arith.constant 0 : index
    %c1_83 = arith.constant 1 : index
    %c0_84 = arith.constant 0 : index
    %193 = vector.load %arg16[%c0_82, %c1_83, %c0_84] : memref<2x4x512xf32, #tpu.memory_space<vmem>>, vector<2x1x512xf32>
    %194 = vector.shape_cast %193 : vector<2x1x512xf32> to vector<2x512xf32>
    %195 = vector.extract_strided_slice %188 {offsets = [0, 512], sizes = [2, 512], strides = [1, 1]} : vector<2x1024xf32> to vector<2x512xf32>
    %196 = arith.addf %194, %195 : vector<2x512xf32>
    %197 = vector.extract_strided_slice %192 {offsets = [0, 0], sizes = [2, 128], strides = [1, 1]} : vector<2x512xf32> to vector<2x128xf32>
    %198 = arith.negf %197 : vector<2x128xf32>
    %199 = math.exp %198 : vector<2x128xf32>
    %cst_85 = arith.constant 1.000000e+00 : f32
    %200 = vector.broadcast %cst_85 : f32 to vector<2x128xf32>
    %201 = arith.addf %200, %199 : vector<2x128xf32>
    %202 = arith.divf %200, %201 : vector<2x128xf32>
    %203 = vector.extract_strided_slice %192 {offsets = [0, 128], sizes = [2, 128], strides = [1, 1]} : vector<2x512xf32> to vector<2x128xf32>
    %204 = arith.negf %203 : vector<2x128xf32>
    %205 = math.exp %204 : vector<2x128xf32>
    %cst_86 = arith.constant 1.000000e+00 : f32
    %206 = vector.broadcast %cst_86 : f32 to vector<2x128xf32>
    %207 = arith.addf %206, %205 : vector<2x128xf32>
    %208 = arith.divf %206, %207 : vector<2x128xf32>
    %209 = vector.extract_strided_slice %192 {offsets = [0, 256], sizes = [2, 128], strides = [1, 1]} : vector<2x512xf32> to vector<2x128xf32>
    %210 = math.tanh %209 : vector<2x128xf32>
    %211 = vector.extract_strided_slice %192 {offsets = [0, 384], sizes = [2, 128], strides = [1, 1]} : vector<2x512xf32> to vector<2x128xf32>
    %212 = arith.negf %211 : vector<2x128xf32>
    %213 = math.exp %212 : vector<2x128xf32>
    %cst_87 = arith.constant 1.000000e+00 : f32
    %214 = vector.broadcast %cst_87 : f32 to vector<2x128xf32>
    %215 = arith.addf %214, %213 : vector<2x128xf32>
    %216 = arith.divf %214, %215 : vector<2x128xf32>
    %217 = arith.mulf %208, %150 : vector<2x128xf32>
    %218 = arith.mulf %202, %210 : vector<2x128xf32>
    %219 = arith.addf %217, %218 : vector<2x128xf32>
    %220 = math.tanh %219 : vector<2x128xf32>
    %221 = arith.mulf %216, %220 : vector<2x128xf32>
    %222 = vector.extract_strided_slice %196 {offsets = [0, 0], sizes = [2, 128], strides = [1, 1]} : vector<2x512xf32> to vector<2x128xf32>
    %223 = arith.negf %222 : vector<2x128xf32>
    %224 = math.exp %223 : vector<2x128xf32>
    %cst_88 = arith.constant 1.000000e+00 : f32
    %225 = vector.broadcast %cst_88 : f32 to vector<2x128xf32>
    %226 = arith.addf %225, %224 : vector<2x128xf32>
    %227 = arith.divf %225, %226 : vector<2x128xf32>
    %228 = vector.extract_strided_slice %196 {offsets = [0, 128], sizes = [2, 128], strides = [1, 1]} : vector<2x512xf32> to vector<2x128xf32>
    %229 = arith.negf %228 : vector<2x128xf32>
    %230 = math.exp %229 : vector<2x128xf32>
    %cst_89 = arith.constant 1.000000e+00 : f32
    %231 = vector.broadcast %cst_89 : f32 to vector<2x128xf32>
    %232 = arith.addf %231, %230 : vector<2x128xf32>
    %233 = arith.divf %231, %232 : vector<2x128xf32>
    %234 = vector.extract_strided_slice %196 {offsets = [0, 256], sizes = [2, 128], strides = [1, 1]} : vector<2x512xf32> to vector<2x128xf32>
    %235 = math.tanh %234 : vector<2x128xf32>
    %236 = vector.extract_strided_slice %196 {offsets = [0, 384], sizes = [2, 128], strides = [1, 1]} : vector<2x512xf32> to vector<2x128xf32>
    %237 = arith.negf %236 : vector<2x128xf32>
    %238 = math.exp %237 : vector<2x128xf32>
    %cst_90 = arith.constant 1.000000e+00 : f32
    %239 = vector.broadcast %cst_90 : f32 to vector<2x128xf32>
    %240 = arith.addf %239, %238 : vector<2x128xf32>
    %241 = arith.divf %239, %240 : vector<2x128xf32>
    %242 = arith.mulf %233, %175 : vector<2x128xf32>
    %243 = arith.mulf %227, %235 : vector<2x128xf32>
    %244 = arith.addf %242, %243 : vector<2x128xf32>
    %245 = math.tanh %244 : vector<2x128xf32>
    %246 = arith.mulf %241, %245 : vector<2x128xf32>
    %247 = arith.truncf %221 : vector<2x128xf32> to vector<2x128xbf16>
    %c0_91 = arith.constant 0 : index
    %c2_92 = arith.constant 2 : index
    %c0_93 = arith.constant 0 : index
    %248 = vector.load %arg10[%c0_91, %c2_92, %c0_93] : memref<2x4x128xbf16, #tpu.memory_space<vmem>>, vector<2x1x128xbf16>
    %249 = vector.shape_cast %248 : vector<2x1x128xbf16> to vector<2x128xbf16>
    %250 = vector.shape_cast %247 : vector<2x128xbf16> to vector<2x1x128xbf16>
    tpu.vector_store %arg10[%c0_91, %c2_92, %c0_93], %250 {strides = array<i32>} : memref<2x4x128xbf16, #tpu.memory_space<vmem>>, vector<2x1x128xbf16>,
    %251 = arith.truncf %246 : vector<2x128xf32> to vector<2x128xbf16>
    %c0_94 = arith.constant 0 : index
    %c1_95 = arith.constant 1 : index
    %c0_96 = arith.constant 0 : index
    %252 = vector.load %arg11[%c0_94, %c1_95, %c0_96] : memref<2x4x128xbf16, #tpu.memory_space<vmem>>, vector<2x1x128xbf16>
    %253 = vector.shape_cast %252 : vector<2x1x128xbf16> to vector<2x128xbf16>
    %254 = vector.shape_cast %251 : vector<2x128xbf16> to vector<2x1x128xbf16>
    tpu.vector_store %arg11[%c0_94, %c1_95, %c0_96], %254 {strides = array<i32>} : memref<2x4x128xbf16, #tpu.memory_space<vmem>>, vector<2x1x128xbf16>,
    %255 = tpu.concatenate %221, %246 in 1 : vector<2x128xf32>, vector<2x128xf32> -> vector<2x256xf32>
    %256 = arith.truncf %255 : vector<2x256xf32> to vector<2x256xbf16>
    %cst_97 = arith.constant dense<0.000000e+00> : vector<2x1024xf32>
    %257 = tpu.matmul %256, %45, %cst_97 {dimension_numbers = #tpu.dot_dimension_numbers<[1], [0], [0], [1], [0, 0, 1, 1], [], []>} : vector<2x256xbf16>, vector<256x1024xbf16>, vector<2x1024xf32> -> vector<2x1024xf32>
    %c0_98 = arith.constant 0 : index
    %c3_99 = arith.constant 3 : index
    %c0_100 = arith.constant 0 : index
    %258 = vector.load %arg15[%c0_98, %c3_99, %c0_100] : memref<2x4x512xf32, #tpu.memory_space<vmem>>, vector<2x1x512xf32>
    %259 = vector.shape_cast %258 : vector<2x1x512xf32> to vector<2x512xf32>
    %260 = vector.extract_strided_slice %257 {offsets = [0, 0], sizes = [2, 512], strides = [1, 1]} : vector<2x1024xf32> to vector<2x512xf32>
    %261 = arith.addf %259, %260 : vector<2x512xf32>
    %c0_101 = arith.constant 0 : index
    %c0_102 = arith.constant 0 : index
    %c0_103 = arith.constant 0 : index
    %262 = vector.load %arg16[%c0_101, %c0_102, %c0_103] : memref<2x4x512xf32, #tpu.memory_space<vmem>>, vector<2x1x512xf32>
    %263 = vector.shape_cast %262 : vector<2x1x512xf32> to vector<2x512xf32>
    %264 = vector.extract_strided_slice %257 {offsets = [0, 512], sizes = [2, 512], strides = [1, 1]} : vector<2x1024xf32> to vector<2x512xf32>
    %265 = arith.addf %263, %264 : vector<2x512xf32>
    %266 = vector.extract_strided_slice %261 {offsets = [0, 0], sizes = [2, 128], strides = [1, 1]} : vector<2x512xf32> to vector<2x128xf32>
    %267 = arith.negf %266 : vector<2x128xf32>
    %268 = math.exp %267 : vector<2x128xf32>
    %cst_104 = arith.constant 1.000000e+00 : f32
    %269 = vector.broadcast %cst_104 : f32 to vector<2x128xf32>
    %270 = arith.addf %269, %268 : vector<2x128xf32>
    %271 = arith.divf %269, %270 : vector<2x128xf32>
    %272 = vector.extract_strided_slice %261 {offsets = [0, 128], sizes = [2, 128], strides = [1, 1]} : vector<2x512xf32> to vector<2x128xf32>
    %273 = arith.negf %272 : vector<2x128xf32>
    %274 = math.exp %273 : vector<2x128xf32>
    %cst_105 = arith.constant 1.000000e+00 : f32
    %275 = vector.broadcast %cst_105 : f32 to vector<2x128xf32>
    %276 = arith.addf %275, %274 : vector<2x128xf32>
    %277 = arith.divf %275, %276 : vector<2x128xf32>
    %278 = vector.extract_strided_slice %261 {offsets = [0, 256], sizes = [2, 128], strides = [1, 1]} : vector<2x512xf32> to vector<2x128xf32>
    %279 = math.tanh %278 : vector<2x128xf32>
    %280 = vector.extract_strided_slice %261 {offsets = [0, 384], sizes = [2, 128], strides = [1, 1]} : vector<2x512xf32> to vector<2x128xf32>
    %281 = arith.negf %280 : vector<2x128xf32>
    %282 = math.exp %281 : vector<2x128xf32>
    %cst_106 = arith.constant 1.000000e+00 : f32
    %283 = vector.broadcast %cst_106 : f32 to vector<2x128xf32>
    %284 = arith.addf %283, %282 : vector<2x128xf32>
    %285 = arith.divf %283, %284 : vector<2x128xf32>
    %286 = arith.mulf %277, %219 : vector<2x128xf32>
    %287 = arith.mulf %271, %279 : vector<2x128xf32>
    %288 = arith.addf %286, %287 : vector<2x128xf32>
    %289 = math.tanh %288 : vector<2x128xf32>
    %290 = arith.mulf %285, %289 : vector<2x128xf32>
    %291 = vector.extract_strided_slice %265 {offsets = [0, 0], sizes = [2, 128], strides = [1, 1]} : vector<2x512xf32> to vector<2x128xf32>
    %292 = arith.negf %291 : vector<2x128xf32>
    %293 = math.exp %292 : vector<2x128xf32>
    %cst_107 = arith.constant 1.000000e+00 : f32
    %294 = vector.broadcast %cst_107 : f32 to vector<2x128xf32>
    %295 = arith.addf %294, %293 : vector<2x128xf32>
    %296 = arith.divf %294, %295 : vector<2x128xf32>
    %297 = vector.extract_strided_slice %265 {offsets = [0, 128], sizes = [2, 128], strides = [1, 1]} : vector<2x512xf32> to vector<2x128xf32>
    %298 = arith.negf %297 : vector<2x128xf32>
    %299 = math.exp %298 : vector<2x128xf32>
    %cst_108 = arith.constant 1.000000e+00 : f32
    %300 = vector.broadcast %cst_108 : f32 to vector<2x128xf32>
    %301 = arith.addf %300, %299 : vector<2x128xf32>
    %302 = arith.divf %300, %301 : vector<2x128xf32>
    %303 = vector.extract_strided_slice %265 {offsets = [0, 256], sizes = [2, 128], strides = [1, 1]} : vector<2x512xf32> to vector<2x128xf32>
    %304 = math.tanh %303 : vector<2x128xf32>
    %305 = vector.extract_strided_slice %265 {offsets = [0, 384], sizes = [2, 128], strides = [1, 1]} : vector<2x512xf32> to vector<2x128xf32>
    %306 = arith.negf %305 : vector<2x128xf32>
    %307 = math.exp %306 : vector<2x128xf32>
    %cst_109 = arith.constant 1.000000e+00 : f32
    %308 = vector.broadcast %cst_109 : f32 to vector<2x128xf32>
    %309 = arith.addf %308, %307 : vector<2x128xf32>
    %310 = arith.divf %308, %309 : vector<2x128xf32>
    %311 = arith.mulf %302, %244 : vector<2x128xf32>
    %312 = arith.mulf %296, %304 : vector<2x128xf32>
    %313 = arith.addf %311, %312 : vector<2x128xf32>
    %314 = math.tanh %313 : vector<2x128xf32>
    %315 = arith.mulf %310, %314 : vector<2x128xf32>
    %316 = arith.truncf %290 : vector<2x128xf32> to vector<2x128xbf16>
    %c0_110 = arith.constant 0 : index
    %c3_111 = arith.constant 3 : index
    %c0_112 = arith.constant 0 : index
    %317 = vector.load %arg10[%c0_110, %c3_111, %c0_112] : memref<2x4x128xbf16, #tpu.memory_space<vmem>>, vector<2x1x128xbf16>
    %318 = vector.shape_cast %317 : vector<2x1x128xbf16> to vector<2x128xbf16>
    %319 = vector.shape_cast %316 : vector<2x128xbf16> to vector<2x1x128xbf16>
    tpu.vector_store %arg10[%c0_110, %c3_111, %c0_112], %319 {strides = array<i32>} : memref<2x4x128xbf16, #tpu.memory_space<vmem>>, vector<2x1x128xbf16>,
    %320 = arith.truncf %315 : vector<2x128xf32> to vector<2x128xbf16>
    %c0_113 = arith.constant 0 : index
    %c0_114 = arith.constant 0 : index
    %c0_115 = arith.constant 0 : index
    %321 = vector.load %arg11[%c0_113, %c0_114, %c0_115] : memref<2x4x128xbf16, #tpu.memory_space<vmem>>, vector<2x1x128xbf16>
    %322 = vector.shape_cast %321 : vector<2x1x128xbf16> to vector<2x128xbf16>
    %323 = vector.shape_cast %320 : vector<2x128xbf16> to vector<2x1x128xbf16>
    tpu.vector_store %arg11[%c0_113, %c0_114, %c0_115], %323 {strides = array<i32>} : memref<2x4x128xbf16, #tpu.memory_space<vmem>>, vector<2x1x128xbf16>,
    %324 = tpu.concatenate %290, %315 in 1 : vector<2x128xf32>, vector<2x128xf32> -> vector<2x256xf32>
    %c0_116 = arith.constant 0 : index
    %c0_117 = arith.constant 0 : index
    %325 = vector.load %arg12[%c0_116, %c0_117] : memref<2x256xf32, #tpu.memory_space<vmem>>, vector<2x256xf32>
    tpu.vector_store %arg12[%c0_116, %c0_117], %324 {strides = array<i32>} : memref<2x256xf32, #tpu.memory_space<vmem>>, vector<2x256xf32>,
    %c0_118 = arith.constant 0 : index
    %c0_119 = arith.constant 0 : index
    %326 = vector.load %arg13[%c0_118, %c0_119] : memref<2x128xf32, #tpu.memory_space<vmem>>, vector<2x128xf32>
    tpu.vector_store %arg13[%c0_118, %c0_119], %288 {strides = array<i32>} : memref<2x128xf32, #tpu.memory_space<vmem>>, vector<2x128xf32>,
    %c0_120 = arith.constant 0 : index
    %c0_121 = arith.constant 0 : index
    %327 = vector.load %arg14[%c0_120, %c0_121] : memref<2x128xf32, #tpu.memory_space<vmem>>, vector<2x128xf32>
    tpu.vector_store %arg14[%c0_120, %c0_121], %313 {strides = array<i32>} : memref<2x128xf32, #tpu.memory_space<vmem>>, vector<2x128xf32>,
    return
  }
  func.func @transform_0(%arg0: i32) -> (i32, i32, i32) {
    %c0_i32 = arith.constant 0 : i32
    %c0_i32_0 = arith.constant 0 : i32
    %c0_i32_1 = arith.constant 0 : i32
    return %c0_i32, %arg0, %c0_i32_0 : i32, i32, i32
  }
  func.func @transform_1(%arg0: i32) -> (i32, i32, i32) {
    %c0_i32 = arith.constant 0 : i32
    %c0_i32_0 = arith.constant 0 : i32
    %c0_i32_1 = arith.constant 0 : i32
    return %c0_i32, %arg0, %c0_i32_0 : i32, i32, i32
  }
  func.func @transform_2(%arg0: i32) -> (i32, i32, i32) {
    %c0_i32 = arith.constant 0 : i32
    %0 = arith.subi %c0_i32, %arg0 : i32
    %c0_i32_0 = arith.constant 0 : i32
    %c0_i32_1 = arith.constant 0 : i32
    %c0_i32_2 = arith.constant 0 : i32
    return %c0_i32_0, %0, %c0_i32_1 : i32, i32, i32
  }
  func.func @transform_3(%arg0: i32) -> (i32, i32, i32) {
    %c0_i32 = arith.constant 0 : i32
    %0 = arith.subi %c0_i32, %arg0 : i32
    %c0_i32_0 = arith.constant 0 : i32
    %c0_i32_1 = arith.constant 0 : i32
    %c0_i32_2 = arith.constant 0 : i32
    return %c0_i32_0, %0, %c0_i32_1 : i32, i32, i32
  }
  func.func @transform_4(%arg0: i32) -> (i32, i32) {
    %c0_i32 = arith.constant 0 : i32
    %c0_i32_0 = arith.constant 0 : i32
    %c0_i32_1 = arith.constant 0 : i32
    return %c0_i32, %c0_i32_0 : i32, i32
  }
  func.func @transform_5(%arg0: i32) -> (i32, i32) {
    %c0_i32 = arith.constant 0 : i32
    %c0_i32_0 = arith.constant 0 : i32
    %c0_i32_1 = arith.constant 0 : i32
    return %c0_i32, %c0_i32_0 : i32, i32
  }
  func.func @transform_6(%arg0: i32) -> (i32, i32) {
    %c0_i32 = arith.constant 0 : i32
    %c0_i32_0 = arith.constant 0 : i32
    %c0_i32_1 = arith.constant 0 : i32
    return %c0_i32, %c0_i32_0 : i32, i32
  }
  func.func @transform_7(%arg0: i32) -> (i32, i32) {
    %c0_i32 = arith.constant 0 : i32
    %c0_i32_0 = arith.constant 0 : i32
    %c0_i32_1 = arith.constant 0 : i32
    return %c0_i32, %c0_i32_0 : i32, i32
  }
  func.func @transform_8(%arg0: i32) -> (i32, i32) {
    %c0_i32 = arith.constant 0 : i32
    %c0_i32_0 = arith.constant 0 : i32
    %c0_i32_1 = arith.constant 0 : i32
    return %c0_i32, %c0_i32_0 : i32, i32
  }
  func.func @transform_9(%arg0: i32) -> (i32, i32, i32) {
    %c0_i32 = arith.constant 0 : i32
    %c0_i32_0 = arith.constant 0 : i32
    %c0_i32_1 = arith.constant 0 : i32
    return %c0_i32, %arg0, %c0_i32_0 : i32, i32, i32
  }
  func.func @transform_10(%arg0: i32) -> (i32, i32, i32) {
    %c0_i32 = arith.constant 0 : i32
    %0 = arith.subi %c0_i32, %arg0 : i32
    %c0_i32_0 = arith.constant 0 : i32
    %c0_i32_1 = arith.constant 0 : i32
    %c0_i32_2 = arith.constant 0 : i32
    return %c0_i32_0, %0, %c0_i32_1 : i32, i32, i32
  }
}

module attributes {stable_mosaic.version = 11 : i64} {
  func.func @kernel(%arg0: i32, %arg1: memref<1x4x128xbf16, #tpu.memory_space<vmem>>, %arg2: memref<1x4x128xbf16, #tpu.memory_space<vmem>>, %arg3: memref<1x128xf32, #tpu.memory_space<vmem>>, %arg4: memref<1x128xf32, #tpu.memory_space<vmem>>, %arg5: memref<1x1xf32, #tpu.memory_space<vmem>>, %arg6: memref<1x4xf32, #tpu.memory_space<vmem>>, %arg7: memref<1x1xf32, #tpu.memory_space<vmem>>, %arg8: memref<1x4x4xf32, #tpu.memory_space<vmem>>) attributes {dimension_semantics = [#tpu.dimension_semantics<parallel>], iteration_bounds = array<i64: 2>, scalar_prefetch = 0 : i64, scratch_operands = 0 : i64, tpu.core_type = #tpu.core_type<tc>, window_params = [{transform_indices = @transform_0, window_bounds = array<i64: 1, 4, 128>}, {transform_indices = @transform_1, window_bounds = array<i64: 1, 4, 128>}, {pipeline_mode = #tpu.pipeline_mode<synchronous>, transform_indices = @transform_2, window_bounds = array<i64: 1, 128>}, {pipeline_mode = #tpu.pipeline_mode<synchronous>, transform_indices = @transform_3, window_bounds = array<i64: 1, 128>}, {pipeline_mode = #tpu.pipeline_mode<synchronous>, transform_indices = @transform_4, window_bounds = array<i64: 1, 1>}, {pipeline_mode = #tpu.pipeline_mode<synchronous>, transform_indices = @transform_5, window_bounds = array<i64: 1, 4>}, {pipeline_mode = #tpu.pipeline_mode<synchronous>, transform_indices = @transform_6, window_bounds = array<i64: 1, 1>}, {transform_indices = @transform_7, window_bounds = array<i64: 1, 4, 4>}]} {
    %c0 = arith.constant 0 : index
    %c0_0 = arith.constant 0 : index
    %c0_1 = arith.constant 0 : index
    %0 = vector.load %arg1[%c0, %c0_0, %c0_1] : memref<1x4x128xbf16, #tpu.memory_space<vmem>>, vector<1x4x128xbf16>
    %1 = vector.shape_cast %0 : vector<1x4x128xbf16> to vector<4x128xbf16>
    %2 = arith.extf %1 : vector<4x128xbf16> to vector<4x128xf32>
    %c0_2 = arith.constant 0 : index
    %c0_3 = arith.constant 0 : index
    %3 = vector.load %arg3[%c0_2, %c0_3] : memref<1x128xf32, #tpu.memory_space<vmem>>, vector<1x128xf32>
    %4 = vector.broadcast %3 : vector<1x128xf32> to vector<4x128xf32>
    %5 = arith.mulf %2, %4 : vector<4x128xf32>
    %cst = arith.constant dense<0.000000e+00> : vector<4xf32>
    %6 = vector.multi_reduction <add>, %5, %cst [1] : vector<4x128xf32> to vector<4xf32>
    %7 = vector.shape_cast %6 : vector<4xf32> to vector<4x1xf32>
    %c0_4 = arith.constant 0 : index
    %c0_5 = arith.constant 0 : index
    %c0_6 = arith.constant 0 : index
    %8 = vector.load %arg2[%c0_4, %c0_5, %c0_6] : memref<1x4x128xbf16, #tpu.memory_space<vmem>>, vector<1x4x128xbf16>
    %9 = vector.shape_cast %8 : vector<1x4x128xbf16> to vector<4x128xbf16>
    %10 = arith.extf %9 : vector<4x128xbf16> to vector<4x128xf32>
    %c0_7 = arith.constant 0 : index
    %c0_8 = arith.constant 0 : index
    %11 = vector.load %arg4[%c0_7, %c0_8] : memref<1x128xf32, #tpu.memory_space<vmem>>, vector<1x128xf32>
    %12 = vector.broadcast %11 : vector<1x128xf32> to vector<4x128xf32>
    %13 = arith.mulf %10, %12 : vector<4x128xf32>
    %cst_9 = arith.constant dense<0.000000e+00> : vector<4xf32>
    %14 = vector.multi_reduction <add>, %13, %cst_9 [1] : vector<4x128xf32> to vector<4xf32>
    %15 = vector.shape_cast %14 : vector<4xf32> to vector<4x1xf32>
    %16 = arith.addf %7, %15 : vector<4x1xf32>
    %c0_10 = arith.constant 0 : index
    %c0_11 = arith.constant 0 : index
    %17 = vector.load %arg5[%c0_10, %c0_11] : memref<1x1xf32, #tpu.memory_space<vmem>>, vector<1x1xf32>
    %18 = vector.broadcast %17 : vector<1x1xf32> to vector<4x1xf32>
    %19 = arith.addf %16, %18 : vector<4x1xf32>
    %cst_12 = arith.constant 0.000000e+00 : f32
    %20 = vector.broadcast %cst_12 : f32 to vector<4x1xf32>
    %21 = arith.maximumf %19, %20 : vector<4x1xf32>
    %c0_13 = arith.constant 0 : index
    %c0_14 = arith.constant 0 : index
    %22 = vector.load %arg6[%c0_13, %c0_14] : memref<1x4xf32, #tpu.memory_space<vmem>>, vector<1x4xf32>
    %23 = vector.broadcast %21 : vector<4x1xf32> to vector<4x4xf32>
    %24 = vector.broadcast %22 : vector<1x4xf32> to vector<4x4xf32>
    %25 = arith.mulf %23, %24 : vector<4x4xf32>
    %c0_15 = arith.constant 0 : index
    %c0_16 = arith.constant 0 : index
    %26 = vector.load %arg7[%c0_15, %c0_16] : memref<1x1xf32, #tpu.memory_space<vmem>>, vector<1x1xf32>
    %27 = vector.broadcast %26 : vector<1x1xf32> to vector<4x4xf32>
    %28 = arith.addf %25, %27 : vector<4x4xf32>
    %c0_17 = arith.constant 0 : index
    %c0_18 = arith.constant 0 : index
    %c0_19 = arith.constant 0 : index
    %29 = vector.load %arg8[%c0_17, %c0_18, %c0_19] : memref<1x4x4xf32, #tpu.memory_space<vmem>>, vector<1x4x4xf32>
    %30 = vector.shape_cast %29 : vector<1x4x4xf32> to vector<4x4xf32>
    %31 = vector.shape_cast %28 : vector<4x4xf32> to vector<1x4x4xf32>
    tpu.vector_store %arg8[%c0_17, %c0_18, %c0_19], %31 {strides = array<i32>} : memref<1x4x4xf32, #tpu.memory_space<vmem>>, vector<1x4x4xf32>,
    return
  }
  func.func @transform_0(%arg0: i32) -> (i32, i32, i32) {
    %c0_i32 = arith.constant 0 : i32
    %c0_i32_0 = arith.constant 0 : i32
    %c0_i32_1 = arith.constant 0 : i32
    return %arg0, %c0_i32, %c0_i32_0 : i32, i32, i32
  }
  func.func @transform_1(%arg0: i32) -> (i32, i32, i32) {
    %c0_i32 = arith.constant 0 : i32
    %c0_i32_0 = arith.constant 0 : i32
    %c0_i32_1 = arith.constant 0 : i32
    return %arg0, %c0_i32, %c0_i32_0 : i32, i32, i32
  }
  func.func @transform_2(%arg0: i32) -> (i32, i32) {
    %c0_i32 = arith.constant 0 : i32
    %c0_i32_0 = arith.constant 0 : i32
    %c0_i32_1 = arith.constant 0 : i32
    return %c0_i32, %c0_i32_0 : i32, i32
  }
  func.func @transform_3(%arg0: i32) -> (i32, i32) {
    %c0_i32 = arith.constant 0 : i32
    %c0_i32_0 = arith.constant 0 : i32
    %c0_i32_1 = arith.constant 0 : i32
    return %c0_i32, %c0_i32_0 : i32, i32
  }
  func.func @transform_4(%arg0: i32) -> (i32, i32) {
    %c0_i32 = arith.constant 0 : i32
    %c0_i32_0 = arith.constant 0 : i32
    %c0_i32_1 = arith.constant 0 : i32
    return %c0_i32, %c0_i32_0 : i32, i32
  }
  func.func @transform_5(%arg0: i32) -> (i32, i32) {
    %c0_i32 = arith.constant 0 : i32
    %c0_i32_0 = arith.constant 0 : i32
    %c0_i32_1 = arith.constant 0 : i32
    return %c0_i32, %c0_i32_0 : i32, i32
  }
  func.func @transform_6(%arg0: i32) -> (i32, i32) {
    %c0_i32 = arith.constant 0 : i32
    %c0_i32_0 = arith.constant 0 : i32
    %c0_i32_1 = arith.constant 0 : i32
    return %c0_i32, %c0_i32_0 : i32, i32
  }
  func.func @transform_7(%arg0: i32) -> (i32, i32, i32) {
    %c0_i32 = arith.constant 0 : i32
    %c0_i32_0 = arith.constant 0 : i32
    %c0_i32_1 = arith.constant 0 : i32
    return %arg0, %c0_i32, %c0_i32_0 : i32, i32, i32
  }
}

</mosaic_0001>

<llo_original>
// kernel: crnn_forward.6
$region0: #{crnn_forward.6}
  #allocation0 [shape = 'u32[]', space=smem, size = 0x4, offset = 0x4, fixed_abs, tag = 'smem constant byte address 0x4 - core index']
  #allocation1 [shape = 'u32[72,128]{1,0:T(1,128)}', space=vmem, size = 0x9000, scoped, tag = 'internal scratch']
  %s0 = inlined_call_operand.vmem [shape: f32[2,20,1], index: 0, kind: input, shape index: {}]
  %s1 = inlined_call_operand.vmem [shape: f32[5,128], index: 1, kind: input, shape index: {}]
  %s2 = inlined_call_operand.vmem [shape: f32[1,128], index: 2, kind: input, shape index: {}]
  %s3 = inlined_call_operand.vmem [shape: f32[1,128], index: 3, kind: input, shape index: {}]
  %s4 = inlined_call_operand.vmem [shape: bf16[2,16,128], index: 4, kind: output, shape index: {}]
  %s5 = sld [smem:[#allocation0]]
  $region49: #{crnn_forward.6} parent=0
    _
  %s7 = ssub.s32 1, %s5
  %s8 = scalar_select 0, %s7, %s5
  loop: start=0, step=1, limit=4
  $region2: #{crnn_forward.6} parent=0 // loop_pre_header
    _
  $region3: #{crnn_forward.6} parent=0 // loop_header
    %s10 = sphi 0, %s14
    %p11 = scmp.ge.s32.totalorder %s10, 4
    %s20 = sphi 0, %s22
    %s23 = sphi 0, %s20
    %s24 = sphi 0, %s23
    %s40 = sphi 0, %s24
    %s44 = sphi 0, %s44
    %s46 = sphi 0, %s44
    %s47 = sphi 0, %s46
    %s61 = sphi 0, %s47
    %s65 = sphi 0, %s65
    %s67 = sphi 0, %s65
    %s68 = sphi 0, %s67
    %s82 = sphi 0, %s68
    %s86 = sphi 0, %s86
    %s88 = sphi 0, %s86
    %s89 = sphi 0, %s88
    %s103 = sphi 0, %s89
    %s109 = sphi 0, %s111
    %s112 = sphi 0, %s109
    %s113 = sphi 0, %s112
    %s129 = sphi 0, %s113
  $region4: #{crnn_forward.6} parent=0 // loop_header_branch
    %13 = sbr.rel (%p11) target = $region8
  $region5: #{crnn_forward.6} parent=0 // loop_body
    %s15 = ssub.s32 %s10, 1
    %s16 = ssub.s32 %s10, 2
    %s17 = sadd.s32 %s10, 1
    %s18 = ssub.s32 %s10, %s17
    %p19 = scmp.eq.s32.totalorder %s18, 0
    %s21 = sadd.s32 %s20, 1
    %s22 = scalar_select %p19, %s20, %s21
    %p25 = pneg %p19
    %p26 = scmp.eq.s32.totalorder %s10, 1
    %p27 = por %p25, %p26
    %p28 = scmp.ne.s32.totalorder %s20, %s23
    %p29 = scmp.eq.s32.totalorder %s10, 0
    %p30 = por %p28, %p29
    %p31 = scmp.ne.s32.totalorder %s20, %s23
    %p32 = scmp.eq.s32.totalorder %s15, 1
    %p33 = por %p31, %p32
    %p34 = scmp.ne.s32.totalorder %s23, %s24
    %p35 = scmp.eq.s32.totalorder %s15, 0
    %p36 = por %p34, %p35
    %p37 = scmp.ne.s32.totalorder %s23, %s24
    %p38 = scmp.eq.s32.totalorder %s16, 1
    %p39 = por %p37, %p38
    %p41 = scmp.ne.s32.totalorder %s24, %s40
    %p42 = scmp.eq.s32.totalorder %s16, 0
    %p43 = por %p41, %p42
    %s45 = sadd.s32 %s44, 1
    %p48 = scmp.eq.s32.totalorder %s10, 1
    %p49 = scmp.ne.s32.totalorder %s44, %s46
    %p50 = scmp.eq.s32.totalorder %s10, 0
    %p51 = por %p49, %p50
    %p52 = scmp.ne.s32.totalorder %s44, %s46
    %p53 = scmp.eq.s32.totalorder %s15, 1
    %p54 = por %p52, %p53
    %p55 = scmp.ne.s32.totalorder %s46, %s47
    %p56 = scmp.eq.s32.totalorder %s15, 0
    %p57 = por %p55, %p56
    %p58 = scmp.ne.s32.totalorder %s46, %s47
    %p59 = scmp.eq.s32.totalorder %s16, 1
    %p60 = por %p58, %p59
    %p62 = scmp.ne.s32.totalorder %s47, %s61
    %p63 = scmp.eq.s32.totalorder %s16, 0
    %p64 = por %p62, %p63
    %s66 = sadd.s32 %s65, 1
    %p69 = scmp.eq.s32.totalorder %s10, 1
    %p70 = scmp.ne.s32.totalorder %s65, %s67
    %p71 = scmp.eq.s32.totalorder %s10, 0
    %p72 = por %p70, %p71
    %p73 = scmp.ne.s32.totalorder %s65, %s67
    %p74 = scmp.eq.s32.totalorder %s15, 1
    %p75 = por %p73, %p74
    %p76 = scmp.ne.s32.totalorder %s67, %s68
    %p77 = scmp.eq.s32.totalorder %s15, 0
    %p78 = por %p76, %p77
    %p79 = scmp.ne.s32.totalorder %s67, %s68
    %p80 = scmp.eq.s32.totalorder %s16, 1
    %p81 = por %p79, %p80
    %p83 = scmp.ne.s32.totalorder %s68, %s82
    %p84 = scmp.eq.s32.totalorder %s16, 0
    %p85 = por %p83, %p84
    %s87 = sadd.s32 %s86, 1
    %p90 = scmp.eq.s32.totalorder %s10, 1
    %p91 = scmp.ne.s32.totalorder %s86, %s88
    %p92 = scmp.eq.s32.totalorder %s10, 0
    %p93 = por %p91, %p92
    %p94 = scmp.ne.s32.totalorder %s86, %s88
    %p95 = scmp.eq.s32.totalorder %s15, 1
    %p96 = por %p94, %p95
    %p97 = scmp.ne.s32.totalorder %s88, %s89
    %p98 = scmp.eq.s32.totalorder %s15, 0
    %p99 = por %p97, %p98
    %p100 = scmp.ne.s32.totalorder %s88, %s89
    %p101 = scmp.eq.s32.totalorder %s16, 1
    %p102 = por %p100, %p101
    %p104 = scmp.ne.s32.totalorder %s89, %s103
    %p105 = scmp.eq.s32.totalorder %s16, 0
    %p106 = por %p104, %p105
    %s107 = ssub.s32 %s10, %s17
    %p108 = scmp.eq.s32.totalorder %s107, 0
    %s110 = sadd.s32 %s109, 1
    %s111 = scalar_select %p108, %s109, %s110
    %p114 = pneg %p108
    %p115 = scmp.eq.s32.totalorder %s10, 1
    %p116 = por %p114, %p115
    %p117 = scmp.ne.s32.totalorder %s109, %s112
    %p118 = scmp.eq.s32.totalorder %s10, 0
    %p119 = por %p117, %p118
    %p120 = scmp.ne.s32.totalorder %s109, %s112
    %p121 = scmp.eq.s32.totalorder %s15, 1
    %p122 = por %p120, %p121
    %p123 = scmp.ne.s32.totalorder %s112, %s113
    %p124 = scmp.eq.s32.totalorder %s15, 0
    %p125 = por %p123, %p124
    %p126 = scmp.ne.s32.totalorder %s112, %s113
    %p127 = scmp.eq.s32.totalorder %s16, 1
    %p128 = por %p126, %p127
    %p130 = scmp.ne.s32.totalorder %s113, %s129
    %p131 = scmp.eq.s32.totalorder %s16, 0
    %p132 = por %p130, %p131
    %p133 = scmp.le.s32.totalorder 1, %s10
    %p134 = scmp.lt.s32.totalorder %s10, 3
    %p135 = pnand %p133, %p134
    %p136 = pneg %p135
    // Predicated region
    $region9: #{crnn_forward.6} parent=5 // pred_check
      _
    $region10: #{crnn_forward.6} parent=5 // pred_check_branch
      %138 = sbr.rel (%p135) target = $region12
    $region11: #{crnn_forward.6} parent=5 // pred_region
      %s139 = ssub.s32 %s10, 1
      // Predicated region
      $region13: #{crnn_forward.6} parent=11 // pred_check
        %p140 = pneg %p57
      $region14: #{crnn_forward.6} parent=11 // pred_check_branch
        %142 = sbr.rel (%p140) target = $region16
      $region15: #{crnn_forward.6} parent=11 // pred_region
        _
      $region16: #{crnn_forward.6} parent=11 // pred_fallthru
        _
      // Predicated region
      $region17: #{crnn_forward.6} parent=11 // pred_check
        %p143 = pneg %p78
      $region18: #{crnn_forward.6} parent=11 // pred_check_branch
        %145 = sbr.rel (%p143) target = $region20
      $region19: #{crnn_forward.6} parent=11 // pred_region
        _
      $region20: #{crnn_forward.6} parent=11 // pred_fallthru
        _
      // Predicated region
      $region21: #{crnn_forward.6} parent=11 // pred_check
        %p146 = pneg %p99
      $region22: #{crnn_forward.6} parent=11 // pred_check_branch
        %148 = sbr.rel (%p146) target = $region24
      $region23: #{crnn_forward.6} parent=11 // pred_region
        _
      $region24: #{crnn_forward.6} parent=11 // pred_fallthru
        _
    $region12: #{crnn_forward.6} parent=5 // pred_fallthru
      _
    %p149 = scmp.lt.s32.totalorder %s10, 2
    // Predicated region
    $region25: #{crnn_forward.6} parent=5 // pred_check
      %p150 = pneg %p149
    $region26: #{crnn_forward.6} parent=5 // pred_check_branch
      %152 = sbr.rel (%p150) target = $region28
    $region27: #{crnn_forward.6} parent=5 // pred_region
      // Predicated region
      $region29: #{crnn_forward.6} parent=27 // pred_check
        %p153 = pneg %p30
      $region30: #{crnn_forward.6} parent=27 // pred_check_branch
        %155 = sbr.rel (%p153) target = $region32
      $region31: #{crnn_forward.6} parent=27 // pred_region
        %p156 = scmp.lt.s32.totalorder %s10, 1
        %s157 = scalar_select %p156, %s10, 1
        %s158 = smul.addr %s157, 3
        %s159 = smul.addr %s158, 8
        %s160 = scalar_lea.vmem %s0, %s159
      $region32: #{crnn_forward.6} parent=27 // pred_fallthru
        _
    $region28: #{crnn_forward.6} parent=5 // pred_fallthru
      _
    %p161 = scmp.le.s32.totalorder 1, %s10
    %p162 = scmp.lt.s32.totalorder %s10, 3
    %p163 = pnand %p161, %p162
    %p164 = pneg %p163
    // Predicated region
    $region33: #{crnn_forward.6} parent=5 // pred_check
      _
    $region34: #{crnn_forward.6} parent=5 // pred_check_branch
      %166 = sbr.rel (%p163) target = $region36
    $region35: #{crnn_forward.6} parent=5 // pred_region
      %s167 = ssub.s32 %s10, 1
      %p168 = scmp.lt.s32.totalorder %s15, 1
      %s169 = scalar_select %p168, %s15, 1
      %s170 = smul.addr %s169, 3
      %s171 = smul.addr %s170, 8
      %s172 = scalar_lea.vmem %s0, %s171
      %p173 = pneg %p36
      %p174 = pneg %p33
      %p175 = pneg %p57
      %p176 = pneg %p54
      %p177 = pneg %p78
      %p178 = pneg %p75
      %p179 = pneg %p99
      %p180 = pneg %p96
      %p181 = pneg %p125
      %p182 = pneg %p122
      %p183 = scmp.lt.s32.totalorder %s15, 1
      %s184 = scalar_select %p183, %s15, 1
      %s185 = smul.addr %s184, 2
      %s186 = smul.addr %s185, 4
      %s187 = scalar_lea.vmem %s4, %s186
      %p188 = scmp.lt.s32.totalorder %s15, 1
      %s189 = scalar_select %p188, %s15, 1
      %s190 = smul.addr %s189, 3
      %s191 = smul.addr %s190, 8
      %s192 = scalar_lea.vmem %s0, %s191
      %p193 = scmp.lt.s32.totalorder %s15, 1
      %s194 = scalar_select %p193, %s15, 1
      %s195 = smul.addr %s194, 2
      %s196 = smul.addr %s195, 4
      %s197 = scalar_lea.vmem %s4, %s196
      %v198 = vld [vmem:[%s192] sm:$0xff]
      %v199 = vld [vmem:[%s192 + $0x8] sm:$0xff]
      %v200 = vld [vmem:[%s1] sm:$0x1]
      %202 = vset.pattern.permute.xlu0 0
      %203 = vperm.xlu0 %202, %v198
      %v204 = vpop.permute.xlu0 %203
      %207 = vset.pattern.permute.xlu0 0
      %208 = vperm.xlu0 %207, %v199
      %v209 = vpop.permute.xlu0 %208
      %v211 = vperm.slane %v200, 0
      %v212 = vmul.f32 %v204, %v211
      %v213 = vmul.f32 %v209, %v211
      %v214 = vld [vmem:[%s192 + $0x1] sm:$0xff]
      %v215 = vld [vmem:[%s192 + $0x9] sm:$0xff]
      %v216 = vld [vmem:[%s1 + $0x1] sm:$0x1]
      %218 = vset.pattern.permute.xlu0 0
      %219 = vperm.xlu0 %218, %v214
      %v220 = vpop.permute.xlu0 %219
      %223 = vset.pattern.permute.xlu0 0
      %224 = vperm.xlu0 %223, %v215
      %v225 = vpop.permute.xlu0 %224
      %v227 = vperm.slane %v216, 0
      %v228 = vmul.f32 %v220, %v227
      %v229 = vmul.f32 %v225, %v227
      %v230 = vadd.f32 %v212, %v228
      %v231 = vadd.f32 %v213, %v229
      %v232 = vld [vmem:[%s192 + $0x2] sm:$0xff]
      %v233 = vld [vmem:[%s192 + $0xa] sm:$0xff]
      %v234 = vld [vmem:[%s1 + $0x2] sm:$0x1]
      %236 = vset.pattern.permute.xlu0 0
      %237 = vperm.xlu0 %236, %v232
      %v238 = vpop.permute.xlu0 %237
      %241 = vset.pattern.permute.xlu0 0
      %242 = vperm.xlu0 %241, %v233
      %v243 = vpop.permute.xlu0 %242
      %v245 = vperm.slane %v234, 0
      %v246 = vmul.f32 %v238, %v245
      %v247 = vmul.f32 %v243, %v245
      %v248 = vadd.f32 %v230, %v246
      %v249 = vadd.f32 %v231, %v247
      %v250 = vld [vmem:[%s192 + $0x3] sm:$0xff]
      %v251 = vld [vmem:[%s192 + $0xb] sm:$0xff]
      %v252 = vld [vmem:[%s1 + $0x3] sm:$0x1]
      %254 = vset.pattern.permute.xlu0 0
      %255 = vperm.xlu0 %254, %v250
      %v256 = vpop.permute.xlu0 %255
      %259 = vset.pattern.permute.xlu0 0
      %260 = vperm.xlu0 %259, %v251
      %v261 = vpop.permute.xlu0 %260
      %v263 = vperm.slane %v252, 0
      %v264 = vmul.f32 %v256, %v263
      %v265 = vmul.f32 %v261, %v263
      %v266 = vadd.f32 %v248, %v264
      %v267 = vadd.f32 %v249, %v265
      %v268 = vld [vmem:[%s192 + $0x4] sm:$0xff]
      %v269 = vld [vmem:[%s192 + $0xc] sm:$0xff]
      %v270 = vld [vmem:[%s1 + $0x4] sm:$0x1]
      %272 = vset.pattern.permute.xlu0 0
      %273 = vperm.xlu0 %272, %v268
      %v274 = vpop.permute.xlu0 %273
      %277 = vset.pattern.permute.xlu0 0
      %278 = vperm.xlu0 %277, %v269
      %v279 = vpop.permute.xlu0 %278
      %v281 = vperm.slane %v270, 0
      %v282 = vmul.f32 %v274, %v281
      %v283 = vmul.f32 %v279, %v281
      %v284 = vadd.f32 %v266, %v282
      %v285 = vadd.f32 %v267, %v283
      %v286 = vld [vmem:[%s2] sm:$0x1]
      %v288 = vperm.slane %v286, 0
      %v290 = vmul.f32 %v284, %v288
      %v291 = vmul.f32 %v285, %v288
      %v292 = vld [vmem:[%s3] sm:$0x1]
      %v294 = vperm.slane %v292, 0
      %v296 = vadd.f32 %v290, %v294
      %v297 = vadd.f32 %v291, %v294
      %v298 = vmul.f32 %v296, 0.5
      %v299 = vmul.f32 %v297, 0.5
      %v300 = vmul.f32 %v296, 0.70710677
      %v301 = vmul.f32 %v297, 0.70710677
      %v302 = vand.u32 2147483647, %v300
      %v303 = vand.u32 2147483647, %v301
      %v304 = vmul.f32 %v302, 0.3275911
      %v305 = vmul.f32 %v303, 0.3275911
      %v306 = vadd.f32 %v304, 1.0
      %v307 = vadd.f32 %v305, 1.0
      %v308 = vrcp.pop %v306
      %v309 = vmul.f32 %v306, %v308
      %v310 = vsub.f32 1.0, %v309
      %v311 = vmul.f32 %v308, %v310
      %v312 = vadd.f32 %v308, %v311
      %vm313 = vweird.f32 %v306
      %vm314 = vweird.f32 %v308
      %vm315 = vmor %vm313, %vm314
      %v316 = vsel %vm315, %v308, %v312
      %v317 = vand.u32 2147483647, %v306
      %vm318 = vcmp.eq.f32.partialorder %v317, 8.507059e+37
      %v319 = vand.u32 %v306, 2147483648
      %v320 = vor.u32 1.1754944e-38, %v319
      %v321 = vsel %vm318, %v320, %v316
      %v322 = vmul.f32 1.0, %v321
      %v323 = vrcp.pop %v307
      %v324 = vmul.f32 %v307, %v323
      %v325 = vsub.f32 1.0, %v324
      %v326 = vmul.f32 %v323, %v325
      %v327 = vadd.f32 %v323, %v326
      %vm328 = vweird.f32 %v307
      %vm329 = vweird.f32 %v323
      %vm330 = vmor %vm328, %vm329
      %v331 = vsel %vm330, %v323, %v327
      %v332 = vand.u32 2147483647, %v307
      %vm333 = vcmp.eq.f32.partialorder %v332, 8.507059e+37
      %v334 = vand.u32 %v307, 2147483648
      %v335 = vor.u32 1.1754944e-38, %v334
      %v336 = vsel %vm333, %v335, %v331
      %v337 = vmul.f32 1.0, %v336
      %v338 = vmul.f32 %v322, 1.0614054
      %v339 = vmul.f32 %v337, 1.0614054
      %v340 = vadd.f32 %v338, -1.4531521
      %v341 = vadd.f32 %v339, -1.4531521
      %v342 = vmul.f32 %v322, %v340
      %v343 = vmul.f32 %v337, %v341
      %v344 = vadd.f32 %v342, 1.4214138
      %v345 = vadd.f32 %v343, 1.4214138
      %v346 = vmul.f32 %v322, %v344
      %v347 = vmul.f32 %v337, %v345
      %v348 = vadd.f32 %v346, -0.28449672
      %v349 = vadd.f32 %v347, -0.28449672
      %v350 = vmul.f32 %v322, %v348
      %v351 = vmul.f32 %v337, %v349
      %v352 = vadd.f32 %v350, 0.2548296
      %v353 = vadd.f32 %v351, 0.2548296
      %v354 = vmul.f32 %v322, %v352
      %v355 = vmul.f32 %v337, %v353
      %v356 = vsub.f32 0.0, %v302
      %v357 = vsub.f32 0.0, %v303
      %v358 = vmul.f32 %v356, %v302
      %v359 = vmul.f32 %v357, %v303
      %v360 = vmul.f32 %v358, 1.442695
      %v361 = vpow.pop %v360
      %v362 = vmul.f32 %v359, 1.442695
      %v363 = vpow.pop %v362
      %v364 = vmul.f32 %v354, %v361
      %v365 = vmul.f32 %v355, %v363
      %v366 = vsub.f32 1.0, %v364
      %v367 = vsub.f32 1.0, %v365
      %vm368 = vcmp.lt.f32.partialorder %v300, 0.0
      %vm369 = vcmp.lt.f32.partialorder %v301, 0.0
      %v370 = vsub.f32 0.0, %v366
      %v371 = vsub.f32 0.0, %v367
      %v372 = vsel %vm368, %v370, %v366
      %v373 = vsel %vm369, %v371, %v367
      %v374 = vadd.f32 %v372, 1.0
      %v375 = vadd.f32 %v373, 1.0
      %v376 = vmul.f32 %v298, %v374
      %v377 = vmul.f32 %v299, %v375
      %v378 = vpack.c.bf16 %v376, %v376
      %v379 = vpack.c.bf16 %v377, %v377
      %380 = vst [vmem:[%s197] sm:$0xf] %v378
      %381 = vst [vmem:[%s197 + $0x4] sm:$0xf] %v379
      %p382 = scmp.lt.s32.totalorder %s15, 1
      %s383 = scalar_select %p382, %s15, 1
      %s384 = smul.addr %s383, 2
      %s385 = smul.addr %s384, 4
      %s386 = scalar_lea.vmem %s4, %s385
      // Predicated region
      $region37: #{crnn_forward.6} parent=35 // pred_check
        %p387 = pneg %p122
      $region38: #{crnn_forward.6} parent=35 // pred_check_branch
        %389 = sbr.rel (%p387) target = $region40
      $region39: #{crnn_forward.6} parent=35 // pred_region
        _
      $region40: #{crnn_forward.6} parent=35 // pred_fallthru
        _
    $region36: #{crnn_forward.6} parent=5 // pred_fallthru
      _
    %p390 = scmp.le.s32.totalorder 2, %s10
    // Predicated region
    $region41: #{crnn_forward.6} parent=5 // pred_check
      %p391 = pneg %p390
    $region42: #{crnn_forward.6} parent=5 // pred_check_branch
      %393 = sbr.rel (%p391) target = $region44
    $region43: #{crnn_forward.6} parent=5 // pred_region
      %s394 = ssub.s32 %s10, 2
      // Predicated region
      $region45: #{crnn_forward.6} parent=43 // pred_check
        %p395 = pneg %p128
      $region46: #{crnn_forward.6} parent=43 // pred_check_branch
        %397 = sbr.rel (%p395) target = $region48
      $region47: #{crnn_forward.6} parent=43 // pred_region
        %p398 = scmp.lt.s32.totalorder %s16, 1
        %s399 = scalar_select %p398, %s16, 1
        %s400 = smul.addr %s399, 2
        %s401 = smul.addr %s400, 4
        %s402 = scalar_lea.vmem %s4, %s401
      $region48: #{crnn_forward.6} parent=43 // pred_fallthru
        _
    $region44: #{crnn_forward.6} parent=5 // pred_fallthru
      _
  $region6: #{crnn_forward.6} parent=0 // loop_footer
    %s14 = sadd.s32 1, %s10
  $region7: #{crnn_forward.6} parent=0 // loop_footer_branch
    %9 = sbr.rel target = $region3
  $region8: #{crnn_forward.6} parent=0 // loop_exit
    _

// kernel: crnn_forward.7
$region0: #{crnn_forward.7}
  #allocation0 [shape = 'u32[]', space=smem, size = 0x4, offset = 0x4, fixed_abs, tag = 'smem constant byte address 0x4 - core index']
  #allocation1 [shape = 'u32[72,128]{1,0:T(1,128)}', space=vmem, size = 0x9000, scoped, tag = 'internal scratch']
  %s0 = inlined_call_operand.vmem [shape: bf16[2,18,128], index: 0, kind: input, shape index: {}]
  %s1 = inlined_call_operand.vmem [shape: bf16[3,128,128], index: 1, kind: input, shape index: {}]
  %s2 = inlined_call_operand.vmem [shape: f32[1,128], index: 2, kind: input, shape index: {}]
  %s3 = inlined_call_operand.vmem [shape: f32[1,128], index: 3, kind: input, shape index: {}]
  %s4 = inlined_call_operand.vmem [shape: bf16[2,8,128], index: 4, kind: output, shape index: {}]
  %s5 = sld [smem:[#allocation0]]
  $region49: #{crnn_forward.7} parent=0
    _
  %s7 = ssub.s32 1, %s5
  %s8 = scalar_select 0, %s7, %s5
  loop: start=0, step=1, limit=4
  $region2: #{crnn_forward.7} parent=0 // loop_pre_header
    _
  $region3: #{crnn_forward.7} parent=0 // loop_header
    %s10 = sphi 0, %s14
    %p11 = scmp.ge.s32.totalorder %s10, 4
    %s20 = sphi 0, %s22
    %s23 = sphi 0, %s20
    %s24 = sphi 0, %s23
    %s40 = sphi 0, %s24
    %s44 = sphi 0, %s44
    %s46 = sphi 0, %s44
    %s47 = sphi 0, %s46
    %s61 = sphi 0, %s47
    %s65 = sphi 0, %s65
    %s67 = sphi 0, %s65
    %s68 = sphi 0, %s67
    %s82 = sphi 0, %s68
    %s86 = sphi 0, %s86
    %s88 = sphi 0, %s86
    %s89 = sphi 0, %s88
    %s103 = sphi 0, %s89
    %s109 = sphi 0, %s111
    %s112 = sphi 0, %s109
    %s113 = sphi 0, %s112
    %s129 = sphi 0, %s113
  $region4: #{crnn_forward.7} parent=0 // loop_header_branch
    %13 = sbr.rel (%p11) target = $region8
  $region5: #{crnn_forward.7} parent=0 // loop_body
    %s15 = ssub.s32 %s10, 1
    %s16 = ssub.s32 %s10, 2
    %s17 = sadd.s32 %s10, 1
    %s18 = ssub.s32 %s10, %s17
    %p19 = scmp.eq.s32.totalorder %s18, 0
    %s21 = sadd.s32 %s20, 1
    %s22 = scalar_select %p19, %s20, %s21
    %p25 = pneg %p19
    %p26 = scmp.eq.s32.totalorder %s10, 1
    %p27 = por %p25, %p26
    %p28 = scmp.ne.s32.totalorder %s20, %s23
    %p29 = scmp.eq.s32.totalorder %s10, 0
    %p30 = por %p28, %p29
    %p31 = scmp.ne.s32.totalorder %s20, %s23
    %p32 = scmp.eq.s32.totalorder %s15, 1
    %p33 = por %p31, %p32
    %p34 = scmp.ne.s32.totalorder %s23, %s24
    %p35 = scmp.eq.s32.totalorder %s15, 0
    %p36 = por %p34, %p35
    %p37 = scmp.ne.s32.totalorder %s23, %s24
    %p38 = scmp.eq.s32.totalorder %s16, 1
    %p39 = por %p37, %p38
    %p41 = scmp.ne.s32.totalorder %s24, %s40
    %p42 = scmp.eq.s32.totalorder %s16, 0
    %p43 = por %p41, %p42
    %s45 = sadd.s32 %s44, 1
    %p48 = scmp.eq.s32.totalorder %s10, 1
    %p49 = scmp.ne.s32.totalorder %s44, %s46
    %p50 = scmp.eq.s32.totalorder %s10, 0
    %p51 = por %p49, %p50
    %p52 = scmp.ne.s32.totalorder %s44, %s46
    %p53 = scmp.eq.s32.totalorder %s15, 1
    %p54 = por %p52, %p53
    %p55 = scmp.ne.s32.totalorder %s46, %s47
    %p56 = scmp.eq.s32.totalorder %s15, 0
    %p57 = por %p55, %p56
    %p58 = scmp.ne.s32.totalorder %s46, %s47
    %p59 = scmp.eq.s32.totalorder %s16, 1
    %p60 = por %p58, %p59
    %p62 = scmp.ne.s32.totalorder %s47, %s61
    %p63 = scmp.eq.s32.totalorder %s16, 0
    %p64 = por %p62, %p63
    %s66 = sadd.s32 %s65, 1
    %p69 = scmp.eq.s32.totalorder %s10, 1
    %p70 = scmp.ne.s32.totalorder %s65, %s67
    %p71 = scmp.eq.s32.totalorder %s10, 0
    %p72 = por %p70, %p71
    %p73 = scmp.ne.s32.totalorder %s65, %s67
    %p74 = scmp.eq.s32.totalorder %s15, 1
    %p75 = por %p73, %p74
    %p76 = scmp.ne.s32.totalorder %s67, %s68
    %p77 = scmp.eq.s32.totalorder %s15, 0
    %p78 = por %p76, %p77
    %p79 = scmp.ne.s32.totalorder %s67, %s68
    %p80 = scmp.eq.s32.totalorder %s16, 1
    %p81 = por %p79, %p80
    %p83 = scmp.ne.s32.totalorder %s68, %s82
    %p84 = scmp.eq.s32.totalorder %s16, 0
    %p85 = por %p83, %p84
    %s87 = sadd.s32 %s86, 1
    %p90 = scmp.eq.s32.totalorder %s10, 1
    %p91 = scmp.ne.s32.totalorder %s86, %s88
    %p92 = scmp.eq.s32.totalorder %s10, 0
    %p93 = por %p91, %p92
    %p94 = scmp.ne.s32.totalorder %s86, %s88
    %p95 = scmp.eq.s32.totalorder %s15, 1
    %p96 = por %p94, %p95
    %p97 = scmp.ne.s32.totalorder %s88, %s89
    %p98 = scmp.eq.s32.totalorder %s15, 0
    %p99 = por %p97, %p98
    %p100 = scmp.ne.s32.totalorder %s88, %s89
    %p101 = scmp.eq.s32.totalorder %s16, 1
    %p102 = por %p100, %p101
    %p104 = scmp.ne.s32.totalorder %s89, %s103
    %p105 = scmp.eq.s32.totalorder %s16, 0
    %p106 = por %p104, %p105
    %s107 = ssub.s32 %s10, %s17
    %p108 = scmp.eq.s32.totalorder %s107, 0
    %s110 = sadd.s32 %s109, 1
    %s111 = scalar_select %p108, %s109, %s110
    %p114 = pneg %p108
    %p115 = scmp.eq.s32.totalorder %s10, 1
    %p116 = por %p114, %p115
    %p117 = scmp.ne.s32.totalorder %s109, %s112
    %p118 = scmp.eq.s32.totalorder %s10, 0
    %p119 = por %p117, %p118
    %p120 = scmp.ne.s32.totalorder %s109, %s112
    %p121 = scmp.eq.s32.totalorder %s15, 1
    %p122 = por %p120, %p121
    %p123 = scmp.ne.s32.totalorder %s112, %s113
    %p124 = scmp.eq.s32.totalorder %s15, 0
    %p125 = por %p123, %p124
    %p126 = scmp.ne.s32.totalorder %s112, %s113
    %p127 = scmp.eq.s32.totalorder %s16, 1
    %p128 = por %p126, %p127
    %p130 = scmp.ne.s32.totalorder %s113, %s129
    %p131 = scmp.eq.s32.totalorder %s16, 0
    %p132 = por %p130, %p131
    %p133 = scmp.le.s32.totalorder 1, %s10
    %p134 = scmp.lt.s32.totalorder %s10, 3
    %p135 = pnand %p133, %p134
    %p136 = pneg %p135
    // Predicated region
    $region9: #{crnn_forward.7} parent=5 // pred_check
      _
    $region10: #{crnn_forward.7} parent=5 // pred_check_branch
      %138 = sbr.rel (%p135) target = $region12
    $region11: #{crnn_forward.7} parent=5 // pred_region
      %s139 = ssub.s32 %s10, 1
      // Predicated region
      $region13: #{crnn_forward.7} parent=11 // pred_check
        %p140 = pneg %p57
      $region14: #{crnn_forward.7} parent=11 // pred_check_branch
        %142 = sbr.rel (%p140) target = $region16
      $region15: #{crnn_forward.7} parent=11 // pred_region
        _
      $region16: #{crnn_forward.7} parent=11 // pred_fallthru
        _
      // Predicated region
      $region17: #{crnn_forward.7} parent=11 // pred_check
        %p143 = pneg %p78
      $region18: #{crnn_forward.7} parent=11 // pred_check_branch
        %145 = sbr.rel (%p143) target = $region20
      $region19: #{crnn_forward.7} parent=11 // pred_region
        _
      $region20: #{crnn_forward.7} parent=11 // pred_fallthru
        _
      // Predicated region
      $region21: #{crnn_forward.7} parent=11 // pred_check
        %p146 = pneg %p99
      $region22: #{crnn_forward.7} parent=11 // pred_check_branch
        %148 = sbr.rel (%p146) target = $region24
      $region23: #{crnn_forward.7} parent=11 // pred_region
        _
      $region24: #{crnn_forward.7} parent=11 // pred_fallthru
        _
    $region12: #{crnn_forward.7} parent=5 // pred_fallthru
      _
    %p149 = scmp.lt.s32.totalorder %s10, 2
    // Predicated region
    $region25: #{crnn_forward.7} parent=5 // pred_check
      %p150 = pneg %p149
    $region26: #{crnn_forward.7} parent=5 // pred_check_branch
      %152 = sbr.rel (%p150) target = $region28
    $region27: #{crnn_forward.7} parent=5 // pred_region
      // Predicated region
      $region29: #{crnn_forward.7} parent=27 // pred_check
        %p153 = pneg %p30
      $region30: #{crnn_forward.7} parent=27 // pred_check_branch
        %155 = sbr.rel (%p153) target = $region32
      $region31: #{crnn_forward.7} parent=27 // pred_region
        %p156 = scmp.lt.s32.totalorder %s10, 1
        %s157 = scalar_select %p156, %s10, 1
        %s158 = smul.addr %s157, 3
        %s159 = smul.addr %s158, 4
        %s160 = scalar_lea.vmem %s0, %s159
      $region32: #{crnn_forward.7} parent=27 // pred_fallthru
        _
    $region28: #{crnn_forward.7} parent=5 // pred_fallthru
      _
    %p161 = scmp.le.s32.totalorder 1, %s10
    %p162 = scmp.lt.s32.totalorder %s10, 3
    %p163 = pnand %p161, %p162
    %p164 = pneg %p163
    // Predicated region
    $region33: #{crnn_forward.7} parent=5 // pred_check
      _
    $region34: #{crnn_forward.7} parent=5 // pred_check_branch
      %166 = sbr.rel (%p163) target = $region36
    $region35: #{crnn_forward.7} parent=5 // pred_region
      %s167 = ssub.s32 %s10, 1
      %p168 = scmp.lt.s32.totalorder %s15, 1
      %s169 = scalar_select %p168, %s15, 1
      %s170 = smul.addr %s169, 3
      %s171 = smul.addr %s170, 4
      %s172 = scalar_lea.vmem %s0, %s171
      %p173 = pneg %p36
      %p174 = pneg %p33
      %p175 = pneg %p57
      %p176 = pneg %p54
      %p177 = pneg %p78
      %p178 = pneg %p75
      %p179 = pneg %p99
      %p180 = pneg %p96
      %p181 = pneg %p125
      %p182 = pneg %p122
      %p183 = scmp.lt.s32.totalorder %s15, 1
      %s184 = scalar_select %p183, %s15, 1
      %s185 = smul.addr %s184, 4
      %s186 = scalar_lea.vmem %s4, %s185
      %p187 = scmp.lt.s32.totalorder %s15, 1
      %s188 = scalar_select %p187, %s15, 1
      %s189 = smul.addr %s188, 3
      %s190 = smul.addr %s189, 4
      %s191 = scalar_lea.vmem %s0, %s190
      %p192 = scmp.lt.s32.totalorder %s15, 1
      %s193 = scalar_select %p192, %s15, 1
      %s194 = smul.addr %s193, 4
      %s195 = scalar_lea.vmem %s4, %s194
      %v196 = vld [vmem:[%s191] sm:$0xf]
      %v197 = vld [vmem:[%s191 + $0x4] sm:$0xf]
      %v198 = vld [vmem:[%s1] sm:$0xf]
      %v199 = vld [vmem:[%s1 + $0x4] sm:$0xf]
      %v200 = vld [vmem:[%s1 + $0x8] sm:$0xf]
      %v201 = vld [vmem:[%s1 + $0xc] sm:$0xf]
      %v202 = vld [vmem:[%s1 + $0x10] sm:$0xf]
      %v203 = vld [vmem:[%s1 + $0x14] sm:$0xf]
      %v204 = vld [vmem:[%s1 + $0x18] sm:$0xf]
      %v205 = vld [vmem:[%s1 + $0x1c] sm:$0xf]
      %v206 = vld [vmem:[%s1 + $0x20] sm:$0xf]
      %v207 = vld [vmem:[%s1 + $0x24] sm:$0xf]
      %v208 = vld [vmem:[%s1 + $0x28] sm:$0xf]
      %v209 = vld [vmem:[%s1 + $0x2c] sm:$0xf]
      %v210 = vld [vmem:[%s1 + $0x30] sm:$0xf]
      %v211 = vld [vmem:[%s1 + $0x34] sm:$0xf]
      %v212 = vld [vmem:[%s1 + $0x38] sm:$0xf]
      %v213 = vld [vmem:[%s1 + $0x3c] sm:$0xf]
      %v214 = vld [vmem:[%s191 + $0x8] sm:$0x1]
      %s215 = scalar_lea.vmem %s1, 64
      %v216 = vld [vmem:[%s215] sm:$0xf]
      %v217 = vld [vmem:[%s215 + $0x4] sm:$0xf]
      %v218 = vld [vmem:[%s215 + $0x8] sm:$0xf]
      %v219 = vld [vmem:[%s215 + $0xc] sm:$0xf]
      %v220 = vld [vmem:[%s215 + $0x10] sm:$0xf]
      %v221 = vld [vmem:[%s215 + $0x14] sm:$0xf]
      %v222 = vld [vmem:[%s215 + $0x18] sm:$0xf]
      %v223 = vld [vmem:[%s215 + $0x1c] sm:$0xf]
      %v224 = vld [vmem:[%s215 + $0x20] sm:$0xf]
      %v225 = vld [vmem:[%s215 + $0x24] sm:$0xf]
      %v226 = vld [vmem:[%s215 + $0x28] sm:$0xf]
      %v227 = vld [vmem:[%s215 + $0x2c] sm:$0xf]
      %v228 = vld [vmem:[%s215 + $0x30] sm:$0xf]
      %v229 = vld [vmem:[%s215 + $0x34] sm:$0xf]
      %v230 = vld [vmem:[%s215 + $0x38] sm:$0xf]
      %v231 = vld [vmem:[%s215 + $0x3c] sm:$0xf]
      %v235 = vunpack.c.l.b16 %v196
      %v236 = vunpack.c.l.b16 %v197
      %v237 = vunpack.c.l.b16 %v214
      %v238 = vpack.c.b16 %v236, %v235
      %v239 = vpack.c.b16 %v237, %v237
      %vm240 = vsmask.f32 7424
      %v242 = vshrl.u32 %v238, 16
      %v244 = vshll.u32 %v238, 16
      %v246 = vrot.slane %v244, 1
      %v247 = vor.u32 %v242, %v246
      %v249 = vshll.u32 %v239, 16
      %v251 = vrot.slane %v249, 1
      %v252 = vsel %vm240, %v247, %v251
      %v270 = vunpack.c.l.b16 %v216
      %v271 = vunpack.c.l.b16 %v217
      %v272 = vunpack.c.l.b16 %v218
      %v273 = vunpack.c.l.b16 %v219
      %v274 = vunpack.c.l.b16 %v220
      %v275 = vunpack.c.l.b16 %v221
      %v276 = vunpack.c.l.b16 %v222
      %v277 = vunpack.c.l.b16 %v223
      %v278 = vunpack.c.l.b16 %v224
      %v279 = vunpack.c.l.b16 %v225
      %v280 = vunpack.c.l.b16 %v226
      %v281 = vunpack.c.l.b16 %v227
      %v282 = vunpack.c.l.b16 %v228
      %v283 = vunpack.c.l.b16 %v229
      %v284 = vunpack.c.l.b16 %v230
      %v285 = vunpack.c.l.b16 %v231
      %v286 = vpack.c.b16 %v271, %v270
      %v287 = vpack.c.b16 %v273, %v272
      %v288 = vpack.c.b16 %v275, %v274
      %v289 = vpack.c.b16 %v277, %v276
      %v290 = vpack.c.b16 %v279, %v278
      %v291 = vpack.c.b16 %v281, %v280
      %v292 = vpack.c.b16 %v283, %v282
      %v293 = vpack.c.b16 %v285, %v284
      %302 = vmatpush.bf16.msra.mxu0 %v293
      %303 = vmatpush.bf16.msra.mxu0 %v292
      %304 = vmatpush.bf16.msra.mxu0 %v291
      %305 = vmatpush.bf16.msra.mxu0 %v290
      %306 = vmatpush.bf16.msra.mxu0 %v289
      %307 = vmatpush.bf16.msra.mxu0 %v288
      %308 = vmatpush.bf16.msra.mxu0 %v287
      %309 = vmatpush.bf16.msra.mxu0 %v286
      %310 = vmatmul.bf16.gmra.mxu0 %v252
      %v311 = vpop.f32.mrf.mxu0
      %v312 = vadd.f32 0.0, %v311
      %v313 = vpop.f32.mrf.mxu0
      %v314 = vadd.f32 0.0, %v313
      %315 = vdwg.mxu0
      %v333 = vunpack.c.l.b16 %v198
      %v334 = vunpack.c.l.b16 %v199
      %v335 = vunpack.c.l.b16 %v200
      %v336 = vunpack.c.l.b16 %v201
      %v337 = vunpack.c.l.b16 %v202
      %v338 = vunpack.c.l.b16 %v203
      %v339 = vunpack.c.l.b16 %v204
      %v340 = vunpack.c.l.b16 %v205
      %v341 = vunpack.c.l.b16 %v206
      %v342 = vunpack.c.l.b16 %v207
      %v343 = vunpack.c.l.b16 %v208
      %v344 = vunpack.c.l.b16 %v209
      %v345 = vunpack.c.l.b16 %v210
      %v346 = vunpack.c.l.b16 %v211
      %v347 = vunpack.c.l.b16 %v212
      %v348 = vunpack.c.l.b16 %v213
      %v349 = vpack.c.b16 %v334, %v333
      %v350 = vpack.c.b16 %v336, %v335
      %v351 = vpack.c.b16 %v338, %v337
      %v352 = vpack.c.b16 %v340, %v339
      %v353 = vpack.c.b16 %v342, %v341
      %v354 = vpack.c.b16 %v344, %v343
      %v355 = vpack.c.b16 %v346, %v345
      %v356 = vpack.c.b16 %v348, %v347
      %365 = vmatpush.bf16.msra.mxu0 %v356
      %366 = vmatpush.bf16.msra.mxu0 %v355
      %367 = vmatpush.bf16.msra.mxu0 %v354
      %368 = vmatpush.bf16.msra.mxu0 %v353
      %369 = vmatpush.bf16.msra.mxu0 %v352
      %370 = vmatpush.bf16.msra.mxu0 %v351
      %371 = vmatpush.bf16.msra.mxu0 %v350
      %372 = vmatpush.bf16.msra.mxu0 %v349
      %373 = vmatmul.bf16.gmra.mxu0 %v238
      %v374 = vpop.f32.mrf.mxu0
      %v375 = vadd.f32 %v312, %v374
      %v376 = vpop.f32.mrf.mxu0
      %v377 = vadd.f32 %v314, %v376
      %378 = vdwg.mxu0
      %v379 = vld [vmem:[%s191] sm:$0xe]
      %s380 = scalar_lea.vmem %s1, 128
      %v381 = vld [vmem:[%s380] sm:$0xf]
      %v382 = vld [vmem:[%s380 + $0x4] sm:$0xf]
      %v383 = vld [vmem:[%s380 + $0x8] sm:$0xf]
      %v384 = vld [vmem:[%s380 + $0xc] sm:$0xf]
      %v385 = vld [vmem:[%s380 + $0x10] sm:$0xf]
      %v386 = vld [vmem:[%s380 + $0x14] sm:$0xf]
      %v387 = vld [vmem:[%s380 + $0x18] sm:$0xf]
      %v388 = vld [vmem:[%s380 + $0x1c] sm:$0xf]
      %v389 = vld [vmem:[%s380 + $0x20] sm:$0xf]
      %v390 = vld [vmem:[%s380 + $0x24] sm:$0xf]
      %v391 = vld [vmem:[%s380 + $0x28] sm:$0xf]
      %v392 = vld [vmem:[%s380 + $0x2c] sm:$0xf]
      %v393 = vld [vmem:[%s380 + $0x30] sm:$0xf]
      %v394 = vld [vmem:[%s380 + $0x34] sm:$0xf]
      %v395 = vld [vmem:[%s380 + $0x38] sm:$0xf]
      %v396 = vld [vmem:[%s380 + $0x3c] sm:$0xf]
      %v398 = vunpack.c.l.b16 %v379
      %v399 = vpack.c.b16 %v236, %v398
      %vm400 = vcmask 1046528
      %v401 = vrot.slane %v399, 1
      %v402 = vrot.slane %v239, 1
      %v403 = vsel %vm400, %v401, %v402
      %v421 = vunpack.c.l.b16 %v381
      %v422 = vunpack.c.l.b16 %v382
      %v423 = vunpack.c.l.b16 %v383
      %v424 = vunpack.c.l.b16 %v384
      %v425 = vunpack.c.l.b16 %v385
      %v426 = vunpack.c.l.b16 %v386
      %v427 = vunpack.c.l.b16 %v387
      %v428 = vunpack.c.l.b16 %v388
      %v429 = vunpack.c.l.b16 %v389
      %v430 = vunpack.c.l.b16 %v390
      %v431 = vunpack.c.l.b16 %v391
      %v432 = vunpack.c.l.b16 %v392
      %v433 = vunpack.c.l.b16 %v393
      %v434 = vunpack.c.l.b16 %v394
      %v435 = vunpack.c.l.b16 %v395
      %v436 = vunpack.c.l.b16 %v396
      %v437 = vpack.c.b16 %v422, %v421
      %v438 = vpack.c.b16 %v424, %v423
      %v439 = vpack.c.b16 %v426, %v425
      %v440 = vpack.c.b16 %v428, %v427
      %v441 = vpack.c.b16 %v430, %v429
      %v442 = vpack.c.b16 %v432, %v431
      %v443 = vpack.c.b16 %v434, %v433
      %v444 = vpack.c.b16 %v436, %v435
      %453 = vmatpush.bf16.msra.mxu0 %v444
      %454 = vmatpush.bf16.msra.mxu0 %v443
      %455 = vmatpush.bf16.msra.mxu0 %v442
      %456 = vmatpush.bf16.msra.mxu0 %v441
      %457 = vmatpush.bf16.msra.mxu0 %v440
      %458 = vmatpush.bf16.msra.mxu0 %v439
      %459 = vmatpush.bf16.msra.mxu0 %v438
      %460 = vmatpush.bf16.msra.mxu0 %v437
      %461 = vmatmul.bf16.gmra.mxu0 %v403
      %v462 = vpop.f32.mrf.mxu0
      %v463 = vadd.f32 0.0, %v462
      %v464 = vpop.f32.mrf.mxu0
      %v465 = vadd.f32 0.0, %v464
      %466 = vdwg.mxu0
      %v467 = vadd.f32 %v375, %v463
      %v468 = vadd.f32 %v377, %v465
      %v469 = vld [vmem:[%s2] sm:$0x1]
      %v471 = vperm.slane %v469, 0
      %v473 = vmul.f32 %v467, %v471
      %v474 = vmul.f32 %v468, %v471
      %v475 = vld [vmem:[%s3] sm:$0x1]
      %v477 = vperm.slane %v475, 0
      %v479 = vadd.f32 %v473, %v477
      %v480 = vadd.f32 %v474, %v477
      %v481 = vmul.f32 %v479, 0.5
      %v482 = vmul.f32 %v480, 0.5
      %v483 = vmul.f32 %v479, 0.70710677
      %v484 = vmul.f32 %v480, 0.70710677
      %v485 = vand.u32 2147483647, %v483
      %v486 = vand.u32 2147483647, %v484
      %v487 = vmul.f32 %v485, 0.3275911
      %v488 = vmul.f32 %v486, 0.3275911
      %v489 = vadd.f32 %v487, 1.0
      %v490 = vadd.f32 %v488, 1.0
      %v491 = vrcp.pop %v489
      %v492 = vmul.f32 %v489, %v491
      %v493 = vsub.f32 1.0, %v492
      %v494 = vmul.f32 %v491, %v493
      %v495 = vadd.f32 %v491, %v494
      %vm496 = vweird.f32 %v489
      %vm497 = vweird.f32 %v491
      %vm498 = vmor %vm496, %vm497
      %v499 = vsel %vm498, %v491, %v495
      %v500 = vand.u32 2147483647, %v489
      %vm501 = vcmp.eq.f32.partialorder %v500, 8.507059e+37
      %v502 = vand.u32 %v489, 2147483648
      %v503 = vor.u32 1.1754944e-38, %v502
      %v504 = vsel %vm501, %v503, %v499
      %v505 = vmul.f32 1.0, %v504
      %v506 = vrcp.pop %v490
      %v507 = vmul.f32 %v490, %v506
      %v508 = vsub.f32 1.0, %v507
      %v509 = vmul.f32 %v506, %v508
      %v510 = vadd.f32 %v506, %v509
      %vm511 = vweird.f32 %v490
      %vm512 = vweird.f32 %v506
      %vm513 = vmor %vm511, %vm512
      %v514 = vsel %vm513, %v506, %v510
      %v515 = vand.u32 2147483647, %v490
      %vm516 = vcmp.eq.f32.partialorder %v515, 8.507059e+37
      %v517 = vand.u32 %v490, 2147483648
      %v518 = vor.u32 1.1754944e-38, %v517
      %v519 = vsel %vm516, %v518, %v514
      %v520 = vmul.f32 1.0, %v519
      %v521 = vmul.f32 %v505, 1.0614054
      %v522 = vmul.f32 %v520, 1.0614054
      %v523 = vadd.f32 %v521, -1.4531521
      %v524 = vadd.f32 %v522, -1.4531521
      %v525 = vmul.f32 %v505, %v523
      %v526 = vmul.f32 %v520, %v524
      %v527 = vadd.f32 %v525, 1.4214138
      %v528 = vadd.f32 %v526, 1.4214138
      %v529 = vmul.f32 %v505, %v527
      %v530 = vmul.f32 %v520, %v528
      %v531 = vadd.f32 %v529, -0.28449672
      %v532 = vadd.f32 %v530, -0.28449672
      %v533 = vmul.f32 %v505, %v531
      %v534 = vmul.f32 %v520, %v532
      %v535 = vadd.f32 %v533, 0.2548296
      %v536 = vadd.f32 %v534, 0.2548296
      %v537 = vmul.f32 %v505, %v535
      %v538 = vmul.f32 %v520, %v536
      %v539 = vsub.f32 0.0, %v485
      %v540 = vsub.f32 0.0, %v486
      %v541 = vmul.f32 %v539, %v485
      %v542 = vmul.f32 %v540, %v486
      %v543 = vmul.f32 %v541, 1.442695
      %v544 = vpow.pop %v543
      %v545 = vmul.f32 %v542, 1.442695
      %v546 = vpow.pop %v545
      %v547 = vmul.f32 %v537, %v544
      %v548 = vmul.f32 %v538, %v546
      %v549 = vsub.f32 1.0, %v547
      %v550 = vsub.f32 1.0, %v548
      %vm551 = vcmp.lt.f32.partialorder %v483, 0.0
      %vm552 = vcmp.lt.f32.partialorder %v484, 0.0
      %v553 = vsub.f32 0.0, %v549
      %v554 = vsub.f32 0.0, %v550
      %v555 = vsel %vm551, %v553, %v549
      %v556 = vsel %vm552, %v554, %v550
      %v557 = vadd.f32 %v555, 1.0
      %v558 = vadd.f32 %v556, 1.0
      %v559 = vmul.f32 %v481, %v557
      %v560 = vmul.f32 %v482, %v558
      %v563 = vrot.slane %v559, 2
      %v564 = vrot.slane %v559, 4
      %v565 = vrot.slane %v559, 6
      %v566 = vrot.slane %v560, 2
      %v567 = vrot.slane %v560, 4
      %v568 = vrot.slane %v560, 6
      %vm575 = vcmask 1041408
      %v576 = vsel %vm575, %v559, -inf
      %v577 = vrot.slane %v576, 4
      %v578 = vmax.f32 %v576, %v577
      %v579 = vrot.slane %v578, 2
      %v580 = vmax.f32 %v578, %v579
      %v581 = vrot.slane %v580, 1
      %v582 = vmax.f32 %v580, %v581
      %v583 = vsel %vm575, %v563, -inf
      %v584 = vrot.slane %v583, 4
      %v585 = vmax.f32 %v583, %v584
      %v586 = vrot.slane %v585, 2
      %v587 = vmax.f32 %v585, %v586
      %v588 = vrot.slane %v587, 1
      %v589 = vmax.f32 %v587, %v588
      %v590 = vsel %vm575, %v564, -inf
      %v591 = vrot.slane %v590, 4
      %v592 = vmax.f32 %v590, %v591
      %v593 = vrot.slane %v592, 2
      %v594 = vmax.f32 %v592, %v593
      %v595 = vrot.slane %v594, 1
      %v596 = vmax.f32 %v594, %v595
      %v597 = vsel %vm575, %v565, -inf
      %v598 = vrot.slane %v597, 4
      %v599 = vmax.f32 %v597, %v598
      %v600 = vrot.slane %v599, 2
      %v601 = vmax.f32 %v599, %v600
      %v602 = vrot.slane %v601, 1
      %v603 = vmax.f32 %v601, %v602
      %v604 = vsel %vm575, %v560, -inf
      %v605 = vrot.slane %v604, 4
      %v606 = vmax.f32 %v604, %v605
      %v607 = vrot.slane %v606, 2
      %v608 = vmax.f32 %v606, %v607
      %v609 = vrot.slane %v608, 1
      %v610 = vmax.f32 %v608, %v609
      %v611 = vsel %vm575, %v566, -inf
      %v612 = vrot.slane %v611, 4
      %v613 = vmax.f32 %v611, %v612
      %v614 = vrot.slane %v613, 2
      %v615 = vmax.f32 %v613, %v614
      %v616 = vrot.slane %v615, 1
      %v617 = vmax.f32 %v615, %v616
      %v618 = vsel %vm575, %v567, -inf
      %v619 = vrot.slane %v618, 4
      %v620 = vmax.f32 %v618, %v619
      %v621 = vrot.slane %v620, 2
      %v622 = vmax.f32 %v620, %v621
      %v623 = vrot.slane %v622, 1
      %v624 = vmax.f32 %v622, %v623
      %v625 = vsel %vm575, %v568, -inf
      %v626 = vrot.slane %v625, 4
      %v627 = vmax.f32 %v625, %v626
      %v628 = vrot.slane %v627, 2
      %v629 = vmax.f32 %v627, %v628
      %v630 = vrot.slane %v629, 1
      %v631 = vmax.f32 %v629, %v630
      %v632 = vpack.c.bf16 %v582, %v582
      %v633 = vpack.c.bf16 %v589, %v589
      %v634 = vpack.c.bf16 %v596, %v596
      %v635 = vpack.c.bf16 %v603, %v603
      %v636 = vpack.c.bf16 %v610, %v610
      %v637 = vpack.c.bf16 %v617, %v617
      %v638 = vpack.c.bf16 %v624, %v624
      %v639 = vpack.c.bf16 %v631, %v631
      %v648 = vunpack.c.l.b16 %v632
      %v649 = vunpack.c.l.b16 %v633
      %v650 = vunpack.c.l.b16 %v634
      %v651 = vunpack.c.l.b16 %v635
      %v652 = vunpack.c.l.b16 %v636
      %v653 = vunpack.c.l.b16 %v637
      %v654 = vunpack.c.l.b16 %v638
      %v655 = vunpack.c.l.b16 %v639
      %vm656 = vcmask 1041409
      %v657 = vsel %vm656, %v649, %v648
      %vm658 = vcmask 1042434
      %v659 = vsel %vm658, %v650, %v657
      %vm660 = vcmask 1043459
      %v661 = vsel %vm660, %v651, %v659
      %vm662 = vcmask 1044484
      %v663 = vsel %vm662, %v652, %v661
      %vm664 = vcmask 1045509
      %v665 = vsel %vm664, %v653, %v663
      %vm666 = vcmask 1046534
      %v667 = vsel %vm666, %v654, %v665
      %vm668 = vcmask 1047559
      %v669 = vsel %vm668, %v655, %v667
      %v670 = vpack.c.b16 %v669, %v669
      %672 = vst [vmem:[%s195] sm:$0xf] %v670
      %p673 = scmp.lt.s32.totalorder %s15, 1
      %s674 = scalar_select %p673, %s15, 1
      %s675 = smul.addr %s674, 4
      %s676 = scalar_lea.vmem %s4, %s675
      // Predicated region
      $region37: #{crnn_forward.7} parent=35 // pred_check
        %p677 = pneg %p122
      $region38: #{crnn_forward.7} parent=35 // pred_check_branch
        %679 = sbr.rel (%p677) target = $region40
      $region39: #{crnn_forward.7} parent=35 // pred_region
        _
      $region40: #{crnn_forward.7} parent=35 // pred_fallthru
        _
    $region36: #{crnn_forward.7} parent=5 // pred_fallthru
      _
    %p680 = scmp.le.s32.totalorder 2, %s10
    // Predicated region
    $region41: #{crnn_forward.7} parent=5 // pred_check
      %p681 = pneg %p680
    $region42: #{crnn_forward.7} parent=5 // pred_check_branch
      %683 = sbr.rel (%p681) target = $region44
    $region43: #{crnn_forward.7} parent=5 // pred_region
      %s684 = ssub.s32 %s10, 2
      // Predicated region
      $region45: #{crnn_forward.7} parent=43 // pred_check
        %p685 = pneg %p128
      $region46: #{crnn_forward.7} parent=43 // pred_check_branch
        %687 = sbr.rel (%p685) target = $region48
      $region47: #{crnn_forward.7} parent=43 // pred_region
        %p688 = scmp.lt.s32.totalorder %s16, 1
        %s689 = scalar_select %p688, %s16, 1
        %s690 = smul.addr %s689, 4
        %s691 = scalar_lea.vmem %s4, %s690
      $region48: #{crnn_forward.7} parent=43 // pred_fallthru
        _
    $region44: #{crnn_forward.7} parent=5 // pred_fallthru
      _
  $region6: #{crnn_forward.7} parent=0 // loop_footer
    %s14 = sadd.s32 1, %s10
  $region7: #{crnn_forward.7} parent=0 // loop_footer_branch
    %9 = sbr.rel target = $region3
  $region8: #{crnn_forward.7} parent=0 // loop_exit
    _

// kernel: crnn_forward.8
$region0: #{crnn_forward.8}
  #allocation0 [shape = 'u32[]', space=smem, size = 0x4, offset = 0x4, fixed_abs, tag = 'smem constant byte address 0x4 - core index']
  #allocation1 [shape = 'u32[72,128]{1,0:T(1,128)}', space=vmem, size = 0x9000, scoped, tag = 'internal scratch']
  %s0 = inlined_call_operand.vmem [shape: bf16[2,10,128], index: 0, kind: input, shape index: {}]
  %s1 = inlined_call_operand.vmem [shape: bf16[3,128,128], index: 1, kind: input, shape index: {}]
  %s2 = inlined_call_operand.vmem [shape: f32[1,128], index: 2, kind: input, shape index: {}]
  %s3 = inlined_call_operand.vmem [shape: f32[1,128], index: 3, kind: input, shape index: {}]
  %s4 = inlined_call_operand.vmem [shape: bf16[2,4,128], index: 4, kind: output, shape index: {}]
  %s5 = sld [smem:[#allocation0]]
  $region49: #{crnn_forward.8} parent=0
    _
  %s7 = ssub.s32 1, %s5
  %s8 = scalar_select 0, %s7, %s5
  loop: start=0, step=1, limit=4
  $region2: #{crnn_forward.8} parent=0 // loop_pre_header
    _
  $region3: #{crnn_forward.8} parent=0 // loop_header
    %s10 = sphi 0, %s14
    %p11 = scmp.ge.s32.totalorder %s10, 4
    %s20 = sphi 0, %s22
    %s23 = sphi 0, %s20
    %s24 = sphi 0, %s23
    %s40 = sphi 0, %s24
    %s44 = sphi 0, %s44
    %s46 = sphi 0, %s44
    %s47 = sphi 0, %s46
    %s61 = sphi 0, %s47
    %s65 = sphi 0, %s65
    %s67 = sphi 0, %s65
    %s68 = sphi 0, %s67
    %s82 = sphi 0, %s68
    %s86 = sphi 0, %s86
    %s88 = sphi 0, %s86
    %s89 = sphi 0, %s88
    %s103 = sphi 0, %s89
    %s109 = sphi 0, %s111
    %s112 = sphi 0, %s109
    %s113 = sphi 0, %s112
    %s129 = sphi 0, %s113
  $region4: #{crnn_forward.8} parent=0 // loop_header_branch
    %13 = sbr.rel (%p11) target = $region8
  $region5: #{crnn_forward.8} parent=0 // loop_body
    %s15 = ssub.s32 %s10, 1
    %s16 = ssub.s32 %s10, 2
    %s17 = sadd.s32 %s10, 1
    %s18 = ssub.s32 %s10, %s17
    %p19 = scmp.eq.s32.totalorder %s18, 0
    %s21 = sadd.s32 %s20, 1
    %s22 = scalar_select %p19, %s20, %s21
    %p25 = pneg %p19
    %p26 = scmp.eq.s32.totalorder %s10, 1
    %p27 = por %p25, %p26
    %p28 = scmp.ne.s32.totalorder %s20, %s23
    %p29 = scmp.eq.s32.totalorder %s10, 0
    %p30 = por %p28, %p29
    %p31 = scmp.ne.s32.totalorder %s20, %s23
    %p32 = scmp.eq.s32.totalorder %s15, 1
    %p33 = por %p31, %p32
    %p34 = scmp.ne.s32.totalorder %s23, %s24
    %p35 = scmp.eq.s32.totalorder %s15, 0
    %p36 = por %p34, %p35
    %p37 = scmp.ne.s32.totalorder %s23, %s24
    %p38 = scmp.eq.s32.totalorder %s16, 1
    %p39 = por %p37, %p38
    %p41 = scmp.ne.s32.totalorder %s24, %s40
    %p42 = scmp.eq.s32.totalorder %s16, 0
    %p43 = por %p41, %p42
    %s45 = sadd.s32 %s44, 1
    %p48 = scmp.eq.s32.totalorder %s10, 1
    %p49 = scmp.ne.s32.totalorder %s44, %s46
    %p50 = scmp.eq.s32.totalorder %s10, 0
    %p51 = por %p49, %p50
    %p52 = scmp.ne.s32.totalorder %s44, %s46
    %p53 = scmp.eq.s32.totalorder %s15, 1
    %p54 = por %p52, %p53
    %p55 = scmp.ne.s32.totalorder %s46, %s47
    %p56 = scmp.eq.s32.totalorder %s15, 0
    %p57 = por %p55, %p56
    %p58 = scmp.ne.s32.totalorder %s46, %s47
    %p59 = scmp.eq.s32.totalorder %s16, 1
    %p60 = por %p58, %p59
    %p62 = scmp.ne.s32.totalorder %s47, %s61
    %p63 = scmp.eq.s32.totalorder %s16, 0
    %p64 = por %p62, %p63
    %s66 = sadd.s32 %s65, 1
    %p69 = scmp.eq.s32.totalorder %s10, 1
    %p70 = scmp.ne.s32.totalorder %s65, %s67
    %p71 = scmp.eq.s32.totalorder %s10, 0
    %p72 = por %p70, %p71
    %p73 = scmp.ne.s32.totalorder %s65, %s67
    %p74 = scmp.eq.s32.totalorder %s15, 1
    %p75 = por %p73, %p74
    %p76 = scmp.ne.s32.totalorder %s67, %s68
    %p77 = scmp.eq.s32.totalorder %s15, 0
    %p78 = por %p76, %p77
    %p79 = scmp.ne.s32.totalorder %s67, %s68
    %p80 = scmp.eq.s32.totalorder %s16, 1
    %p81 = por %p79, %p80
    %p83 = scmp.ne.s32.totalorder %s68, %s82
    %p84 = scmp.eq.s32.totalorder %s16, 0
    %p85 = por %p83, %p84
    %s87 = sadd.s32 %s86, 1
    %p90 = scmp.eq.s32.totalorder %s10, 1
    %p91 = scmp.ne.s32.totalorder %s86, %s88
    %p92 = scmp.eq.s32.totalorder %s10, 0
    %p93 = por %p91, %p92
    %p94 = scmp.ne.s32.totalorder %s86, %s88
    %p95 = scmp.eq.s32.totalorder %s15, 1
    %p96 = por %p94, %p95
    %p97 = scmp.ne.s32.totalorder %s88, %s89
    %p98 = scmp.eq.s32.totalorder %s15, 0
    %p99 = por %p97, %p98
    %p100 = scmp.ne.s32.totalorder %s88, %s89
    %p101 = scmp.eq.s32.totalorder %s16, 1
    %p102 = por %p100, %p101
    %p104 = scmp.ne.s32.totalorder %s89, %s103
    %p105 = scmp.eq.s32.totalorder %s16, 0
    %p106 = por %p104, %p105
    %s107 = ssub.s32 %s10, %s17
    %p108 = scmp.eq.s32.totalorder %s107, 0
    %s110 = sadd.s32 %s109, 1
    %s111 = scalar_select %p108, %s109, %s110
    %p114 = pneg %p108
    %p115 = scmp.eq.s32.totalorder %s10, 1
    %p116 = por %p114, %p115
    %p117 = scmp.ne.s32.totalorder %s109, %s112
    %p118 = scmp.eq.s32.totalorder %s10, 0
    %p119 = por %p117, %p118
    %p120 = scmp.ne.s32.totalorder %s109, %s112
    %p121 = scmp.eq.s32.totalorder %s15, 1
    %p122 = por %p120, %p121
    %p123 = scmp.ne.s32.totalorder %s112, %s113
    %p124 = scmp.eq.s32.totalorder %s15, 0
    %p125 = por %p123, %p124
    %p126 = scmp.ne.s32.totalorder %s112, %s113
    %p127 = scmp.eq.s32.totalorder %s16, 1
    %p128 = por %p126, %p127
    %p130 = scmp.ne.s32.totalorder %s113, %s129
    %p131 = scmp.eq.s32.totalorder %s16, 0
    %p132 = por %p130, %p131
    %p133 = scmp.le.s32.totalorder 1, %s10
    %p134 = scmp.lt.s32.totalorder %s10, 3
    %p135 = pnand %p133, %p134
    %p136 = pneg %p135
    // Predicated region
    $region9: #{crnn_forward.8} parent=5 // pred_check
      _
    $region10: #{crnn_forward.8} parent=5 // pred_check_branch
      %138 = sbr.rel (%p135) target = $region12
    $region11: #{crnn_forward.8} parent=5 // pred_region
      %s139 = ssub.s32 %s10, 1
      // Predicated region
      $region13: #{crnn_forward.8} parent=11 // pred_check
        %p140 = pneg %p57
      $region14: #{crnn_forward.8} parent=11 // pred_check_branch
        %142 = sbr.rel (%p140) target = $region16
      $region15: #{crnn_forward.8} parent=11 // pred_region
        _
      $region16: #{crnn_forward.8} parent=11 // pred_fallthru
        _
      // Predicated region
      $region17: #{crnn_forward.8} parent=11 // pred_check
        %p143 = pneg %p78
      $region18: #{crnn_forward.8} parent=11 // pred_check_branch
        %145 = sbr.rel (%p143) target = $region20
      $region19: #{crnn_forward.8} parent=11 // pred_region
        _
      $region20: #{crnn_forward.8} parent=11 // pred_fallthru
        _
      // Predicated region
      $region21: #{crnn_forward.8} parent=11 // pred_check
        %p146 = pneg %p99
      $region22: #{crnn_forward.8} parent=11 // pred_check_branch
        %148 = sbr.rel (%p146) target = $region24
      $region23: #{crnn_forward.8} parent=11 // pred_region
        _
      $region24: #{crnn_forward.8} parent=11 // pred_fallthru
        _
    $region12: #{crnn_forward.8} parent=5 // pred_fallthru
      _
    %p149 = scmp.lt.s32.totalorder %s10, 2
    // Predicated region
    $region25: #{crnn_forward.8} parent=5 // pred_check
      %p150 = pneg %p149
    $region26: #{crnn_forward.8} parent=5 // pred_check_branch
      %152 = sbr.rel (%p150) target = $region28
    $region27: #{crnn_forward.8} parent=5 // pred_region
      // Predicated region
      $region29: #{crnn_forward.8} parent=27 // pred_check
        %p153 = pneg %p30
      $region30: #{crnn_forward.8} parent=27 // pred_check_branch
        %155 = sbr.rel (%p153) target = $region32
      $region31: #{crnn_forward.8} parent=27 // pred_region
        %p156 = scmp.lt.s32.totalorder %s10, 1
        %s157 = scalar_select %p156, %s10, 1
        %s158 = smul.addr %s157, 2
        %s159 = smul.addr %s158, 4
        %s160 = scalar_lea.vmem %s0, %s159
      $region32: #{crnn_forward.8} parent=27 // pred_fallthru
        _
    $region28: #{crnn_forward.8} parent=5 // pred_fallthru
      _
    %p161 = scmp.le.s32.totalorder 1, %s10
    %p162 = scmp.lt.s32.totalorder %s10, 3
    %p163 = pnand %p161, %p162
    %p164 = pneg %p163
    // Predicated region
    $region33: #{crnn_forward.8} parent=5 // pred_check
      _
    $region34: #{crnn_forward.8} parent=5 // pred_check_branch
      %166 = sbr.rel (%p163) target = $region36
    $region35: #{crnn_forward.8} parent=5 // pred_region
      %s167 = ssub.s32 %s10, 1
      %p168 = scmp.lt.s32.totalorder %s15, 1
      %s169 = scalar_select %p168, %s15, 1
      %s170 = smul.addr %s169, 2
      %s171 = smul.addr %s170, 4
      %s172 = scalar_lea.vmem %s0, %s171
      %p173 = pneg %p36
      %p174 = pneg %p33
      %p175 = pneg %p57
      %p176 = pneg %p54
      %p177 = pneg %p78
      %p178 = pneg %p75
      %p179 = pneg %p99
      %p180 = pneg %p96
      %p181 = pneg %p125
      %p182 = pneg %p122
      %p183 = scmp.lt.s32.totalorder %s15, 1
      %s184 = scalar_select %p183, %s15, 1
      %s185 = smul.addr %s184, 2
      %s186 = scalar_lea.vmem %s4, %s185
      %p187 = scmp.lt.s32.totalorder %s15, 1
      %s188 = scalar_select %p187, %s15, 1
      %s189 = smul.addr %s188, 2
      %s190 = smul.addr %s189, 4
      %s191 = scalar_lea.vmem %s0, %s190
      %p192 = scmp.lt.s32.totalorder %s15, 1
      %s193 = scalar_select %p192, %s15, 1
      %s194 = smul.addr %s193, 2
      %s195 = scalar_lea.vmem %s4, %s194
      %v196 = vld [vmem:[%s191] sm:$0xf]
      %v197 = vld [vmem:[%s1] sm:$0xf]
      %v198 = vld [vmem:[%s1 + $0x4] sm:$0xf]
      %v199 = vld [vmem:[%s1 + $0x8] sm:$0xf]
      %v200 = vld [vmem:[%s1 + $0xc] sm:$0xf]
      %v201 = vld [vmem:[%s1 + $0x10] sm:$0xf]
      %v202 = vld [vmem:[%s1 + $0x14] sm:$0xf]
      %v203 = vld [vmem:[%s1 + $0x18] sm:$0xf]
      %v204 = vld [vmem:[%s1 + $0x1c] sm:$0xf]
      %v205 = vld [vmem:[%s1 + $0x20] sm:$0xf]
      %v206 = vld [vmem:[%s1 + $0x24] sm:$0xf]
      %v207 = vld [vmem:[%s1 + $0x28] sm:$0xf]
      %v208 = vld [vmem:[%s1 + $0x2c] sm:$0xf]
      %v209 = vld [vmem:[%s1 + $0x30] sm:$0xf]
      %v210 = vld [vmem:[%s1 + $0x34] sm:$0xf]
      %v211 = vld [vmem:[%s1 + $0x38] sm:$0xf]
      %v212 = vld [vmem:[%s1 + $0x3c] sm:$0xf]
      %v213 = vld [vmem:[%s191 + $0x4] sm:$0x1]
      %s214 = scalar_lea.vmem %s1, 64
      %v215 = vld [vmem:[%s214] sm:$0xf]
      %v216 = vld [vmem:[%s214 + $0x4] sm:$0xf]
      %v217 = vld [vmem:[%s214 + $0x8] sm:$0xf]
      %v218 = vld [vmem:[%s214 + $0xc] sm:$0xf]
      %v219 = vld [vmem:[%s214 + $0x10] sm:$0xf]
      %v220 = vld [vmem:[%s214 + $0x14] sm:$0xf]
      %v221 = vld [vmem:[%s214 + $0x18] sm:$0xf]
      %v222 = vld [vmem:[%s214 + $0x1c] sm:$0xf]
      %v223 = vld [vmem:[%s214 + $0x20] sm:$0xf]
      %v224 = vld [vmem:[%s214 + $0x24] sm:$0xf]
      %v225 = vld [vmem:[%s214 + $0x28] sm:$0xf]
      %v226 = vld [vmem:[%s214 + $0x2c] sm:$0xf]
      %v227 = vld [vmem:[%s214 + $0x30] sm:$0xf]
      %v228 = vld [vmem:[%s214 + $0x34] sm:$0xf]
      %v229 = vld [vmem:[%s214 + $0x38] sm:$0xf]
      %v230 = vld [vmem:[%s214 + $0x3c] sm:$0xf]
      %v233 = vunpack.c.l.b16 %v196
      %v234 = vunpack.c.l.b16 %v213
      %v235 = vpack.c.b16 %v234, %v233
      %v237 = vshrl.u32 %v235, 16
      %v239 = vshll.u32 %v235, 16
      %v241 = vrot.slane %v239, 1
      %v242 = vor.u32 %v237, %v241
      %v260 = vunpack.c.l.b16 %v215
      %v261 = vunpack.c.l.b16 %v216
      %v262 = vunpack.c.l.b16 %v217
      %v263 = vunpack.c.l.b16 %v218
      %v264 = vunpack.c.l.b16 %v219
      %v265 = vunpack.c.l.b16 %v220
      %v266 = vunpack.c.l.b16 %v221
      %v267 = vunpack.c.l.b16 %v222
      %v268 = vunpack.c.l.b16 %v223
      %v269 = vunpack.c.l.b16 %v224
      %v270 = vunpack.c.l.b16 %v225
      %v271 = vunpack.c.l.b16 %v226
      %v272 = vunpack.c.l.b16 %v227
      %v273 = vunpack.c.l.b16 %v228
      %v274 = vunpack.c.l.b16 %v229
      %v275 = vunpack.c.l.b16 %v230
      %v276 = vpack.c.b16 %v261, %v260
      %v277 = vpack.c.b16 %v263, %v262
      %v278 = vpack.c.b16 %v265, %v264
      %v279 = vpack.c.b16 %v267, %v266
      %v280 = vpack.c.b16 %v269, %v268
      %v281 = vpack.c.b16 %v271, %v270
      %v282 = vpack.c.b16 %v273, %v272
      %v283 = vpack.c.b16 %v275, %v274
      %292 = vmatpush.bf16.msra.mxu0 %v283
      %293 = vmatpush.bf16.msra.mxu0 %v282
      %294 = vmatpush.bf16.msra.mxu0 %v281
      %295 = vmatpush.bf16.msra.mxu0 %v280
      %296 = vmatpush.bf16.msra.mxu0 %v279
      %297 = vmatpush.bf16.msra.mxu0 %v278
      %298 = vmatpush.bf16.msra.mxu0 %v277
      %299 = vmatpush.bf16.msra.mxu0 %v276
      %300 = vmatmul.bf16.gmra.mxu0 %v242
      %v301 = vpop.f32.mrf.mxu0
      %v302 = vadd.f32 0.0, %v301
      %v303 = vpop.f32.mrf.mxu0
      %304 = vdwg.mxu0
      %v321 = vunpack.c.l.b16 %v197
      %v322 = vunpack.c.l.b16 %v198
      %v323 = vunpack.c.l.b16 %v199
      %v324 = vunpack.c.l.b16 %v200
      %v325 = vunpack.c.l.b16 %v201
      %v326 = vunpack.c.l.b16 %v202
      %v327 = vunpack.c.l.b16 %v203
      %v328 = vunpack.c.l.b16 %v204
      %v329 = vunpack.c.l.b16 %v205
      %v330 = vunpack.c.l.b16 %v206
      %v331 = vunpack.c.l.b16 %v207
      %v332 = vunpack.c.l.b16 %v208
      %v333 = vunpack.c.l.b16 %v209
      %v334 = vunpack.c.l.b16 %v210
      %v335 = vunpack.c.l.b16 %v211
      %v336 = vunpack.c.l.b16 %v212
      %v337 = vpack.c.b16 %v322, %v321
      %v338 = vpack.c.b16 %v324, %v323
      %v339 = vpack.c.b16 %v326, %v325
      %v340 = vpack.c.b16 %v328, %v327
      %v341 = vpack.c.b16 %v330, %v329
      %v342 = vpack.c.b16 %v332, %v331
      %v343 = vpack.c.b16 %v334, %v333
      %v344 = vpack.c.b16 %v336, %v335
      %353 = vmatpush.bf16.msra.mxu0 %v344
      %354 = vmatpush.bf16.msra.mxu0 %v343
      %355 = vmatpush.bf16.msra.mxu0 %v342
      %356 = vmatpush.bf16.msra.mxu0 %v341
      %357 = vmatpush.bf16.msra.mxu0 %v340
      %358 = vmatpush.bf16.msra.mxu0 %v339
      %359 = vmatpush.bf16.msra.mxu0 %v338
      %360 = vmatpush.bf16.msra.mxu0 %v337
      %361 = vmatmul.bf16.gmra.mxu0 %v196
      %v362 = vpop.f32.mrf.mxu0
      %v363 = vadd.f32 %v302, %v362
      %v364 = vpop.f32.mrf.mxu0
      %365 = vdwg.mxu0
      %v366 = vld [vmem:[%s191] sm:$0xe]
      %s367 = scalar_lea.vmem %s1, 128
      %v368 = vld [vmem:[%s367] sm:$0xf]
      %v369 = vld [vmem:[%s367 + $0x4] sm:$0xf]
      %v370 = vld [vmem:[%s367 + $0x8] sm:$0xf]
      %v371 = vld [vmem:[%s367 + $0xc] sm:$0xf]
      %v372 = vld [vmem:[%s367 + $0x10] sm:$0xf]
      %v373 = vld [vmem:[%s367 + $0x14] sm:$0xf]
      %v374 = vld [vmem:[%s367 + $0x18] sm:$0xf]
      %v375 = vld [vmem:[%s367 + $0x1c] sm:$0xf]
      %v376 = vld [vmem:[%s367 + $0x20] sm:$0xf]
      %v377 = vld [vmem:[%s367 + $0x24] sm:$0xf]
      %v378 = vld [vmem:[%s367 + $0x28] sm:$0xf]
      %v379 = vld [vmem:[%s367 + $0x2c] sm:$0xf]
      %v380 = vld [vmem:[%s367 + $0x30] sm:$0xf]
      %v381 = vld [vmem:[%s367 + $0x34] sm:$0xf]
      %v382 = vld [vmem:[%s367 + $0x38] sm:$0xf]
      %v383 = vld [vmem:[%s367 + $0x3c] sm:$0xf]
      %v385 = vunpack.c.l.b16 %v366
      %v386 = vpack.c.b16 %v234, %v385
      %v387 = vrot.slane %v386, 1
      %v405 = vunpack.c.l.b16 %v368
      %v406 = vunpack.c.l.b16 %v369
      %v407 = vunpack.c.l.b16 %v370
      %v408 = vunpack.c.l.b16 %v371
      %v409 = vunpack.c.l.b16 %v372
      %v410 = vunpack.c.l.b16 %v373
      %v411 = vunpack.c.l.b16 %v374
      %v412 = vunpack.c.l.b16 %v375
      %v413 = vunpack.c.l.b16 %v376
      %v414 = vunpack.c.l.b16 %v377
      %v415 = vunpack.c.l.b16 %v378
      %v416 = vunpack.c.l.b16 %v379
      %v417 = vunpack.c.l.b16 %v380
      %v418 = vunpack.c.l.b16 %v381
      %v419 = vunpack.c.l.b16 %v382
      %v420 = vunpack.c.l.b16 %v383
      %v421 = vpack.c.b16 %v406, %v405
      %v422 = vpack.c.b16 %v408, %v407
      %v423 = vpack.c.b16 %v410, %v409
      %v424 = vpack.c.b16 %v412, %v411
      %v425 = vpack.c.b16 %v414, %v413
      %v426 = vpack.c.b16 %v416, %v415
      %v427 = vpack.c.b16 %v418, %v417
      %v428 = vpack.c.b16 %v420, %v419
      %437 = vmatpush.bf16.msra.mxu0 %v428
      %438 = vmatpush.bf16.msra.mxu0 %v427
      %439 = vmatpush.bf16.msra.mxu0 %v426
      %440 = vmatpush.bf16.msra.mxu0 %v425
      %441 = vmatpush.bf16.msra.mxu0 %v424
      %442 = vmatpush.bf16.msra.mxu0 %v423
      %443 = vmatpush.bf16.msra.mxu0 %v422
      %444 = vmatpush.bf16.msra.mxu0 %v421
      %445 = vmatmul.bf16.gmra.mxu0 %v387
      %v446 = vpop.f32.mrf.mxu0
      %v447 = vadd.f32 0.0, %v446
      %v448 = vpop.f32.mrf.mxu0
      %449 = vdwg.mxu0
      %v450 = vadd.f32 %v363, %v447
      %v451 = vld [vmem:[%s2] sm:$0x1]
      %v453 = vperm.slane %v451, 0
      %v455 = vmul.f32 %v450, %v453
      %v456 = vld [vmem:[%s3] sm:$0x1]
      %v458 = vperm.slane %v456, 0
      %v460 = vadd.f32 %v455, %v458
      %v461 = vmul.f32 %v460, 0.5
      %v462 = vmul.f32 %v460, 0.70710677
      %v463 = vand.u32 2147483647, %v462
      %v464 = vmul.f32 %v463, 0.3275911
      %v465 = vadd.f32 %v464, 1.0
      %v466 = vrcp.pop %v465
      %v467 = vmul.f32 %v465, %v466
      %v468 = vsub.f32 1.0, %v467
      %v469 = vmul.f32 %v466, %v468
      %v470 = vadd.f32 %v466, %v469
      %vm471 = vweird.f32 %v465
      %vm472 = vweird.f32 %v466
      %vm473 = vmor %vm471, %vm472
      %v474 = vsel %vm473, %v466, %v470
      %v475 = vand.u32 2147483647, %v465
      %vm476 = vcmp.eq.f32.partialorder %v475, 8.507059e+37
      %v477 = vand.u32 %v465, 2147483648
      %v478 = vor.u32 1.1754944e-38, %v477
      %v479 = vsel %vm476, %v478, %v474
      %v480 = vmul.f32 1.0, %v479
      %v481 = vmul.f32 %v480, 1.0614054
      %v482 = vadd.f32 %v481, -1.4531521
      %v483 = vmul.f32 %v480, %v482
      %v484 = vadd.f32 %v483, 1.4214138
      %v485 = vmul.f32 %v480, %v484
      %v486 = vadd.f32 %v485, -0.28449672
      %v487 = vmul.f32 %v480, %v486
      %v488 = vadd.f32 %v487, 0.2548296
      %v489 = vmul.f32 %v480, %v488
      %v490 = vsub.f32 0.0, %v463
      %v491 = vmul.f32 %v490, %v463
      %v492 = vmul.f32 %v491, 1.442695
      %v493 = vpow.pop %v492
      %v494 = vmul.f32 %v489, %v493
      %v495 = vsub.f32 1.0, %v494
      %vm496 = vcmp.lt.f32.partialorder %v462, 0.0
      %v497 = vsub.f32 0.0, %v495
      %v498 = vsel %vm496, %v497, %v495
      %v499 = vadd.f32 %v498, 1.0
      %v500 = vmul.f32 %v461, %v499
      %v502 = vrot.slane %v500, 2
      %v503 = vrot.slane %v500, 4
      %v504 = vrot.slane %v500, 6
      %vm508 = vcmask 1041408
      %v509 = vsel %vm508, %v500, -inf
      %v510 = vrot.slane %v509, 4
      %v511 = vmax.f32 %v509, %v510
      %v512 = vrot.slane %v511, 2
      %v513 = vmax.f32 %v511, %v512
      %v514 = vrot.slane %v513, 1
      %v515 = vmax.f32 %v513, %v514
      %v516 = vsel %vm508, %v502, -inf
      %v517 = vrot.slane %v516, 4
      %v518 = vmax.f32 %v516, %v517
      %v519 = vrot.slane %v518, 2
      %v520 = vmax.f32 %v518, %v519
      %v521 = vrot.slane %v520, 1
      %v522 = vmax.f32 %v520, %v521
      %v523 = vsel %vm508, %v503, -inf
      %v524 = vrot.slane %v523, 4
      %v525 = vmax.f32 %v523, %v524
      %v526 = vrot.slane %v525, 2
      %v527 = vmax.f32 %v525, %v526
      %v528 = vrot.slane %v527, 1
      %v529 = vmax.f32 %v527, %v528
      %v530 = vsel %vm508, %v504, -inf
      %v531 = vrot.slane %v530, 4
      %v532 = vmax.f32 %v530, %v531
      %v533 = vrot.slane %v532, 2
      %v534 = vmax.f32 %v532, %v533
      %v535 = vrot.slane %v534, 1
      %v536 = vmax.f32 %v534, %v535
      %v537 = vpack.c.bf16 %v515, %v515
      %v538 = vpack.c.bf16 %v522, %v522
      %v539 = vpack.c.bf16 %v529, %v529
      %v540 = vpack.c.bf16 %v536, %v536
      %v545 = vrot.slane %v537, 2
      %v546 = vrot.slane %v538, 2
      %v547 = vrot.slane %v539, 2
      %v548 = vrot.slane %v540, 2
      %v551 = vsel %vm508, %v537, %v545
      %v554 = vsel %vm508, %v538, %v546
      %v557 = vsel %vm508, %v539, %v547
      %v560 = vsel %vm508, %v540, %v548
      %561 = vst [vmem:[#allocation1] ss:$2 sm:$0xff] %v551
      %v562 = vld.sshfl [vmem:[#allocation1] sm:$0xff pattern:$0x75643120]
      %s564 = scalar_lea.vmem [#allocation1], 16
      %565 = vst [vmem:[%s564] ss:$2 sm:$0xff] %v554
      %v566 = vld.sshfl [vmem:[#allocation1 + $0x10] sm:$0xff pattern:$0x75643120]
      %s568 = scalar_lea.vmem [#allocation1], 32
      %569 = vst [vmem:[%s568] ss:$2 sm:$0xff] %v557
      %v570 = vld.sshfl [vmem:[#allocation1 + $0x20] sm:$0xff pattern:$0x75643120]
      %s572 = scalar_lea.vmem [#allocation1], 48
      %573 = vst [vmem:[%s572] ss:$2 sm:$0xff] %v560
      %v574 = vld.sshfl [vmem:[#allocation1 + $0x30] sm:$0xff pattern:$0x75643120]
      %v576 = vunpack.c.l.b16 %v562
      %v577 = vunpack.c.l.b16 %v566
      %v578 = vunpack.c.l.b16 %v570
      %v579 = vunpack.c.l.b16 %v574
      %v580 = vrot.slane %v577, 7
      %vm581 = vcmask 1041409
      %v582 = vsel %vm581, %v580, %v576
      %v583 = vrot.slane %v578, 6
      %vm584 = vcmask 1042434
      %v585 = vsel %vm584, %v583, %v582
      %v586 = vrot.slane %v579, 5
      %vm587 = vcmask 1043459
      %v588 = vsel %vm587, %v586, %v585
      %v589 = vpack.c.b16 %v588, %v588
      %v590 = vrot.slane %v589, 2
      %v593 = vsel %vm508, %v589, %v590
      %595 = vst [vmem:[%s195] sm:$0x3] %v593
      %p596 = scmp.lt.s32.totalorder %s15, 1
      %s597 = scalar_select %p596, %s15, 1
      %s598 = smul.addr %s597, 2
      %s599 = scalar_lea.vmem %s4, %s598
      // Predicated region
      $region37: #{crnn_forward.8} parent=35 // pred_check
        %p600 = pneg %p122
      $region38: #{crnn_forward.8} parent=35 // pred_check_branch
        %602 = sbr.rel (%p600) target = $region40
      $region39: #{crnn_forward.8} parent=35 // pred_region
        _
      $region40: #{crnn_forward.8} parent=35 // pred_fallthru
        _
    $region36: #{crnn_forward.8} parent=5 // pred_fallthru
      _
    %p603 = scmp.le.s32.totalorder 2, %s10
    // Predicated region
    $region41: #{crnn_forward.8} parent=5 // pred_check
      %p604 = pneg %p603
    $region42: #{crnn_forward.8} parent=5 // pred_check_branch
      %606 = sbr.rel (%p604) target = $region44
    $region43: #{crnn_forward.8} parent=5 // pred_region
      %s607 = ssub.s32 %s10, 2
      // Predicated region
      $region45: #{crnn_forward.8} parent=43 // pred_check
        %p608 = pneg %p128
      $region46: #{crnn_forward.8} parent=43 // pred_check_branch
        %610 = sbr.rel (%p608) target = $region48
      $region47: #{crnn_forward.8} parent=43 // pred_region
        %p611 = scmp.lt.s32.totalorder %s16, 1
        %s612 = scalar_select %p611, %s16, 1
        %s613 = smul.addr %s612, 2
        %s614 = scalar_lea.vmem %s4, %s613
      $region48: #{crnn_forward.8} parent=43 // pred_fallthru
        _
    $region44: #{crnn_forward.8} parent=5 // pred_fallthru
      _
  $region6: #{crnn_forward.8} parent=0 // loop_footer
    %s14 = sadd.s32 1, %s10
  $region7: #{crnn_forward.8} parent=0 // loop_footer_branch
    %9 = sbr.rel target = $region3
  $region8: #{crnn_forward.8} parent=0 // loop_exit
    _

// kernel: crnn_forward.11
$region0: #{crnn_forward.11}
  #allocation0 [shape = 'u32[]', space=smem, size = 0x4, offset = 0x4, fixed_abs, tag = 'smem constant byte address 0x4 - core index']
  #allocation1 [shape = 'u32[72,128]{1,0:T(1,128)}', space=vmem, size = 0x9000, scoped, tag = 'internal scratch']
  #allocation2 [shape = 'f32[1,1]{1,0:T(1,128)S(1)}', space=vmem, size = 0x200, scoped, tag = 'scoped memory for crnn_forward.11']
  #allocation3 [shape = 'f32[1,1]{1,0:T(1,128)S(1)}', space=vmem, size = 0x200, scoped, tag = 'scoped memory for crnn_forward.11']
  %s0 = inlined_call_operand.vmem [shape: bf16[2,4,128], index: 0, kind: input, shape index: {}]
  %s1 = inlined_call_operand.vmem [shape: bf16[2,4,128], index: 1, kind: input, shape index: {}]
  %s2 = inlined_call_operand.vmem [shape: f32[1,128], index: 2, kind: input, shape index: {}]
  %s3 = inlined_call_operand.vmem [shape: f32[1,128], index: 3, kind: input, shape index: {}]
  %s4 = inlined_call_operand.<no memory space> [shape: f32[1,1], index: 4, kind: input, shape index: {}]
  %s5 = inlined_call_operand.vmem [shape: f32[1,4], index: 5, kind: input, shape index: {}]
  %s6 = inlined_call_operand.<no memory space> [shape: f32[1,1], index: 6, kind: input, shape index: {}]
  %s7 = inlined_call_operand.vmem [shape: f32[2,4,4], index: 7, kind: output, shape index: {}]
  %s8 = sld [smem:[#allocation0]]
  $region61: #{crnn_forward.11} parent=0
    _
  %s10 = ssub.s32 1, %s8
  %s11 = scalar_select 0, %s10, %s8
  %v12 = vstv %s4
  %13 = vst [vmem:[#allocation2] sm:$0x1] %v12
  %v14 = vstv %s6
  %15 = vst [vmem:[#allocation3] sm:$0x1] %v14
  loop: start=0, step=1, limit=4
  $region2: #{crnn_forward.11} parent=0 // loop_pre_header
    _
  $region3: #{crnn_forward.11} parent=0 // loop_header
    %s17 = sphi 0, %s21
    %p18 = scmp.ge.s32.totalorder %s17, 4
    %s27 = sphi 0, %s29
    %s30 = sphi 0, %s27
    %s31 = sphi 0, %s30
    %s47 = sphi 0, %s31
    %s53 = sphi 0, %s55
    %s56 = sphi 0, %s53
    %s57 = sphi 0, %s56
    %s73 = sphi 0, %s57
    %s77 = sphi 0, %s77
    %s79 = sphi 0, %s77
    %s80 = sphi 0, %s79
    %s94 = sphi 0, %s80
    %s98 = sphi 0, %s98
    %s100 = sphi 0, %s98
    %s101 = sphi 0, %s100
    %s115 = sphi 0, %s101
    %s119 = sphi 0, %s119
    %s121 = sphi 0, %s119
    %s122 = sphi 0, %s121
    %s136 = sphi 0, %s122
    %s140 = sphi 0, %s140
    %s142 = sphi 0, %s140
    %s143 = sphi 0, %s142
    %s157 = sphi 0, %s143
    %s161 = sphi 0, %s161
    %s163 = sphi 0, %s161
    %s164 = sphi 0, %s163
    %s178 = sphi 0, %s164
    %s184 = sphi 0, %s186
    %s187 = sphi 0, %s184
    %s188 = sphi 0, %s187
    %s204 = sphi 0, %s188
  $region4: #{crnn_forward.11} parent=0 // loop_header_branch
    %20 = sbr.rel (%p18) target = $region8
  $region5: #{crnn_forward.11} parent=0 // loop_body
    %s22 = ssub.s32 %s17, 1
    %s23 = ssub.s32 %s17, 2
    %s24 = sadd.s32 %s17, 1
    %s25 = ssub.s32 %s17, %s24
    %p26 = scmp.eq.s32.totalorder %s25, 0
    %s28 = sadd.s32 %s27, 1
    %s29 = scalar_select %p26, %s27, %s28
    %p32 = pneg %p26
    %p33 = scmp.eq.s32.totalorder %s17, 1
    %p34 = por %p32, %p33
    %p35 = scmp.ne.s32.totalorder %s27, %s30
    %p36 = scmp.eq.s32.totalorder %s17, 0
    %p37 = por %p35, %p36
    %p38 = scmp.ne.s32.totalorder %s27, %s30
    %p39 = scmp.eq.s32.totalorder %s22, 1
    %p40 = por %p38, %p39
    %p41 = scmp.ne.s32.totalorder %s30, %s31
    %p42 = scmp.eq.s32.totalorder %s22, 0
    %p43 = por %p41, %p42
    %p44 = scmp.ne.s32.totalorder %s30, %s31
    %p45 = scmp.eq.s32.totalorder %s23, 1
    %p46 = por %p44, %p45
    %p48 = scmp.ne.s32.totalorder %s31, %s47
    %p49 = scmp.eq.s32.totalorder %s23, 0
    %p50 = por %p48, %p49
    %s51 = ssub.s32 %s17, %s24
    %p52 = scmp.eq.s32.totalorder %s51, 0
    %s54 = sadd.s32 %s53, 1
    %s55 = scalar_select %p52, %s53, %s54
    %p58 = pneg %p52
    %p59 = scmp.eq.s32.totalorder %s17, 1
    %p60 = por %p58, %p59
    %p61 = scmp.ne.s32.totalorder %s53, %s56
    %p62 = scmp.eq.s32.totalorder %s17, 0
    %p63 = por %p61, %p62
    %p64 = scmp.ne.s32.totalorder %s53, %s56
    %p65 = scmp.eq.s32.totalorder %s22, 1
    %p66 = por %p64, %p65
    %p67 = scmp.ne.s32.totalorder %s56, %s57
    %p68 = scmp.eq.s32.totalorder %s22, 0
    %p69 = por %p67, %p68
    %p70 = scmp.ne.s32.totalorder %s56, %s57
    %p71 = scmp.eq.s32.totalorder %s23, 1
    %p72 = por %p70, %p71
    %p74 = scmp.ne.s32.totalorder %s57, %s73
    %p75 = scmp.eq.s32.totalorder %s23, 0
    %p76 = por %p74, %p75
    %s78 = sadd.s32 %s77, 1
    %p81 = scmp.eq.s32.totalorder %s17, 1
    %p82 = scmp.ne.s32.totalorder %s77, %s79
    %p83 = scmp.eq.s32.totalorder %s17, 0
    %p84 = por %p82, %p83
    %p85 = scmp.ne.s32.totalorder %s77, %s79
    %p86 = scmp.eq.s32.totalorder %s22, 1
    %p87 = por %p85, %p86
    %p88 = scmp.ne.s32.totalorder %s79, %s80
    %p89 = scmp.eq.s32.totalorder %s22, 0
    %p90 = por %p88, %p89
    %p91 = scmp.ne.s32.totalorder %s79, %s80
    %p92 = scmp.eq.s32.totalorder %s23, 1
    %p93 = por %p91, %p92
    %p95 = scmp.ne.s32.totalorder %s80, %s94
    %p96 = scmp.eq.s32.totalorder %s23, 0
    %p97 = por %p95, %p96
    %s99 = sadd.s32 %s98, 1
    %p102 = scmp.eq.s32.totalorder %s17, 1
    %p103 = scmp.ne.s32.totalorder %s98, %s100
    %p104 = scmp.eq.s32.totalorder %s17, 0
    %p105 = por %p103, %p104
    %p106 = scmp.ne.s32.totalorder %s98, %s100
    %p107 = scmp.eq.s32.totalorder %s22, 1
    %p108 = por %p106, %p107
    %p109 = scmp.ne.s32.totalorder %s100, %s101
    %p110 = scmp.eq.s32.totalorder %s22, 0
    %p111 = por %p109, %p110
    %p112 = scmp.ne.s32.totalorder %s100, %s101
    %p113 = scmp.eq.s32.totalorder %s23, 1
    %p114 = por %p112, %p113
    %p116 = scmp.ne.s32.totalorder %s101, %s115
    %p117 = scmp.eq.s32.totalorder %s23, 0
    %p118 = por %p116, %p117
    %s120 = sadd.s32 %s119, 1
    %p123 = scmp.eq.s32.totalorder %s17, 1
    %p124 = scmp.ne.s32.totalorder %s119, %s121
    %p125 = scmp.eq.s32.totalorder %s17, 0
    %p126 = por %p124, %p125
    %p127 = scmp.ne.s32.totalorder %s119, %s121
    %p128 = scmp.eq.s32.totalorder %s22, 1
    %p129 = por %p127, %p128
    %p130 = scmp.ne.s32.totalorder %s121, %s122
    %p131 = scmp.eq.s32.totalorder %s22, 0
    %p132 = por %p130, %p131
    %p133 = scmp.ne.s32.totalorder %s121, %s122
    %p134 = scmp.eq.s32.totalorder %s23, 1
    %p135 = por %p133, %p134
    %p137 = scmp.ne.s32.totalorder %s122, %s136
    %p138 = scmp.eq.s32.totalorder %s23, 0
    %p139 = por %p137, %p138
    %s141 = sadd.s32 %s140, 1
    %p144 = scmp.eq.s32.totalorder %s17, 1
    %p145 = scmp.ne.s32.totalorder %s140, %s142
    %p146 = scmp.eq.s32.totalorder %s17, 0
    %p147 = por %p145, %p146
    %p148 = scmp.ne.s32.totalorder %s140, %s142
    %p149 = scmp.eq.s32.totalorder %s22, 1
    %p150 = por %p148, %p149
    %p151 = scmp.ne.s32.totalorder %s142, %s143
    %p152 = scmp.eq.s32.totalorder %s22, 0
    %p153 = por %p151, %p152
    %p154 = scmp.ne.s32.totalorder %s142, %s143
    %p155 = scmp.eq.s32.totalorder %s23, 1
    %p156 = por %p154, %p155
    %p158 = scmp.ne.s32.totalorder %s143, %s157
    %p159 = scmp.eq.s32.totalorder %s23, 0
    %p160 = por %p158, %p159
    %s162 = sadd.s32 %s161, 1
    %p165 = scmp.eq.s32.totalorder %s17, 1
    %p166 = scmp.ne.s32.totalorder %s161, %s163
    %p167 = scmp.eq.s32.totalorder %s17, 0
    %p168 = por %p166, %p167
    %p169 = scmp.ne.s32.totalorder %s161, %s163
    %p170 = scmp.eq.s32.totalorder %s22, 1
    %p171 = por %p169, %p170
    %p172 = scmp.ne.s32.totalorder %s163, %s164
    %p173 = scmp.eq.s32.totalorder %s22, 0
    %p174 = por %p172, %p173
    %p175 = scmp.ne.s32.totalorder %s163, %s164
    %p176 = scmp.eq.s32.totalorder %s23, 1
    %p177 = por %p175, %p176
    %p179 = scmp.ne.s32.totalorder %s164, %s178
    %p180 = scmp.eq.s32.totalorder %s23, 0
    %p181 = por %p179, %p180
    %s182 = ssub.s32 %s17, %s24
    %p183 = scmp.eq.s32.totalorder %s182, 0
    %s185 = sadd.s32 %s184, 1
    %s186 = scalar_select %p183, %s184, %s185
    %p189 = pneg %p183
    %p190 = scmp.eq.s32.totalorder %s17, 1
    %p191 = por %p189, %p190
    %p192 = scmp.ne.s32.totalorder %s184, %s187
    %p193 = scmp.eq.s32.totalorder %s17, 0
    %p194 = por %p192, %p193
    %p195 = scmp.ne.s32.totalorder %s184, %s187
    %p196 = scmp.eq.s32.totalorder %s22, 1
    %p197 = por %p195, %p196
    %p198 = scmp.ne.s32.totalorder %s187, %s188
    %p199 = scmp.eq.s32.totalorder %s22, 0
    %p200 = por %p198, %p199
    %p201 = scmp.ne.s32.totalorder %s187, %s188
    %p202 = scmp.eq.s32.totalorder %s23, 1
    %p203 = por %p201, %p202
    %p205 = scmp.ne.s32.totalorder %s188, %s204
    %p206 = scmp.eq.s32.totalorder %s23, 0
    %p207 = por %p205, %p206
    %p208 = scmp.le.s32.totalorder 1, %s17
    %p209 = scmp.lt.s32.totalorder %s17, 3
    %p210 = pnand %p208, %p209
    %p211 = pneg %p210
    // Predicated region
    $region9: #{crnn_forward.11} parent=5 // pred_check
      _
    $region10: #{crnn_forward.11} parent=5 // pred_check_branch
      %213 = sbr.rel (%p210) target = $region12
    $region11: #{crnn_forward.11} parent=5 // pred_region
      %s214 = ssub.s32 %s17, 1
      // Predicated region
      $region13: #{crnn_forward.11} parent=11 // pred_check
        %p215 = pneg %p90
      $region14: #{crnn_forward.11} parent=11 // pred_check_branch
        %217 = sbr.rel (%p215) target = $region16
      $region15: #{crnn_forward.11} parent=11 // pred_region
        _
      $region16: #{crnn_forward.11} parent=11 // pred_fallthru
        _
      // Predicated region
      $region17: #{crnn_forward.11} parent=11 // pred_check
        %p218 = pneg %p111
      $region18: #{crnn_forward.11} parent=11 // pred_check_branch
        %220 = sbr.rel (%p218) target = $region20
      $region19: #{crnn_forward.11} parent=11 // pred_region
        _
      $region20: #{crnn_forward.11} parent=11 // pred_fallthru
        _
      // Predicated region
      $region21: #{crnn_forward.11} parent=11 // pred_check
        %p221 = pneg %p132
      $region22: #{crnn_forward.11} parent=11 // pred_check_branch
        %223 = sbr.rel (%p221) target = $region24
      $region23: #{crnn_forward.11} parent=11 // pred_region
        _
      $region24: #{crnn_forward.11} parent=11 // pred_fallthru
        _
      // Predicated region
      $region25: #{crnn_forward.11} parent=11 // pred_check
        %p224 = pneg %p153
      $region26: #{crnn_forward.11} parent=11 // pred_check_branch
        %226 = sbr.rel (%p224) target = $region28
      $region27: #{crnn_forward.11} parent=11 // pred_region
        _
      $region28: #{crnn_forward.11} parent=11 // pred_fallthru
        _
      // Predicated region
      $region29: #{crnn_forward.11} parent=11 // pred_check
        %p227 = pneg %p174
      $region30: #{crnn_forward.11} parent=11 // pred_check_branch
        %229 = sbr.rel (%p227) target = $region32
      $region31: #{crnn_forward.11} parent=11 // pred_region
        _
      $region32: #{crnn_forward.11} parent=11 // pred_fallthru
        _
    $region12: #{crnn_forward.11} parent=5 // pred_fallthru
      _
    %p230 = scmp.lt.s32.totalorder %s17, 2
    // Predicated region
    $region33: #{crnn_forward.11} parent=5 // pred_check
      %p231 = pneg %p230
    $region34: #{crnn_forward.11} parent=5 // pred_check_branch
      %233 = sbr.rel (%p231) target = $region36
    $region35: #{crnn_forward.11} parent=5 // pred_region
      // Predicated region
      $region37: #{crnn_forward.11} parent=35 // pred_check
        %p234 = pneg %p37
      $region38: #{crnn_forward.11} parent=35 // pred_check_branch
        %236 = sbr.rel (%p234) target = $region40
      $region39: #{crnn_forward.11} parent=35 // pred_region
        %p237 = scmp.lt.s32.totalorder %s17, 1
        %s238 = scalar_select %p237, %s17, 1
        %s239 = smul.addr %s238, 2
        %s240 = scalar_lea.vmem %s0, %s239
      $region40: #{crnn_forward.11} parent=35 // pred_fallthru
        _
      // Predicated region
      $region41: #{crnn_forward.11} parent=35 // pred_check
        %p241 = pneg %p63
      $region42: #{crnn_forward.11} parent=35 // pred_check_branch
        %243 = sbr.rel (%p241) target = $region44
      $region43: #{crnn_forward.11} parent=35 // pred_region
        %p244 = scmp.lt.s32.totalorder %s17, 1
        %s245 = scalar_select %p244, %s17, 1
        %s246 = smul.addr %s245, 2
        %s247 = scalar_lea.vmem %s1, %s246
      $region44: #{crnn_forward.11} parent=35 // pred_fallthru
        _
    $region36: #{crnn_forward.11} parent=5 // pred_fallthru
      _
    %p248 = scmp.le.s32.totalorder 1, %s17
    %p249 = scmp.lt.s32.totalorder %s17, 3
    %p250 = pnand %p248, %p249
    %p251 = pneg %p250
    // Predicated region
    $region45: #{crnn_forward.11} parent=5 // pred_check
      _
    $region46: #{crnn_forward.11} parent=5 // pred_check_branch
      %253 = sbr.rel (%p250) target = $region48
    $region47: #{crnn_forward.11} parent=5 // pred_region
      %s254 = ssub.s32 %s17, 1
      %p255 = scmp.lt.s32.totalorder %s22, 1
      %s256 = scalar_select %p255, %s22, 1
      %s257 = smul.addr %s256, 2
      %s258 = scalar_lea.vmem %s0, %s257
      %p259 = pneg %p43
      %p260 = pneg %p40
      %p261 = scmp.lt.s32.totalorder %s22, 1
      %s262 = scalar_select %p261, %s22, 1
      %s263 = smul.addr %s262, 2
      %s264 = scalar_lea.vmem %s1, %s263
      %p265 = pneg %p69
      %p266 = pneg %p66
      %p267 = pneg %p90
      %p268 = pneg %p87
      %p269 = pneg %p111
      %p270 = pneg %p108
      %p271 = pneg %p132
      %p272 = pneg %p129
      %p273 = pneg %p153
      %p274 = pneg %p150
      %p275 = pneg %p174
      %p276 = pneg %p171
      %p277 = pneg %p200
      %p278 = pneg %p197
      %p279 = scmp.lt.s32.totalorder %s22, 1
      %s280 = scalar_select %p279, %s22, 1
      %s281 = smul.addr %s280, 4
      %s282 = scalar_lea.vmem %s7, %s281
      %p283 = scmp.lt.s32.totalorder %s22, 1
      %s284 = scalar_select %p283, %s22, 1
      %s285 = smul.addr %s284, 2
      %s286 = scalar_lea.vmem %s0, %s285
      %p287 = scmp.lt.s32.totalorder %s22, 1
      %s288 = scalar_select %p287, %s22, 1
      %s289 = smul.addr %s288, 2
      %s290 = scalar_lea.vmem %s1, %s289
      %p291 = scmp.lt.s32.totalorder %s22, 1
      %s292 = scalar_select %p291, %s22, 1
      %s293 = smul.addr %s292, 4
      %s294 = scalar_lea.vmem %s7, %s293
      %v295 = vld [vmem:[%s286] sm:$0x3]
      %v296 = vunpack.c.l.bf16 %v295
      %v297 = vld [vmem:[%s2] sm:$0x1]
      %v299 = vperm.slane %v297, 0
      %v301 = vmul.f32 %v296, %v299
      %vm302 = vcmask 1043456
      %v303 = vsel %vm302, %v301, 0.0
      %304 = vadd.xlane.f32.xlu0 %v303
      %v305 = vpop.xlane.xlu0 %304
      %v306 = vld [vmem:[%s290] sm:$0x3]
      %v307 = vunpack.c.l.bf16 %v306
      %v308 = vld [vmem:[%s3] sm:$0x1]
      %v310 = vperm.slane %v308, 0
      %v312 = vmul.f32 %v307, %v310
      %v313 = vsel %vm302, %v312, 0.0
      %314 = vadd.xlane.f32.xlu0 %v313
      %v315 = vpop.xlane.xlu0 %314
      %v316 = vadd.f32 %v305, %v315
      %v317 = vld [vmem:[#allocation2] sm:$0x1]
      %v319 = vperm.slane %v317, 0
      %v321 = vadd.f32 %v316, %v319
      %v322 = vmax.f32 %v321, 0.0
      %v323 = vld [vmem:[%s5] sm:$0x1]
      %325 = vset.pattern.permute.xlu0 0
      %326 = vperm.xlu0 %325, %v322
      %v327 = vpop.permute.xlu0 %326
      %v330 = vperm.slane %v323, 0
      %v332 = vmul.f32 %v327, %v330
      %v333 = vld [vmem:[#allocation3] sm:$0x1]
      %v335 = vperm.slane %v333, 0
      %336 = vset.pattern.permute.xlu0 0
      %337 = vperm.xlu0 %336, %v335
      %v338 = vpop.permute.xlu0 %337
      %v340 = vadd.f32 %v332, %v338
      %vm341 = vcmask 27648
      %342 = vst.msk [vmem:[%s294] sm:$0xf] %vm341, %v340
      %p343 = scmp.lt.s32.totalorder %s22, 1
      %s344 = scalar_select %p343, %s22, 1
      %s345 = smul.addr %s344, 4
      %s346 = scalar_lea.vmem %s7, %s345
      // Predicated region
      $region49: #{crnn_forward.11} parent=47 // pred_check
        %p347 = pneg %p197
      $region50: #{crnn_forward.11} parent=47 // pred_check_branch
        %349 = sbr.rel (%p347) target = $region52
      $region51: #{crnn_forward.11} parent=47 // pred_region
        _
      $region52: #{crnn_forward.11} parent=47 // pred_fallthru
        _
    $region48: #{crnn_forward.11} parent=5 // pred_fallthru
      _
    %p350 = scmp.le.s32.totalorder 2, %s17
    // Predicated region
    $region53: #{crnn_forward.11} parent=5 // pred_check
      %p351 = pneg %p350
    $region54: #{crnn_forward.11} parent=5 // pred_check_branch
      %353 = sbr.rel (%p351) target = $region56
    $region55: #{crnn_forward.11} parent=5 // pred_region
      %s354 = ssub.s32 %s17, 2
      // Predicated region
      $region57: #{crnn_forward.11} parent=55 // pred_check
        %p355 = pneg %p203
      $region58: #{crnn_forward.11} parent=55 // pred_check_branch
        %357 = sbr.rel (%p355) target = $region60
      $region59: #{crnn_forward.11} parent=55 // pred_region
        %p358 = scmp.lt.s32.totalorder %s23, 1
        %s359 = scalar_select %p358, %s23, 1
        %s360 = smul.addr %s359, 4
        %s361 = scalar_lea.vmem %s7, %s360
      $region60: #{crnn_forward.11} parent=55 // pred_fallthru
        _
    $region56: #{crnn_forward.11} parent=5 // pred_fallthru
      _
  $region6: #{crnn_forward.11} parent=0 // loop_footer
    %s21 = sadd.s32 1, %s17
  $region7: #{crnn_forward.11} parent=0 // loop_footer_branch
    %16 = sbr.rel target = $region3
  $region8: #{crnn_forward.11} parent=0 // loop_exit
    _

// kernel: crnn_forward.9
$region0: #{crnn_forward.9}
  #allocation0 [shape = 'u32[]', space=smem, size = 0x4, offset = 0x4, fixed_abs, tag = 'smem constant byte address 0x4 - core index']
  #allocation1 [shape = 'u32[72,128]{1,0:T(1,128)}', space=vmem, size = 0x9000, scoped, tag = 'internal scratch']
  #allocation2 [shape = 'f32[2,256]{1,0:T(2,128)}', space=vmem, size = 0x800, scoped, tag = 'scratch operand']
  #allocation3 [shape = 'f32[2,128]{1,0:T(2,128)}', space=vmem, size = 0x400, scoped, tag = 'scratch operand']
  #allocation4 [shape = 'f32[2,128]{1,0:T(2,128)}', space=vmem, size = 0x400, scoped, tag = 'scratch operand']
  #allocation5 [shape = 'f32[2,4,512]{2,1,0:T(4,128)}', space=vmem, size = 0x4000, scoped, tag = 'scratch operand']
  #allocation6 [shape = 'f32[2,4,512]{2,1,0:T(4,128)}', space=vmem, size = 0x4000, scoped, tag = 'scratch operand']
  %s0 = inlined_call_operand.vmem [shape: bf16[2,4,128], index: 0, kind: input, shape index: {}, may-alias: {0,1}]
  %s1 = inlined_call_operand.vmem [shape: bf16[2,4,128], index: 1, kind: input, shape index: {}, may-alias: {0,1}]
  %s2 = inlined_call_operand.vmem [shape: bf16[128,512], index: 2, kind: input, shape index: {}]
  %s3 = inlined_call_operand.vmem [shape: bf16[128,512], index: 3, kind: input, shape index: {}]
  %s4 = inlined_call_operand.vmem [shape: bf16[256,1024], index: 4, kind: input, shape index: {}]
  %s5 = inlined_call_operand.vmem [shape: f32[1,512], index: 5, kind: input, shape index: {}]
  %s6 = inlined_call_operand.vmem [shape: f32[1,512], index: 6, kind: input, shape index: {}]
  %s7 = inlined_call_operand.vmem [shape: bf16[2,4,128], index: 7, kind: output, shape index: {0}]
  %s8 = inlined_call_operand.vmem [shape: bf16[2,4,128], index: 8, kind: output, shape index: {1}]
  %9 = xla_tuple %s7, %s8
  %s10 = sld [smem:[#allocation0]]
  $region50: #{crnn_forward.9} parent=0
    _
  %s12 = ssub.s32 1, %s10
  %s13 = scalar_select 0, %s12, %s10
  // Predicated region
  $region2: #{crnn_forward.9} parent=0 // pred_check
    _
  $region3: #{crnn_forward.9} parent=0 // pred_check_branch
    %15 = sbr.rel (0) target = $region5
  $region4: #{crnn_forward.9} parent=0 // pred_region
    _
  $region5: #{crnn_forward.9} parent=0 // pred_fallthru
    _
  // Predicated region
  $region6: #{crnn_forward.9} parent=0 // pred_check
    _
  $region7: #{crnn_forward.9} parent=0 // pred_check_branch
    %17 = sbr.rel (0) target = $region9
  $region8: #{crnn_forward.9} parent=0 // pred_region
    %s18 = ssub.s32 0, 0
    %p19 = scmp.lt.s32.totalorder %s18, 0
    %s20 = scalar_select %p19, %s18, 0
    %s21 = smul.addr %s20, 2
    %s22 = scalar_lea.vmem %s1, %s21
    %s23 = ssub.s32 0, 0
  $region9: #{crnn_forward.9} parent=0 // pred_fallthru
    _
  // Predicated region
  $region10: #{crnn_forward.9} parent=0 // pred_check
    _
  $region11: #{crnn_forward.9} parent=0 // pred_check_branch
    %25 = sbr.rel (0) target = $region13
  $region12: #{crnn_forward.9} parent=0 // pred_region
    _
  $region13: #{crnn_forward.9} parent=0 // pred_fallthru
    _
  // Predicated region
  $region14: #{crnn_forward.9} parent=0 // pred_check
    _
  $region15: #{crnn_forward.9} parent=0 // pred_check_branch
    %27 = sbr.rel (0) target = $region17
  $region16: #{crnn_forward.9} parent=0 // pred_region
    _
  $region17: #{crnn_forward.9} parent=0 // pred_fallthru
    _
  // Predicated region
  $region18: #{crnn_forward.9} parent=0 // pred_check
    _
  $region19: #{crnn_forward.9} parent=0 // pred_check_branch
    %29 = sbr.rel (0) target = $region21
  $region20: #{crnn_forward.9} parent=0 // pred_region
    _
  $region21: #{crnn_forward.9} parent=0 // pred_fallthru
    _
  // Predicated region
  $region22: #{crnn_forward.9} parent=0 // pred_check
    _
  $region23: #{crnn_forward.9} parent=0 // pred_check_branch
    %31 = sbr.rel (0) target = $region25
  $region24: #{crnn_forward.9} parent=0 // pred_region
    _
  $region25: #{crnn_forward.9} parent=0 // pred_fallthru
    _
  // Predicated region
  $region26: #{crnn_forward.9} parent=0 // pred_check
    _
  $region27: #{crnn_forward.9} parent=0 // pred_check_branch
    %33 = sbr.rel (0) target = $region29
  $region28: #{crnn_forward.9} parent=0 // pred_region
    _
  $region29: #{crnn_forward.9} parent=0 // pred_fallthru
    _
  %s34 = ssub.s32 0, 0
  %p35 = scmp.lt.s32.totalorder %s34, 0
  %s36 = scalar_select %p35, %s34, 0
  %s37 = smul.addr %s36, 2
  %s38 = scalar_lea.vmem %s1, %s37
  %s39 = ssub.s32 0, 0
  %p40 = scmp.lt.s32.totalorder %s39, 0
  %s41 = scalar_select %p40, %s39, 0
  %s42 = smul.addr %s41, 2
  %s43 = scalar_lea.vmem %s8, %s42
  %s44 = ssub.s32 0, 0
  %p45 = scmp.lt.s32.totalorder %s44, 0
  %s46 = scalar_select %p45, %s44, 0
  %s47 = smul.addr %s46, 2
  %s48 = scalar_lea.vmem %s1, %s47
  %s49 = ssub.s32 0, 0
  %s50 = ssub.s32 0, 0
  %p51 = scmp.lt.s32.totalorder %s50, 0
  %s52 = scalar_select %p51, %s50, 0
  %s53 = smul.addr %s52, 2
  %s54 = scalar_lea.vmem %s8, %s53
  %s55 = ssub.s32 0, 0
  %p56 = scmp.eq.s32.totalorder 0, 0
  // Predicated region
  $region30: #{crnn_forward.9} parent=0 // pred_check
    %p57 = pneg %p56
  $region31: #{crnn_forward.9} parent=0 // pred_check_branch
    %59 = sbr.rel (%p57) target = $region33
  $region32: #{crnn_forward.9} parent=0 // pred_region
    %60 = vst [vmem:[#allocation2] sm:$0xf] 0.0
    %61 = vst [vmem:[#allocation3] sm:$0x3] 0.0
    %62 = vst [vmem:[#allocation4] sm:$0x3] 0.0
  $region33: #{crnn_forward.9} parent=0 // pred_fallthru
    _
  %v63 = vld [vmem:[%s0] sm:$0x3]
  %v64 = vld [vmem:[%s0 + $0x2] sm:$0x3]
  %v65 = vld [vmem:[%s2] sm:$0xff]
  %v66 = vld [vmem:[%s2 + $0x8] sm:$0xff]
  %v67 = vld [vmem:[%s2 + $0x10] sm:$0xff]
  %v68 = vld [vmem:[%s2 + $0x18] sm:$0xff]
  %v69 = vld [vmem:[%s2 + $0x20] sm:$0xff]
  %v70 = vld [vmem:[%s2 + $0x28] sm:$0xff]
  %v71 = vld [vmem:[%s2 + $0x30] sm:$0xff]
  %v72 = vld [vmem:[%s2 + $0x38] sm:$0xff]
  %v73 = vld [vmem:[%s2 + $0x40] sm:$0xff]
  %v74 = vld [vmem:[%s2 + $0x48] sm:$0xff]
  %v75 = vld [vmem:[%s2 + $0x50] sm:$0xff]
  %v76 = vld [vmem:[%s2 + $0x58] sm:$0xff]
  %v77 = vld [vmem:[%s2 + $0x60] sm:$0xff]
  %v78 = vld [vmem:[%s2 + $0x68] sm:$0xff]
  %v79 = vld [vmem:[%s2 + $0x70] sm:$0xff]
  %v80 = vld [vmem:[%s2 + $0x78] sm:$0xff]
  %v81 = vld [vmem:[%s2 + $0x80] sm:$0xff]
  %v82 = vld [vmem:[%s2 + $0x88] sm:$0xff]
  %v83 = vld [vmem:[%s2 + $0x90] sm:$0xff]
  %v84 = vld [vmem:[%s2 + $0x98] sm:$0xff]
  %v85 = vld [vmem:[%s2 + $0xa0] sm:$0xff]
  %v86 = vld [vmem:[%s2 + $0xa8] sm:$0xff]
  %v87 = vld [vmem:[%s2 + $0xb0] sm:$0xff]
  %v88 = vld [vmem:[%s2 + $0xb8] sm:$0xff]
  %v89 = vld [vmem:[%s2 + $0xc0] sm:$0xff]
  %v90 = vld [vmem:[%s2 + $0xc8] sm:$0xff]
  %v91 = vld [vmem:[%s2 + $0xd0] sm:$0xff]
  %v92 = vld [vmem:[%s2 + $0xd8] sm:$0xff]
  %v93 = vld [vmem:[%s2 + $0xe0] sm:$0xff]
  %v94 = vld [vmem:[%s2 + $0xe8] sm:$0xff]
  %v95 = vld [vmem:[%s2 + $0xf0] sm:$0xff]
  %v96 = vld [vmem:[%s2 + $0xf8] sm:$0xff]
  %v97 = vld [vmem:[%s5] sm:$0xf]
  %v99 = vperm.slane %v97, 0
  %v100 = vperm.slane %v97, 1
  %v101 = vperm.slane %v97, 2
  %v102 = vperm.slane %v97, 3
  %v139 = vunpack.c.l.b16 %v65
  %v140 = vunpack.c.h.b16 %v65
  %v141 = vunpack.c.l.b16 %v66
  %v142 = vunpack.c.h.b16 %v66
  %v143 = vunpack.c.l.b16 %v67
  %v144 = vunpack.c.h.b16 %v67
  %v145 = vunpack.c.l.b16 %v68
  %v146 = vunpack.c.h.b16 %v68
  %v147 = vunpack.c.l.b16 %v69
  %v148 = vunpack.c.h.b16 %v69
  %v149 = vunpack.c.l.b16 %v70
  %v150 = vunpack.c.h.b16 %v70
  %v151 = vunpack.c.l.b16 %v71
  %v152 = vunpack.c.h.b16 %v71
  %v153 = vunpack.c.l.b16 %v72
  %v154 = vunpack.c.h.b16 %v72
  %v155 = vunpack.c.l.b16 %v73
  %v156 = vunpack.c.h.b16 %v73
  %v157 = vunpack.c.l.b16 %v74
  %v158 = vunpack.c.h.b16 %v74
  %v159 = vunpack.c.l.b16 %v75
  %v160 = vunpack.c.h.b16 %v75
  %v161 = vunpack.c.l.b16 %v76
  %v162 = vunpack.c.h.b16 %v76
  %v163 = vunpack.c.l.b16 %v77
  %v164 = vunpack.c.h.b16 %v77
  %v165 = vunpack.c.l.b16 %v78
  %v166 = vunpack.c.h.b16 %v78
  %v167 = vunpack.c.l.b16 %v79
  %v168 = vunpack.c.h.b16 %v79
  %v169 = vunpack.c.l.b16 %v80
  %v170 = vunpack.c.h.b16 %v80
  %v171 = vunpack.c.l.b16 %v81
  %v172 = vunpack.c.h.b16 %v81
  %v173 = vunpack.c.l.b16 %v82
  %v174 = vunpack.c.h.b16 %v82
  %v175 = vunpack.c.l.b16 %v83
  %v176 = vunpack.c.h.b16 %v83
  %v177 = vunpack.c.l.b16 %v84
  %v178 = vunpack.c.h.b16 %v84
  %v179 = vunpack.c.l.b16 %v85
  %v180 = vunpack.c.h.b16 %v85
  %v181 = vunpack.c.l.b16 %v86
  %v182 = vunpack.c.h.b16 %v86
  %v183 = vunpack.c.l.b16 %v87
  %v184 = vunpack.c.h.b16 %v87
  %v185 = vunpack.c.l.b16 %v88
  %v186 = vunpack.c.h.b16 %v88
  %v187 = vunpack.c.l.b16 %v89
  %v188 = vunpack.c.h.b16 %v89
  %v189 = vunpack.c.l.b16 %v90
  %v190 = vunpack.c.h.b16 %v90
  %v191 = vunpack.c.l.b16 %v91
  %v192 = vunpack.c.h.b16 %v91
  %v193 = vunpack.c.l.b16 %v92
  %v194 = vunpack.c.h.b16 %v92
  %v195 = vunpack.c.l.b16 %v93
  %v196 = vunpack.c.h.b16 %v93
  %v197 = vunpack.c.l.b16 %v94
  %v198 = vunpack.c.h.b16 %v94
  %v199 = vunpack.c.l.b16 %v95
  %v200 = vunpack.c.h.b16 %v95
  %v201 = vunpack.c.l.b16 %v96
  %v202 = vunpack.c.h.b16 %v96
  %v203 = vpack.c.b16 %v143, %v139
  %v204 = vpack.c.b16 %v144, %v140
  %v205 = vpack.c.b16 %v145, %v141
  %v206 = vpack.c.b16 %v146, %v142
  %v207 = vpack.c.b16 %v151, %v147
  %v208 = vpack.c.b16 %v152, %v148
  %v209 = vpack.c.b16 %v153, %v149
  %v210 = vpack.c.b16 %v154, %v150
  %v211 = vpack.c.b16 %v159, %v155
  %v212 = vpack.c.b16 %v160, %v156
  %v213 = vpack.c.b16 %v161, %v157
  %v214 = vpack.c.b16 %v162, %v158
  %v215 = vpack.c.b16 %v167, %v163
  %v216 = vpack.c.b16 %v168, %v164
  %v217 = vpack.c.b16 %v169, %v165
  %v218 = vpack.c.b16 %v170, %v166
  %v219 = vpack.c.b16 %v175, %v171
  %v220 = vpack.c.b16 %v176, %v172
  %v221 = vpack.c.b16 %v177, %v173
  %v222 = vpack.c.b16 %v178, %v174
  %v223 = vpack.c.b16 %v183, %v179
  %v224 = vpack.c.b16 %v184, %v180
  %v225 = vpack.c.b16 %v185, %v181
  %v226 = vpack.c.b16 %v186, %v182
  %v227 = vpack.c.b16 %v191, %v187
  %v228 = vpack.c.b16 %v192, %v188
  %v229 = vpack.c.b16 %v193, %v189
  %v230 = vpack.c.b16 %v194, %v190
  %v231 = vpack.c.b16 %v199, %v195
  %v232 = vpack.c.b16 %v200, %v196
  %v233 = vpack.c.b16 %v201, %v197
  %v234 = vpack.c.b16 %v202, %v198
  %267 = vmatpush.bf16.msra.mxu0 %v231
  %268 = vmatpush.bf16.msra.mxu0 %v227
  %269 = vmatpush.bf16.msra.mxu0 %v223
  %270 = vmatpush.bf16.msra.mxu0 %v219
  %271 = vmatpush.bf16.msra.mxu0 %v215
  %272 = vmatpush.bf16.msra.mxu0 %v211
  %273 = vmatpush.bf16.msra.mxu0 %v207
  %274 = vmatpush.bf16.msra.mxu0 %v203
  %275 = vmatmul.bf16.gmra.mxu0 %v63
  %v276 = vpop.f32.mrf.mxu0
  %v277 = vadd.f32 %v99, %v276
  %v278 = vpop.f32.mrf.mxu0
  %279 = vdwg.mxu0
  %280 = vmatpush.bf16.msra.mxu0 %v232
  %281 = vmatpush.bf16.msra.mxu0 %v228
  %282 = vmatpush.bf16.msra.mxu0 %v224
  %283 = vmatpush.bf16.msra.mxu0 %v220
  %284 = vmatpush.bf16.msra.mxu0 %v216
  %285 = vmatpush.bf16.msra.mxu0 %v212
  %286 = vmatpush.bf16.msra.mxu0 %v208
  %287 = vmatpush.bf16.msra.mxu0 %v204
  %288 = vmatmul.bf16.gmra.mxu0 %v63
  %v289 = vpop.f32.mrf.mxu0
  %v290 = vadd.f32 %v100, %v289
  %v291 = vpop.f32.mrf.mxu0
  %292 = vdwg.mxu0
  %293 = vmatpush.bf16.msra.mxu0 %v233
  %294 = vmatpush.bf16.msra.mxu0 %v229
  %295 = vmatpush.bf16.msra.mxu0 %v225
  %296 = vmatpush.bf16.msra.mxu0 %v221
  %297 = vmatpush.bf16.msra.mxu0 %v217
  %298 = vmatpush.bf16.msra.mxu0 %v213
  %299 = vmatpush.bf16.msra.mxu0 %v209
  %300 = vmatpush.bf16.msra.mxu0 %v205
  %301 = vmatmul.bf16.gmra.mxu0 %v63
  %v302 = vpop.f32.mrf.mxu0
  %v303 = vadd.f32 %v101, %v302
  %v304 = vpop.f32.mrf.mxu0
  %305 = vdwg.mxu0
  %306 = vmatpush.bf16.msra.mxu0 %v234
  %307 = vmatpush.bf16.msra.mxu0 %v230
  %308 = vmatpush.bf16.msra.mxu0 %v226
  %309 = vmatpush.bf16.msra.mxu0 %v222
  %310 = vmatpush.bf16.msra.mxu0 %v218
  %311 = vmatpush.bf16.msra.mxu0 %v214
  %312 = vmatpush.bf16.msra.mxu0 %v210
  %313 = vmatpush.bf16.msra.mxu0 %v206
  %314 = vmatmul.bf16.gmra.mxu0 %v63
  %v315 = vpop.f32.mrf.mxu0
  %v316 = vadd.f32 %v102, %v315
  %v317 = vpop.f32.mrf.mxu0
  %318 = vdwg.mxu0
  %v323 = vrot.slane %v290, 4
  %v324 = vrot.slane %v316, 4
  %vm325 = vcmask 1043456
  %v326 = vsel %vm325, %v277, %v323
  %v327 = vsel %vm325, %v303, %v324
  %330 = vst [vmem:[#allocation5] sm:$0xff] %v326
  %331 = vst [vmem:[#allocation5 + $0x8] sm:$0xff] %v327
  %332 = vmatpush.bf16.msra.mxu0 %v231
  %333 = vmatpush.bf16.msra.mxu0 %v227
  %334 = vmatpush.bf16.msra.mxu0 %v223
  %335 = vmatpush.bf16.msra.mxu0 %v219
  %336 = vmatpush.bf16.msra.mxu0 %v215
  %337 = vmatpush.bf16.msra.mxu0 %v211
  %338 = vmatpush.bf16.msra.mxu0 %v207
  %339 = vmatpush.bf16.msra.mxu0 %v203
  %340 = vmatmul.bf16.gmra.mxu0 %v64
  %v341 = vpop.f32.mrf.mxu0
  %v342 = vadd.f32 %v99, %v341
  %v343 = vpop.f32.mrf.mxu0
  %344 = vdwg.mxu0
  %345 = vmatpush.bf16.msra.mxu0 %v232
  %346 = vmatpush.bf16.msra.mxu0 %v228
  %347 = vmatpush.bf16.msra.mxu0 %v224
  %348 = vmatpush.bf16.msra.mxu0 %v220
  %349 = vmatpush.bf16.msra.mxu0 %v216
  %350 = vmatpush.bf16.msra.mxu0 %v212
  %351 = vmatpush.bf16.msra.mxu0 %v208
  %352 = vmatpush.bf16.msra.mxu0 %v204
  %353 = vmatmul.bf16.gmra.mxu0 %v64
  %v354 = vpop.f32.mrf.mxu0
  %v355 = vadd.f32 %v100, %v354
  %v356 = vpop.f32.mrf.mxu0
  %357 = vdwg.mxu0
  %358 = vmatpush.bf16.msra.mxu0 %v233
  %359 = vmatpush.bf16.msra.mxu0 %v229
  %360 = vmatpush.bf16.msra.mxu0 %v225
  %361 = vmatpush.bf16.msra.mxu0 %v221
  %362 = vmatpush.bf16.msra.mxu0 %v217
  %363 = vmatpush.bf16.msra.mxu0 %v213
  %364 = vmatpush.bf16.msra.mxu0 %v209
  %365 = vmatpush.bf16.msra.mxu0 %v205
  %366 = vmatmul.bf16.gmra.mxu0 %v64
  %v367 = vpop.f32.mrf.mxu0
  %v368 = vadd.f32 %v101, %v367
  %v369 = vpop.f32.mrf.mxu0
  %370 = vdwg.mxu0
  %371 = vmatpush.bf16.msra.mxu0 %v234
  %372 = vmatpush.bf16.msra.mxu0 %v230
  %373 = vmatpush.bf16.msra.mxu0 %v226
  %374 = vmatpush.bf16.msra.mxu0 %v222
  %375 = vmatpush.bf16.msra.mxu0 %v218
  %376 = vmatpush.bf16.msra.mxu0 %v214
  %377 = vmatpush.bf16.msra.mxu0 %v210
  %378 = vmatpush.bf16.msra.mxu0 %v206
  %379 = vmatmul.bf16.gmra.mxu0 %v64
  %v380 = vpop.f32.mrf.mxu0
  %v381 = vadd.f32 %v102, %v380
  %v382 = vpop.f32.mrf.mxu0
  %383 = vdwg.mxu0
  %v388 = vrot.slane %v355, 4
  %v389 = vrot.slane %v381, 4
  %v390 = vsel %vm325, %v342, %v388
  %v391 = vsel %vm325, %v368, %v389
  %s394 = scalar_lea.vmem [#allocation5], 16
  %395 = vst [vmem:[%s394] sm:$0xff] %v390
  %396 = vst [vmem:[%s394 + $0x8] sm:$0xff] %v391
  %v397 = vld [vmem:[%s48] sm:$0x3]
  %v398 = vld [vmem:[%s48 + $0x2] sm:$0x3]
  %v399 = vld [vmem:[%s3] sm:$0xff]
  %v400 = vld [vmem:[%s3 + $0x8] sm:$0xff]
  %v401 = vld [vmem:[%s3 + $0x10] sm:$0xff]
  %v402 = vld [vmem:[%s3 + $0x18] sm:$0xff]
  %v403 = vld [vmem:[%s3 + $0x20] sm:$0xff]
  %v404 = vld [vmem:[%s3 + $0x28] sm:$0xff]
  %v405 = vld [vmem:[%s3 + $0x30] sm:$0xff]
  %v406 = vld [vmem:[%s3 + $0x38] sm:$0xff]
  %v407 = vld [vmem:[%s3 + $0x40] sm:$0xff]
  %v408 = vld [vmem:[%s3 + $0x48] sm:$0xff]
  %v409 = vld [vmem:[%s3 + $0x50] sm:$0xff]
  %v410 = vld [vmem:[%s3 + $0x58] sm:$0xff]
  %v411 = vld [vmem:[%s3 + $0x60] sm:$0xff]
  %v412 = vld [vmem:[%s3 + $0x68] sm:$0xff]
  %v413 = vld [vmem:[%s3 + $0x70] sm:$0xff]
  %v414 = vld [vmem:[%s3 + $0x78] sm:$0xff]
  %v415 = vld [vmem:[%s3 + $0x80] sm:$0xff]
  %v416 = vld [vmem:[%s3 + $0x88] sm:$0xff]
  %v417 = vld [vmem:[%s3 + $0x90] sm:$0xff]
  %v418 = vld [vmem:[%s3 + $0x98] sm:$0xff]
  %v419 = vld [vmem:[%s3 + $0xa0] sm:$0xff]
  %v420 = vld [vmem:[%s3 + $0xa8] sm:$0xff]
  %v421 = vld [vmem:[%s3 + $0xb0] sm:$0xff]
  %v422 = vld [vmem:[%s3 + $0xb8] sm:$0xff]
  %v423 = vld [vmem:[%s3 + $0xc0] sm:$0xff]
  %v424 = vld [vmem:[%s3 + $0xc8] sm:$0xff]
  %v425 = vld [vmem:[%s3 + $0xd0] sm:$0xff]
  %v426 = vld [vmem:[%s3 + $0xd8] sm:$0xff]
  %v427 = vld [vmem:[%s3 + $0xe0] sm:$0xff]
  %v428 = vld [vmem:[%s3 + $0xe8] sm:$0xff]
  %v429 = vld [vmem:[%s3 + $0xf0] sm:$0xff]
  %v430 = vld [vmem:[%s3 + $0xf8] sm:$0xff]
  %v431 = vld [vmem:[%s6] sm:$0xf]
  %v433 = vperm.slane %v431, 0
  %v434 = vperm.slane %v431, 1
  %v435 = vperm.slane %v431, 2
  %v436 = vperm.slane %v431, 3
  %v473 = vunpack.c.l.b16 %v399
  %v474 = vunpack.c.h.b16 %v399
  %v475 = vunpack.c.l.b16 %v400
  %v476 = vunpack.c.h.b16 %v400
  %v477 = vunpack.c.l.b16 %v401
  %v478 = vunpack.c.h.b16 %v401
  %v479 = vunpack.c.l.b16 %v402
  %v480 = vunpack.c.h.b16 %v402
  %v481 = vunpack.c.l.b16 %v403
  %v482 = vunpack.c.h.b16 %v403
  %v483 = vunpack.c.l.b16 %v404
  %v484 = vunpack.c.h.b16 %v404
  %v485 = vunpack.c.l.b16 %v405
  %v486 = vunpack.c.h.b16 %v405
  %v487 = vunpack.c.l.b16 %v406
  %v488 = vunpack.c.h.b16 %v406
  %v489 = vunpack.c.l.b16 %v407
  %v490 = vunpack.c.h.b16 %v407
  %v491 = vunpack.c.l.b16 %v408
  %v492 = vunpack.c.h.b16 %v408
  %v493 = vunpack.c.l.b16 %v409
  %v494 = vunpack.c.h.b16 %v409
  %v495 = vunpack.c.l.b16 %v410
  %v496 = vunpack.c.h.b16 %v410
  %v497 = vunpack.c.l.b16 %v411
  %v498 = vunpack.c.h.b16 %v411
  %v499 = vunpack.c.l.b16 %v412
  %v500 = vunpack.c.h.b16 %v412
  %v501 = vunpack.c.l.b16 %v413
  %v502 = vunpack.c.h.b16 %v413
  %v503 = vunpack.c.l.b16 %v414
  %v504 = vunpack.c.h.b16 %v414
  %v505 = vunpack.c.l.b16 %v415
  %v506 = vunpack.c.h.b16 %v415
  %v507 = vunpack.c.l.b16 %v416
  %v508 = vunpack.c.h.b16 %v416
  %v509 = vunpack.c.l.b16 %v417
  %v510 = vunpack.c.h.b16 %v417
  %v511 = vunpack.c.l.b16 %v418
  %v512 = vunpack.c.h.b16 %v418
  %v513 = vunpack.c.l.b16 %v419
  %v514 = vunpack.c.h.b16 %v419
  %v515 = vunpack.c.l.b16 %v420
  %v516 = vunpack.c.h.b16 %v420
  %v517 = vunpack.c.l.b16 %v421
  %v518 = vunpack.c.h.b16 %v421
  %v519 = vunpack.c.l.b16 %v422
  %v520 = vunpack.c.h.b16 %v422
  %v521 = vunpack.c.l.b16 %v423
  %v522 = vunpack.c.h.b16 %v423
  %v523 = vunpack.c.l.b16 %v424
  %v524 = vunpack.c.h.b16 %v424
  %v525 = vunpack.c.l.b16 %v425
  %v526 = vunpack.c.h.b16 %v425
  %v527 = vunpack.c.l.b16 %v426
  %v528 = vunpack.c.h.b16 %v426
  %v529 = vunpack.c.l.b16 %v427
  %v530 = vunpack.c.h.b16 %v427
  %v531 = vunpack.c.l.b16 %v428
  %v532 = vunpack.c.h.b16 %v428
  %v533 = vunpack.c.l.b16 %v429
  %v534 = vunpack.c.h.b16 %v429
  %v535 = vunpack.c.l.b16 %v430
  %v536 = vunpack.c.h.b16 %v430
  %v537 = vpack.c.b16 %v477, %v473
  %v538 = vpack.c.b16 %v478, %v474
  %v539 = vpack.c.b16 %v479, %v475
  %v540 = vpack.c.b16 %v480, %v476
  %v541 = vpack.c.b16 %v485, %v481
  %v542 = vpack.c.b16 %v486, %v482
  %v543 = vpack.c.b16 %v487, %v483
  %v544 = vpack.c.b16 %v488, %v484
  %v545 = vpack.c.b16 %v493, %v489
  %v546 = vpack.c.b16 %v494, %v490
  %v547 = vpack.c.b16 %v495, %v491
  %v548 = vpack.c.b16 %v496, %v492
  %v549 = vpack.c.b16 %v501, %v497
  %v550 = vpack.c.b16 %v502, %v498
  %v551 = vpack.c.b16 %v503, %v499
  %v552 = vpack.c.b16 %v504, %v500
  %v553 = vpack.c.b16 %v509, %v505
  %v554 = vpack.c.b16 %v510, %v506
  %v555 = vpack.c.b16 %v511, %v507
  %v556 = vpack.c.b16 %v512, %v508
  %v557 = vpack.c.b16 %v517, %v513
  %v558 = vpack.c.b16 %v518, %v514
  %v559 = vpack.c.b16 %v519, %v515
  %v560 = vpack.c.b16 %v520, %v516
  %v561 = vpack.c.b16 %v525, %v521
  %v562 = vpack.c.b16 %v526, %v522
  %v563 = vpack.c.b16 %v527, %v523
  %v564 = vpack.c.b16 %v528, %v524
  %v565 = vpack.c.b16 %v533, %v529
  %v566 = vpack.c.b16 %v534, %v530
  %v567 = vpack.c.b16 %v535, %v531
  %v568 = vpack.c.b16 %v536, %v532
  %601 = vmatpush.bf16.msra.mxu0 %v565
  %602 = vmatpush.bf16.msra.mxu0 %v561
  %603 = vmatpush.bf16.msra.mxu0 %v557
  %604 = vmatpush.bf16.msra.mxu0 %v553
  %605 = vmatpush.bf16.msra.mxu0 %v549
  %606 = vmatpush.bf16.msra.mxu0 %v545
  %607 = vmatpush.bf16.msra.mxu0 %v541
  %608 = vmatpush.bf16.msra.mxu0 %v537
  %609 = vmatmul.bf16.gmra.mxu0 %v397
  %v610 = vpop.f32.mrf.mxu0
  %v611 = vadd.f32 %v433, %v610
  %v612 = vpop.f32.mrf.mxu0
  %613 = vdwg.mxu0
  %614 = vmatpush.bf16.msra.mxu0 %v566
  %615 = vmatpush.bf16.msra.mxu0 %v562
  %616 = vmatpush.bf16.msra.mxu0 %v558
  %617 = vmatpush.bf16.msra.mxu0 %v554
  %618 = vmatpush.bf16.msra.mxu0 %v550
  %619 = vmatpush.bf16.msra.mxu0 %v546
  %620 = vmatpush.bf16.msra.mxu0 %v542
  %621 = vmatpush.bf16.msra.mxu0 %v538
  %622 = vmatmul.bf16.gmra.mxu0 %v397
  %v623 = vpop.f32.mrf.mxu0
  %v624 = vadd.f32 %v434, %v623
  %v625 = vpop.f32.mrf.mxu0
  %626 = vdwg.mxu0
  %627 = vmatpush.bf16.msra.mxu0 %v567
  %628 = vmatpush.bf16.msra.mxu0 %v563
  %629 = vmatpush.bf16.msra.mxu0 %v559
  %630 = vmatpush.bf16.msra.mxu0 %v555
  %631 = vmatpush.bf16.msra.mxu0 %v551
  %632 = vmatpush.bf16.msra.mxu0 %v547
  %633 = vmatpush.bf16.msra.mxu0 %v543
  %634 = vmatpush.bf16.msra.mxu0 %v539
  %635 = vmatmul.bf16.gmra.mxu0 %v397
  %v636 = vpop.f32.mrf.mxu0
  %v637 = vadd.f32 %v435, %v636
  %v638 = vpop.f32.mrf.mxu0
  %639 = vdwg.mxu0
  %640 = vmatpush.bf16.msra.mxu0 %v568
  %641 = vmatpush.bf16.msra.mxu0 %v564
  %642 = vmatpush.bf16.msra.mxu0 %v560
  %643 = vmatpush.bf16.msra.mxu0 %v556
  %644 = vmatpush.bf16.msra.mxu0 %v552
  %645 = vmatpush.bf16.msra.mxu0 %v548
  %646 = vmatpush.bf16.msra.mxu0 %v544
  %647 = vmatpush.bf16.msra.mxu0 %v540
  %648 = vmatmul.bf16.gmra.mxu0 %v397
  %v649 = vpop.f32.mrf.mxu0
  %v650 = vadd.f32 %v436, %v649
  %v651 = vpop.f32.mrf.mxu0
  %652 = vdwg.mxu0
  %v657 = vrot.slane %v624, 4
  %v658 = vrot.slane %v650, 4
  %v659 = vsel %vm325, %v611, %v657
  %v660 = vsel %vm325, %v637, %v658
  %663 = vst [vmem:[#allocation6] sm:$0xff] %v659
  %664 = vst [vmem:[#allocation6 + $0x8] sm:$0xff] %v660
  %665 = vmatpush.bf16.msra.mxu0 %v565
  %666 = vmatpush.bf16.msra.mxu0 %v561
  %667 = vmatpush.bf16.msra.mxu0 %v557
  %668 = vmatpush.bf16.msra.mxu0 %v553
  %669 = vmatpush.bf16.msra.mxu0 %v549
  %670 = vmatpush.bf16.msra.mxu0 %v545
  %671 = vmatpush.bf16.msra.mxu0 %v541
  %672 = vmatpush.bf16.msra.mxu0 %v537
  %673 = vmatmul.bf16.gmra.mxu0 %v398
  %v674 = vpop.f32.mrf.mxu0
  %v675 = vadd.f32 %v433, %v674
  %v676 = vpop.f32.mrf.mxu0
  %677 = vdwg.mxu0
  %678 = vmatpush.bf16.msra.mxu0 %v566
  %679 = vmatpush.bf16.msra.mxu0 %v562
  %680 = vmatpush.bf16.msra.mxu0 %v558
  %681 = vmatpush.bf16.msra.mxu0 %v554
  %682 = vmatpush.bf16.msra.mxu0 %v550
  %683 = vmatpush.bf16.msra.mxu0 %v546
  %684 = vmatpush.bf16.msra.mxu0 %v542
  %685 = vmatpush.bf16.msra.mxu0 %v538
  %686 = vmatmul.bf16.gmra.mxu0 %v398
  %v687 = vpop.f32.mrf.mxu0
  %v688 = vadd.f32 %v434, %v687
  %v689 = vpop.f32.mrf.mxu0
  %690 = vdwg.mxu0
  %691 = vmatpush.bf16.msra.mxu0 %v567
  %692 = vmatpush.bf16.msra.mxu0 %v563
  %693 = vmatpush.bf16.msra.mxu0 %v559
  %694 = vmatpush.bf16.msra.mxu0 %v555
  %695 = vmatpush.bf16.msra.mxu0 %v551
  %696 = vmatpush.bf16.msra.mxu0 %v547
  %697 = vmatpush.bf16.msra.mxu0 %v543
  %698 = vmatpush.bf16.msra.mxu0 %v539
  %699 = vmatmul.bf16.gmra.mxu0 %v398
  %v700 = vpop.f32.mrf.mxu0
  %v701 = vadd.f32 %v435, %v700
  %v702 = vpop.f32.mrf.mxu0
  %703 = vdwg.mxu0
  %704 = vmatpush.bf16.msra.mxu0 %v568
  %705 = vmatpush.bf16.msra.mxu0 %v564
  %706 = vmatpush.bf16.msra.mxu0 %v560
  %707 = vmatpush.bf16.msra.mxu0 %v556
  %708 = vmatpush.bf16.msra.mxu0 %v552
  %709 = vmatpush.bf16.msra.mxu0 %v548
  %710 = vmatpush.bf16.msra.mxu0 %v544
  %711 = vmatpush.bf16.msra.mxu0 %v540
  %712 = vmatmul.bf16.gmra.mxu0 %v398
  %v713 = vpop.f32.mrf.mxu0
  %v714 = vadd.f32 %v436, %v713
  %v715 = vpop.f32.mrf.mxu0
  %716 = vdwg.mxu0
  %v721 = vrot.slane %v688, 4
  %v722 = vrot.slane %v714, 4
  %v723 = vsel %vm325, %v675, %v721
  %v724 = vsel %vm325, %v701, %v722
  %s727 = scalar_lea.vmem [#allocation6], 16
  %728 = vst [vmem:[%s727] sm:$0xff] %v723
  %729 = vst [vmem:[%s727 + $0x8] sm:$0xff] %v724
  %v730 = vld [vmem:[%s4] sm:$0xff]
  %v731 = vld [vmem:[%s4 + $0x8] sm:$0xff]
  %v732 = vld [vmem:[%s4 + $0x10] sm:$0xff]
  %v733 = vld [vmem:[%s4 + $0x18] sm:$0xff]
  %v734 = vld [vmem:[%s4 + $0x20] sm:$0xff]
  %v735 = vld [vmem:[%s4 + $0x28] sm:$0xff]
  %v736 = vld [vmem:[%s4 + $0x30] sm:$0xff]
  %v737 = vld [vmem:[%s4 + $0x38] sm:$0xff]
  %v738 = vld [vmem:[%s4 + $0x40] sm:$0xff]
  %v739 = vld [vmem:[%s4 + $0x48] sm:$0xff]
  %v740 = vld [vmem:[%s4 + $0x50] sm:$0xff]
  %v741 = vld [vmem:[%s4 + $0x58] sm:$0xff]
  %v742 = vld [vmem:[%s4 + $0x60] sm:$0xff]
  %v743 = vld [vmem:[%s4 + $0x68] sm:$0xff]
  %v744 = vld [vmem:[%s4 + $0x70] sm:$0xff]
  %v745 = vld [vmem:[%s4 + $0x78] sm:$0xff]
  %v746 = vld [vmem:[%s4 + $0x80] sm:$0xff]
  %v747 = vld [vmem:[%s4 + $0x88] sm:$0xff]
  %v748 = vld [vmem:[%s4 + $0x90] sm:$0xff]
  %v749 = vld [vmem:[%s4 + $0x98] sm:$0xff]
  %v750 = vld [vmem:[%s4 + $0xa0] sm:$0xff]
  %v751 = vld [vmem:[%s4 + $0xa8] sm:$0xff]
  %v752 = vld [vmem:[%s4 + $0xb0] sm:$0xff]
  %v753 = vld [vmem:[%s4 + $0xb8] sm:$0xff]
  %v754 = vld [vmem:[%s4 + $0xc0] sm:$0xff]
  %v755 = vld [vmem:[%s4 + $0xc8] sm:$0xff]
  %v756 = vld [vmem:[%s4 + $0xd0] sm:$0xff]
  %v757 = vld [vmem:[%s4 + $0xd8] sm:$0xff]
  %v758 = vld [vmem:[%s4 + $0xe0] sm:$0xff]
  %v759 = vld [vmem:[%s4 + $0xe8] sm:$0xff]
  %v760 = vld [vmem:[%s4 + $0xf0] sm:$0xff]
  %v761 = vld [vmem:[%s4 + $0xf8] sm:$0xff]
  %v762 = vld [vmem:[%s4 + $0x100] sm:$0xff]
  %v763 = vld [vmem:[%s4 + $0x108] sm:$0xff]
  %v764 = vld [vmem:[%s4 + $0x110] sm:$0xff]
  %v765 = vld [vmem:[%s4 + $0x118] sm:$0xff]
  %v766 = vld [vmem:[%s4 + $0x120] sm:$0xff]
  %v767 = vld [vmem:[%s4 + $0x128] sm:$0xff]
  %v768 = vld [vmem:[%s4 + $0x130] sm:$0xff]
  %v769 = vld [vmem:[%s4 + $0x138] sm:$0xff]
  %v770 = vld [vmem:[%s4 + $0x140] sm:$0xff]
  %v771 = vld [vmem:[%s4 + $0x148] sm:$0xff]
  %v772 = vld [vmem:[%s4 + $0x150] sm:$0xff]
  %v773 = vld [vmem:[%s4 + $0x158] sm:$0xff]
  %v774 = vld [vmem:[%s4 + $0x160] sm:$0xff]
  %v775 = vld [vmem:[%s4 + $0x168] sm:$0xff]
  %v776 = vld [vmem:[%s4 + $0x170] sm:$0xff]
  %v777 = vld [vmem:[%s4 + $0x178] sm:$0xff]
  %v778 = vld [vmem:[%s4 + $0x180] sm:$0xff]
  %v779 = vld [vmem:[%s4 + $0x188] sm:$0xff]
  %v780 = vld [vmem:[%s4 + $0x190] sm:$0xff]
  %v781 = vld [vmem:[%s4 + $0x198] sm:$0xff]
  %v782 = vld [vmem:[%s4 + $0x1a0] sm:$0xff]
  %v783 = vld [vmem:[%s4 + $0x1a8] sm:$0xff]
  %v784 = vld [vmem:[%s4 + $0x1b0] sm:$0xff]
  %v785 = vld [vmem:[%s4 + $0x1b8] sm:$0xff]
  %v786 = vld [vmem:[%s4 + $0x1c0] sm:$0xff]
  %v787 = vld [vmem:[%s4 + $0x1c8] sm:$0xff]
  %v788 = vld [vmem:[%s4 + $0x1d0] sm:$0xff]
  %v789 = vld [vmem:[%s4 + $0x1d8] sm:$0xff]
  %v790 = vld [vmem:[%s4 + $0x1e0] sm:$0xff]
  %v791 = vld [vmem:[%s4 + $0x1e8] sm:$0xff]
  %v792 = vld [vmem:[%s4 + $0x1f0] sm:$0xff]
  %v793 = vld [vmem:[%s4 + $0x1f8] sm:$0xff]
  %v794 = vld [vmem:[%s4 + $0x200] sm:$0xff]
  %v795 = vld [vmem:[%s4 + $0x208] sm:$0xff]
  %v796 = vld [vmem:[%s4 + $0x210] sm:$0xff]
  %v797 = vld [vmem:[%s4 + $0x218] sm:$0xff]
  %v798 = vld [vmem:[%s4 + $0x220] sm:$0xff]
  %v799 = vld [vmem:[%s4 + $0x228] sm:$0xff]
  %v800 = vld [vmem:[%s4 + $0x230] sm:$0xff]
  %v801 = vld [vmem:[%s4 + $0x238] sm:$0xff]
  %v802 = vld [vmem:[%s4 + $0x240] sm:$0xff]
  %v803 = vld [vmem:[%s4 + $0x248] sm:$0xff]
  %v804 = vld [vmem:[%s4 + $0x250] sm:$0xff]
  %v805 = vld [vmem:[%s4 + $0x258] sm:$0xff]
  %v806 = vld [vmem:[%s4 + $0x260] sm:$0xff]
  %v807 = vld [vmem:[%s4 + $0x268] sm:$0xff]
  %v808 = vld [vmem:[%s4 + $0x270] sm:$0xff]
  %v809 = vld [vmem:[%s4 + $0x278] sm:$0xff]
  %v810 = vld [vmem:[%s4 + $0x280] sm:$0xff]
  %v811 = vld [vmem:[%s4 + $0x288] sm:$0xff]
  %v812 = vld [vmem:[%s4 + $0x290] sm:$0xff]
  %v813 = vld [vmem:[%s4 + $0x298] sm:$0xff]
  %v814 = vld [vmem:[%s4 + $0x2a0] sm:$0xff]
  %v815 = vld [vmem:[%s4 + $0x2a8] sm:$0xff]
  %v816 = vld [vmem:[%s4 + $0x2b0] sm:$0xff]
  %v817 = vld [vmem:[%s4 + $0x2b8] sm:$0xff]
  %v818 = vld [vmem:[%s4 + $0x2c0] sm:$0xff]
  %v819 = vld [vmem:[%s4 + $0x2c8] sm:$0xff]
  %v820 = vld [vmem:[%s4 + $0x2d0] sm:$0xff]
  %v821 = vld [vmem:[%s4 + $0x2d8] sm:$0xff]
  %v822 = vld [vmem:[%s4 + $0x2e0] sm:$0xff]
  %v823 = vld [vmem:[%s4 + $0x2e8] sm:$0xff]
  %v824 = vld [vmem:[%s4 + $0x2f0] sm:$0xff]
  %v825 = vld [vmem:[%s4 + $0x2f8] sm:$0xff]
  %v826 = vld [vmem:[%s4 + $0x300] sm:$0xff]
  %v827 = vld [vmem:[%s4 + $0x308] sm:$0xff]
  %v828 = vld [vmem:[%s4 + $0x310] sm:$0xff]
  %v829 = vld [vmem:[%s4 + $0x318] sm:$0xff]
  %v830 = vld [vmem:[%s4 + $0x320] sm:$0xff]
  %v831 = vld [vmem:[%s4 + $0x328] sm:$0xff]
  %v832 = vld [vmem:[%s4 + $0x330] sm:$0xff]
  %v833 = vld [vmem:[%s4 + $0x338] sm:$0xff]
  %v834 = vld [vmem:[%s4 + $0x340] sm:$0xff]
  %v835 = vld [vmem:[%s4 + $0x348] sm:$0xff]
  %v836 = vld [vmem:[%s4 + $0x350] sm:$0xff]
  %v837 = vld [vmem:[%s4 + $0x358] sm:$0xff]
  %v838 = vld [vmem:[%s4 + $0x360] sm:$0xff]
  %v839 = vld [vmem:[%s4 + $0x368] sm:$0xff]
  %v840 = vld [vmem:[%s4 + $0x370] sm:$0xff]
  %v841 = vld [vmem:[%s4 + $0x378] sm:$0xff]
  %v842 = vld [vmem:[%s4 + $0x380] sm:$0xff]
  %v843 = vld [vmem:[%s4 + $0x388] sm:$0xff]
  %v844 = vld [vmem:[%s4 + $0x390] sm:$0xff]
  %v845 = vld [vmem:[%s4 + $0x398] sm:$0xff]
  %v846 = vld [vmem:[%s4 + $0x3a0] sm:$0xff]
  %v847 = vld [vmem:[%s4 + $0x3a8] sm:$0xff]
  %v848 = vld [vmem:[%s4 + $0x3b0] sm:$0xff]
  %v849 = vld [vmem:[%s4 + $0x3b8] sm:$0xff]
  %v850 = vld [vmem:[%s4 + $0x3c0] sm:$0xff]
  %v851 = vld [vmem:[%s4 + $0x3c8] sm:$0xff]
  %v852 = vld [vmem:[%s4 + $0x3d0] sm:$0xff]
  %v853 = vld [vmem:[%s4 + $0x3d8] sm:$0xff]
  %v854 = vld [vmem:[%s4 + $0x3e0] sm:$0xff]
  %v855 = vld [vmem:[%s4 + $0x3e8] sm:$0xff]
  %v856 = vld [vmem:[%s4 + $0x3f0] sm:$0xff]
  %v857 = vld [vmem:[%s4 + $0x3f8] sm:$0xff]
  %v858 = vld [vmem:[#allocation2] sm:$0xf]
  %v859 = vld [vmem:[#allocation3] sm:$0x3]
  %v860 = vld [vmem:[#allocation4] sm:$0x3]
  %862 = vst [vmem:[#allocation1] ss:$4 sm:$0xff] %v858
  %v863 = vld.sshfl [vmem:[#allocation1] sm:$0xff pattern:$0x73625140]
  %v864 = vld.sshfl [vmem:[#allocation1 + $0x8] sm:$0xff pattern:$0x73625140]
  %v867 = vpack.c.bf16 %v863, %v863
  %v868 = vpack.c.bf16 %v864, %v864
  %v997 = vunpack.c.l.b16 %v730
  %v998 = vunpack.c.h.b16 %v730
  %v999 = vunpack.c.l.b16 %v731
  %v1000 = vunpack.c.h.b16 %v731
  %v1001 = vunpack.c.l.b16 %v732
  %v1002 = vunpack.c.h.b16 %v732
  %v1003 = vunpack.c.l.b16 %v733
  %v1004 = vunpack.c.h.b16 %v733
  %v1005 = vunpack.c.l.b16 %v734
  %v1006 = vunpack.c.h.b16 %v734
  %v1007 = vunpack.c.l.b16 %v735
  %v1008 = vunpack.c.h.b16 %v735
  %v1009 = vunpack.c.l.b16 %v736
  %v1010 = vunpack.c.h.b16 %v736
  %v1011 = vunpack.c.l.b16 %v737
  %v1012 = vunpack.c.h.b16 %v737
  %v1013 = vunpack.c.l.b16 %v738
  %v1014 = vunpack.c.h.b16 %v738
  %v1015 = vunpack.c.l.b16 %v739
  %v1016 = vunpack.c.h.b16 %v739
  %v1017 = vunpack.c.l.b16 %v740
  %v1018 = vunpack.c.h.b16 %v740
  %v1019 = vunpack.c.l.b16 %v741
  %v1020 = vunpack.c.h.b16 %v741
  %v1021 = vunpack.c.l.b16 %v742
  %v1022 = vunpack.c.h.b16 %v742
  %v1023 = vunpack.c.l.b16 %v743
  %v1024 = vunpack.c.h.b16 %v743
  %v1025 = vunpack.c.l.b16 %v744
  %v1026 = vunpack.c.h.b16 %v744
  %v1027 = vunpack.c.l.b16 %v745
  %v1028 = vunpack.c.h.b16 %v745
  %v1029 = vunpack.c.l.b16 %v746
  %v1030 = vunpack.c.h.b16 %v746
  %v1031 = vunpack.c.l.b16 %v747
  %v1032 = vunpack.c.h.b16 %v747
  %v1033 = vunpack.c.l.b16 %v748
  %v1034 = vunpack.c.h.b16 %v748
  %v1035 = vunpack.c.l.b16 %v749
  %v1036 = vunpack.c.h.b16 %v749
  %v1037 = vunpack.c.l.b16 %v750
  %v1038 = vunpack.c.h.b16 %v750
  %v1039 = vunpack.c.l.b16 %v751
  %v1040 = vunpack.c.h.b16 %v751
  %v1041 = vunpack.c.l.b16 %v752
  %v1042 = vunpack.c.h.b16 %v752
  %v1043 = vunpack.c.l.b16 %v753
  %v1044 = vunpack.c.h.b16 %v753
  %v1045 = vunpack.c.l.b16 %v754
  %v1046 = vunpack.c.h.b16 %v754
  %v1047 = vunpack.c.l.b16 %v755
  %v1048 = vunpack.c.h.b16 %v755
  %v1049 = vunpack.c.l.b16 %v756
  %v1050 = vunpack.c.h.b16 %v756
  %v1051 = vunpack.c.l.b16 %v757
  %v1052 = vunpack.c.h.b16 %v757
  %v1053 = vunpack.c.l.b16 %v758
  %v1054 = vunpack.c.h.b16 %v758
  %v1055 = vunpack.c.l.b16 %v759
  %v1056 = vunpack.c.h.b16 %v759
  %v1057 = vunpack.c.l.b16 %v760
  %v1058 = vunpack.c.h.b16 %v760
  %v1059 = vunpack.c.l.b16 %v761
  %v1060 = vunpack.c.h.b16 %v761
  %v1061 = vunpack.c.l.b16 %v762
  %v1062 = vunpack.c.h.b16 %v762
  %v1063 = vunpack.c.l.b16 %v763
  %v1064 = vunpack.c.h.b16 %v763
  %v1065 = vunpack.c.l.b16 %v764
  %v1066 = vunpack.c.h.b16 %v764
  %v1067 = vunpack.c.l.b16 %v765
  %v1068 = vunpack.c.h.b16 %v765
  %v1069 = vunpack.c.l.b16 %v766
  %v1070 = vunpack.c.h.b16 %v766
  %v1071 = vunpack.c.l.b16 %v767
  %v1072 = vunpack.c.h.b16 %v767
  %v1073 = vunpack.c.l.b16 %v768
  %v1074 = vunpack.c.h.b16 %v768
  %v1075 = vunpack.c.l.b16 %v769
  %v1076 = vunpack.c.h.b16 %v769
  %v1077 = vunpack.c.l.b16 %v770
  %v1078 = vunpack.c.h.b16 %v770
  %v1079 = vunpack.c.l.b16 %v771
  %v1080 = vunpack.c.h.b16 %v771
  %v1081 = vunpack.c.l.b16 %v772
  %v1082 = vunpack.c.h.b16 %v772
  %v1083 = vunpack.c.l.b16 %v773
  %v1084 = vunpack.c.h.b16 %v773
  %v1085 = vunpack.c.l.b16 %v774
  %v1086 = vunpack.c.h.b16 %v774
  %v1087 = vunpack.c.l.b16 %v775
  %v1088 = vunpack.c.h.b16 %v775
  %v1089 = vunpack.c.l.b16 %v776
  %v1090 = vunpack.c.h.b16 %v776
  %v1091 = vunpack.c.l.b16 %v777
  %v1092 = vunpack.c.h.b16 %v777
  %v1093 = vunpack.c.l.b16 %v778
  %v1094 = vunpack.c.h.b16 %v778
  %v1095 = vunpack.c.l.b16 %v779
  %v1096 = vunpack.c.h.b16 %v779
  %v1097 = vunpack.c.l.b16 %v780
  %v1098 = vunpack.c.h.b16 %v780
  %v1099 = vunpack.c.l.b16 %v781
  %v1100 = vunpack.c.h.b16 %v781
  %v1101 = vunpack.c.l.b16 %v782
  %v1102 = vunpack.c.h.b16 %v782
  %v1103 = vunpack.c.l.b16 %v783
  %v1104 = vunpack.c.h.b16 %v783
  %v1105 = vunpack.c.l.b16 %v784
  %v1106 = vunpack.c.h.b16 %v784
  %v1107 = vunpack.c.l.b16 %v785
  %v1108 = vunpack.c.h.b16 %v785
  %v1109 = vunpack.c.l.b16 %v786
  %v1110 = vunpack.c.h.b16 %v786
  %v1111 = vunpack.c.l.b16 %v787
  %v1112 = vunpack.c.h.b16 %v787
  %v1113 = vunpack.c.l.b16 %v788
  %v1114 = vunpack.c.h.b16 %v788
  %v1115 = vunpack.c.l.b16 %v789
  %v1116 = vunpack.c.h.b16 %v789
  %v1117 = vunpack.c.l.b16 %v790
  %v1118 = vunpack.c.h.b16 %v790
  %v1119 = vunpack.c.l.b16 %v791
  %v1120 = vunpack.c.h.b16 %v791
  %v1121 = vunpack.c.l.b16 %v792
  %v1122 = vunpack.c.h.b16 %v792
  %v1123 = vunpack.c.l.b16 %v793
  %v1124 = vunpack.c.h.b16 %v793
  %v1125 = vunpack.c.l.b16 %v794
  %v1126 = vunpack.c.h.b16 %v794
  %v1127 = vunpack.c.l.b16 %v795
  %v1128 = vunpack.c.h.b16 %v795
  %v1129 = vunpack.c.l.b16 %v796
  %v1130 = vunpack.c.h.b16 %v796
  %v1131 = vunpack.c.l.b16 %v797
  %v1132 = vunpack.c.h.b16 %v797
  %v1133 = vunpack.c.l.b16 %v798
  %v1134 = vunpack.c.h.b16 %v798
  %v1135 = vunpack.c.l.b16 %v799
  %v1136 = vunpack.c.h.b16 %v799
  %v1137 = vunpack.c.l.b16 %v800
  %v1138 = vunpack.c.h.b16 %v800
  %v1139 = vunpack.c.l.b16 %v801
  %v1140 = vunpack.c.h.b16 %v801
  %v1141 = vunpack.c.l.b16 %v802
  %v1142 = vunpack.c.h.b16 %v802
  %v1143 = vunpack.c.l.b16 %v803
  %v1144 = vunpack.c.h.b16 %v803
  %v1145 = vunpack.c.l.b16 %v804
  %v1146 = vunpack.c.h.b16 %v804
  %v1147 = vunpack.c.l.b16 %v805
  %v1148 = vunpack.c.h.b16 %v805
  %v1149 = vunpack.c.l.b16 %v806
  %v1150 = vunpack.c.h.b16 %v806
  %v1151 = vunpack.c.l.b16 %v807
  %v1152 = vunpack.c.h.b16 %v807
  %v1153 = vunpack.c.l.b16 %v808
  %v1154 = vunpack.c.h.b16 %v808
  %v1155 = vunpack.c.l.b16 %v809
  %v1156 = vunpack.c.h.b16 %v809
  %v1157 = vunpack.c.l.b16 %v810
  %v1158 = vunpack.c.h.b16 %v810
  %v1159 = vunpack.c.l.b16 %v811
  %v1160 = vunpack.c.h.b16 %v811
  %v1161 = vunpack.c.l.b16 %v812
  %v1162 = vunpack.c.h.b16 %v812
  %v1163 = vunpack.c.l.b16 %v813
  %v1164 = vunpack.c.h.b16 %v813
  %v1165 = vunpack.c.l.b16 %v814
  %v1166 = vunpack.c.h.b16 %v814
  %v1167 = vunpack.c.l.b16 %v815
  %v1168 = vunpack.c.h.b16 %v815
  %v1169 = vunpack.c.l.b16 %v816
  %v1170 = vunpack.c.h.b16 %v816
  %v1171 = vunpack.c.l.b16 %v817
  %v1172 = vunpack.c.h.b16 %v817
  %v1173 = vunpack.c.l.b16 %v818
  %v1174 = vunpack.c.h.b16 %v818
  %v1175 = vunpack.c.l.b16 %v819
  %v1176 = vunpack.c.h.b16 %v819
  %v1177 = vunpack.c.l.b16 %v820
  %v1178 = vunpack.c.h.b16 %v820
  %v1179 = vunpack.c.l.b16 %v821
  %v1180 = vunpack.c.h.b16 %v821
  %v1181 = vunpack.c.l.b16 %v822
  %v1182 = vunpack.c.h.b16 %v822
  %v1183 = vunpack.c.l.b16 %v823
  %v1184 = vunpack.c.h.b16 %v823
  %v1185 = vunpack.c.l.b16 %v824
  %v1186 = vunpack.c.h.b16 %v824
  %v1187 = vunpack.c.l.b16 %v825
  %v1188 = vunpack.c.h.b16 %v825
  %v1189 = vunpack.c.l.b16 %v826
  %v1190 = vunpack.c.h.b16 %v826
  %v1191 = vunpack.c.l.b16 %v827
  %v1192 = vunpack.c.h.b16 %v827
  %v1193 = vunpack.c.l.b16 %v828
  %v1194 = vunpack.c.h.b16 %v828
  %v1195 = vunpack.c.l.b16 %v829
  %v1196 = vunpack.c.h.b16 %v829
  %v1197 = vunpack.c.l.b16 %v830
  %v1198 = vunpack.c.h.b16 %v830
  %v1199 = vunpack.c.l.b16 %v831
  %v1200 = vunpack.c.h.b16 %v831
  %v1201 = vunpack.c.l.b16 %v832
  %v1202 = vunpack.c.h.b16 %v832
  %v1203 = vunpack.c.l.b16 %v833
  %v1204 = vunpack.c.h.b16 %v833
  %v1205 = vunpack.c.l.b16 %v834
  %v1206 = vunpack.c.h.b16 %v834
  %v1207 = vunpack.c.l.b16 %v835
  %v1208 = vunpack.c.h.b16 %v835
  %v1209 = vunpack.c.l.b16 %v836
  %v1210 = vunpack.c.h.b16 %v836
  %v1211 = vunpack.c.l.b16 %v837
  %v1212 = vunpack.c.h.b16 %v837
  %v1213 = vunpack.c.l.b16 %v838
  %v1214 = vunpack.c.h.b16 %v838
  %v1215 = vunpack.c.l.b16 %v839
  %v1216 = vunpack.c.h.b16 %v839
  %v1217 = vunpack.c.l.b16 %v840
  %v1218 = vunpack.c.h.b16 %v840
  %v1219 = vunpack.c.l.b16 %v841
  %v1220 = vunpack.c.h.b16 %v841
  %v1221 = vunpack.c.l.b16 %v842
  %v1222 = vunpack.c.h.b16 %v842
  %v1223 = vunpack.c.l.b16 %v843
  %v1224 = vunpack.c.h.b16 %v843
  %v1225 = vunpack.c.l.b16 %v844
  %v1226 = vunpack.c.h.b16 %v844
  %v1227 = vunpack.c.l.b16 %v845
  %v1228 = vunpack.c.h.b16 %v845
  %v1229 = vunpack.c.l.b16 %v846
  %v1230 = vunpack.c.h.b16 %v846
  %v1231 = vunpack.c.l.b16 %v847
  %v1232 = vunpack.c.h.b16 %v847
  %v1233 = vunpack.c.l.b16 %v848
  %v1234 = vunpack.c.h.b16 %v848
  %v1235 = vunpack.c.l.b16 %v849
  %v1236 = vunpack.c.h.b16 %v849
  %v1237 = vunpack.c.l.b16 %v850
  %v1238 = vunpack.c.h.b16 %v850
  %v1239 = vunpack.c.l.b16 %v851
  %v1240 = vunpack.c.h.b16 %v851
  %v1241 = vunpack.c.l.b16 %v852
  %v1242 = vunpack.c.h.b16 %v852
  %v1243 = vunpack.c.l.b16 %v853
  %v1244 = vunpack.c.h.b16 %v853
  %v1245 = vunpack.c.l.b16 %v854
  %v1246 = vunpack.c.h.b16 %v854
  %v1247 = vunpack.c.l.b16 %v855
  %v1248 = vunpack.c.h.b16 %v855
  %v1249 = vunpack.c.l.b16 %v856
  %v1250 = vunpack.c.h.b16 %v856
  %v1251 = vunpack.c.l.b16 %v857
  %v1252 = vunpack.c.h.b16 %v857
  %v1253 = vpack.c.b16 %v1005, %v997
  %v1254 = vpack.c.b16 %v1006, %v998
  %v1255 = vpack.c.b16 %v1007, %v999
  %v1256 = vpack.c.b16 %v1008, %v1000
  %v1257 = vpack.c.b16 %v1009, %v1001
  %v1258 = vpack.c.b16 %v1010, %v1002
  %v1259 = vpack.c.b16 %v1011, %v1003
  %v1260 = vpack.c.b16 %v1012, %v1004
  %v1261 = vpack.c.b16 %v1021, %v1013
  %v1262 = vpack.c.b16 %v1022, %v1014
  %v1263 = vpack.c.b16 %v1023, %v1015
  %v1264 = vpack.c.b16 %v1024, %v1016
  %v1265 = vpack.c.b16 %v1025, %v1017
  %v1266 = vpack.c.b16 %v1026, %v1018
  %v1267 = vpack.c.b16 %v1027, %v1019
  %v1268 = vpack.c.b16 %v1028, %v1020
  %v1269 = vpack.c.b16 %v1037, %v1029
  %v1270 = vpack.c.b16 %v1038, %v1030
  %v1271 = vpack.c.b16 %v1039, %v1031
  %v1272 = vpack.c.b16 %v1040, %v1032
  %v1273 = vpack.c.b16 %v1041, %v1033
  %v1274 = vpack.c.b16 %v1042, %v1034
  %v1275 = vpack.c.b16 %v1043, %v1035
  %v1276 = vpack.c.b16 %v1044, %v1036
  %v1277 = vpack.c.b16 %v1053, %v1045
  %v1278 = vpack.c.b16 %v1054, %v1046
  %v1279 = vpack.c.b16 %v1055, %v1047
  %v1280 = vpack.c.b16 %v1056, %v1048
  %v1281 = vpack.c.b16 %v1057, %v1049
  %v1282 = vpack.c.b16 %v1058, %v1050
  %v1283 = vpack.c.b16 %v1059, %v1051
  %v1284 = vpack.c.b16 %v1060, %v1052
  %v1285 = vpack.c.b16 %v1069, %v1061
  %v1286 = vpack.c.b16 %v1070, %v1062
  %v1287 = vpack.c.b16 %v1071, %v1063
  %v1288 = vpack.c.b16 %v1072, %v1064
  %v1289 = vpack.c.b16 %v1073, %v1065
  %v1290 = vpack.c.b16 %v1074, %v1066
  %v1291 = vpack.c.b16 %v1075, %v1067
  %v1292 = vpack.c.b16 %v1076, %v1068
  %v1293 = vpack.c.b16 %v1085, %v1077
  %v1294 = vpack.c.b16 %v1086, %v1078
  %v1295 = vpack.c.b16 %v1087, %v1079
  %v1296 = vpack.c.b16 %v1088, %v1080
  %v1297 = vpack.c.b16 %v1089, %v1081
  %v1298 = vpack.c.b16 %v1090, %v1082
  %v1299 = vpack.c.b16 %v1091, %v1083
  %v1300 = vpack.c.b16 %v1092, %v1084
  %v1301 = vpack.c.b16 %v1101, %v1093
  %v1302 = vpack.c.b16 %v1102, %v1094
  %v1303 = vpack.c.b16 %v1103, %v1095
  %v1304 = vpack.c.b16 %v1104, %v1096
  %v1305 = vpack.c.b16 %v1105, %v1097
  %v1306 = vpack.c.b16 %v1106, %v1098
  %v1307 = vpack.c.b16 %v1107, %v1099
  %v1308 = vpack.c.b16 %v1108, %v1100
  %v1309 = vpack.c.b16 %v1117, %v1109
  %v1310 = vpack.c.b16 %v1118, %v1110
  %v1311 = vpack.c.b16 %v1119, %v1111
  %v1312 = vpack.c.b16 %v1120, %v1112
  %v1313 = vpack.c.b16 %v1121, %v1113
  %v1314 = vpack.c.b16 %v1122, %v1114
  %v1315 = vpack.c.b16 %v1123, %v1115
  %v1316 = vpack.c.b16 %v1124, %v1116
  %v1317 = vpack.c.b16 %v1133, %v1125
  %v1318 = vpack.c.b16 %v1134, %v1126
  %v1319 = vpack.c.b16 %v1135, %v1127
  %v1320 = vpack.c.b16 %v1136, %v1128
  %v1321 = vpack.c.b16 %v1137, %v1129
  %v1322 = vpack.c.b16 %v1138, %v1130
  %v1323 = vpack.c.b16 %v1139, %v1131
  %v1324 = vpack.c.b16 %v1140, %v1132
  %v1325 = vpack.c.b16 %v1149, %v1141
  %v1326 = vpack.c.b16 %v1150, %v1142
  %v1327 = vpack.c.b16 %v1151, %v1143
  %v1328 = vpack.c.b16 %v1152, %v1144
  %v1329 = vpack.c.b16 %v1153, %v1145
  %v1330 = vpack.c.b16 %v1154, %v1146
  %v1331 = vpack.c.b16 %v1155, %v1147
  %v1332 = vpack.c.b16 %v1156, %v1148
  %v1333 = vpack.c.b16 %v1165, %v1157
  %v1334 = vpack.c.b16 %v1166, %v1158
  %v1335 = vpack.c.b16 %v1167, %v1159
  %v1336 = vpack.c.b16 %v1168, %v1160
  %v1337 = vpack.c.b16 %v1169, %v1161
  %v1338 = vpack.c.b16 %v1170, %v1162
  %v1339 = vpack.c.b16 %v1171, %v1163
  %v1340 = vpack.c.b16 %v1172, %v1164
  %v1341 = vpack.c.b16 %v1181, %v1173
  %v1342 = vpack.c.b16 %v1182, %v1174
  %v1343 = vpack.c.b16 %v1183, %v1175
  %v1344 = vpack.c.b16 %v1184, %v1176
  %v1345 = vpack.c.b16 %v1185, %v1177
  %v1346 = vpack.c.b16 %v1186, %v1178
  %v1347 = vpack.c.b16 %v1187, %v1179
  %v1348 = vpack.c.b16 %v1188, %v1180
  %v1349 = vpack.c.b16 %v1197, %v1189
  %v1350 = vpack.c.b16 %v1198, %v1190
  %v1351 = vpack.c.b16 %v1199, %v1191
  %v1352 = vpack.c.b16 %v1200, %v1192
  %v1353 = vpack.c.b16 %v1201, %v1193
  %v1354 = vpack.c.b16 %v1202, %v1194
  %v1355 = vpack.c.b16 %v1203, %v1195
  %v1356 = vpack.c.b16 %v1204, %v1196
  %v1357 = vpack.c.b16 %v1213, %v1205
  %v1358 = vpack.c.b16 %v1214, %v1206
  %v1359 = vpack.c.b16 %v1215, %v1207
  %v1360 = vpack.c.b16 %v1216, %v1208
  %v1361 = vpack.c.b16 %v1217, %v1209
  %v1362 = vpack.c.b16 %v1218, %v1210
  %v1363 = vpack.c.b16 %v1219, %v1211
  %v1364 = vpack.c.b16 %v1220, %v1212
  %v1365 = vpack.c.b16 %v1229, %v1221
  %v1366 = vpack.c.b16 %v1230, %v1222
  %v1367 = vpack.c.b16 %v1231, %v1223
  %v1368 = vpack.c.b16 %v1232, %v1224
  %v1369 = vpack.c.b16 %v1233, %v1225
  %v1370 = vpack.c.b16 %v1234, %v1226
  %v1371 = vpack.c.b16 %v1235, %v1227
  %v1372 = vpack.c.b16 %v1236, %v1228
  %v1373 = vpack.c.b16 %v1245, %v1237
  %v1374 = vpack.c.b16 %v1246, %v1238
  %v1375 = vpack.c.b16 %v1247, %v1239
  %v1376 = vpack.c.b16 %v1248, %v1240
  %v1377 = vpack.c.b16 %v1249, %v1241
  %v1378 = vpack.c.b16 %v1250, %v1242
  %v1379 = vpack.c.b16 %v1251, %v1243
  %v1380 = vpack.c.b16 %v1252, %v1244
  %1509 = vmatpush.bf16.msra.mxu0 %v1309
  %1510 = vmatpush.bf16.msra.mxu0 %v1301
  %1511 = vmatpush.bf16.msra.mxu0 %v1293
  %1512 = vmatpush.bf16.msra.mxu0 %v1285
  %1513 = vmatpush.bf16.msra.mxu0 %v1277
  %1514 = vmatpush.bf16.msra.mxu0 %v1269
  %1515 = vmatpush.bf16.msra.mxu0 %v1261
  %1516 = vmatpush.bf16.msra.mxu0 %v1253
  %1517 = vmatmul.bf16.gmra.mxu0 %v867
  %v1518 = vpop.f32.mrf.mxu0
  %v1519 = vadd.f32 0.0, %v1518
  %v1520 = vpop.f32.mrf.mxu0
  %1521 = vdwg.mxu0
  %1522 = vmatpush.bf16.msra.mxu0 %v1373
  %1523 = vmatpush.bf16.msra.mxu0 %v1365
  %1524 = vmatpush.bf16.msra.mxu0 %v1357
  %1525 = vmatpush.bf16.msra.mxu0 %v1349
  %1526 = vmatpush.bf16.msra.mxu0 %v1341
  %1527 = vmatpush.bf16.msra.mxu0 %v1333
  %1528 = vmatpush.bf16.msra.mxu0 %v1325
  %1529 = vmatpush.bf16.msra.mxu0 %v1317
  %1530 = vmatmul.bf16.gmra.mxu0 %v868
  %v1531 = vpop.f32.mrf.mxu0
  %v1532 = vadd.f32 %v1519, %v1531
  %v1533 = vpop.f32.mrf.mxu0
  %1534 = vdwg.mxu0
  %1535 = vmatpush.bf16.msra.mxu0 %v1310
  %1536 = vmatpush.bf16.msra.mxu0 %v1302
  %1537 = vmatpush.bf16.msra.mxu0 %v1294
  %1538 = vmatpush.bf16.msra.mxu0 %v1286
  %1539 = vmatpush.bf16.msra.mxu0 %v1278
  %1540 = vmatpush.bf16.msra.mxu0 %v1270
  %1541 = vmatpush.bf16.msra.mxu0 %v1262
  %1542 = vmatpush.bf16.msra.mxu0 %v1254
  %1543 = vmatmul.bf16.gmra.mxu0 %v867
  %v1544 = vpop.f32.mrf.mxu0
  %v1545 = vadd.f32 0.0, %v1544
  %v1546 = vpop.f32.mrf.mxu0
  %1547 = vdwg.mxu0
  %1548 = vmatpush.bf16.msra.mxu0 %v1374
  %1549 = vmatpush.bf16.msra.mxu0 %v1366
  %1550 = vmatpush.bf16.msra.mxu0 %v1358
  %1551 = vmatpush.bf16.msra.mxu0 %v1350
  %1552 = vmatpush.bf16.msra.mxu0 %v1342
  %1553 = vmatpush.bf16.msra.mxu0 %v1334
  %1554 = vmatpush.bf16.msra.mxu0 %v1326
  %1555 = vmatpush.bf16.msra.mxu0 %v1318
  %1556 = vmatmul.bf16.gmra.mxu0 %v868
  %v1557 = vpop.f32.mrf.mxu0
  %v1558 = vadd.f32 %v1545, %v1557
  %v1559 = vpop.f32.mrf.mxu0
  %1560 = vdwg.mxu0
  %1561 = vmatpush.bf16.msra.mxu0 %v1311
  %1562 = vmatpush.bf16.msra.mxu0 %v1303
  %1563 = vmatpush.bf16.msra.mxu0 %v1295
  %1564 = vmatpush.bf16.msra.mxu0 %v1287
  %1565 = vmatpush.bf16.msra.mxu0 %v1279
  %1566 = vmatpush.bf16.msra.mxu0 %v1271
  %1567 = vmatpush.bf16.msra.mxu0 %v1263
  %1568 = vmatpush.bf16.msra.mxu0 %v1255
  %1569 = vmatmul.bf16.gmra.mxu0 %v867
  %v1570 = vpop.f32.mrf.mxu0
  %v1571 = vadd.f32 0.0, %v1570
  %v1572 = vpop.f32.mrf.mxu0
  %1573 = vdwg.mxu0
  %1574 = vmatpush.bf16.msra.mxu0 %v1375
  %1575 = vmatpush.bf16.msra.mxu0 %v1367
  %1576 = vmatpush.bf16.msra.mxu0 %v1359
  %1577 = vmatpush.bf16.msra.mxu0 %v1351
  %1578 = vmatpush.bf16.msra.mxu0 %v1343
  %1579 = vmatpush.bf16.msra.mxu0 %v1335
  %1580 = vmatpush.bf16.msra.mxu0 %v1327
  %1581 = vmatpush.bf16.msra.mxu0 %v1319
  %1582 = vmatmul.bf16.gmra.mxu0 %v868
  %v1583 = vpop.f32.mrf.mxu0
  %v1584 = vadd.f32 %v1571, %v1583
  %v1585 = vpop.f32.mrf.mxu0
  %1586 = vdwg.mxu0
  %1587 = vmatpush.bf16.msra.mxu0 %v1312
  %1588 = vmatpush.bf16.msra.mxu0 %v1304
  %1589 = vmatpush.bf16.msra.mxu0 %v1296
  %1590 = vmatpush.bf16.msra.mxu0 %v1288
  %1591 = vmatpush.bf16.msra.mxu0 %v1280
  %1592 = vmatpush.bf16.msra.mxu0 %v1272
  %1593 = vmatpush.bf16.msra.mxu0 %v1264
  %1594 = vmatpush.bf16.msra.mxu0 %v1256
  %1595 = vmatmul.bf16.gmra.mxu0 %v867
  %v1596 = vpop.f32.mrf.mxu0
  %v1597 = vadd.f32 0.0, %v1596
  %v1598 = vpop.f32.mrf.mxu0
  %1599 = vdwg.mxu0
  %1600 = vmatpush.bf16.msra.mxu0 %v1376
  %1601 = vmatpush.bf16.msra.mxu0 %v1368
  %1602 = vmatpush.bf16.msra.mxu0 %v1360
  %1603 = vmatpush.bf16.msra.mxu0 %v1352
  %1604 = vmatpush.bf16.msra.mxu0 %v1344
  %1605 = vmatpush.bf16.msra.mxu0 %v1336
  %1606 = vmatpush.bf16.msra.mxu0 %v1328
  %1607 = vmatpush.bf16.msra.mxu0 %v1320
  %1608 = vmatmul.bf16.gmra.mxu0 %v868
  %v1609 = vpop.f32.mrf.mxu0
  %v1610 = vadd.f32 %v1597, %v1609
  %v1611 = vpop.f32.mrf.mxu0
  %1612 = vdwg.mxu0
  %1613 = vmatpush.bf16.msra.mxu0 %v1313
  %1614 = vmatpush.bf16.msra.mxu0 %v1305
  %1615 = vmatpush.bf16.msra.mxu0 %v1297
  %1616 = vmatpush.bf16.msra.mxu0 %v1289
  %1617 = vmatpush.bf16.msra.mxu0 %v1281
  %1618 = vmatpush.bf16.msra.mxu0 %v1273
  %1619 = vmatpush.bf16.msra.mxu0 %v1265
  %1620 = vmatpush.bf16.msra.mxu0 %v1257
  %1621 = vmatmul.bf16.gmra.mxu0 %v867
  %v1622 = vpop.f32.mrf.mxu0
  %v1623 = vadd.f32 0.0, %v1622
  %v1624 = vpop.f32.mrf.mxu0
  %1625 = vdwg.mxu0
  %1626 = vmatpush.bf16.msra.mxu0 %v1377
  %1627 = vmatpush.bf16.msra.mxu0 %v1369
  %1628 = vmatpush.bf16.msra.mxu0 %v1361
  %1629 = vmatpush.bf16.msra.mxu0 %v1353
  %1630 = vmatpush.bf16.msra.mxu0 %v1345
  %1631 = vmatpush.bf16.msra.mxu0 %v1337
  %1632 = vmatpush.bf16.msra.mxu0 %v1329
  %1633 = vmatpush.bf16.msra.mxu0 %v1321
  %1634 = vmatmul.bf16.gmra.mxu0 %v868
  %v1635 = vpop.f32.mrf.mxu0
  %v1636 = vadd.f32 %v1623, %v1635
  %v1637 = vpop.f32.mrf.mxu0
  %1638 = vdwg.mxu0
  %1639 = vmatpush.bf16.msra.mxu0 %v1314
  %1640 = vmatpush.bf16.msra.mxu0 %v1306
  %1641 = vmatpush.bf16.msra.mxu0 %v1298
  %1642 = vmatpush.bf16.msra.mxu0 %v1290
  %1643 = vmatpush.bf16.msra.mxu0 %v1282
  %1644 = vmatpush.bf16.msra.mxu0 %v1274
  %1645 = vmatpush.bf16.msra.mxu0 %v1266
  %1646 = vmatpush.bf16.msra.mxu0 %v1258
  %1647 = vmatmul.bf16.gmra.mxu0 %v867
  %v1648 = vpop.f32.mrf.mxu0
  %v1649 = vadd.f32 0.0, %v1648
  %v1650 = vpop.f32.mrf.mxu0
  %1651 = vdwg.mxu0
  %1652 = vmatpush.bf16.msra.mxu0 %v1378
  %1653 = vmatpush.bf16.msra.mxu0 %v1370
  %1654 = vmatpush.bf16.msra.mxu0 %v1362
  %1655 = vmatpush.bf16.msra.mxu0 %v1354
  %1656 = vmatpush.bf16.msra.mxu0 %v1346
  %1657 = vmatpush.bf16.msra.mxu0 %v1338
  %1658 = vmatpush.bf16.msra.mxu0 %v1330
  %1659 = vmatpush.bf16.msra.mxu0 %v1322
  %1660 = vmatmul.bf16.gmra.mxu0 %v868
  %v1661 = vpop.f32.mrf.mxu0
  %v1662 = vadd.f32 %v1649, %v1661
  %v1663 = vpop.f32.mrf.mxu0
  %1664 = vdwg.mxu0
  %1665 = vmatpush.bf16.msra.mxu0 %v1315
  %1666 = vmatpush.bf16.msra.mxu0 %v1307
  %1667 = vmatpush.bf16.msra.mxu0 %v1299
  %1668 = vmatpush.bf16.msra.mxu0 %v1291
  %1669 = vmatpush.bf16.msra.mxu0 %v1283
  %1670 = vmatpush.bf16.msra.mxu0 %v1275
  %1671 = vmatpush.bf16.msra.mxu0 %v1267
  %1672 = vmatpush.bf16.msra.mxu0 %v1259
  %1673 = vmatmul.bf16.gmra.mxu0 %v867
  %v1674 = vpop.f32.mrf.mxu0
  %v1675 = vadd.f32 0.0, %v1674
  %v1676 = vpop.f32.mrf.mxu0
  %1677 = vdwg.mxu0
  %1678 = vmatpush.bf16.msra.mxu0 %v1379
  %1679 = vmatpush.bf16.msra.mxu0 %v1371
  %1680 = vmatpush.bf16.msra.mxu0 %v1363
  %1681 = vmatpush.bf16.msra.mxu0 %v1355
  %1682 = vmatpush.bf16.msra.mxu0 %v1347
  %1683 = vmatpush.bf16.msra.mxu0 %v1339
  %1684 = vmatpush.bf16.msra.mxu0 %v1331
  %1685 = vmatpush.bf16.msra.mxu0 %v1323
  %1686 = vmatmul.bf16.gmra.mxu0 %v868
  %v1687 = vpop.f32.mrf.mxu0
  %v1688 = vadd.f32 %v1675, %v1687
  %v1689 = vpop.f32.mrf.mxu0
  %1690 = vdwg.mxu0
  %1691 = vmatpush.bf16.msra.mxu0 %v1316
  %1692 = vmatpush.bf16.msra.mxu0 %v1308
  %1693 = vmatpush.bf16.msra.mxu0 %v1300
  %1694 = vmatpush.bf16.msra.mxu0 %v1292
  %1695 = vmatpush.bf16.msra.mxu0 %v1284
  %1696 = vmatpush.bf16.msra.mxu0 %v1276
  %1697 = vmatpush.bf16.msra.mxu0 %v1268
  %1698 = vmatpush.bf16.msra.mxu0 %v1260
  %1699 = vmatmul.bf16.gmra.mxu0 %v867
  %v1700 = vpop.f32.mrf.mxu0
  %v1701 = vadd.f32 0.0, %v1700
  %v1702 = vpop.f32.mrf.mxu0
  %1703 = vdwg.mxu0
  %1704 = vmatpush.bf16.msra.mxu0 %v1380
  %1705 = vmatpush.bf16.msra.mxu0 %v1372
  %1706 = vmatpush.bf16.msra.mxu0 %v1364
  %1707 = vmatpush.bf16.msra.mxu0 %v1356
  %1708 = vmatpush.bf16.msra.mxu0 %v1348
  %1709 = vmatpush.bf16.msra.mxu0 %v1340
  %1710 = vmatpush.bf16.msra.mxu0 %v1332
  %1711 = vmatpush.bf16.msra.mxu0 %v1324
  %1712 = vmatmul.bf16.gmra.mxu0 %v868
  %v1713 = vpop.f32.mrf.mxu0
  %v1714 = vadd.f32 %v1701, %v1713
  %v1715 = vpop.f32.mrf.mxu0
  %1716 = vdwg.mxu0
  %v1717 = vld [vmem:[#allocation5] ss:$4 sm:$0xf]
  %s1718 = scalar_lea.vmem [#allocation5], 16
  %v1719 = vld [vmem:[%s1718] ss:$4 sm:$0xf]
  %v1724 = vrot.slane %v1558, 7
  %v1725 = vrot.slane %v1584, 6
  %v1726 = vrot.slane %v1610, 5
  %vm1727 = vcmask 1040384
  %v1728 = vsel %vm1727, %v1532, %v1724
  %vm1729 = vcmask 1042434
  %v1730 = vsel %vm1729, %v1725, %v1726
  %vm1731 = vcmask 1041408
  %v1732 = vsel %vm1731, %v1728, %v1730
  %vm1733 = vcmask 1041409
  %v1734 = vsel %vm1733, %v1532, %v1724
  %vm1735 = vcmask 1043459
  %v1736 = vsel %vm1735, %v1725, %v1726
  %vm1737 = vcmask 1042433
  %v1738 = vsel %vm1737, %v1734, %v1736
  %v1739 = vrot.slane %v1738, 1
  %v1742 = vadd.f32 %v1717, %v1732
  %v1743 = vadd.f32 %v1719, %v1739
  %s1744 = scalar_lea.vmem [#allocation6], 3
  %v1745 = vld [vmem:[%s1744] ss:$4 sm:$0xf]
  %s1746 = scalar_lea.vmem [#allocation6], 19
  %v1747 = vld [vmem:[%s1746] ss:$4 sm:$0xf]
  %v1752 = vrot.slane %v1662, 7
  %v1753 = vrot.slane %v1688, 6
  %v1754 = vrot.slane %v1714, 5
  %v1755 = vsel %vm1727, %v1636, %v1752
  %v1756 = vsel %vm1729, %v1753, %v1754
  %v1757 = vsel %vm1731, %v1755, %v1756
  %v1758 = vsel %vm1733, %v1636, %v1752
  %v1759 = vsel %vm1735, %v1753, %v1754
  %v1760 = vsel %vm1737, %v1758, %v1759
  %v1761 = vrot.slane %v1760, 1
  %v1764 = vadd.f32 %v1745, %v1757
  %v1765 = vadd.f32 %v1747, %v1761
  %v1766 = vxor.u32 %v1742, 2147483648
  %v1767 = vxor.u32 %v1743, 2147483648
  %v1768 = vmul.f32 %v1766, 1.442695
  %v1769 = vpow.pop %v1768
  %v1770 = vmul.f32 %v1767, 1.442695
  %v1771 = vpow.pop %v1770
  %v1772 = vadd.f32 %v1769, 1.0
  %v1773 = vadd.f32 %v1771, 1.0
  %v1774 = vrcp.pop %v1772
  %v1775 = vmul.f32 %v1772, %v1774
  %v1776 = vsub.f32 1.0, %v1775
  %v1777 = vmul.f32 %v1774, %v1776
  %v1778 = vadd.f32 %v1774, %v1777
  %vm1779 = vweird.f32 %v1772
  %vm1780 = vweird.f32 %v1774
  %vm1781 = vmor %vm1779, %vm1780
  %v1782 = vsel %vm1781, %v1774, %v1778
  %v1783 = vand.u32 2147483647, %v1772
  %vm1784 = vcmp.eq.f32.partialorder %v1783, 8.507059e+37
  %v1785 = vand.u32 %v1772, 2147483648
  %v1786 = vor.u32 1.1754944e-38, %v1785
  %v1787 = vsel %vm1784, %v1786, %v1782
  %v1788 = vmul.f32 1.0, %v1787
  %v1789 = vrcp.pop %v1773
  %v1790 = vmul.f32 %v1773, %v1789
  %v1791 = vsub.f32 1.0, %v1790
  %v1792 = vmul.f32 %v1789, %v1791
  %v1793 = vadd.f32 %v1789, %v1792
  %vm1794 = vweird.f32 %v1773
  %vm1795 = vweird.f32 %v1789
  %vm1796 = vmor %vm1794, %vm1795
  %v1797 = vsel %vm1796, %v1789, %v1793
  %v1798 = vand.u32 2147483647, %v1773
  %vm1799 = vcmp.eq.f32.partialorder %v1798, 8.507059e+37
  %v1800 = vand.u32 %v1773, 2147483648
  %v1801 = vor.u32 1.1754944e-38, %v1800
  %v1802 = vsel %vm1799, %v1801, %v1797
  %v1803 = vmul.f32 1.0, %v1802
  %v1806 = vrot.slane %v1742, 1
  %v1807 = vrot.slane %v1743, 1
  %v1810 = vxor.u32 %v1806, 2147483648
  %v1811 = vxor.u32 %v1807, 2147483648
  %v1812 = vmul.f32 %v1810, 1.442695
  %v1813 = vpow.pop %v1812
  %v1814 = vmul.f32 %v1811, 1.442695
  %v1815 = vpow.pop %v1814
  %v1816 = vadd.f32 %v1813, 1.0
  %v1817 = vadd.f32 %v1815, 1.0
  %v1818 = vrcp.pop %v1816
  %v1819 = vmul.f32 %v1816, %v1818
  %v1820 = vsub.f32 1.0, %v1819
  %v1821 = vmul.f32 %v1818, %v1820
  %v1822 = vadd.f32 %v1818, %v1821
  %vm1823 = vweird.f32 %v1816
  %vm1824 = vweird.f32 %v1818
  %vm1825 = vmor %vm1823, %vm1824
  %v1826 = vsel %vm1825, %v1818, %v1822
  %v1827 = vand.u32 2147483647, %v1816
  %vm1828 = vcmp.eq.f32.partialorder %v1827, 8.507059e+37
  %v1829 = vand.u32 %v1816, 2147483648
  %v1830 = vor.u32 1.1754944e-38, %v1829
  %v1831 = vsel %vm1828, %v1830, %v1826
  %v1832 = vmul.f32 1.0, %v1831
  %v1833 = vrcp.pop %v1817
  %v1834 = vmul.f32 %v1817, %v1833
  %v1835 = vsub.f32 1.0, %v1834
  %v1836 = vmul.f32 %v1833, %v1835
  %v1837 = vadd.f32 %v1833, %v1836
  %vm1838 = vweird.f32 %v1817
  %vm1839 = vweird.f32 %v1833
  %vm1840 = vmor %vm1838, %vm1839
  %v1841 = vsel %vm1840, %v1833, %v1837
  %v1842 = vand.u32 2147483647, %v1817
  %vm1843 = vcmp.eq.f32.partialorder %v1842, 8.507059e+37
  %v1844 = vand.u32 %v1817, 2147483648
  %v1845 = vor.u32 1.1754944e-38, %v1844
  %v1846 = vsel %vm1843, %v1845, %v1841
  %v1847 = vmul.f32 1.0, %v1846
  %v1848 = vrot.slane %v1742, 2
  %v1849 = vrot.slane %v1743, 2
  %v1852 = vtanh.pop %v1848
  %v1853 = vtanh.pop %v1849
  %v1854 = vrot.slane %v1742, 3
  %v1855 = vrot.slane %v1743, 3
  %v1858 = vxor.u32 %v1854, 2147483648
  %v1859 = vxor.u32 %v1855, 2147483648
  %v1860 = vmul.f32 %v1858, 1.442695
  %v1861 = vpow.pop %v1860
  %v1862 = vmul.f32 %v1859, 1.442695
  %v1863 = vpow.pop %v1862
  %v1864 = vadd.f32 %v1861, 1.0
  %v1865 = vadd.f32 %v1863, 1.0
  %v1866 = vrcp.pop %v1864
  %v1867 = vmul.f32 %v1864, %v1866
  %v1868 = vsub.f32 1.0, %v1867
  %v1869 = vmul.f32 %v1866, %v1868
  %v1870 = vadd.f32 %v1866, %v1869
  %vm1871 = vweird.f32 %v1864
  %vm1872 = vweird.f32 %v1866
  %vm1873 = vmor %vm1871, %vm1872
  %v1874 = vsel %vm1873, %v1866, %v1870
  %v1875 = vand.u32 2147483647, %v1864
  %vm1876 = vcmp.eq.f32.partialorder %v1875, 8.507059e+37
  %v1877 = vand.u32 %v1864, 2147483648
  %v1878 = vor.u32 1.1754944e-38, %v1877
  %v1879 = vsel %vm1876, %v1878, %v1874
  %v1880 = vmul.f32 1.0, %v1879
  %v1881 = vrcp.pop %v1865
  %v1882 = vmul.f32 %v1865, %v1881
  %v1883 = vsub.f32 1.0, %v1882
  %v1884 = vmul.f32 %v1881, %v1883
  %v1885 = vadd.f32 %v1881, %v1884
  %vm1886 = vweird.f32 %v1865
  %vm1887 = vweird.f32 %v1881
  %vm1888 = vmor %vm1886, %vm1887
  %v1889 = vsel %vm1888, %v1881, %v1885
  %v1890 = vand.u32 2147483647, %v1865
  %vm1891 = vcmp.eq.f32.partialorder %v1890, 8.507059e+37
  %v1892 = vand.u32 %v1865, 2147483648
  %v1893 = vor.u32 1.1754944e-38, %v1892
  %v1894 = vsel %vm1891, %v1893, %v1889
  %v1895 = vmul.f32 1.0, %v1894
  %v1897 = vrot.slane %v859, 1
  %v1899 = vmul.f32 %v1832, %v859
  %v1900 = vmul.f32 %v1847, %v1897
  %v1901 = vmul.f32 %v1788, %v1852
  %v1902 = vmul.f32 %v1803, %v1853
  %v1903 = vadd.f32 %v1899, %v1901
  %v1904 = vadd.f32 %v1900, %v1902
  %v1905 = vtanh.pop %v1903
  %v1906 = vtanh.pop %v1904
  %v1907 = vmul.f32 %v1880, %v1905
  %v1908 = vmul.f32 %v1895, %v1906
  %v1909 = vxor.u32 %v1764, 2147483648
  %v1910 = vxor.u32 %v1765, 2147483648
  %v1911 = vmul.f32 %v1909, 1.442695
  %v1912 = vpow.pop %v1911
  %v1913 = vmul.f32 %v1910, 1.442695
  %v1914 = vpow.pop %v1913
  %v1915 = vadd.f32 %v1912, 1.0
  %v1916 = vadd.f32 %v1914, 1.0
  %v1917 = vrcp.pop %v1915
  %v1918 = vmul.f32 %v1915, %v1917
  %v1919 = vsub.f32 1.0, %v1918
  %v1920 = vmul.f32 %v1917, %v1919
  %v1921 = vadd.f32 %v1917, %v1920
  %vm1922 = vweird.f32 %v1915
  %vm1923 = vweird.f32 %v1917
  %vm1924 = vmor %vm1922, %vm1923
  %v1925 = vsel %vm1924, %v1917, %v1921
  %v1926 = vand.u32 2147483647, %v1915
  %vm1927 = vcmp.eq.f32.partialorder %v1926, 8.507059e+37
  %v1928 = vand.u32 %v1915, 2147483648
  %v1929 = vor.u32 1.1754944e-38, %v1928
  %v1930 = vsel %vm1927, %v1929, %v1925
  %v1931 = vmul.f32 1.0, %v1930
  %v1932 = vrcp.pop %v1916
  %v1933 = vmul.f32 %v1916, %v1932
  %v1934 = vsub.f32 1.0, %v1933
  %v1935 = vmul.f32 %v1932, %v1934
  %v1936 = vadd.f32 %v1932, %v1935
  %vm1937 = vweird.f32 %v1916
  %vm1938 = vweird.f32 %v1932
  %vm1939 = vmor %vm1937, %vm1938
  %v1940 = vsel %vm1939, %v1932, %v1936
  %v1941 = vand.u32 2147483647, %v1916
  %vm1942 = vcmp.eq.f32.partialorder %v1941, 8.507059e+37
  %v1943 = vand.u32 %v1916, 2147483648
  %v1944 = vor.u32 1.1754944e-38, %v1943
  %v1945 = vsel %vm1942, %v1944, %v1940
  %v1946 = vmul.f32 1.0, %v1945
  %v1949 = vrot.slane %v1764, 1
  %v1950 = vrot.slane %v1765, 1
  %v1953 = vxor.u32 %v1949, 2147483648
  %v1954 = vxor.u32 %v1950, 2147483648
  %v1955 = vmul.f32 %v1953, 1.442695
  %v1956 = vpow.pop %v1955
  %v1957 = vmul.f32 %v1954, 1.442695
  %v1958 = vpow.pop %v1957
  %v1959 = vadd.f32 %v1956, 1.0
  %v1960 = vadd.f32 %v1958, 1.0
  %v1961 = vrcp.pop %v1959
  %v1962 = vmul.f32 %v1959, %v1961
  %v1963 = vsub.f32 1.0, %v1962
  %v1964 = vmul.f32 %v1961, %v1963
  %v1965 = vadd.f32 %v1961, %v1964
  %vm1966 = vweird.f32 %v1959
  %vm1967 = vweird.f32 %v1961
  %vm1968 = vmor %vm1966, %vm1967
  %v1969 = vsel %vm1968, %v1961, %v1965
  %v1970 = vand.u32 2147483647, %v1959
  %vm1971 = vcmp.eq.f32.partialorder %v1970, 8.507059e+37
  %v1972 = vand.u32 %v1959, 2147483648
  %v1973 = vor.u32 1.1754944e-38, %v1972
  %v1974 = vsel %vm1971, %v1973, %v1969
  %v1975 = vmul.f32 1.0, %v1974
  %v1976 = vrcp.pop %v1960
  %v1977 = vmul.f32 %v1960, %v1976
  %v1978 = vsub.f32 1.0, %v1977
  %v1979 = vmul.f32 %v1976, %v1978
  %v1980 = vadd.f32 %v1976, %v1979
  %vm1981 = vweird.f32 %v1960
  %vm1982 = vweird.f32 %v1976
  %vm1983 = vmor %vm1981, %vm1982
  %v1984 = vsel %vm1983, %v1976, %v1980
  %v1985 = vand.u32 2147483647, %v1960
  %vm1986 = vcmp.eq.f32.partialorder %v1985, 8.507059e+37
  %v1987 = vand.u32 %v1960, 2147483648
  %v1988 = vor.u32 1.1754944e-38, %v1987
  %v1989 = vsel %vm1986, %v1988, %v1984
  %v1990 = vmul.f32 1.0, %v1989
  %v1991 = vrot.slane %v1764, 2
  %v1992 = vrot.slane %v1765, 2
  %v1995 = vtanh.pop %v1991
  %v1996 = vtanh.pop %v1992
  %v1997 = vrot.slane %v1764, 3
  %v1998 = vrot.slane %v1765, 3
  %v2001 = vxor.u32 %v1997, 2147483648
  %v2002 = vxor.u32 %v1998, 2147483648
  %v2003 = vmul.f32 %v2001, 1.442695
  %v2004 = vpow.pop %v2003
  %v2005 = vmul.f32 %v2002, 1.442695
  %v2006 = vpow.pop %v2005
  %v2007 = vadd.f32 %v2004, 1.0
  %v2008 = vadd.f32 %v2006, 1.0
  %v2009 = vrcp.pop %v2007
  %v2010 = vmul.f32 %v2007, %v2009
  %v2011 = vsub.f32 1.0, %v2010
  %v2012 = vmul.f32 %v2009, %v2011
  %v2013 = vadd.f32 %v2009, %v2012
  %vm2014 = vweird.f32 %v2007
  %vm2015 = vweird.f32 %v2009
  %vm2016 = vmor %vm2014, %vm2015
  %v2017 = vsel %vm2016, %v2009, %v2013
  %v2018 = vand.u32 2147483647, %v2007
  %vm2019 = vcmp.eq.f32.partialorder %v2018, 8.507059e+37
  %v2020 = vand.u32 %v2007, 2147483648
  %v2021 = vor.u32 1.1754944e-38, %v2020
  %v2022 = vsel %vm2019, %v2021, %v2017
  %v2023 = vmul.f32 1.0, %v2022
  %v2024 = vrcp.pop %v2008
  %v2025 = vmul.f32 %v2008, %v2024
  %v2026 = vsub.f32 1.0, %v2025
  %v2027 = vmul.f32 %v2024, %v2026
  %v2028 = vadd.f32 %v2024, %v2027
  %vm2029 = vweird.f32 %v2008
  %vm2030 = vweird.f32 %v2024
  %vm2031 = vmor %vm2029, %vm2030
  %v2032 = vsel %vm2031, %v2024, %v2028
  %v2033 = vand.u32 2147483647, %v2008
  %vm2034 = vcmp.eq.f32.partialorder %v2033, 8.507059e+37
  %v2035 = vand.u32 %v2008, 2147483648
  %v2036 = vor.u32 1.1754944e-38, %v2035
  %v2037 = vsel %vm2034, %v2036, %v2032
  %v2038 = vmul.f32 1.0, %v2037
  %v2040 = vrot.slane %v860, 1
  %v2042 = vmul.f32 %v1975, %v860
  %v2043 = vmul.f32 %v1990, %v2040
  %v2044 = vmul.f32 %v1931, %v1995
  %v2045 = vmul.f32 %v1946, %v1996
  %v2046 = vadd.f32 %v2042, %v2044
  %v2047 = vadd.f32 %v2043, %v2045
  %v2048 = vtanh.pop %v2046
  %v2049 = vtanh.pop %v2047
  %v2050 = vmul.f32 %v2023, %v2048
  %v2051 = vmul.f32 %v2038, %v2049
  %v2052 = vpack.c.bf16 %v1907, %v1907
  %v2053 = vpack.c.bf16 %v1908, %v1908
  %vm2054 = vcmask 1040384
  %vm2055 = vsmask.f32 256
  %vm2056 = vmand %vm2054, %vm2055
  %v2057 = vld [vmem:[%s7] sm:$0x1]
  %v2058 = vsel %vm2056, %v2052, %v2057
  %2059 = vst [vmem:[%s7] sm:$0x1] %v2058
  %v2060 = vld [vmem:[%s7 + $0x2] sm:$0x1]
  %v2061 = vsel %vm2056, %v2053, %v2060
  %2062 = vst [vmem:[%s7 + $0x2] sm:$0x1] %v2061
  %v2063 = vpack.c.bf16 %v2050, %v2050
  %v2064 = vpack.c.bf16 %v2051, %v2051
  %v2067 = vrot.slane %v2063, 2
  %v2068 = vrot.slane %v2064, 2
  %v2071 = vsel %vm1731, %v2063, %v2067
  %v2074 = vsel %vm1731, %v2064, %v2068
  %v2075 = vshll.u32 %v2071, 16
  %v2077 = vrot.slane %v2075, 7
  %v2078 = vshll.u32 %v2074, 16
  %v2080 = vrot.slane %v2078, 7
  %vm2083 = vcmask 1041409
  %vm2084 = vsmask.f32 7942
  %vm2085 = vmand %vm2083, %vm2084
  %v2086 = vld [vmem:[%s54] sm:$0x2]
  %v2087 = vsel %vm2085, %v2077, %v2086
  %2088 = vst [vmem:[%s54] sm:$0x2] %v2087
  %v2089 = vld [vmem:[%s54 + $0x2] sm:$0x2]
  %v2090 = vsel %vm2085, %v2080, %v2089
  %2091 = vst [vmem:[%s54 + $0x2] sm:$0x2] %v2090
  %2094 = vst [vmem:[#allocation1] ss:$9 sm:$0xff] %v1907
  %s2095 = scalar_lea.vmem [#allocation1], 1
  %2096 = vst [vmem:[%s2095] ss:$9 sm:$0xff] %v1908
  %v2097 = vld [vmem:[#allocation1] sm:$0xff]
  %2101 = vst [vmem:[#allocation1] ss:$9 sm:$0xff] %v2050
  %s2102 = scalar_lea.vmem [#allocation1], 1
  %2103 = vst [vmem:[%s2102] ss:$9 sm:$0xff] %v2051
  %v2104 = vld [vmem:[#allocation1] sm:$0xff]
  %v2106 = vpack.c.bf16 %v2097, %v2097
  %v2107 = vpack.c.bf16 %v2104, %v2104
  %2108 = vmatpush.bf16.msra.mxu0 %v1309
  %2109 = vmatpush.bf16.msra.mxu0 %v1301
  %2110 = vmatpush.bf16.msra.mxu0 %v1293
  %2111 = vmatpush.bf16.msra.mxu0 %v1285
  %2112 = vmatpush.bf16.msra.mxu0 %v1277
  %2113 = vmatpush.bf16.msra.mxu0 %v1269
  %2114 = vmatpush.bf16.msra.mxu0 %v1261
  %2115 = vmatpush.bf16.msra.mxu0 %v1253
  %2116 = vmatmul.bf16.gmra.mxu0 %v2106
  %v2117 = vpop.f32.mrf.mxu0
  %v2118 = vadd.f32 0.0, %v2117
  %v2119 = vpop.f32.mrf.mxu0
  %2120 = vdwg.mxu0
  %2121 = vmatpush.bf16.msra.mxu0 %v1373
  %2122 = vmatpush.bf16.msra.mxu0 %v1365
  %2123 = vmatpush.bf16.msra.mxu0 %v1357
  %2124 = vmatpush.bf16.msra.mxu0 %v1349
  %2125 = vmatpush.bf16.msra.mxu0 %v1341
  %2126 = vmatpush.bf16.msra.mxu0 %v1333
  %2127 = vmatpush.bf16.msra.mxu0 %v1325
  %2128 = vmatpush.bf16.msra.mxu0 %v1317
  %2129 = vmatmul.bf16.gmra.mxu0 %v2107
  %v2130 = vpop.f32.mrf.mxu0
  %v2131 = vadd.f32 %v2118, %v2130
  %v2132 = vpop.f32.mrf.mxu0
  %2133 = vdwg.mxu0
  %2134 = vmatpush.bf16.msra.mxu0 %v1310
  %2135 = vmatpush.bf16.msra.mxu0 %v1302
  %2136 = vmatpush.bf16.msra.mxu0 %v1294
  %2137 = vmatpush.bf16.msra.mxu0 %v1286
  %2138 = vmatpush.bf16.msra.mxu0 %v1278
  %2139 = vmatpush.bf16.msra.mxu0 %v1270
  %2140 = vmatpush.bf16.msra.mxu0 %v1262
  %2141 = vmatpush.bf16.msra.mxu0 %v1254
  %2142 = vmatmul.bf16.gmra.mxu0 %v2106
  %v2143 = vpop.f32.mrf.mxu0
  %v2144 = vadd.f32 0.0, %v2143
  %v2145 = vpop.f32.mrf.mxu0
  %2146 = vdwg.mxu0
  %2147 = vmatpush.bf16.msra.mxu0 %v1374
  %2148 = vmatpush.bf16.msra.mxu0 %v1366
  %2149 = vmatpush.bf16.msra.mxu0 %v1358
  %2150 = vmatpush.bf16.msra.mxu0 %v1350
  %2151 = vmatpush.bf16.msra.mxu0 %v1342
  %2152 = vmatpush.bf16.msra.mxu0 %v1334
  %2153 = vmatpush.bf16.msra.mxu0 %v1326
  %2154 = vmatpush.bf16.msra.mxu0 %v1318
  %2155 = vmatmul.bf16.gmra.mxu0 %v2107
  %v2156 = vpop.f32.mrf.mxu0
  %v2157 = vadd.f32 %v2144, %v2156
  %v2158 = vpop.f32.mrf.mxu0
  %2159 = vdwg.mxu0
  %2160 = vmatpush.bf16.msra.mxu0 %v1311
  %2161 = vmatpush.bf16.msra.mxu0 %v1303
  %2162 = vmatpush.bf16.msra.mxu0 %v1295
  %2163 = vmatpush.bf16.msra.mxu0 %v1287
  %2164 = vmatpush.bf16.msra.mxu0 %v1279
  %2165 = vmatpush.bf16.msra.mxu0 %v1271
  %2166 = vmatpush.bf16.msra.mxu0 %v1263
  %2167 = vmatpush.bf16.msra.mxu0 %v1255
  %2168 = vmatmul.bf16.gmra.mxu0 %v2106
  %v2169 = vpop.f32.mrf.mxu0
  %v2170 = vadd.f32 0.0, %v2169
  %v2171 = vpop.f32.mrf.mxu0
  %2172 = vdwg.mxu0
  %2173 = vmatpush.bf16.msra.mxu0 %v1375
  %2174 = vmatpush.bf16.msra.mxu0 %v1367
  %2175 = vmatpush.bf16.msra.mxu0 %v1359
  %2176 = vmatpush.bf16.msra.mxu0 %v1351
  %2177 = vmatpush.bf16.msra.mxu0 %v1343
  %2178 = vmatpush.bf16.msra.mxu0 %v1335
  %2179 = vmatpush.bf16.msra.mxu0 %v1327
  %2180 = vmatpush.bf16.msra.mxu0 %v1319
  %2181 = vmatmul.bf16.gmra.mxu0 %v2107
  %v2182 = vpop.f32.mrf.mxu0
  %v2183 = vadd.f32 %v2170, %v2182
  %v2184 = vpop.f32.mrf.mxu0
  %2185 = vdwg.mxu0
  %2186 = vmatpush.bf16.msra.mxu0 %v1312
  %2187 = vmatpush.bf16.msra.mxu0 %v1304
  %2188 = vmatpush.bf16.msra.mxu0 %v1296
  %2189 = vmatpush.bf16.msra.mxu0 %v1288
  %2190 = vmatpush.bf16.msra.mxu0 %v1280
  %2191 = vmatpush.bf16.msra.mxu0 %v1272
  %2192 = vmatpush.bf16.msra.mxu0 %v1264
  %2193 = vmatpush.bf16.msra.mxu0 %v1256
  %2194 = vmatmul.bf16.gmra.mxu0 %v2106
  %v2195 = vpop.f32.mrf.mxu0
  %v2196 = vadd.f32 0.0, %v2195
  %v2197 = vpop.f32.mrf.mxu0
  %2198 = vdwg.mxu0
  %2199 = vmatpush.bf16.msra.mxu0 %v1376
  %2200 = vmatpush.bf16.msra.mxu0 %v1368
  %2201 = vmatpush.bf16.msra.mxu0 %v1360
  %2202 = vmatpush.bf16.msra.mxu0 %v1352
  %2203 = vmatpush.bf16.msra.mxu0 %v1344
  %2204 = vmatpush.bf16.msra.mxu0 %v1336
  %2205 = vmatpush.bf16.msra.mxu0 %v1328
  %2206 = vmatpush.bf16.msra.mxu0 %v1320
  %2207 = vmatmul.bf16.gmra.mxu0 %v2107
  %v2208 = vpop.f32.mrf.mxu0
  %v2209 = vadd.f32 %v2196, %v2208
  %v2210 = vpop.f32.mrf.mxu0
  %2211 = vdwg.mxu0
  %2212 = vmatpush.bf16.msra.mxu0 %v1313
  %2213 = vmatpush.bf16.msra.mxu0 %v1305
  %2214 = vmatpush.bf16.msra.mxu0 %v1297
  %2215 = vmatpush.bf16.msra.mxu0 %v1289
  %2216 = vmatpush.bf16.msra.mxu0 %v1281
  %2217 = vmatpush.bf16.msra.mxu0 %v1273
  %2218 = vmatpush.bf16.msra.mxu0 %v1265
  %2219 = vmatpush.bf16.msra.mxu0 %v1257
  %2220 = vmatmul.bf16.gmra.mxu0 %v2106
  %v2221 = vpop.f32.mrf.mxu0
  %v2222 = vadd.f32 0.0, %v2221
  %v2223 = vpop.f32.mrf.mxu0
  %2224 = vdwg.mxu0
  %2225 = vmatpush.bf16.msra.mxu0 %v1377
  %2226 = vmatpush.bf16.msra.mxu0 %v1369
  %2227 = vmatpush.bf16.msra.mxu0 %v1361
  %2228 = vmatpush.bf16.msra.mxu0 %v1353
  %2229 = vmatpush.bf16.msra.mxu0 %v1345
  %2230 = vmatpush.bf16.msra.mxu0 %v1337
  %2231 = vmatpush.bf16.msra.mxu0 %v1329
  %2232 = vmatpush.bf16.msra.mxu0 %v1321
  %2233 = vmatmul.bf16.gmra.mxu0 %v2107
  %v2234 = vpop.f32.mrf.mxu0
  %v2235 = vadd.f32 %v2222, %v2234
  %v2236 = vpop.f32.mrf.mxu0
  %2237 = vdwg.mxu0
  %2238 = vmatpush.bf16.msra.mxu0 %v1314
  %2239 = vmatpush.bf16.msra.mxu0 %v1306
  %2240 = vmatpush.bf16.msra.mxu0 %v1298
  %2241 = vmatpush.bf16.msra.mxu0 %v1290
  %2242 = vmatpush.bf16.msra.mxu0 %v1282
  %2243 = vmatpush.bf16.msra.mxu0 %v1274
  %2244 = vmatpush.bf16.msra.mxu0 %v1266
  %2245 = vmatpush.bf16.msra.mxu0 %v1258
  %2246 = vmatmul.bf16.gmra.mxu0 %v2106
  %v2247 = vpop.f32.mrf.mxu0
  %v2248 = vadd.f32 0.0, %v2247
  %v2249 = vpop.f32.mrf.mxu0
  %2250 = vdwg.mxu0
  %2251 = vmatpush.bf16.msra.mxu0 %v1378
  %2252 = vmatpush.bf16.msra.mxu0 %v1370
  %2253 = vmatpush.bf16.msra.mxu0 %v1362
  %2254 = vmatpush.bf16.msra.mxu0 %v1354
  %2255 = vmatpush.bf16.msra.mxu0 %v1346
  %2256 = vmatpush.bf16.msra.mxu0 %v1338
  %2257 = vmatpush.bf16.msra.mxu0 %v1330
  %2258 = vmatpush.bf16.msra.mxu0 %v1322
  %2259 = vmatmul.bf16.gmra.mxu0 %v2107
  %v2260 = vpop.f32.mrf.mxu0
  %v2261 = vadd.f32 %v2248, %v2260
  %v2262 = vpop.f32.mrf.mxu0
  %2263 = vdwg.mxu0
  %2264 = vmatpush.bf16.msra.mxu0 %v1315
  %2265 = vmatpush.bf16.msra.mxu0 %v1307
  %2266 = vmatpush.bf16.msra.mxu0 %v1299
  %2267 = vmatpush.bf16.msra.mxu0 %v1291
  %2268 = vmatpush.bf16.msra.mxu0 %v1283
  %2269 = vmatpush.bf16.msra.mxu0 %v1275
  %2270 = vmatpush.bf16.msra.mxu0 %v1267
  %2271 = vmatpush.bf16.msra.mxu0 %v1259
  %2272 = vmatmul.bf16.gmra.mxu0 %v2106
  %v2273 = vpop.f32.mrf.mxu0
  %v2274 = vadd.f32 0.0, %v2273
  %v2275 = vpop.f32.mrf.mxu0
  %2276 = vdwg.mxu0
  %2277 = vmatpush.bf16.msra.mxu0 %v1379
  %2278 = vmatpush.bf16.msra.mxu0 %v1371
  %2279 = vmatpush.bf16.msra.mxu0 %v1363
  %2280 = vmatpush.bf16.msra.mxu0 %v1355
  %2281 = vmatpush.bf16.msra.mxu0 %v1347
  %2282 = vmatpush.bf16.msra.mxu0 %v1339
  %2283 = vmatpush.bf16.msra.mxu0 %v1331
  %2284 = vmatpush.bf16.msra.mxu0 %v1323
  %2285 = vmatmul.bf16.gmra.mxu0 %v2107
  %v2286 = vpop.f32.mrf.mxu0
  %v2287 = vadd.f32 %v2274, %v2286
  %v2288 = vpop.f32.mrf.mxu0
  %2289 = vdwg.mxu0
  %2290 = vmatpush.bf16.msra.mxu0 %v1316
  %2291 = vmatpush.bf16.msra.mxu0 %v1308
  %2292 = vmatpush.bf16.msra.mxu0 %v1300
  %2293 = vmatpush.bf16.msra.mxu0 %v1292
  %2294 = vmatpush.bf16.msra.mxu0 %v1284
  %2295 = vmatpush.bf16.msra.mxu0 %v1276
  %2296 = vmatpush.bf16.msra.mxu0 %v1268
  %2297 = vmatpush.bf16.msra.mxu0 %v1260
  %2298 = vmatmul.bf16.gmra.mxu0 %v2106
  %v2299 = vpop.f32.mrf.mxu0
  %v2300 = vadd.f32 0.0, %v2299
  %v2301 = vpop.f32.mrf.mxu0
  %2302 = vdwg.mxu0
  %2303 = vmatpush.bf16.msra.mxu0 %v1380
  %2304 = vmatpush.bf16.msra.mxu0 %v1372
  %2305 = vmatpush.bf16.msra.mxu0 %v1364
  %2306 = vmatpush.bf16.msra.mxu0 %v1356
  %2307 = vmatpush.bf16.msra.mxu0 %v1348
  %2308 = vmatpush.bf16.msra.mxu0 %v1340
  %2309 = vmatpush.bf16.msra.mxu0 %v1332
  %2310 = vmatpush.bf16.msra.mxu0 %v1324
  %2311 = vmatmul.bf16.gmra.mxu0 %v2107
  %v2312 = vpop.f32.mrf.mxu0
  %v2313 = vadd.f32 %v2300, %v2312
  %v2314 = vpop.f32.mrf.mxu0
  %2315 = vdwg.mxu0
  %s2316 = scalar_lea.vmem [#allocation5], 1
  %v2317 = vld [vmem:[%s2316] ss:$4 sm:$0xf]
  %s2318 = scalar_lea.vmem [#allocation5], 17
  %v2319 = vld [vmem:[%s2318] ss:$4 sm:$0xf]
  %v2324 = vrot.slane %v2157, 7
  %v2325 = vrot.slane %v2183, 6
  %v2326 = vrot.slane %v2209, 5
  %v2327 = vsel %vm1727, %v2131, %v2324
  %v2328 = vsel %vm1729, %v2325, %v2326
  %v2329 = vsel %vm1731, %v2327, %v2328
  %v2330 = vsel %vm1733, %v2131, %v2324
  %v2331 = vsel %vm1735, %v2325, %v2326
  %v2332 = vsel %vm1737, %v2330, %v2331
  %v2333 = vrot.slane %v2332, 1
  %v2336 = vadd.f32 %v2317, %v2329
  %v2337 = vadd.f32 %v2319, %v2333
  %s2338 = scalar_lea.vmem [#allocation6], 2
  %v2339 = vld [vmem:[%s2338] ss:$4 sm:$0xf]
  %s2340 = scalar_lea.vmem [#allocation6], 18
  %v2341 = vld [vmem:[%s2340] ss:$4 sm:$0xf]
  %v2346 = vrot.slane %v2261, 7
  %v2347 = vrot.slane %v2287, 6
  %v2348 = vrot.slane %v2313, 5
  %v2349 = vsel %vm1727, %v2235, %v2346
  %v2350 = vsel %vm1729, %v2347, %v2348
  %v2351 = vsel %vm1731, %v2349, %v2350
  %v2352 = vsel %vm1733, %v2235, %v2346
  %v2353 = vsel %vm1735, %v2347, %v2348
  %v2354 = vsel %vm1737, %v2352, %v2353
  %v2355 = vrot.slane %v2354, 1
  %v2358 = vadd.f32 %v2339, %v2351
  %v2359 = vadd.f32 %v2341, %v2355
  %v2360 = vxor.u32 %v2336, 2147483648
  %v2361 = vxor.u32 %v2337, 2147483648
  %v2362 = vmul.f32 %v2360, 1.442695
  %v2363 = vpow.pop %v2362
  %v2364 = vmul.f32 %v2361, 1.442695
  %v2365 = vpow.pop %v2364
  %v2366 = vadd.f32 %v2363, 1.0
  %v2367 = vadd.f32 %v2365, 1.0
  %v2368 = vrcp.pop %v2366
  %v2369 = vmul.f32 %v2366, %v2368
  %v2370 = vsub.f32 1.0, %v2369
  %v2371 = vmul.f32 %v2368, %v2370
  %v2372 = vadd.f32 %v2368, %v2371
  %vm2373 = vweird.f32 %v2366
  %vm2374 = vweird.f32 %v2368
  %vm2375 = vmor %vm2373, %vm2374
  %v2376 = vsel %vm2375, %v2368, %v2372
  %v2377 = vand.u32 2147483647, %v2366
  %vm2378 = vcmp.eq.f32.partialorder %v2377, 8.507059e+37
  %v2379 = vand.u32 %v2366, 2147483648
  %v2380 = vor.u32 1.1754944e-38, %v2379
  %v2381 = vsel %vm2378, %v2380, %v2376
  %v2382 = vmul.f32 1.0, %v2381
  %v2383 = vrcp.pop %v2367
  %v2384 = vmul.f32 %v2367, %v2383
  %v2385 = vsub.f32 1.0, %v2384
  %v2386 = vmul.f32 %v2383, %v2385
  %v2387 = vadd.f32 %v2383, %v2386
  %vm2388 = vweird.f32 %v2367
  %vm2389 = vweird.f32 %v2383
  %vm2390 = vmor %vm2388, %vm2389
  %v2391 = vsel %vm2390, %v2383, %v2387
  %v2392 = vand.u32 2147483647, %v2367
  %vm2393 = vcmp.eq.f32.partialorder %v2392, 8.507059e+37
  %v2394 = vand.u32 %v2367, 2147483648
  %v2395 = vor.u32 1.1754944e-38, %v2394
  %v2396 = vsel %vm2393, %v2395, %v2391
  %v2397 = vmul.f32 1.0, %v2396
  %v2400 = vrot.slane %v2336, 1
  %v2401 = vrot.slane %v2337, 1
  %v2404 = vxor.u32 %v2400, 2147483648
  %v2405 = vxor.u32 %v2401, 2147483648
  %v2406 = vmul.f32 %v2404, 1.442695
  %v2407 = vpow.pop %v2406
  %v2408 = vmul.f32 %v2405, 1.442695
  %v2409 = vpow.pop %v2408
  %v2410 = vadd.f32 %v2407, 1.0
  %v2411 = vadd.f32 %v2409, 1.0
  %v2412 = vrcp.pop %v2410
  %v2413 = vmul.f32 %v2410, %v2412
  %v2414 = vsub.f32 1.0, %v2413
  %v2415 = vmul.f32 %v2412, %v2414
  %v2416 = vadd.f32 %v2412, %v2415
  %vm2417 = vweird.f32 %v2410
  %vm2418 = vweird.f32 %v2412
  %vm2419 = vmor %vm2417, %vm2418
  %v2420 = vsel %vm2419, %v2412, %v2416
  %v2421 = vand.u32 2147483647, %v2410
  %vm2422 = vcmp.eq.f32.partialorder %v2421, 8.507059e+37
  %v2423 = vand.u32 %v2410, 2147483648
  %v2424 = vor.u32 1.1754944e-38, %v2423
  %v2425 = vsel %vm2422, %v2424, %v2420
  %v2426 = vmul.f32 1.0, %v2425
  %v2427 = vrcp.pop %v2411
  %v2428 = vmul.f32 %v2411, %v2427
  %v2429 = vsub.f32 1.0, %v2428
  %v2430 = vmul.f32 %v2427, %v2429
  %v2431 = vadd.f32 %v2427, %v2430
  %vm2432 = vweird.f32 %v2411
  %vm2433 = vweird.f32 %v2427
  %vm2434 = vmor %vm2432, %vm2433
  %v2435 = vsel %vm2434, %v2427, %v2431
  %v2436 = vand.u32 2147483647, %v2411
  %vm2437 = vcmp.eq.f32.partialorder %v2436, 8.507059e+37
  %v2438 = vand.u32 %v2411, 2147483648
  %v2439 = vor.u32 1.1754944e-38, %v2438
  %v2440 = vsel %vm2437, %v2439, %v2435
  %v2441 = vmul.f32 1.0, %v2440
  %v2442 = vrot.slane %v2336, 2
  %v2443 = vrot.slane %v2337, 2
  %v2446 = vtanh.pop %v2442
  %v2447 = vtanh.pop %v2443
  %v2448 = vrot.slane %v2336, 3
  %v2449 = vrot.slane %v2337, 3
  %v2452 = vxor.u32 %v2448, 2147483648
  %v2453 = vxor.u32 %v2449, 2147483648
  %v2454 = vmul.f32 %v2452, 1.442695
  %v2455 = vpow.pop %v2454
  %v2456 = vmul.f32 %v2453, 1.442695
  %v2457 = vpow.pop %v2456
  %v2458 = vadd.f32 %v2455, 1.0
  %v2459 = vadd.f32 %v2457, 1.0
  %v2460 = vrcp.pop %v2458
  %v2461 = vmul.f32 %v2458, %v2460
  %v2462 = vsub.f32 1.0, %v2461
  %v2463 = vmul.f32 %v2460, %v2462
  %v2464 = vadd.f32 %v2460, %v2463
  %vm2465 = vweird.f32 %v2458
  %vm2466 = vweird.f32 %v2460
  %vm2467 = vmor %vm2465, %vm2466
  %v2468 = vsel %vm2467, %v2460, %v2464
  %v2469 = vand.u32 2147483647, %v2458
  %vm2470 = vcmp.eq.f32.partialorder %v2469, 8.507059e+37
  %v2471 = vand.u32 %v2458, 2147483648
  %v2472 = vor.u32 1.1754944e-38, %v2471
  %v2473 = vsel %vm2470, %v2472, %v2468
  %v2474 = vmul.f32 1.0, %v2473
  %v2475 = vrcp.pop %v2459
  %v2476 = vmul.f32 %v2459, %v2475
  %v2477 = vsub.f32 1.0, %v2476
  %v2478 = vmul.f32 %v2475, %v2477
  %v2479 = vadd.f32 %v2475, %v2478
  %vm2480 = vweird.f32 %v2459
  %vm2481 = vweird.f32 %v2475
  %vm2482 = vmor %vm2480, %vm2481
  %v2483 = vsel %vm2482, %v2475, %v2479
  %v2484 = vand.u32 2147483647, %v2459
  %vm2485 = vcmp.eq.f32.partialorder %v2484, 8.507059e+37
  %v2486 = vand.u32 %v2459, 2147483648
  %v2487 = vor.u32 1.1754944e-38, %v2486
  %v2488 = vsel %vm2485, %v2487, %v2483
  %v2489 = vmul.f32 1.0, %v2488
  %v2490 = vmul.f32 %v2426, %v1903
  %v2491 = vmul.f32 %v2441, %v1904
  %v2492 = vmul.f32 %v2382, %v2446
  %v2493 = vmul.f32 %v2397, %v2447
  %v2494 = vadd.f32 %v2490, %v2492
  %v2495 = vadd.f32 %v2491, %v2493
  %v2496 = vtanh.pop %v2494
  %v2497 = vtanh.pop %v2495
  %v2498 = vmul.f32 %v2474, %v2496
  %v2499 = vmul.f32 %v2489, %v2497
  %v2500 = vxor.u32 %v2358, 2147483648
  %v2501 = vxor.u32 %v2359, 2147483648
  %v2502 = vmul.f32 %v2500, 1.442695
  %v2503 = vpow.pop %v2502
  %v2504 = vmul.f32 %v2501, 1.442695
  %v2505 = vpow.pop %v2504
  %v2506 = vadd.f32 %v2503, 1.0
  %v2507 = vadd.f32 %v2505, 1.0
  %v2508 = vrcp.pop %v2506
  %v2509 = vmul.f32 %v2506, %v2508
  %v2510 = vsub.f32 1.0, %v2509
  %v2511 = vmul.f32 %v2508, %v2510
  %v2512 = vadd.f32 %v2508, %v2511
  %vm2513 = vweird.f32 %v2506
  %vm2514 = vweird.f32 %v2508
  %vm2515 = vmor %vm2513, %vm2514
  %v2516 = vsel %vm2515, %v2508, %v2512
  %v2517 = vand.u32 2147483647, %v2506
  %vm2518 = vcmp.eq.f32.partialorder %v2517, 8.507059e+37
  %v2519 = vand.u32 %v2506, 2147483648
  %v2520 = vor.u32 1.1754944e-38, %v2519
  %v2521 = vsel %vm2518, %v2520, %v2516
  %v2522 = vmul.f32 1.0, %v2521
  %v2523 = vrcp.pop %v2507
  %v2524 = vmul.f32 %v2507, %v2523
  %v2525 = vsub.f32 1.0, %v2524
  %v2526 = vmul.f32 %v2523, %v2525
  %v2527 = vadd.f32 %v2523, %v2526
  %vm2528 = vweird.f32 %v2507
  %vm2529 = vweird.f32 %v2523
  %vm2530 = vmor %vm2528, %vm2529
  %v2531 = vsel %vm2530, %v2523, %v2527
  %v2532 = vand.u32 2147483647, %v2507
  %vm2533 = vcmp.eq.f32.partialorder %v2532, 8.507059e+37
  %v2534 = vand.u32 %v2507, 2147483648
  %v2535 = vor.u32 1.1754944e-38, %v2534
  %v2536 = vsel %vm2533, %v2535, %v2531
  %v2537 = vmul.f32 1.0, %v2536
  %v2540 = vrot.slane %v2358, 1
  %v2541 = vrot.slane %v2359, 1
  %v2544 = vxor.u32 %v2540, 2147483648
  %v2545 = vxor.u32 %v2541, 2147483648
  %v2546 = vmul.f32 %v2544, 1.442695
  %v2547 = vpow.pop %v2546
  %v2548 = vmul.f32 %v2545, 1.442695
  %v2549 = vpow.pop %v2548
  %v2550 = vadd.f32 %v2547, 1.0
  %v2551 = vadd.f32 %v2549, 1.0
  %v2552 = vrcp.pop %v2550
  %v2553 = vmul.f32 %v2550, %v2552
  %v2554 = vsub.f32 1.0, %v2553
  %v2555 = vmul.f32 %v2552, %v2554
  %v2556 = vadd.f32 %v2552, %v2555
  %vm2557 = vweird.f32 %v2550
  %vm2558 = vweird.f32 %v2552
  %vm2559 = vmor %vm2557, %vm2558
  %v2560 = vsel %vm2559, %v2552, %v2556
  %v2561 = vand.u32 2147483647, %v2550
  %vm2562 = vcmp.eq.f32.partialorder %v2561, 8.507059e+37
  %v2563 = vand.u32 %v2550, 2147483648
  %v2564 = vor.u32 1.1754944e-38, %v2563
  %v2565 = vsel %vm2562, %v2564, %v2560
  %v2566 = vmul.f32 1.0, %v2565
  %v2567 = vrcp.pop %v2551
  %v2568 = vmul.f32 %v2551, %v2567
  %v2569 = vsub.f32 1.0, %v2568
  %v2570 = vmul.f32 %v2567, %v2569
  %v2571 = vadd.f32 %v2567, %v2570
  %vm2572 = vweird.f32 %v2551
  %vm2573 = vweird.f32 %v2567
  %vm2574 = vmor %vm2572, %vm2573
  %v2575 = vsel %vm2574, %v2567, %v2571
  %v2576 = vand.u32 2147483647, %v2551
  %vm2577 = vcmp.eq.f32.partialorder %v2576, 8.507059e+37
  %v2578 = vand.u32 %v2551, 2147483648
  %v2579 = vor.u32 1.1754944e-38, %v2578
  %v2580 = vsel %vm2577, %v2579, %v2575
  %v2581 = vmul.f32 1.0, %v2580
  %v2582 = vrot.slane %v2358, 2
  %v2583 = vrot.slane %v2359, 2
  %v2586 = vtanh.pop %v2582
  %v2587 = vtanh.pop %v2583
  %v2588 = vrot.slane %v2358, 3
  %v2589 = vrot.slane %v2359, 3
  %v2592 = vxor.u32 %v2588, 2147483648
  %v2593 = vxor.u32 %v2589, 2147483648
  %v2594 = vmul.f32 %v2592, 1.442695
  %v2595 = vpow.pop %v2594
  %v2596 = vmul.f32 %v2593, 1.442695
  %v2597 = vpow.pop %v2596
  %v2598 = vadd.f32 %v2595, 1.0
  %v2599 = vadd.f32 %v2597, 1.0
  %v2600 = vrcp.pop %v2598
  %v2601 = vmul.f32 %v2598, %v2600
  %v2602 = vsub.f32 1.0, %v2601
  %v2603 = vmul.f32 %v2600, %v2602
  %v2604 = vadd.f32 %v2600, %v2603
  %vm2605 = vweird.f32 %v2598
  %vm2606 = vweird.f32 %v2600
  %vm2607 = vmor %vm2605, %vm2606
  %v2608 = vsel %vm2607, %v2600, %v2604
  %v2609 = vand.u32 2147483647, %v2598
  %vm2610 = vcmp.eq.f32.partialorder %v2609, 8.507059e+37
  %v2611 = vand.u32 %v2598, 2147483648
  %v2612 = vor.u32 1.1754944e-38, %v2611
  %v2613 = vsel %vm2610, %v2612, %v2608
  %v2614 = vmul.f32 1.0, %v2613
  %v2615 = vrcp.pop %v2599
  %v2616 = vmul.f32 %v2599, %v2615
  %v2617 = vsub.f32 1.0, %v2616
  %v2618 = vmul.f32 %v2615, %v2617
  %v2619 = vadd.f32 %v2615, %v2618
  %vm2620 = vweird.f32 %v2599
  %vm2621 = vweird.f32 %v2615
  %vm2622 = vmor %vm2620, %vm2621
  %v2623 = vsel %vm2622, %v2615, %v2619
  %v2624 = vand.u32 2147483647, %v2599
  %vm2625 = vcmp.eq.f32.partialorder %v2624, 8.507059e+37
  %v2626 = vand.u32 %v2599, 2147483648
  %v2627 = vor.u32 1.1754944e-38, %v2626
  %v2628 = vsel %vm2625, %v2627, %v2623
  %v2629 = vmul.f32 1.0, %v2628
  %v2630 = vmul.f32 %v2566, %v2046
  %v2631 = vmul.f32 %v2581, %v2047
  %v2632 = vmul.f32 %v2522, %v2586
  %v2633 = vmul.f32 %v2537, %v2587
  %v2634 = vadd.f32 %v2630, %v2632
  %v2635 = vadd.f32 %v2631, %v2633
  %v2636 = vtanh.pop %v2634
  %v2637 = vtanh.pop %v2635
  %v2638 = vmul.f32 %v2614, %v2636
  %v2639 = vmul.f32 %v2629, %v2637
  %v2640 = vpack.c.bf16 %v2498, %v2498
  %v2641 = vpack.c.bf16 %v2499, %v2499
  %v2644 = vrot.slane %v2640, 2
  %v2645 = vrot.slane %v2641, 2
  %v2648 = vsel %vm1731, %v2640, %v2644
  %v2651 = vsel %vm1731, %v2641, %v2645
  %v2652 = vshll.u32 %v2648, 16
  %v2654 = vshll.u32 %v2651, 16
  %vm2658 = vsmask.f32 7938
  %vm2659 = vmand %vm2054, %vm2658
  %v2660 = vld [vmem:[%s7] sm:$0x1]
  %v2661 = vsel %vm2659, %v2652, %v2660
  %2662 = vst [vmem:[%s7] sm:$0x1] %v2661
  %v2663 = vld [vmem:[%s7 + $0x2] sm:$0x1]
  %v2664 = vsel %vm2659, %v2654, %v2663
  %2665 = vst [vmem:[%s7 + $0x2] sm:$0x1] %v2664
  %v2666 = vpack.c.bf16 %v2638, %v2638
  %v2667 = vpack.c.bf16 %v2639, %v2639
  %v2670 = vrot.slane %v2666, 2
  %v2671 = vrot.slane %v2667, 2
  %v2674 = vsel %vm1731, %v2666, %v2670
  %v2678 = vsel %vm1731, %v2667, %v2671
  %v2680 = vrot.slane %v2674, 7
  %v2681 = vrot.slane %v2678, 7
  %vm2684 = vsmask.f32 1280
  %vm2685 = vmand %vm2083, %vm2684
  %v2686 = vld [vmem:[%s54] sm:$0x2]
  %v2687 = vsel %vm2685, %v2680, %v2686
  %2688 = vst [vmem:[%s54] sm:$0x2] %v2687
  %v2689 = vld [vmem:[%s54 + $0x2] sm:$0x2]
  %v2690 = vsel %vm2685, %v2681, %v2689
  %2691 = vst [vmem:[%s54 + $0x2] sm:$0x2] %v2690
  %2694 = vst [vmem:[#allocation1] ss:$9 sm:$0xff] %v2498
  %s2695 = scalar_lea.vmem [#allocation1], 1
  %2696 = vst [vmem:[%s2695] ss:$9 sm:$0xff] %v2499
  %v2697 = vld [vmem:[#allocation1] sm:$0xff]
  %2701 = vst [vmem:[#allocation1] ss:$9 sm:$0xff] %v2638
  %s2702 = scalar_lea.vmem [#allocation1], 1
  %2703 = vst [vmem:[%s2702] ss:$9 sm:$0xff] %v2639
  %v2704 = vld [vmem:[#allocation1] sm:$0xff]
  %v2706 = vpack.c.bf16 %v2697, %v2697
  %v2707 = vpack.c.bf16 %v2704, %v2704
  %2708 = vmatpush.bf16.msra.mxu0 %v1309
  %2709 = vmatpush.bf16.msra.mxu0 %v1301
  %2710 = vmatpush.bf16.msra.mxu0 %v1293
  %2711 = vmatpush.bf16.msra.mxu0 %v1285
  %2712 = vmatpush.bf16.msra.mxu0 %v1277
  %2713 = vmatpush.bf16.msra.mxu0 %v1269
  %2714 = vmatpush.bf16.msra.mxu0 %v1261
  %2715 = vmatpush.bf16.msra.mxu0 %v1253
  %2716 = vmatmul.bf16.gmra.mxu0 %v2706
  %v2717 = vpop.f32.mrf.mxu0
  %v2718 = vadd.f32 0.0, %v2717
  %v2719 = vpop.f32.mrf.mxu0
  %2720 = vdwg.mxu0
  %2721 = vmatpush.bf16.msra.mxu0 %v1373
  %2722 = vmatpush.bf16.msra.mxu0 %v1365
  %2723 = vmatpush.bf16.msra.mxu0 %v1357
  %2724 = vmatpush.bf16.msra.mxu0 %v1349
  %2725 = vmatpush.bf16.msra.mxu0 %v1341
  %2726 = vmatpush.bf16.msra.mxu0 %v1333
  %2727 = vmatpush.bf16.msra.mxu0 %v1325
  %2728 = vmatpush.bf16.msra.mxu0 %v1317
  %2729 = vmatmul.bf16.gmra.mxu0 %v2707
  %v2730 = vpop.f32.mrf.mxu0
  %v2731 = vadd.f32 %v2718, %v2730
  %v2732 = vpop.f32.mrf.mxu0
  %2733 = vdwg.mxu0
  %2734 = vmatpush.bf16.msra.mxu0 %v1310
  %2735 = vmatpush.bf16.msra.mxu0 %v1302
  %2736 = vmatpush.bf16.msra.mxu0 %v1294
  %2737 = vmatpush.bf16.msra.mxu0 %v1286
  %2738 = vmatpush.bf16.msra.mxu0 %v1278
  %2739 = vmatpush.bf16.msra.mxu0 %v1270
  %2740 = vmatpush.bf16.msra.mxu0 %v1262
  %2741 = vmatpush.bf16.msra.mxu0 %v1254
  %2742 = vmatmul.bf16.gmra.mxu0 %v2706
  %v2743 = vpop.f32.mrf.mxu0
  %v2744 = vadd.f32 0.0, %v2743
  %v2745 = vpop.f32.mrf.mxu0
  %2746 = vdwg.mxu0
  %2747 = vmatpush.bf16.msra.mxu0 %v1374
  %2748 = vmatpush.bf16.msra.mxu0 %v1366
  %2749 = vmatpush.bf16.msra.mxu0 %v1358
  %2750 = vmatpush.bf16.msra.mxu0 %v1350
  %2751 = vmatpush.bf16.msra.mxu0 %v1342
  %2752 = vmatpush.bf16.msra.mxu0 %v1334
  %2753 = vmatpush.bf16.msra.mxu0 %v1326
  %2754 = vmatpush.bf16.msra.mxu0 %v1318
  %2755 = vmatmul.bf16.gmra.mxu0 %v2707
  %v2756 = vpop.f32.mrf.mxu0
  %v2757 = vadd.f32 %v2744, %v2756
  %v2758 = vpop.f32.mrf.mxu0
  %2759 = vdwg.mxu0
  %2760 = vmatpush.bf16.msra.mxu0 %v1311
  %2761 = vmatpush.bf16.msra.mxu0 %v1303
  %2762 = vmatpush.bf16.msra.mxu0 %v1295
  %2763 = vmatpush.bf16.msra.mxu0 %v1287
  %2764 = vmatpush.bf16.msra.mxu0 %v1279
  %2765 = vmatpush.bf16.msra.mxu0 %v1271
  %2766 = vmatpush.bf16.msra.mxu0 %v1263
  %2767 = vmatpush.bf16.msra.mxu0 %v1255
  %2768 = vmatmul.bf16.gmra.mxu0 %v2706
  %v2769 = vpop.f32.mrf.mxu0
  %v2770 = vadd.f32 0.0, %v2769
  %v2771 = vpop.f32.mrf.mxu0
  %2772 = vdwg.mxu0
  %2773 = vmatpush.bf16.msra.mxu0 %v1375
  %2774 = vmatpush.bf16.msra.mxu0 %v1367
  %2775 = vmatpush.bf16.msra.mxu0 %v1359
  %2776 = vmatpush.bf16.msra.mxu0 %v1351
  %2777 = vmatpush.bf16.msra.mxu0 %v1343
  %2778 = vmatpush.bf16.msra.mxu0 %v1335
  %2779 = vmatpush.bf16.msra.mxu0 %v1327
  %2780 = vmatpush.bf16.msra.mxu0 %v1319
  %2781 = vmatmul.bf16.gmra.mxu0 %v2707
  %v2782 = vpop.f32.mrf.mxu0
  %v2783 = vadd.f32 %v2770, %v2782
  %v2784 = vpop.f32.mrf.mxu0
  %2785 = vdwg.mxu0
  %2786 = vmatpush.bf16.msra.mxu0 %v1312
  %2787 = vmatpush.bf16.msra.mxu0 %v1304
  %2788 = vmatpush.bf16.msra.mxu0 %v1296
  %2789 = vmatpush.bf16.msra.mxu0 %v1288
  %2790 = vmatpush.bf16.msra.mxu0 %v1280
  %2791 = vmatpush.bf16.msra.mxu0 %v1272
  %2792 = vmatpush.bf16.msra.mxu0 %v1264
  %2793 = vmatpush.bf16.msra.mxu0 %v1256
  %2794 = vmatmul.bf16.gmra.mxu0 %v2706
  %v2795 = vpop.f32.mrf.mxu0
  %v2796 = vadd.f32 0.0, %v2795
  %v2797 = vpop.f32.mrf.mxu0
  %2798 = vdwg.mxu0
  %2799 = vmatpush.bf16.msra.mxu0 %v1376
  %2800 = vmatpush.bf16.msra.mxu0 %v1368
  %2801 = vmatpush.bf16.msra.mxu0 %v1360
  %2802 = vmatpush.bf16.msra.mxu0 %v1352
  %2803 = vmatpush.bf16.msra.mxu0 %v1344
  %2804 = vmatpush.bf16.msra.mxu0 %v1336
  %2805 = vmatpush.bf16.msra.mxu0 %v1328
  %2806 = vmatpush.bf16.msra.mxu0 %v1320
  %2807 = vmatmul.bf16.gmra.mxu0 %v2707
  %v2808 = vpop.f32.mrf.mxu0
  %v2809 = vadd.f32 %v2796, %v2808
  %v2810 = vpop.f32.mrf.mxu0
  %2811 = vdwg.mxu0
  %2812 = vmatpush.bf16.msra.mxu0 %v1313
  %2813 = vmatpush.bf16.msra.mxu0 %v1305
  %2814 = vmatpush.bf16.msra.mxu0 %v1297
  %2815 = vmatpush.bf16.msra.mxu0 %v1289
  %2816 = vmatpush.bf16.msra.mxu0 %v1281
  %2817 = vmatpush.bf16.msra.mxu0 %v1273
  %2818 = vmatpush.bf16.msra.mxu0 %v1265
  %2819 = vmatpush.bf16.msra.mxu0 %v1257
  %2820 = vmatmul.bf16.gmra.mxu0 %v2706
  %v2821 = vpop.f32.mrf.mxu0
  %v2822 = vadd.f32 0.0, %v2821
  %v2823 = vpop.f32.mrf.mxu0
  %2824 = vdwg.mxu0
  %2825 = vmatpush.bf16.msra.mxu0 %v1377
  %2826 = vmatpush.bf16.msra.mxu0 %v1369
  %2827 = vmatpush.bf16.msra.mxu0 %v1361
  %2828 = vmatpush.bf16.msra.mxu0 %v1353
  %2829 = vmatpush.bf16.msra.mxu0 %v1345
  %2830 = vmatpush.bf16.msra.mxu0 %v1337
  %2831 = vmatpush.bf16.msra.mxu0 %v1329
  %2832 = vmatpush.bf16.msra.mxu0 %v1321
  %2833 = vmatmul.bf16.gmra.mxu0 %v2707
  %v2834 = vpop.f32.mrf.mxu0
  %v2835 = vadd.f32 %v2822, %v2834
  %v2836 = vpop.f32.mrf.mxu0
  %2837 = vdwg.mxu0
  %2838 = vmatpush.bf16.msra.mxu0 %v1314
  %2839 = vmatpush.bf16.msra.mxu0 %v1306
  %2840 = vmatpush.bf16.msra.mxu0 %v1298
  %2841 = vmatpush.bf16.msra.mxu0 %v1290
  %2842 = vmatpush.bf16.msra.mxu0 %v1282
  %2843 = vmatpush.bf16.msra.mxu0 %v1274
  %2844 = vmatpush.bf16.msra.mxu0 %v1266
  %2845 = vmatpush.bf16.msra.mxu0 %v1258
  %2846 = vmatmul.bf16.gmra.mxu0 %v2706
  %v2847 = vpop.f32.mrf.mxu0
  %v2848 = vadd.f32 0.0, %v2847
  %v2849 = vpop.f32.mrf.mxu0
  %2850 = vdwg.mxu0
  %2851 = vmatpush.bf16.msra.mxu0 %v1378
  %2852 = vmatpush.bf16.msra.mxu0 %v1370
  %2853 = vmatpush.bf16.msra.mxu0 %v1362
  %2854 = vmatpush.bf16.msra.mxu0 %v1354
  %2855 = vmatpush.bf16.msra.mxu0 %v1346
  %2856 = vmatpush.bf16.msra.mxu0 %v1338
  %2857 = vmatpush.bf16.msra.mxu0 %v1330
  %2858 = vmatpush.bf16.msra.mxu0 %v1322
  %2859 = vmatmul.bf16.gmra.mxu0 %v2707
  %v2860 = vpop.f32.mrf.mxu0
  %v2861 = vadd.f32 %v2848, %v2860
  %v2862 = vpop.f32.mrf.mxu0
  %2863 = vdwg.mxu0
  %2864 = vmatpush.bf16.msra.mxu0 %v1315
  %2865 = vmatpush.bf16.msra.mxu0 %v1307
  %2866 = vmatpush.bf16.msra.mxu0 %v1299
  %2867 = vmatpush.bf16.msra.mxu0 %v1291
  %2868 = vmatpush.bf16.msra.mxu0 %v1283
  %2869 = vmatpush.bf16.msra.mxu0 %v1275
  %2870 = vmatpush.bf16.msra.mxu0 %v1267
  %2871 = vmatpush.bf16.msra.mxu0 %v1259
  %2872 = vmatmul.bf16.gmra.mxu0 %v2706
  %v2873 = vpop.f32.mrf.mxu0
  %v2874 = vadd.f32 0.0, %v2873
  %v2875 = vpop.f32.mrf.mxu0
  %2876 = vdwg.mxu0
  %2877 = vmatpush.bf16.msra.mxu0 %v1379
  %2878 = vmatpush.bf16.msra.mxu0 %v1371
  %2879 = vmatpush.bf16.msra.mxu0 %v1363
  %2880 = vmatpush.bf16.msra.mxu0 %v1355
  %2881 = vmatpush.bf16.msra.mxu0 %v1347
  %2882 = vmatpush.bf16.msra.mxu0 %v1339
  %2883 = vmatpush.bf16.msra.mxu0 %v1331
  %2884 = vmatpush.bf16.msra.mxu0 %v1323
  %2885 = vmatmul.bf16.gmra.mxu0 %v2707
  %v2886 = vpop.f32.mrf.mxu0
  %v2887 = vadd.f32 %v2874, %v2886
  %v2888 = vpop.f32.mrf.mxu0
  %2889 = vdwg.mxu0
  %2890 = vmatpush.bf16.msra.mxu0 %v1316
  %2891 = vmatpush.bf16.msra.mxu0 %v1308
  %2892 = vmatpush.bf16.msra.mxu0 %v1300
  %2893 = vmatpush.bf16.msra.mxu0 %v1292
  %2894 = vmatpush.bf16.msra.mxu0 %v1284
  %2895 = vmatpush.bf16.msra.mxu0 %v1276
  %2896 = vmatpush.bf16.msra.mxu0 %v1268
  %2897 = vmatpush.bf16.msra.mxu0 %v1260
  %2898 = vmatmul.bf16.gmra.mxu0 %v2706
  %v2899 = vpop.f32.mrf.mxu0
  %v2900 = vadd.f32 0.0, %v2899
  %v2901 = vpop.f32.mrf.mxu0
  %2902 = vdwg.mxu0
  %2903 = vmatpush.bf16.msra.mxu0 %v1380
  %2904 = vmatpush.bf16.msra.mxu0 %v1372
  %2905 = vmatpush.bf16.msra.mxu0 %v1364
  %2906 = vmatpush.bf16.msra.mxu0 %v1356
  %2907 = vmatpush.bf16.msra.mxu0 %v1348
  %2908 = vmatpush.bf16.msra.mxu0 %v1340
  %2909 = vmatpush.bf16.msra.mxu0 %v1332
  %2910 = vmatpush.bf16.msra.mxu0 %v1324
  %2911 = vmatmul.bf16.gmra.mxu0 %v2707
  %v2912 = vpop.f32.mrf.mxu0
  %v2913 = vadd.f32 %v2900, %v2912
  %v2914 = vpop.f32.mrf.mxu0
  %2915 = vdwg.mxu0
  %s2916 = scalar_lea.vmem [#allocation5], 2
  %v2917 = vld [vmem:[%s2916] ss:$4 sm:$0xf]
  %s2918 = scalar_lea.vmem [#allocation5], 18
  %v2919 = vld [vmem:[%s2918] ss:$4 sm:$0xf]
  %v2924 = vrot.slane %v2757, 7
  %v2925 = vrot.slane %v2783, 6
  %v2926 = vrot.slane %v2809, 5
  %v2927 = vsel %vm1727, %v2731, %v2924
  %v2928 = vsel %vm1729, %v2925, %v2926
  %v2929 = vsel %vm1731, %v2927, %v2928
  %v2930 = vsel %vm1733, %v2731, %v2924
  %v2931 = vsel %vm1735, %v2925, %v2926
  %v2932 = vsel %vm1737, %v2930, %v2931
  %v2933 = vrot.slane %v2932, 1
  %v2936 = vadd.f32 %v2917, %v2929
  %v2937 = vadd.f32 %v2919, %v2933
  %s2938 = scalar_lea.vmem [#allocation6], 1
  %v2939 = vld [vmem:[%s2938] ss:$4 sm:$0xf]
  %s2940 = scalar_lea.vmem [#allocation6], 17
  %v2941 = vld [vmem:[%s2940] ss:$4 sm:$0xf]
  %v2946 = vrot.slane %v2861, 7
  %v2947 = vrot.slane %v2887, 6
  %v2948 = vrot.slane %v2913, 5
  %v2949 = vsel %vm1727, %v2835, %v2946
  %v2950 = vsel %vm1729, %v2947, %v2948
  %v2951 = vsel %vm1731, %v2949, %v2950
  %v2952 = vsel %vm1733, %v2835, %v2946
  %v2953 = vsel %vm1735, %v2947, %v2948
  %v2954 = vsel %vm1737, %v2952, %v2953
  %v2955 = vrot.slane %v2954, 1
  %v2958 = vadd.f32 %v2939, %v2951
  %v2959 = vadd.f32 %v2941, %v2955
  %v2960 = vxor.u32 %v2936, 2147483648
  %v2961 = vxor.u32 %v2937, 2147483648
  %v2962 = vmul.f32 %v2960, 1.442695
  %v2963 = vpow.pop %v2962
  %v2964 = vmul.f32 %v2961, 1.442695
  %v2965 = vpow.pop %v2964
  %v2966 = vadd.f32 %v2963, 1.0
  %v2967 = vadd.f32 %v2965, 1.0
  %v2968 = vrcp.pop %v2966
  %v2969 = vmul.f32 %v2966, %v2968
  %v2970 = vsub.f32 1.0, %v2969
  %v2971 = vmul.f32 %v2968, %v2970
  %v2972 = vadd.f32 %v2968, %v2971
  %vm2973 = vweird.f32 %v2966
  %vm2974 = vweird.f32 %v2968
  %vm2975 = vmor %vm2973, %vm2974
  %v2976 = vsel %vm2975, %v2968, %v2972
  %v2977 = vand.u32 2147483647, %v2966
  %vm2978 = vcmp.eq.f32.partialorder %v2977, 8.507059e+37
  %v2979 = vand.u32 %v2966, 2147483648
  %v2980 = vor.u32 1.1754944e-38, %v2979
  %v2981 = vsel %vm2978, %v2980, %v2976
  %v2982 = vmul.f32 1.0, %v2981
  %v2983 = vrcp.pop %v2967
  %v2984 = vmul.f32 %v2967, %v2983
  %v2985 = vsub.f32 1.0, %v2984
  %v2986 = vmul.f32 %v2983, %v2985
  %v2987 = vadd.f32 %v2983, %v2986
  %vm2988 = vweird.f32 %v2967
  %vm2989 = vweird.f32 %v2983
  %vm2990 = vmor %vm2988, %vm2989
  %v2991 = vsel %vm2990, %v2983, %v2987
  %v2992 = vand.u32 2147483647, %v2967
  %vm2993 = vcmp.eq.f32.partialorder %v2992, 8.507059e+37
  %v2994 = vand.u32 %v2967, 2147483648
  %v2995 = vor.u32 1.1754944e-38, %v2994
  %v2996 = vsel %vm2993, %v2995, %v2991
  %v2997 = vmul.f32 1.0, %v2996
  %v3000 = vrot.slane %v2936, 1
  %v3001 = vrot.slane %v2937, 1
  %v3004 = vxor.u32 %v3000, 2147483648
  %v3005 = vxor.u32 %v3001, 2147483648
  %v3006 = vmul.f32 %v3004, 1.442695
  %v3007 = vpow.pop %v3006
  %v3008 = vmul.f32 %v3005, 1.442695
  %v3009 = vpow.pop %v3008
  %v3010 = vadd.f32 %v3007, 1.0
  %v3011 = vadd.f32 %v3009, 1.0
  %v3012 = vrcp.pop %v3010
  %v3013 = vmul.f32 %v3010, %v3012
  %v3014 = vsub.f32 1.0, %v3013
  %v3015 = vmul.f32 %v3012, %v3014
  %v3016 = vadd.f32 %v3012, %v3015
  %vm3017 = vweird.f32 %v3010
  %vm3018 = vweird.f32 %v3012
  %vm3019 = vmor %vm3017, %vm3018
  %v3020 = vsel %vm3019, %v3012, %v3016
  %v3021 = vand.u32 2147483647, %v3010
  %vm3022 = vcmp.eq.f32.partialorder %v3021, 8.507059e+37
  %v3023 = vand.u32 %v3010, 2147483648
  %v3024 = vor.u32 1.1754944e-38, %v3023
  %v3025 = vsel %vm3022, %v3024, %v3020
  %v3026 = vmul.f32 1.0, %v3025
  %v3027 = vrcp.pop %v3011
  %v3028 = vmul.f32 %v3011, %v3027
  %v3029 = vsub.f32 1.0, %v3028
  %v3030 = vmul.f32 %v3027, %v3029
  %v3031 = vadd.f32 %v3027, %v3030
  %vm3032 = vweird.f32 %v3011
  %vm3033 = vweird.f32 %v3027
  %vm3034 = vmor %vm3032, %vm3033
  %v3035 = vsel %vm3034, %v3027, %v3031
  %v3036 = vand.u32 2147483647, %v3011
  %vm3037 = vcmp.eq.f32.partialorder %v3036, 8.507059e+37
  %v3038 = vand.u32 %v3011, 2147483648
  %v3039 = vor.u32 1.1754944e-38, %v3038
  %v3040 = vsel %vm3037, %v3039, %v3035
  %v3041 = vmul.f32 1.0, %v3040
  %v3042 = vrot.slane %v2936, 2
  %v3043 = vrot.slane %v2937, 2
  %v3046 = vtanh.pop %v3042
  %v3047 = vtanh.pop %v3043
  %v3048 = vrot.slane %v2936, 3
  %v3049 = vrot.slane %v2937, 3
  %v3052 = vxor.u32 %v3048, 2147483648
  %v3053 = vxor.u32 %v3049, 2147483648
  %v3054 = vmul.f32 %v3052, 1.442695
  %v3055 = vpow.pop %v3054
  %v3056 = vmul.f32 %v3053, 1.442695
  %v3057 = vpow.pop %v3056
  %v3058 = vadd.f32 %v3055, 1.0
  %v3059 = vadd.f32 %v3057, 1.0
  %v3060 = vrcp.pop %v3058
  %v3061 = vmul.f32 %v3058, %v3060
  %v3062 = vsub.f32 1.0, %v3061
  %v3063 = vmul.f32 %v3060, %v3062
  %v3064 = vadd.f32 %v3060, %v3063
  %vm3065 = vweird.f32 %v3058
  %vm3066 = vweird.f32 %v3060
  %vm3067 = vmor %vm3065, %vm3066
  %v3068 = vsel %vm3067, %v3060, %v3064
  %v3069 = vand.u32 2147483647, %v3058
  %vm3070 = vcmp.eq.f32.partialorder %v3069, 8.507059e+37
  %v3071 = vand.u32 %v3058, 2147483648
  %v3072 = vor.u32 1.1754944e-38, %v3071
  %v3073 = vsel %vm3070, %v3072, %v3068
  %v3074 = vmul.f32 1.0, %v3073
  %v3075 = vrcp.pop %v3059
  %v3076 = vmul.f32 %v3059, %v3075
  %v3077 = vsub.f32 1.0, %v3076
  %v3078 = vmul.f32 %v3075, %v3077
  %v3079 = vadd.f32 %v3075, %v3078
  %vm3080 = vweird.f32 %v3059
  %vm3081 = vweird.f32 %v3075
  %vm3082 = vmor %vm3080, %vm3081
  %v3083 = vsel %vm3082, %v3075, %v3079
  %v3084 = vand.u32 2147483647, %v3059
  %vm3085 = vcmp.eq.f32.partialorder %v3084, 8.507059e+37
  %v3086 = vand.u32 %v3059, 2147483648
  %v3087 = vor.u32 1.1754944e-38, %v3086
  %v3088 = vsel %vm3085, %v3087, %v3083
  %v3089 = vmul.f32 1.0, %v3088
  %v3090 = vmul.f32 %v3026, %v2494
  %v3091 = vmul.f32 %v3041, %v2495
  %v3092 = vmul.f32 %v2982, %v3046
  %v3093 = vmul.f32 %v2997, %v3047
  %v3094 = vadd.f32 %v3090, %v3092
  %v3095 = vadd.f32 %v3091, %v3093
  %v3096 = vtanh.pop %v3094
  %v3097 = vtanh.pop %v3095
  %v3098 = vmul.f32 %v3074, %v3096
  %v3099 = vmul.f32 %v3089, %v3097
  %v3100 = vxor.u32 %v2958, 2147483648
  %v3101 = vxor.u32 %v2959, 2147483648
  %v3102 = vmul.f32 %v3100, 1.442695
  %v3103 = vpow.pop %v3102
  %v3104 = vmul.f32 %v3101, 1.442695
  %v3105 = vpow.pop %v3104
  %v3106 = vadd.f32 %v3103, 1.0
  %v3107 = vadd.f32 %v3105, 1.0
  %v3108 = vrcp.pop %v3106
  %v3109 = vmul.f32 %v3106, %v3108
  %v3110 = vsub.f32 1.0, %v3109
  %v3111 = vmul.f32 %v3108, %v3110
  %v3112 = vadd.f32 %v3108, %v3111
  %vm3113 = vweird.f32 %v3106
  %vm3114 = vweird.f32 %v3108
  %vm3115 = vmor %vm3113, %vm3114
  %v3116 = vsel %vm3115, %v3108, %v3112
  %v3117 = vand.u32 2147483647, %v3106
  %vm3118 = vcmp.eq.f32.partialorder %v3117, 8.507059e+37
  %v3119 = vand.u32 %v3106, 2147483648
  %v3120 = vor.u32 1.1754944e-38, %v3119
  %v3121 = vsel %vm3118, %v3120, %v3116
  %v3122 = vmul.f32 1.0, %v3121
  %v3123 = vrcp.pop %v3107
  %v3124 = vmul.f32 %v3107, %v3123
  %v3125 = vsub.f32 1.0, %v3124
  %v3126 = vmul.f32 %v3123, %v3125
  %v3127 = vadd.f32 %v3123, %v3126
  %vm3128 = vweird.f32 %v3107
  %vm3129 = vweird.f32 %v3123
  %vm3130 = vmor %vm3128, %vm3129
  %v3131 = vsel %vm3130, %v3123, %v3127
  %v3132 = vand.u32 2147483647, %v3107
  %vm3133 = vcmp.eq.f32.partialorder %v3132, 8.507059e+37
  %v3134 = vand.u32 %v3107, 2147483648
  %v3135 = vor.u32 1.1754944e-38, %v3134
  %v3136 = vsel %vm3133, %v3135, %v3131
  %v3137 = vmul.f32 1.0, %v3136
  %v3140 = vrot.slane %v2958, 1
  %v3141 = vrot.slane %v2959, 1
  %v3144 = vxor.u32 %v3140, 2147483648
  %v3145 = vxor.u32 %v3141, 2147483648
  %v3146 = vmul.f32 %v3144, 1.442695
  %v3147 = vpow.pop %v3146
  %v3148 = vmul.f32 %v3145, 1.442695
  %v3149 = vpow.pop %v3148
  %v3150 = vadd.f32 %v3147, 1.0
  %v3151 = vadd.f32 %v3149, 1.0
  %v3152 = vrcp.pop %v3150
  %v3153 = vmul.f32 %v3150, %v3152
  %v3154 = vsub.f32 1.0, %v3153
  %v3155 = vmul.f32 %v3152, %v3154
  %v3156 = vadd.f32 %v3152, %v3155
  %vm3157 = vweird.f32 %v3150
  %vm3158 = vweird.f32 %v3152
  %vm3159 = vmor %vm3157, %vm3158
  %v3160 = vsel %vm3159, %v3152, %v3156
  %v3161 = vand.u32 2147483647, %v3150
  %vm3162 = vcmp.eq.f32.partialorder %v3161, 8.507059e+37
  %v3163 = vand.u32 %v3150, 2147483648
  %v3164 = vor.u32 1.1754944e-38, %v3163
  %v3165 = vsel %vm3162, %v3164, %v3160
  %v3166 = vmul.f32 1.0, %v3165
  %v3167 = vrcp.pop %v3151
  %v3168 = vmul.f32 %v3151, %v3167
  %v3169 = vsub.f32 1.0, %v3168
  %v3170 = vmul.f32 %v3167, %v3169
  %v3171 = vadd.f32 %v3167, %v3170
  %vm3172 = vweird.f32 %v3151
  %vm3173 = vweird.f32 %v3167
  %vm3174 = vmor %vm3172, %vm3173
  %v3175 = vsel %vm3174, %v3167, %v3171
  %v3176 = vand.u32 2147483647, %v3151
  %vm3177 = vcmp.eq.f32.partialorder %v3176, 8.507059e+37
  %v3178 = vand.u32 %v3151, 2147483648
  %v3179 = vor.u32 1.1754944e-38, %v3178
  %v3180 = vsel %vm3177, %v3179, %v3175
  %v3181 = vmul.f32 1.0, %v3180
  %v3182 = vrot.slane %v2958, 2
  %v3183 = vrot.slane %v2959, 2
  %v3186 = vtanh.pop %v3182
  %v3187 = vtanh.pop %v3183
  %v3188 = vrot.slane %v2958, 3
  %v3189 = vrot.slane %v2959, 3
  %v3192 = vxor.u32 %v3188, 2147483648
  %v3193 = vxor.u32 %v3189, 2147483648
  %v3194 = vmul.f32 %v3192, 1.442695
  %v3195 = vpow.pop %v3194
  %v3196 = vmul.f32 %v3193, 1.442695
  %v3197 = vpow.pop %v3196
  %v3198 = vadd.f32 %v3195, 1.0
  %v3199 = vadd.f32 %v3197, 1.0
  %v3200 = vrcp.pop %v3198
  %v3201 = vmul.f32 %v3198, %v3200
  %v3202 = vsub.f32 1.0, %v3201
  %v3203 = vmul.f32 %v3200, %v3202
  %v3204 = vadd.f32 %v3200, %v3203
  %vm3205 = vweird.f32 %v3198
  %vm3206 = vweird.f32 %v3200
  %vm3207 = vmor %vm3205, %vm3206
  %v3208 = vsel %vm3207, %v3200, %v3204
  %v3209 = vand.u32 2147483647, %v3198
  %vm3210 = vcmp.eq.f32.partialorder %v3209, 8.507059e+37
  %v3211 = vand.u32 %v3198, 2147483648
  %v3212 = vor.u32 1.1754944e-38, %v3211
  %v3213 = vsel %vm3210, %v3212, %v3208
  %v3214 = vmul.f32 1.0, %v3213
  %v3215 = vrcp.pop %v3199
  %v3216 = vmul.f32 %v3199, %v3215
  %v3217 = vsub.f32 1.0, %v3216
  %v3218 = vmul.f32 %v3215, %v3217
  %v3219 = vadd.f32 %v3215, %v3218
  %vm3220 = vweird.f32 %v3199
  %vm3221 = vweird.f32 %v3215
  %vm3222 = vmor %vm3220, %vm3221
  %v3223 = vsel %vm3222, %v3215, %v3219
  %v3224 = vand.u32 2147483647, %v3199
  %vm3225 = vcmp.eq.f32.partialorder %v3224, 8.507059e+37
  %v3226 = vand.u32 %v3199, 2147483648
  %v3227 = vor.u32 1.1754944e-38, %v3226
  %v3228 = vsel %vm3225, %v3227, %v3223
  %v3229 = vmul.f32 1.0, %v3228
  %v3230 = vmul.f32 %v3166, %v2634
  %v3231 = vmul.f32 %v3181, %v2635
  %v3232 = vmul.f32 %v3122, %v3186
  %v3233 = vmul.f32 %v3137, %v3187
  %v3234 = vadd.f32 %v3230, %v3232
  %v3235 = vadd.f32 %v3231, %v3233
  %v3236 = vtanh.pop %v3234
  %v3237 = vtanh.pop %v3235
  %v3238 = vmul.f32 %v3214, %v3236
  %v3239 = vmul.f32 %v3229, %v3237
  %v3240 = vpack.c.bf16 %v3098, %v3098
  %v3241 = vpack.c.bf16 %v3099, %v3099
  %v3244 = vrot.slane %v3240, 2
  %v3245 = vrot.slane %v3241, 2
  %v3248 = vsel %vm1731, %v3240, %v3244
  %v3252 = vsel %vm1731, %v3241, %v3245
  %v3254 = vrot.slane %v3248, 7
  %v3255 = vrot.slane %v3252, 7
  %v3258 = vld [vmem:[%s7] sm:$0x2]
  %v3259 = vsel %vm2685, %v3254, %v3258
  %3260 = vst [vmem:[%s7] sm:$0x2] %v3259
  %v3261 = vld [vmem:[%s7 + $0x2] sm:$0x2]
  %v3262 = vsel %vm2685, %v3255, %v3261
  %3263 = vst [vmem:[%s7 + $0x2] sm:$0x2] %v3262
  %v3264 = vpack.c.bf16 %v3238, %v3238
  %v3265 = vpack.c.bf16 %v3239, %v3239
  %v3268 = vrot.slane %v3264, 2
  %v3269 = vrot.slane %v3265, 2
  %v3272 = vsel %vm1731, %v3264, %v3268
  %v3275 = vsel %vm1731, %v3265, %v3269
  %v3276 = vshll.u32 %v3272, 16
  %v3278 = vshll.u32 %v3275, 16
  %v3282 = vld [vmem:[%s54] sm:$0x1]
  %v3283 = vsel %vm2659, %v3276, %v3282
  %3284 = vst [vmem:[%s54] sm:$0x1] %v3283
  %v3285 = vld [vmem:[%s54 + $0x2] sm:$0x1]
  %v3286 = vsel %vm2659, %v3278, %v3285
  %3287 = vst [vmem:[%s54 + $0x2] sm:$0x1] %v3286
  %3290 = vst [vmem:[#allocation1] ss:$9 sm:$0xff] %v3098
  %s3291 = scalar_lea.vmem [#allocation1], 1
  %3292 = vst [vmem:[%s3291] ss:$9 sm:$0xff] %v3099
  %v3293 = vld [vmem:[#allocation1] sm:$0xff]
  %3297 = vst [vmem:[#allocation1] ss:$9 sm:$0xff] %v3238
  %s3298 = scalar_lea.vmem [#allocation1], 1
  %3299 = vst [vmem:[%s3298] ss:$9 sm:$0xff] %v3239
  %v3300 = vld [vmem:[#allocation1] sm:$0xff]
  %v3302 = vpack.c.bf16 %v3293, %v3293
  %v3303 = vpack.c.bf16 %v3300, %v3300
  %3304 = vmatpush.bf16.msra.mxu0 %v1309
  %3305 = vmatpush.bf16.msra.mxu0 %v1301
  %3306 = vmatpush.bf16.msra.mxu0 %v1293
  %3307 = vmatpush.bf16.msra.mxu0 %v1285
  %3308 = vmatpush.bf16.msra.mxu0 %v1277
  %3309 = vmatpush.bf16.msra.mxu0 %v1269
  %3310 = vmatpush.bf16.msra.mxu0 %v1261
  %3311 = vmatpush.bf16.msra.mxu0 %v1253
  %3312 = vmatmul.bf16.gmra.mxu0 %v3302
  %v3313 = vpop.f32.mrf.mxu0
  %v3314 = vadd.f32 0.0, %v3313
  %v3315 = vpop.f32.mrf.mxu0
  %3316 = vdwg.mxu0
  %3317 = vmatpush.bf16.msra.mxu0 %v1373
  %3318 = vmatpush.bf16.msra.mxu0 %v1365
  %3319 = vmatpush.bf16.msra.mxu0 %v1357
  %3320 = vmatpush.bf16.msra.mxu0 %v1349
  %3321 = vmatpush.bf16.msra.mxu0 %v1341
  %3322 = vmatpush.bf16.msra.mxu0 %v1333
  %3323 = vmatpush.bf16.msra.mxu0 %v1325
  %3324 = vmatpush.bf16.msra.mxu0 %v1317
  %3325 = vmatmul.bf16.gmra.mxu0 %v3303
  %v3326 = vpop.f32.mrf.mxu0
  %v3327 = vadd.f32 %v3314, %v3326
  %v3328 = vpop.f32.mrf.mxu0
  %3329 = vdwg.mxu0
  %3330 = vmatpush.bf16.msra.mxu0 %v1310
  %3331 = vmatpush.bf16.msra.mxu0 %v1302
  %3332 = vmatpush.bf16.msra.mxu0 %v1294
  %3333 = vmatpush.bf16.msra.mxu0 %v1286
  %3334 = vmatpush.bf16.msra.mxu0 %v1278
  %3335 = vmatpush.bf16.msra.mxu0 %v1270
  %3336 = vmatpush.bf16.msra.mxu0 %v1262
  %3337 = vmatpush.bf16.msra.mxu0 %v1254
  %3338 = vmatmul.bf16.gmra.mxu0 %v3302
  %v3339 = vpop.f32.mrf.mxu0
  %v3340 = vadd.f32 0.0, %v3339
  %v3341 = vpop.f32.mrf.mxu0
  %3342 = vdwg.mxu0
  %3343 = vmatpush.bf16.msra.mxu0 %v1374
  %3344 = vmatpush.bf16.msra.mxu0 %v1366
  %3345 = vmatpush.bf16.msra.mxu0 %v1358
  %3346 = vmatpush.bf16.msra.mxu0 %v1350
  %3347 = vmatpush.bf16.msra.mxu0 %v1342
  %3348 = vmatpush.bf16.msra.mxu0 %v1334
  %3349 = vmatpush.bf16.msra.mxu0 %v1326
  %3350 = vmatpush.bf16.msra.mxu0 %v1318
  %3351 = vmatmul.bf16.gmra.mxu0 %v3303
  %v3352 = vpop.f32.mrf.mxu0
  %v3353 = vadd.f32 %v3340, %v3352
  %v3354 = vpop.f32.mrf.mxu0
  %3355 = vdwg.mxu0
  %3356 = vmatpush.bf16.msra.mxu0 %v1311
  %3357 = vmatpush.bf16.msra.mxu0 %v1303
  %3358 = vmatpush.bf16.msra.mxu0 %v1295
  %3359 = vmatpush.bf16.msra.mxu0 %v1287
  %3360 = vmatpush.bf16.msra.mxu0 %v1279
  %3361 = vmatpush.bf16.msra.mxu0 %v1271
  %3362 = vmatpush.bf16.msra.mxu0 %v1263
  %3363 = vmatpush.bf16.msra.mxu0 %v1255
  %3364 = vmatmul.bf16.gmra.mxu0 %v3302
  %v3365 = vpop.f32.mrf.mxu0
  %v3366 = vadd.f32 0.0, %v3365
  %v3367 = vpop.f32.mrf.mxu0
  %3368 = vdwg.mxu0
  %3369 = vmatpush.bf16.msra.mxu0 %v1375
  %3370 = vmatpush.bf16.msra.mxu0 %v1367
  %3371 = vmatpush.bf16.msra.mxu0 %v1359
  %3372 = vmatpush.bf16.msra.mxu0 %v1351
  %3373 = vmatpush.bf16.msra.mxu0 %v1343
  %3374 = vmatpush.bf16.msra.mxu0 %v1335
  %3375 = vmatpush.bf16.msra.mxu0 %v1327
  %3376 = vmatpush.bf16.msra.mxu0 %v1319
  %3377 = vmatmul.bf16.gmra.mxu0 %v3303
  %v3378 = vpop.f32.mrf.mxu0
  %v3379 = vadd.f32 %v3366, %v3378
  %v3380 = vpop.f32.mrf.mxu0
  %3381 = vdwg.mxu0
  %3382 = vmatpush.bf16.msra.mxu0 %v1312
  %3383 = vmatpush.bf16.msra.mxu0 %v1304
  %3384 = vmatpush.bf16.msra.mxu0 %v1296
  %3385 = vmatpush.bf16.msra.mxu0 %v1288
  %3386 = vmatpush.bf16.msra.mxu0 %v1280
  %3387 = vmatpush.bf16.msra.mxu0 %v1272
  %3388 = vmatpush.bf16.msra.mxu0 %v1264
  %3389 = vmatpush.bf16.msra.mxu0 %v1256
  %3390 = vmatmul.bf16.gmra.mxu0 %v3302
  %v3391 = vpop.f32.mrf.mxu0
  %v3392 = vadd.f32 0.0, %v3391
  %v3393 = vpop.f32.mrf.mxu0
  %3394 = vdwg.mxu0
  %3395 = vmatpush.bf16.msra.mxu0 %v1376
  %3396 = vmatpush.bf16.msra.mxu0 %v1368
  %3397 = vmatpush.bf16.msra.mxu0 %v1360
  %3398 = vmatpush.bf16.msra.mxu0 %v1352
  %3399 = vmatpush.bf16.msra.mxu0 %v1344
  %3400 = vmatpush.bf16.msra.mxu0 %v1336
  %3401 = vmatpush.bf16.msra.mxu0 %v1328
  %3402 = vmatpush.bf16.msra.mxu0 %v1320
  %3403 = vmatmul.bf16.gmra.mxu0 %v3303
  %v3404 = vpop.f32.mrf.mxu0
  %v3405 = vadd.f32 %v3392, %v3404
  %v3406 = vpop.f32.mrf.mxu0
  %3407 = vdwg.mxu0
  %3408 = vmatpush.bf16.msra.mxu0 %v1313
  %3409 = vmatpush.bf16.msra.mxu0 %v1305
  %3410 = vmatpush.bf16.msra.mxu0 %v1297
  %3411 = vmatpush.bf16.msra.mxu0 %v1289
  %3412 = vmatpush.bf16.msra.mxu0 %v1281
  %3413 = vmatpush.bf16.msra.mxu0 %v1273
  %3414 = vmatpush.bf16.msra.mxu0 %v1265
  %3415 = vmatpush.bf16.msra.mxu0 %v1257
  %3416 = vmatmul.bf16.gmra.mxu0 %v3302
  %v3417 = vpop.f32.mrf.mxu0
  %v3418 = vadd.f32 0.0, %v3417
  %v3419 = vpop.f32.mrf.mxu0
  %3420 = vdwg.mxu0
  %3421 = vmatpush.bf16.msra.mxu0 %v1377
  %3422 = vmatpush.bf16.msra.mxu0 %v1369
  %3423 = vmatpush.bf16.msra.mxu0 %v1361
  %3424 = vmatpush.bf16.msra.mxu0 %v1353
  %3425 = vmatpush.bf16.msra.mxu0 %v1345
  %3426 = vmatpush.bf16.msra.mxu0 %v1337
  %3427 = vmatpush.bf16.msra.mxu0 %v1329
  %3428 = vmatpush.bf16.msra.mxu0 %v1321
  %3429 = vmatmul.bf16.gmra.mxu0 %v3303
  %v3430 = vpop.f32.mrf.mxu0
  %v3431 = vadd.f32 %v3418, %v3430
  %v3432 = vpop.f32.mrf.mxu0
  %3433 = vdwg.mxu0
  %3434 = vmatpush.bf16.msra.mxu0 %v1314
  %3435 = vmatpush.bf16.msra.mxu0 %v1306
  %3436 = vmatpush.bf16.msra.mxu0 %v1298
  %3437 = vmatpush.bf16.msra.mxu0 %v1290
  %3438 = vmatpush.bf16.msra.mxu0 %v1282
  %3439 = vmatpush.bf16.msra.mxu0 %v1274
  %3440 = vmatpush.bf16.msra.mxu0 %v1266
  %3441 = vmatpush.bf16.msra.mxu0 %v1258
  %3442 = vmatmul.bf16.gmra.mxu0 %v3302
  %v3443 = vpop.f32.mrf.mxu0
  %v3444 = vadd.f32 0.0, %v3443
  %v3445 = vpop.f32.mrf.mxu0
  %3446 = vdwg.mxu0
  %3447 = vmatpush.bf16.msra.mxu0 %v1378
  %3448 = vmatpush.bf16.msra.mxu0 %v1370
  %3449 = vmatpush.bf16.msra.mxu0 %v1362
  %3450 = vmatpush.bf16.msra.mxu0 %v1354
  %3451 = vmatpush.bf16.msra.mxu0 %v1346
  %3452 = vmatpush.bf16.msra.mxu0 %v1338
  %3453 = vmatpush.bf16.msra.mxu0 %v1330
  %3454 = vmatpush.bf16.msra.mxu0 %v1322
  %3455 = vmatmul.bf16.gmra.mxu0 %v3303
  %v3456 = vpop.f32.mrf.mxu0
  %v3457 = vadd.f32 %v3444, %v3456
  %v3458 = vpop.f32.mrf.mxu0
  %3459 = vdwg.mxu0
  %3460 = vmatpush.bf16.msra.mxu0 %v1315
  %3461 = vmatpush.bf16.msra.mxu0 %v1307
  %3462 = vmatpush.bf16.msra.mxu0 %v1299
  %3463 = vmatpush.bf16.msra.mxu0 %v1291
  %3464 = vmatpush.bf16.msra.mxu0 %v1283
  %3465 = vmatpush.bf16.msra.mxu0 %v1275
  %3466 = vmatpush.bf16.msra.mxu0 %v1267
  %3467 = vmatpush.bf16.msra.mxu0 %v1259
  %3468 = vmatmul.bf16.gmra.mxu0 %v3302
  %v3469 = vpop.f32.mrf.mxu0
  %v3470 = vadd.f32 0.0, %v3469
  %v3471 = vpop.f32.mrf.mxu0
  %3472 = vdwg.mxu0
  %3473 = vmatpush.bf16.msra.mxu0 %v1379
  %3474 = vmatpush.bf16.msra.mxu0 %v1371
  %3475 = vmatpush.bf16.msra.mxu0 %v1363
  %3476 = vmatpush.bf16.msra.mxu0 %v1355
  %3477 = vmatpush.bf16.msra.mxu0 %v1347
  %3478 = vmatpush.bf16.msra.mxu0 %v1339
  %3479 = vmatpush.bf16.msra.mxu0 %v1331
  %3480 = vmatpush.bf16.msra.mxu0 %v1323
  %3481 = vmatmul.bf16.gmra.mxu0 %v3303
  %v3482 = vpop.f32.mrf.mxu0
  %v3483 = vadd.f32 %v3470, %v3482
  %v3484 = vpop.f32.mrf.mxu0
  %3485 = vdwg.mxu0
  %3486 = vmatpush.bf16.msra.mxu0 %v1316
  %3487 = vmatpush.bf16.msra.mxu0 %v1308
  %3488 = vmatpush.bf16.msra.mxu0 %v1300
  %3489 = vmatpush.bf16.msra.mxu0 %v1292
  %3490 = vmatpush.bf16.msra.mxu0 %v1284
  %3491 = vmatpush.bf16.msra.mxu0 %v1276
  %3492 = vmatpush.bf16.msra.mxu0 %v1268
  %3493 = vmatpush.bf16.msra.mxu0 %v1260
  %3494 = vmatmul.bf16.gmra.mxu0 %v3302
  %v3495 = vpop.f32.mrf.mxu0
  %v3496 = vadd.f32 0.0, %v3495
  %v3497 = vpop.f32.mrf.mxu0
  %3498 = vdwg.mxu0
  %3499 = vmatpush.bf16.msra.mxu0 %v1380
  %3500 = vmatpush.bf16.msra.mxu0 %v1372
  %3501 = vmatpush.bf16.msra.mxu0 %v1364
  %3502 = vmatpush.bf16.msra.mxu0 %v1356
  %3503 = vmatpush.bf16.msra.mxu0 %v1348
  %3504 = vmatpush.bf16.msra.mxu0 %v1340
  %3505 = vmatpush.bf16.msra.mxu0 %v1332
  %3506 = vmatpush.bf16.msra.mxu0 %v1324
  %3507 = vmatmul.bf16.gmra.mxu0 %v3303
  %v3508 = vpop.f32.mrf.mxu0
  %v3509 = vadd.f32 %v3496, %v3508
  %v3510 = vpop.f32.mrf.mxu0
  %3511 = vdwg.mxu0
  %s3512 = scalar_lea.vmem [#allocation5], 3
  %v3513 = vld [vmem:[%s3512] ss:$4 sm:$0xf]
  %s3514 = scalar_lea.vmem [#allocation5], 19
  %v3515 = vld [vmem:[%s3514] ss:$4 sm:$0xf]
  %v3520 = vrot.slane %v3353, 7
  %v3521 = vrot.slane %v3379, 6
  %v3522 = vrot.slane %v3405, 5
  %v3523 = vsel %vm1727, %v3327, %v3520
  %v3524 = vsel %vm1729, %v3521, %v3522
  %v3525 = vsel %vm1731, %v3523, %v3524
  %v3526 = vsel %vm1733, %v3327, %v3520
  %v3527 = vsel %vm1735, %v3521, %v3522
  %v3528 = vsel %vm1737, %v3526, %v3527
  %v3529 = vrot.slane %v3528, 1
  %v3532 = vadd.f32 %v3513, %v3525
  %v3533 = vadd.f32 %v3515, %v3529
  %v3534 = vld [vmem:[#allocation6] ss:$4 sm:$0xf]
  %s3535 = scalar_lea.vmem [#allocation6], 16
  %v3536 = vld [vmem:[%s3535] ss:$4 sm:$0xf]
  %v3541 = vrot.slane %v3457, 7
  %v3542 = vrot.slane %v3483, 6
  %v3543 = vrot.slane %v3509, 5
  %v3544 = vsel %vm1727, %v3431, %v3541
  %v3545 = vsel %vm1729, %v3542, %v3543
  %v3546 = vsel %vm1731, %v3544, %v3545
  %v3547 = vsel %vm1733, %v3431, %v3541
  %v3548 = vsel %vm1735, %v3542, %v3543
  %v3549 = vsel %vm1737, %v3547, %v3548
  %v3550 = vrot.slane %v3549, 1
  %v3553 = vadd.f32 %v3534, %v3546
  %v3554 = vadd.f32 %v3536, %v3550
  %v3555 = vxor.u32 %v3532, 2147483648
  %v3556 = vxor.u32 %v3533, 2147483648
  %v3557 = vmul.f32 %v3555, 1.442695
  %v3558 = vpow.pop %v3557
  %v3559 = vmul.f32 %v3556, 1.442695
  %v3560 = vpow.pop %v3559
  %v3561 = vadd.f32 %v3558, 1.0
  %v3562 = vadd.f32 %v3560, 1.0
  %v3563 = vrcp.pop %v3561
  %v3564 = vmul.f32 %v3561, %v3563
  %v3565 = vsub.f32 1.0, %v3564
  %v3566 = vmul.f32 %v3563, %v3565
  %v3567 = vadd.f32 %v3563, %v3566
  %vm3568 = vweird.f32 %v3561
  %vm3569 = vweird.f32 %v3563
  %vm3570 = vmor %vm3568, %vm3569
  %v3571 = vsel %vm3570, %v3563, %v3567
  %v3572 = vand.u32 2147483647, %v3561
  %vm3573 = vcmp.eq.f32.partialorder %v3572, 8.507059e+37
  %v3574 = vand.u32 %v3561, 2147483648
  %v3575 = vor.u32 1.1754944e-38, %v3574
  %v3576 = vsel %vm3573, %v3575, %v3571
  %v3577 = vmul.f32 1.0, %v3576
  %v3578 = vrcp.pop %v3562
  %v3579 = vmul.f32 %v3562, %v3578
  %v3580 = vsub.f32 1.0, %v3579
  %v3581 = vmul.f32 %v3578, %v3580
  %v3582 = vadd.f32 %v3578, %v3581
  %vm3583 = vweird.f32 %v3562
  %vm3584 = vweird.f32 %v3578
  %vm3585 = vmor %vm3583, %vm3584
  %v3586 = vsel %vm3585, %v3578, %v3582
  %v3587 = vand.u32 2147483647, %v3562
  %vm3588 = vcmp.eq.f32.partialorder %v3587, 8.507059e+37
  %v3589 = vand.u32 %v3562, 2147483648
  %v3590 = vor.u32 1.1754944e-38, %v3589
  %v3591 = vsel %vm3588, %v3590, %v3586
  %v3592 = vmul.f32 1.0, %v3591
  %v3595 = vrot.slane %v3532, 1
  %v3596 = vrot.slane %v3533, 1
  %v3599 = vxor.u32 %v3595, 2147483648
  %v3600 = vxor.u32 %v3596, 2147483648
  %v3601 = vmul.f32 %v3599, 1.442695
  %v3602 = vpow.pop %v3601
  %v3603 = vmul.f32 %v3600, 1.442695
  %v3604 = vpow.pop %v3603
  %v3605 = vadd.f32 %v3602, 1.0
  %v3606 = vadd.f32 %v3604, 1.0
  %v3607 = vrcp.pop %v3605
  %v3608 = vmul.f32 %v3605, %v3607
  %v3609 = vsub.f32 1.0, %v3608
  %v3610 = vmul.f32 %v3607, %v3609
  %v3611 = vadd.f32 %v3607, %v3610
  %vm3612 = vweird.f32 %v3605
  %vm3613 = vweird.f32 %v3607
  %vm3614 = vmor %vm3612, %vm3613
  %v3615 = vsel %vm3614, %v3607, %v3611
  %v3616 = vand.u32 2147483647, %v3605
  %vm3617 = vcmp.eq.f32.partialorder %v3616, 8.507059e+37
  %v3618 = vand.u32 %v3605, 2147483648
  %v3619 = vor.u32 1.1754944e-38, %v3618
  %v3620 = vsel %vm3617, %v3619, %v3615
  %v3621 = vmul.f32 1.0, %v3620
  %v3622 = vrcp.pop %v3606
  %v3623 = vmul.f32 %v3606, %v3622
  %v3624 = vsub.f32 1.0, %v3623
  %v3625 = vmul.f32 %v3622, %v3624
  %v3626 = vadd.f32 %v3622, %v3625
  %vm3627 = vweird.f32 %v3606
  %vm3628 = vweird.f32 %v3622
  %vm3629 = vmor %vm3627, %vm3628
  %v3630 = vsel %vm3629, %v3622, %v3626
  %v3631 = vand.u32 2147483647, %v3606
  %vm3632 = vcmp.eq.f32.partialorder %v3631, 8.507059e+37
  %v3633 = vand.u32 %v3606, 2147483648
  %v3634 = vor.u32 1.1754944e-38, %v3633
  %v3635 = vsel %vm3632, %v3634, %v3630
  %v3636 = vmul.f32 1.0, %v3635
  %v3637 = vrot.slane %v3532, 2
  %v3638 = vrot.slane %v3533, 2
  %v3641 = vtanh.pop %v3637
  %v3642 = vtanh.pop %v3638
  %v3643 = vrot.slane %v3532, 3
  %v3644 = vrot.slane %v3533, 3
  %v3647 = vxor.u32 %v3643, 2147483648
  %v3648 = vxor.u32 %v3644, 2147483648
  %v3649 = vmul.f32 %v3647, 1.442695
  %v3650 = vpow.pop %v3649
  %v3651 = vmul.f32 %v3648, 1.442695
  %v3652 = vpow.pop %v3651
  %v3653 = vadd.f32 %v3650, 1.0
  %v3654 = vadd.f32 %v3652, 1.0
  %v3655 = vrcp.pop %v3653
  %v3656 = vmul.f32 %v3653, %v3655
  %v3657 = vsub.f32 1.0, %v3656
  %v3658 = vmul.f32 %v3655, %v3657
  %v3659 = vadd.f32 %v3655, %v3658
  %vm3660 = vweird.f32 %v3653
  %vm3661 = vweird.f32 %v3655
  %vm3662 = vmor %vm3660, %vm3661
  %v3663 = vsel %vm3662, %v3655, %v3659
  %v3664 = vand.u32 2147483647, %v3653
  %vm3665 = vcmp.eq.f32.partialorder %v3664, 8.507059e+37
  %v3666 = vand.u32 %v3653, 2147483648
  %v3667 = vor.u32 1.1754944e-38, %v3666
  %v3668 = vsel %vm3665, %v3667, %v3663
  %v3669 = vmul.f32 1.0, %v3668
  %v3670 = vrcp.pop %v3654
  %v3671 = vmul.f32 %v3654, %v3670
  %v3672 = vsub.f32 1.0, %v3671
  %v3673 = vmul.f32 %v3670, %v3672
  %v3674 = vadd.f32 %v3670, %v3673
  %vm3675 = vweird.f32 %v3654
  %vm3676 = vweird.f32 %v3670
  %vm3677 = vmor %vm3675, %vm3676
  %v3678 = vsel %vm3677, %v3670, %v3674
  %v3679 = vand.u32 2147483647, %v3654
  %vm3680 = vcmp.eq.f32.partialorder %v3679, 8.507059e+37
  %v3681 = vand.u32 %v3654, 2147483648
  %v3682 = vor.u32 1.1754944e-38, %v3681
  %v3683 = vsel %vm3680, %v3682, %v3678
  %v3684 = vmul.f32 1.0, %v3683
  %v3685 = vmul.f32 %v3621, %v3094
  %v3686 = vmul.f32 %v3636, %v3095
  %v3687 = vmul.f32 %v3577, %v3641
  %v3688 = vmul.f32 %v3592, %v3642
  %v3689 = vadd.f32 %v3685, %v3687
  %v3690 = vadd.f32 %v3686, %v3688
  %v3691 = vtanh.pop %v3689
  %v3692 = vtanh.pop %v3690
  %v3693 = vmul.f32 %v3669, %v3691
  %v3694 = vmul.f32 %v3684, %v3692
  %v3695 = vxor.u32 %v3553, 2147483648
  %v3696 = vxor.u32 %v3554, 2147483648
  %v3697 = vmul.f32 %v3695, 1.442695
  %v3698 = vpow.pop %v3697
  %v3699 = vmul.f32 %v3696, 1.442695
  %v3700 = vpow.pop %v3699
  %v3701 = vadd.f32 %v3698, 1.0
  %v3702 = vadd.f32 %v3700, 1.0
  %v3703 = vrcp.pop %v3701
  %v3704 = vmul.f32 %v3701, %v3703
  %v3705 = vsub.f32 1.0, %v3704
  %v3706 = vmul.f32 %v3703, %v3705
  %v3707 = vadd.f32 %v3703, %v3706
  %vm3708 = vweird.f32 %v3701
  %vm3709 = vweird.f32 %v3703
  %vm3710 = vmor %vm3708, %vm3709
  %v3711 = vsel %vm3710, %v3703, %v3707
  %v3712 = vand.u32 2147483647, %v3701
  %vm3713 = vcmp.eq.f32.partialorder %v3712, 8.507059e+37
  %v3714 = vand.u32 %v3701, 2147483648
  %v3715 = vor.u32 1.1754944e-38, %v3714
  %v3716 = vsel %vm3713, %v3715, %v3711
  %v3717 = vmul.f32 1.0, %v3716
  %v3718 = vrcp.pop %v3702
  %v3719 = vmul.f32 %v3702, %v3718
  %v3720 = vsub.f32 1.0, %v3719
  %v3721 = vmul.f32 %v3718, %v3720
  %v3722 = vadd.f32 %v3718, %v3721
  %vm3723 = vweird.f32 %v3702
  %vm3724 = vweird.f32 %v3718
  %vm3725 = vmor %vm3723, %vm3724
  %v3726 = vsel %vm3725, %v3718, %v3722
  %v3727 = vand.u32 2147483647, %v3702
  %vm3728 = vcmp.eq.f32.partialorder %v3727, 8.507059e+37
  %v3729 = vand.u32 %v3702, 2147483648
  %v3730 = vor.u32 1.1754944e-38, %v3729
  %v3731 = vsel %vm3728, %v3730, %v3726
  %v3732 = vmul.f32 1.0, %v3731
  %v3735 = vrot.slane %v3553, 1
  %v3736 = vrot.slane %v3554, 1
  %v3739 = vxor.u32 %v3735, 2147483648
  %v3740 = vxor.u32 %v3736, 2147483648
  %v3741 = vmul.f32 %v3739, 1.442695
  %v3742 = vpow.pop %v3741
  %v3743 = vmul.f32 %v3740, 1.442695
  %v3744 = vpow.pop %v3743
  %v3745 = vadd.f32 %v3742, 1.0
  %v3746 = vadd.f32 %v3744, 1.0
  %v3747 = vrcp.pop %v3745
  %v3748 = vmul.f32 %v3745, %v3747
  %v3749 = vsub.f32 1.0, %v3748
  %v3750 = vmul.f32 %v3747, %v3749
  %v3751 = vadd.f32 %v3747, %v3750
  %vm3752 = vweird.f32 %v3745
  %vm3753 = vweird.f32 %v3747
  %vm3754 = vmor %vm3752, %vm3753
  %v3755 = vsel %vm3754, %v3747, %v3751
  %v3756 = vand.u32 2147483647, %v3745
  %vm3757 = vcmp.eq.f32.partialorder %v3756, 8.507059e+37
  %v3758 = vand.u32 %v3745, 2147483648
  %v3759 = vor.u32 1.1754944e-38, %v3758
  %v3760 = vsel %vm3757, %v3759, %v3755
  %v3761 = vmul.f32 1.0, %v3760
  %v3762 = vrcp.pop %v3746
  %v3763 = vmul.f32 %v3746, %v3762
  %v3764 = vsub.f32 1.0, %v3763
  %v3765 = vmul.f32 %v3762, %v3764
  %v3766 = vadd.f32 %v3762, %v3765
  %vm3767 = vweird.f32 %v3746
  %vm3768 = vweird.f32 %v3762
  %vm3769 = vmor %vm3767, %vm3768
  %v3770 = vsel %vm3769, %v3762, %v3766
  %v3771 = vand.u32 2147483647, %v3746
  %vm3772 = vcmp.eq.f32.partialorder %v3771, 8.507059e+37
  %v3773 = vand.u32 %v3746, 2147483648
  %v3774 = vor.u32 1.1754944e-38, %v3773
  %v3775 = vsel %vm3772, %v3774, %v3770
  %v3776 = vmul.f32 1.0, %v3775
  %v3777 = vrot.slane %v3553, 2
  %v3778 = vrot.slane %v3554, 2
  %v3781 = vtanh.pop %v3777
  %v3782 = vtanh.pop %v3778
  %v3783 = vrot.slane %v3553, 3
  %v3784 = vrot.slane %v3554, 3
  %v3787 = vxor.u32 %v3783, 2147483648
  %v3788 = vxor.u32 %v3784, 2147483648
  %v3789 = vmul.f32 %v3787, 1.442695
  %v3790 = vpow.pop %v3789
  %v3791 = vmul.f32 %v3788, 1.442695
  %v3792 = vpow.pop %v3791
  %v3793 = vadd.f32 %v3790, 1.0
  %v3794 = vadd.f32 %v3792, 1.0
  %v3795 = vrcp.pop %v3793
  %v3796 = vmul.f32 %v3793, %v3795
  %v3797 = vsub.f32 1.0, %v3796
  %v3798 = vmul.f32 %v3795, %v3797
  %v3799 = vadd.f32 %v3795, %v3798
  %vm3800 = vweird.f32 %v3793
  %vm3801 = vweird.f32 %v3795
  %vm3802 = vmor %vm3800, %vm3801
  %v3803 = vsel %vm3802, %v3795, %v3799
  %v3804 = vand.u32 2147483647, %v3793
  %vm3805 = vcmp.eq.f32.partialorder %v3804, 8.507059e+37
  %v3806 = vand.u32 %v3793, 2147483648
  %v3807 = vor.u32 1.1754944e-38, %v3806
  %v3808 = vsel %vm3805, %v3807, %v3803
  %v3809 = vmul.f32 1.0, %v3808
  %v3810 = vrcp.pop %v3794
  %v3811 = vmul.f32 %v3794, %v3810
  %v3812 = vsub.f32 1.0, %v3811
  %v3813 = vmul.f32 %v3810, %v3812
  %v3814 = vadd.f32 %v3810, %v3813
  %vm3815 = vweird.f32 %v3794
  %vm3816 = vweird.f32 %v3810
  %vm3817 = vmor %vm3815, %vm3816
  %v3818 = vsel %vm3817, %v3810, %v3814
  %v3819 = vand.u32 2147483647, %v3794
  %vm3820 = vcmp.eq.f32.partialorder %v3819, 8.507059e+37
  %v3821 = vand.u32 %v3794, 2147483648
  %v3822 = vor.u32 1.1754944e-38, %v3821
  %v3823 = vsel %vm3820, %v3822, %v3818
  %v3824 = vmul.f32 1.0, %v3823
  %v3825 = vmul.f32 %v3761, %v3234
  %v3826 = vmul.f32 %v3776, %v3235
  %v3827 = vmul.f32 %v3717, %v3781
  %v3828 = vmul.f32 %v3732, %v3782
  %v3829 = vadd.f32 %v3825, %v3827
  %v3830 = vadd.f32 %v3826, %v3828
  %v3831 = vtanh.pop %v3829
  %v3832 = vtanh.pop %v3830
  %v3833 = vmul.f32 %v3809, %v3831
  %v3834 = vmul.f32 %v3824, %v3832
  %v3835 = vpack.c.bf16 %v3693, %v3693
  %v3836 = vpack.c.bf16 %v3694, %v3694
  %v3839 = vrot.slane %v3835, 2
  %v3840 = vrot.slane %v3836, 2
  %v3843 = vsel %vm1731, %v3835, %v3839
  %v3846 = vsel %vm1731, %v3836, %v3840
  %v3847 = vshll.u32 %v3843, 16
  %v3849 = vrot.slane %v3847, 7
  %v3850 = vshll.u32 %v3846, 16
  %v3852 = vrot.slane %v3850, 7
  %v3855 = vld [vmem:[%s7] sm:$0x2]
  %v3856 = vsel %vm2085, %v3849, %v3855
  %3857 = vst [vmem:[%s7] sm:$0x2] %v3856
  %v3858 = vld [vmem:[%s7 + $0x2] sm:$0x2]
  %v3859 = vsel %vm2085, %v3852, %v3858
  %3860 = vst [vmem:[%s7 + $0x2] sm:$0x2] %v3859
  %v3861 = vpack.c.bf16 %v3833, %v3833
  %v3862 = vpack.c.bf16 %v3834, %v3834
  %v3863 = vld [vmem:[%s54] sm:$0x1]
  %v3864 = vsel %vm2056, %v3861, %v3863
  %3865 = vst [vmem:[%s54] sm:$0x1] %v3864
  %v3866 = vld [vmem:[%s54 + $0x2] sm:$0x1]
  %v3867 = vsel %vm2056, %v3862, %v3866
  %3868 = vst [vmem:[%s54 + $0x2] sm:$0x1] %v3867
  %3871 = vst [vmem:[#allocation1] ss:$9 sm:$0xff] %v3693
  %s3872 = scalar_lea.vmem [#allocation1], 1
  %3873 = vst [vmem:[%s3872] ss:$9 sm:$0xff] %v3694
  %v3874 = vld [vmem:[#allocation1] sm:$0xff]
  %3877 = vst [vmem:[#allocation1] ss:$9 sm:$0xff] %v3833
  %s3878 = scalar_lea.vmem [#allocation1], 1
  %3879 = vst [vmem:[%s3878] ss:$9 sm:$0xff] %v3834
  %v3880 = vld [vmem:[#allocation1] sm:$0xff]
  %v3881 = vrot.slane %v3880, 6
  %v3882 = vsel %vm1731, %v3874, %v3881
  %3884 = vst [vmem:[#allocation2] sm:$0xf] %v3882
  %3887 = vst [vmem:[#allocation1] ss:$9 sm:$0xff] %v3689
  %s3888 = scalar_lea.vmem [#allocation1], 1
  %3889 = vst [vmem:[%s3888] ss:$9 sm:$0xff] %v3690
  %v3890 = vld [vmem:[#allocation1] sm:$0xff]
  %3892 = vst [vmem:[#allocation3] sm:$0x3] %v3890
  %3895 = vst [vmem:[#allocation1] ss:$9 sm:$0xff] %v3829
  %s3896 = scalar_lea.vmem [#allocation1], 1
  %3897 = vst [vmem:[%s3896] ss:$9 sm:$0xff] %v3830
  %v3898 = vld [vmem:[#allocation1] sm:$0xff]
  %3900 = vst [vmem:[#allocation4] sm:$0x3] %v3898
  %s3901 = ssub.s32 0, 0
  %p3902 = scmp.lt.s32.totalorder %s3901, 0
  %s3903 = scalar_select %p3902, %s3901, 0
  %s3904 = smul.addr %s3903, 2
  %s3905 = scalar_lea.vmem %s8, %s3904
  // Predicated region
  $region34: #{crnn_forward.9} parent=0 // pred_check
    _
  $region35: #{crnn_forward.9} parent=0 // pred_check_branch
    %3907 = sbr.rel (0) target = $region37
  $region36: #{crnn_forward.9} parent=0 // pred_region
    _
  $region37: #{crnn_forward.9} parent=0 // pred_fallthru
    _
  // Predicated region
  $region38: #{crnn_forward.9} parent=0 // pred_check
    _
  $region39: #{crnn_forward.9} parent=0 // pred_check_branch
    %3909 = sbr.rel (0) target = $region41
  $region40: #{crnn_forward.9} parent=0 // pred_region
    %s3910 = ssub.s32 0, 0
  $region41: #{crnn_forward.9} parent=0 // pred_fallthru
    _
  // Predicated region
  $region42: #{crnn_forward.9} parent=0 // pred_check
    _
  $region43: #{crnn_forward.9} parent=0 // pred_check_branch
    %3912 = sbr.rel (0) target = $region45
  $region44: #{crnn_forward.9} parent=0 // pred_region
    _
  $region45: #{crnn_forward.9} parent=0 // pred_fallthru
    _
  // Predicated region
  $region46: #{crnn_forward.9} parent=0 // pred_check
    _
  $region47: #{crnn_forward.9} parent=0 // pred_check_branch
    %3914 = sbr.rel (0) target = $region49
  $region48: #{crnn_forward.9} parent=0 // pred_region
    %s3915 = ssub.s32 0, 0
    %p3916 = scmp.lt.s32.totalorder %s3915, 0
    %s3917 = scalar_select %p3916, %s3915, 0
    %s3918 = smul.addr %s3917, 2
    %s3919 = scalar_lea.vmem %s8, %s3918
  $region49: #{crnn_forward.9} parent=0 // pred_fallthru
    _

// kernel: crnn_forward.10
$region0: #{crnn_forward.10}
  #allocation0 [shape = 'u32[]', space=smem, size = 0x4, offset = 0x4, fixed_abs, tag = 'smem constant byte address 0x4 - core index']
  #allocation1 [shape = 'u32[72,128]{1,0:T(1,128)}', space=vmem, size = 0x9000, scoped, tag = 'internal scratch']
  #allocation2 [shape = 'f32[2,256]{1,0:T(2,128)}', space=vmem, size = 0x800, scoped, tag = 'scratch operand']
  #allocation3 [shape = 'f32[2,128]{1,0:T(2,128)}', space=vmem, size = 0x400, scoped, tag = 'scratch operand']
  #allocation4 [shape = 'f32[2,128]{1,0:T(2,128)}', space=vmem, size = 0x400, scoped, tag = 'scratch operand']
  #allocation5 [shape = 'f32[2,4,512]{2,1,0:T(4,128)}', space=vmem, size = 0x4000, scoped, tag = 'scratch operand']
  #allocation6 [shape = 'f32[2,4,512]{2,1,0:T(4,128)}', space=vmem, size = 0x4000, scoped, tag = 'scratch operand']
  %s0 = inlined_call_operand.vmem [shape: bf16[2,4,128], index: 0, kind: input, shape index: {}, may-alias: {0,2}]
  %s1 = inlined_call_operand.vmem [shape: bf16[2,4,128], index: 1, kind: input, shape index: {}, may-alias: {1,3}]
  %s2 = inlined_call_operand.vmem [shape: bf16[2,4,128], index: 2, kind: input, shape index: {}, may-alias: {0,2}]
  %s3 = inlined_call_operand.vmem [shape: bf16[2,4,128], index: 3, kind: input, shape index: {}, may-alias: {1,3}]
  %s4 = inlined_call_operand.vmem [shape: bf16[256,512], index: 4, kind: input, shape index: {}]
  %s5 = inlined_call_operand.vmem [shape: bf16[256,512], index: 5, kind: input, shape index: {}]
  %s6 = inlined_call_operand.vmem [shape: bf16[256,1024], index: 6, kind: input, shape index: {}]
  %s7 = inlined_call_operand.vmem [shape: f32[1,512], index: 7, kind: input, shape index: {}]
  %s8 = inlined_call_operand.vmem [shape: f32[1,512], index: 8, kind: input, shape index: {}]
  %s9 = inlined_call_operand.vmem [shape: bf16[2,4,128], index: 9, kind: output, shape index: {0}]
  %s10 = inlined_call_operand.vmem [shape: bf16[2,4,128], index: 10, kind: output, shape index: {1}]
  %11 = xla_tuple %s9, %s10
  %s12 = sld [smem:[#allocation0]]
  $region58: #{crnn_forward.10} parent=0
    _
  %s14 = ssub.s32 1, %s12
  %s15 = scalar_select 0, %s14, %s12
  // Predicated region
  $region2: #{crnn_forward.10} parent=0 // pred_check
    _
  $region3: #{crnn_forward.10} parent=0 // pred_check_branch
    %17 = sbr.rel (0) target = $region5
  $region4: #{crnn_forward.10} parent=0 // pred_region
    _
  $region5: #{crnn_forward.10} parent=0 // pred_fallthru
    _
  // Predicated region
  $region6: #{crnn_forward.10} parent=0 // pred_check
    _
  $region7: #{crnn_forward.10} parent=0 // pred_check_branch
    %19 = sbr.rel (0) target = $region9
  $region8: #{crnn_forward.10} parent=0 // pred_region
    _
  $region9: #{crnn_forward.10} parent=0 // pred_fallthru
    _
  // Predicated region
  $region10: #{crnn_forward.10} parent=0 // pred_check
    _
  $region11: #{crnn_forward.10} parent=0 // pred_check_branch
    %21 = sbr.rel (0) target = $region13
  $region12: #{crnn_forward.10} parent=0 // pred_region
    %s22 = ssub.s32 0, 0
    %p23 = scmp.lt.s32.totalorder %s22, 0
    %s24 = scalar_select %p23, %s22, 0
    %s25 = smul.addr %s24, 2
    %s26 = scalar_lea.vmem %s2, %s25
    %s27 = ssub.s32 0, 0
  $region13: #{crnn_forward.10} parent=0 // pred_fallthru
    _
  // Predicated region
  $region14: #{crnn_forward.10} parent=0 // pred_check
    _
  $region15: #{crnn_forward.10} parent=0 // pred_check_branch
    %29 = sbr.rel (0) target = $region17
  $region16: #{crnn_forward.10} parent=0 // pred_region
    %s30 = ssub.s32 0, 0
    %p31 = scmp.lt.s32.totalorder %s30, 0
    %s32 = scalar_select %p31, %s30, 0
    %s33 = smul.addr %s32, 2
    %s34 = scalar_lea.vmem %s3, %s33
    %s35 = ssub.s32 0, 0
  $region17: #{crnn_forward.10} parent=0 // pred_fallthru
    _
  // Predicated region
  $region18: #{crnn_forward.10} parent=0 // pred_check
    _
  $region19: #{crnn_forward.10} parent=0 // pred_check_branch
    %37 = sbr.rel (0) target = $region21
  $region20: #{crnn_forward.10} parent=0 // pred_region
    _
  $region21: #{crnn_forward.10} parent=0 // pred_fallthru
    _
  // Predicated region
  $region22: #{crnn_forward.10} parent=0 // pred_check
    _
  $region23: #{crnn_forward.10} parent=0 // pred_check_branch
    %39 = sbr.rel (0) target = $region25
  $region24: #{crnn_forward.10} parent=0 // pred_region
    _
  $region25: #{crnn_forward.10} parent=0 // pred_fallthru
    _
  // Predicated region
  $region26: #{crnn_forward.10} parent=0 // pred_check
    _
  $region27: #{crnn_forward.10} parent=0 // pred_check_branch
    %41 = sbr.rel (0) target = $region29
  $region28: #{crnn_forward.10} parent=0 // pred_region
    _
  $region29: #{crnn_forward.10} parent=0 // pred_fallthru
    _
  // Predicated region
  $region30: #{crnn_forward.10} parent=0 // pred_check
    _
  $region31: #{crnn_forward.10} parent=0 // pred_check_branch
    %43 = sbr.rel (0) target = $region33
  $region32: #{crnn_forward.10} parent=0 // pred_region
    _
  $region33: #{crnn_forward.10} parent=0 // pred_fallthru
    _
  // Predicated region
  $region34: #{crnn_forward.10} parent=0 // pred_check
    _
  $region35: #{crnn_forward.10} parent=0 // pred_check_branch
    %45 = sbr.rel (0) target = $region37
  $region36: #{crnn_forward.10} parent=0 // pred_region
    _
  $region37: #{crnn_forward.10} parent=0 // pred_fallthru
    _
  %s46 = ssub.s32 0, 0
  %p47 = scmp.lt.s32.totalorder %s46, 0
  %s48 = scalar_select %p47, %s46, 0
  %s49 = smul.addr %s48, 2
  %s50 = scalar_lea.vmem %s2, %s49
  %s51 = ssub.s32 0, 0
  %p52 = scmp.lt.s32.totalorder %s51, 0
  %s53 = scalar_select %p52, %s51, 0
  %s54 = smul.addr %s53, 2
  %s55 = scalar_lea.vmem %s3, %s54
  %s56 = ssub.s32 0, 0
  %p57 = scmp.lt.s32.totalorder %s56, 0
  %s58 = scalar_select %p57, %s56, 0
  %s59 = smul.addr %s58, 2
  %s60 = scalar_lea.vmem %s10, %s59
  %s61 = ssub.s32 0, 0
  %p62 = scmp.lt.s32.totalorder %s61, 0
  %s63 = scalar_select %p62, %s61, 0
  %s64 = smul.addr %s63, 2
  %s65 = scalar_lea.vmem %s2, %s64
  %s66 = ssub.s32 0, 0
  %s67 = ssub.s32 0, 0
  %p68 = scmp.lt.s32.totalorder %s67, 0
  %s69 = scalar_select %p68, %s67, 0
  %s70 = smul.addr %s69, 2
  %s71 = scalar_lea.vmem %s3, %s70
  %s72 = ssub.s32 0, 0
  %s73 = ssub.s32 0, 0
  %p74 = scmp.lt.s32.totalorder %s73, 0
  %s75 = scalar_select %p74, %s73, 0
  %s76 = smul.addr %s75, 2
  %s77 = scalar_lea.vmem %s10, %s76
  %s78 = ssub.s32 0, 0
  %p79 = scmp.eq.s32.totalorder 0, 0
  // Predicated region
  $region38: #{crnn_forward.10} parent=0 // pred_check
    %p80 = pneg %p79
  $region39: #{crnn_forward.10} parent=0 // pred_check_branch
    %82 = sbr.rel (%p80) target = $region41
  $region40: #{crnn_forward.10} parent=0 // pred_region
    %83 = vst [vmem:[#allocation2] sm:$0xf] 0.0
    %84 = vst [vmem:[#allocation3] sm:$0x3] 0.0
    %85 = vst [vmem:[#allocation4] sm:$0x3] 0.0
  $region41: #{crnn_forward.10} parent=0 // pred_fallthru
    _
  %v86 = vld [vmem:[%s0] sm:$0x3]
  %v87 = vld [vmem:[%s0 + $0x2] sm:$0x3]
  %v88 = vld [vmem:[%s1] sm:$0x3]
  %v89 = vld [vmem:[%s1 + $0x2] sm:$0x3]
  %v90 = vld [vmem:[%s4] sm:$0xff]
  %v91 = vld [vmem:[%s4 + $0x8] sm:$0xff]
  %v92 = vld [vmem:[%s4 + $0x10] sm:$0xff]
  %v93 = vld [vmem:[%s4 + $0x18] sm:$0xff]
  %v94 = vld [vmem:[%s4 + $0x20] sm:$0xff]
  %v95 = vld [vmem:[%s4 + $0x28] sm:$0xff]
  %v96 = vld [vmem:[%s4 + $0x30] sm:$0xff]
  %v97 = vld [vmem:[%s4 + $0x38] sm:$0xff]
  %v98 = vld [vmem:[%s4 + $0x40] sm:$0xff]
  %v99 = vld [vmem:[%s4 + $0x48] sm:$0xff]
  %v100 = vld [vmem:[%s4 + $0x50] sm:$0xff]
  %v101 = vld [vmem:[%s4 + $0x58] sm:$0xff]
  %v102 = vld [vmem:[%s4 + $0x60] sm:$0xff]
  %v103 = vld [vmem:[%s4 + $0x68] sm:$0xff]
  %v104 = vld [vmem:[%s4 + $0x70] sm:$0xff]
  %v105 = vld [vmem:[%s4 + $0x78] sm:$0xff]
  %v106 = vld [vmem:[%s4 + $0x80] sm:$0xff]
  %v107 = vld [vmem:[%s4 + $0x88] sm:$0xff]
  %v108 = vld [vmem:[%s4 + $0x90] sm:$0xff]
  %v109 = vld [vmem:[%s4 + $0x98] sm:$0xff]
  %v110 = vld [vmem:[%s4 + $0xa0] sm:$0xff]
  %v111 = vld [vmem:[%s4 + $0xa8] sm:$0xff]
  %v112 = vld [vmem:[%s4 + $0xb0] sm:$0xff]
  %v113 = vld [vmem:[%s4 + $0xb8] sm:$0xff]
  %v114 = vld [vmem:[%s4 + $0xc0] sm:$0xff]
  %v115 = vld [vmem:[%s4 + $0xc8] sm:$0xff]
  %v116 = vld [vmem:[%s4 + $0xd0] sm:$0xff]
  %v117 = vld [vmem:[%s4 + $0xd8] sm:$0xff]
  %v118 = vld [vmem:[%s4 + $0xe0] sm:$0xff]
  %v119 = vld [vmem:[%s4 + $0xe8] sm:$0xff]
  %v120 = vld [vmem:[%s4 + $0xf0] sm:$0xff]
  %v121 = vld [vmem:[%s4 + $0xf8] sm:$0xff]
  %v122 = vld [vmem:[%s4 + $0x100] sm:$0xff]
  %v123 = vld [vmem:[%s4 + $0x108] sm:$0xff]
  %v124 = vld [vmem:[%s4 + $0x110] sm:$0xff]
  %v125 = vld [vmem:[%s4 + $0x118] sm:$0xff]
  %v126 = vld [vmem:[%s4 + $0x120] sm:$0xff]
  %v127 = vld [vmem:[%s4 + $0x128] sm:$0xff]
  %v128 = vld [vmem:[%s4 + $0x130] sm:$0xff]
  %v129 = vld [vmem:[%s4 + $0x138] sm:$0xff]
  %v130 = vld [vmem:[%s4 + $0x140] sm:$0xff]
  %v131 = vld [vmem:[%s4 + $0x148] sm:$0xff]
  %v132 = vld [vmem:[%s4 + $0x150] sm:$0xff]
  %v133 = vld [vmem:[%s4 + $0x158] sm:$0xff]
  %v134 = vld [vmem:[%s4 + $0x160] sm:$0xff]
  %v135 = vld [vmem:[%s4 + $0x168] sm:$0xff]
  %v136 = vld [vmem:[%s4 + $0x170] sm:$0xff]
  %v137 = vld [vmem:[%s4 + $0x178] sm:$0xff]
  %v138 = vld [vmem:[%s4 + $0x180] sm:$0xff]
  %v139 = vld [vmem:[%s4 + $0x188] sm:$0xff]
  %v140 = vld [vmem:[%s4 + $0x190] sm:$0xff]
  %v141 = vld [vmem:[%s4 + $0x198] sm:$0xff]
  %v142 = vld [vmem:[%s4 + $0x1a0] sm:$0xff]
  %v143 = vld [vmem:[%s4 + $0x1a8] sm:$0xff]
  %v144 = vld [vmem:[%s4 + $0x1b0] sm:$0xff]
  %v145 = vld [vmem:[%s4 + $0x1b8] sm:$0xff]
  %v146 = vld [vmem:[%s4 + $0x1c0] sm:$0xff]
  %v147 = vld [vmem:[%s4 + $0x1c8] sm:$0xff]
  %v148 = vld [vmem:[%s4 + $0x1d0] sm:$0xff]
  %v149 = vld [vmem:[%s4 + $0x1d8] sm:$0xff]
  %v150 = vld [vmem:[%s4 + $0x1e0] sm:$0xff]
  %v151 = vld [vmem:[%s4 + $0x1e8] sm:$0xff]
  %v152 = vld [vmem:[%s4 + $0x1f0] sm:$0xff]
  %v153 = vld [vmem:[%s4 + $0x1f8] sm:$0xff]
  %v154 = vld [vmem:[%s7] sm:$0xf]
  %v156 = vperm.slane %v154, 0
  %v157 = vperm.slane %v154, 1
  %v158 = vperm.slane %v154, 2
  %v159 = vperm.slane %v154, 3
  %v228 = vunpack.c.l.b16 %v90
  %v229 = vunpack.c.h.b16 %v90
  %v230 = vunpack.c.l.b16 %v91
  %v231 = vunpack.c.h.b16 %v91
  %v232 = vunpack.c.l.b16 %v92
  %v233 = vunpack.c.h.b16 %v92
  %v234 = vunpack.c.l.b16 %v93
  %v235 = vunpack.c.h.b16 %v93
  %v236 = vunpack.c.l.b16 %v94
  %v237 = vunpack.c.h.b16 %v94
  %v238 = vunpack.c.l.b16 %v95
  %v239 = vunpack.c.h.b16 %v95
  %v240 = vunpack.c.l.b16 %v96
  %v241 = vunpack.c.h.b16 %v96
  %v242 = vunpack.c.l.b16 %v97
  %v243 = vunpack.c.h.b16 %v97
  %v244 = vunpack.c.l.b16 %v98
  %v245 = vunpack.c.h.b16 %v98
  %v246 = vunpack.c.l.b16 %v99
  %v247 = vunpack.c.h.b16 %v99
  %v248 = vunpack.c.l.b16 %v100
  %v249 = vunpack.c.h.b16 %v100
  %v250 = vunpack.c.l.b16 %v101
  %v251 = vunpack.c.h.b16 %v101
  %v252 = vunpack.c.l.b16 %v102
  %v253 = vunpack.c.h.b16 %v102
  %v254 = vunpack.c.l.b16 %v103
  %v255 = vunpack.c.h.b16 %v103
  %v256 = vunpack.c.l.b16 %v104
  %v257 = vunpack.c.h.b16 %v104
  %v258 = vunpack.c.l.b16 %v105
  %v259 = vunpack.c.h.b16 %v105
  %v260 = vunpack.c.l.b16 %v106
  %v261 = vunpack.c.h.b16 %v106
  %v262 = vunpack.c.l.b16 %v107
  %v263 = vunpack.c.h.b16 %v107
  %v264 = vunpack.c.l.b16 %v108
  %v265 = vunpack.c.h.b16 %v108
  %v266 = vunpack.c.l.b16 %v109
  %v267 = vunpack.c.h.b16 %v109
  %v268 = vunpack.c.l.b16 %v110
  %v269 = vunpack.c.h.b16 %v110
  %v270 = vunpack.c.l.b16 %v111
  %v271 = vunpack.c.h.b16 %v111
  %v272 = vunpack.c.l.b16 %v112
  %v273 = vunpack.c.h.b16 %v112
  %v274 = vunpack.c.l.b16 %v113
  %v275 = vunpack.c.h.b16 %v113
  %v276 = vunpack.c.l.b16 %v114
  %v277 = vunpack.c.h.b16 %v114
  %v278 = vunpack.c.l.b16 %v115
  %v279 = vunpack.c.h.b16 %v115
  %v280 = vunpack.c.l.b16 %v116
  %v281 = vunpack.c.h.b16 %v116
  %v282 = vunpack.c.l.b16 %v117
  %v283 = vunpack.c.h.b16 %v117
  %v284 = vunpack.c.l.b16 %v118
  %v285 = vunpack.c.h.b16 %v118
  %v286 = vunpack.c.l.b16 %v119
  %v287 = vunpack.c.h.b16 %v119
  %v288 = vunpack.c.l.b16 %v120
  %v289 = vunpack.c.h.b16 %v120
  %v290 = vunpack.c.l.b16 %v121
  %v291 = vunpack.c.h.b16 %v121
  %v292 = vunpack.c.l.b16 %v122
  %v293 = vunpack.c.h.b16 %v122
  %v294 = vunpack.c.l.b16 %v123
  %v295 = vunpack.c.h.b16 %v123
  %v296 = vunpack.c.l.b16 %v124
  %v297 = vunpack.c.h.b16 %v124
  %v298 = vunpack.c.l.b16 %v125
  %v299 = vunpack.c.h.b16 %v125
  %v300 = vunpack.c.l.b16 %v126
  %v301 = vunpack.c.h.b16 %v126
  %v302 = vunpack.c.l.b16 %v127
  %v303 = vunpack.c.h.b16 %v127
  %v304 = vunpack.c.l.b16 %v128
  %v305 = vunpack.c.h.b16 %v128
  %v306 = vunpack.c.l.b16 %v129
  %v307 = vunpack.c.h.b16 %v129
  %v308 = vunpack.c.l.b16 %v130
  %v309 = vunpack.c.h.b16 %v130
  %v310 = vunpack.c.l.b16 %v131
  %v311 = vunpack.c.h.b16 %v131
  %v312 = vunpack.c.l.b16 %v132
  %v313 = vunpack.c.h.b16 %v132
  %v314 = vunpack.c.l.b16 %v133
  %v315 = vunpack.c.h.b16 %v133
  %v316 = vunpack.c.l.b16 %v134
  %v317 = vunpack.c.h.b16 %v134
  %v318 = vunpack.c.l.b16 %v135
  %v319 = vunpack.c.h.b16 %v135
  %v320 = vunpack.c.l.b16 %v136
  %v321 = vunpack.c.h.b16 %v136
  %v322 = vunpack.c.l.b16 %v137
  %v323 = vunpack.c.h.b16 %v137
  %v324 = vunpack.c.l.b16 %v138
  %v325 = vunpack.c.h.b16 %v138
  %v326 = vunpack.c.l.b16 %v139
  %v327 = vunpack.c.h.b16 %v139
  %v328 = vunpack.c.l.b16 %v140
  %v329 = vunpack.c.h.b16 %v140
  %v330 = vunpack.c.l.b16 %v141
  %v331 = vunpack.c.h.b16 %v141
  %v332 = vunpack.c.l.b16 %v142
  %v333 = vunpack.c.h.b16 %v142
  %v334 = vunpack.c.l.b16 %v143
  %v335 = vunpack.c.h.b16 %v143
  %v336 = vunpack.c.l.b16 %v144
  %v337 = vunpack.c.h.b16 %v144
  %v338 = vunpack.c.l.b16 %v145
  %v339 = vunpack.c.h.b16 %v145
  %v340 = vunpack.c.l.b16 %v146
  %v341 = vunpack.c.h.b16 %v146
  %v342 = vunpack.c.l.b16 %v147
  %v343 = vunpack.c.h.b16 %v147
  %v344 = vunpack.c.l.b16 %v148
  %v345 = vunpack.c.h.b16 %v148
  %v346 = vunpack.c.l.b16 %v149
  %v347 = vunpack.c.h.b16 %v149
  %v348 = vunpack.c.l.b16 %v150
  %v349 = vunpack.c.h.b16 %v150
  %v350 = vunpack.c.l.b16 %v151
  %v351 = vunpack.c.h.b16 %v151
  %v352 = vunpack.c.l.b16 %v152
  %v353 = vunpack.c.h.b16 %v152
  %v354 = vunpack.c.l.b16 %v153
  %v355 = vunpack.c.h.b16 %v153
  %v356 = vpack.c.b16 %v232, %v228
  %v357 = vpack.c.b16 %v233, %v229
  %v358 = vpack.c.b16 %v234, %v230
  %v359 = vpack.c.b16 %v235, %v231
  %v360 = vpack.c.b16 %v240, %v236
  %v361 = vpack.c.b16 %v241, %v237
  %v362 = vpack.c.b16 %v242, %v238
  %v363 = vpack.c.b16 %v243, %v239
  %v364 = vpack.c.b16 %v248, %v244
  %v365 = vpack.c.b16 %v249, %v245
  %v366 = vpack.c.b16 %v250, %v246
  %v367 = vpack.c.b16 %v251, %v247
  %v368 = vpack.c.b16 %v256, %v252
  %v369 = vpack.c.b16 %v257, %v253
  %v370 = vpack.c.b16 %v258, %v254
  %v371 = vpack.c.b16 %v259, %v255
  %v372 = vpack.c.b16 %v264, %v260
  %v373 = vpack.c.b16 %v265, %v261
  %v374 = vpack.c.b16 %v266, %v262
  %v375 = vpack.c.b16 %v267, %v263
  %v376 = vpack.c.b16 %v272, %v268
  %v377 = vpack.c.b16 %v273, %v269
  %v378 = vpack.c.b16 %v274, %v270
  %v379 = vpack.c.b16 %v275, %v271
  %v380 = vpack.c.b16 %v280, %v276
  %v381 = vpack.c.b16 %v281, %v277
  %v382 = vpack.c.b16 %v282, %v278
  %v383 = vpack.c.b16 %v283, %v279
  %v384 = vpack.c.b16 %v288, %v284
  %v385 = vpack.c.b16 %v289, %v285
  %v386 = vpack.c.b16 %v290, %v286
  %v387 = vpack.c.b16 %v291, %v287
  %v388 = vpack.c.b16 %v296, %v292
  %v389 = vpack.c.b16 %v297, %v293
  %v390 = vpack.c.b16 %v298, %v294
  %v391 = vpack.c.b16 %v299, %v295
  %v392 = vpack.c.b16 %v304, %v300
  %v393 = vpack.c.b16 %v305, %v301
  %v394 = vpack.c.b16 %v306, %v302
  %v395 = vpack.c.b16 %v307, %v303
  %v396 = vpack.c.b16 %v312, %v308
  %v397 = vpack.c.b16 %v313, %v309
  %v398 = vpack.c.b16 %v314, %v310
  %v399 = vpack.c.b16 %v315, %v311
  %v400 = vpack.c.b16 %v320, %v316
  %v401 = vpack.c.b16 %v321, %v317
  %v402 = vpack.c.b16 %v322, %v318
  %v403 = vpack.c.b16 %v323, %v319
  %v404 = vpack.c.b16 %v328, %v324
  %v405 = vpack.c.b16 %v329, %v325
  %v406 = vpack.c.b16 %v330, %v326
  %v407 = vpack.c.b16 %v331, %v327
  %v408 = vpack.c.b16 %v336, %v332
  %v409 = vpack.c.b16 %v337, %v333
  %v410 = vpack.c.b16 %v338, %v334
  %v411 = vpack.c.b16 %v339, %v335
  %v412 = vpack.c.b16 %v344, %v340
  %v413 = vpack.c.b16 %v345, %v341
  %v414 = vpack.c.b16 %v346, %v342
  %v415 = vpack.c.b16 %v347, %v343
  %v416 = vpack.c.b16 %v352, %v348
  %v417 = vpack.c.b16 %v353, %v349
  %v418 = vpack.c.b16 %v354, %v350
  %v419 = vpack.c.b16 %v355, %v351
  %484 = vmatpush.bf16.msra.mxu0 %v384
  %485 = vmatpush.bf16.msra.mxu0 %v380
  %486 = vmatpush.bf16.msra.mxu0 %v376
  %487 = vmatpush.bf16.msra.mxu0 %v372
  %488 = vmatpush.bf16.msra.mxu0 %v368
  %489 = vmatpush.bf16.msra.mxu0 %v364
  %490 = vmatpush.bf16.msra.mxu0 %v360
  %491 = vmatpush.bf16.msra.mxu0 %v356
  %492 = vmatmul.bf16.gmra.mxu0 %v86
  %v493 = vpop.f32.mrf.mxu0
  %v494 = vadd.f32 %v156, %v493
  %v495 = vpop.f32.mrf.mxu0
  %496 = vdwg.mxu0
  %497 = vmatpush.bf16.msra.mxu0 %v416
  %498 = vmatpush.bf16.msra.mxu0 %v412
  %499 = vmatpush.bf16.msra.mxu0 %v408
  %500 = vmatpush.bf16.msra.mxu0 %v404
  %501 = vmatpush.bf16.msra.mxu0 %v400
  %502 = vmatpush.bf16.msra.mxu0 %v396
  %503 = vmatpush.bf16.msra.mxu0 %v392
  %504 = vmatpush.bf16.msra.mxu0 %v388
  %505 = vmatmul.bf16.gmra.mxu0 %v88
  %v506 = vpop.f32.mrf.mxu0
  %v507 = vadd.f32 %v494, %v506
  %v508 = vpop.f32.mrf.mxu0
  %509 = vdwg.mxu0
  %510 = vmatpush.bf16.msra.mxu0 %v385
  %511 = vmatpush.bf16.msra.mxu0 %v381
  %512 = vmatpush.bf16.msra.mxu0 %v377
  %513 = vmatpush.bf16.msra.mxu0 %v373
  %514 = vmatpush.bf16.msra.mxu0 %v369
  %515 = vmatpush.bf16.msra.mxu0 %v365
  %516 = vmatpush.bf16.msra.mxu0 %v361
  %517 = vmatpush.bf16.msra.mxu0 %v357
  %518 = vmatmul.bf16.gmra.mxu0 %v86
  %v519 = vpop.f32.mrf.mxu0
  %v520 = vadd.f32 %v157, %v519
  %v521 = vpop.f32.mrf.mxu0
  %522 = vdwg.mxu0
  %523 = vmatpush.bf16.msra.mxu0 %v417
  %524 = vmatpush.bf16.msra.mxu0 %v413
  %525 = vmatpush.bf16.msra.mxu0 %v409
  %526 = vmatpush.bf16.msra.mxu0 %v405
  %527 = vmatpush.bf16.msra.mxu0 %v401
  %528 = vmatpush.bf16.msra.mxu0 %v397
  %529 = vmatpush.bf16.msra.mxu0 %v393
  %530 = vmatpush.bf16.msra.mxu0 %v389
  %531 = vmatmul.bf16.gmra.mxu0 %v88
  %v532 = vpop.f32.mrf.mxu0
  %v533 = vadd.f32 %v520, %v532
  %v534 = vpop.f32.mrf.mxu0
  %535 = vdwg.mxu0
  %536 = vmatpush.bf16.msra.mxu0 %v386
  %537 = vmatpush.bf16.msra.mxu0 %v382
  %538 = vmatpush.bf16.msra.mxu0 %v378
  %539 = vmatpush.bf16.msra.mxu0 %v374
  %540 = vmatpush.bf16.msra.mxu0 %v370
  %541 = vmatpush.bf16.msra.mxu0 %v366
  %542 = vmatpush.bf16.msra.mxu0 %v362
  %543 = vmatpush.bf16.msra.mxu0 %v358
  %544 = vmatmul.bf16.gmra.mxu0 %v86
  %v545 = vpop.f32.mrf.mxu0
  %v546 = vadd.f32 %v158, %v545
  %v547 = vpop.f32.mrf.mxu0
  %548 = vdwg.mxu0
  %549 = vmatpush.bf16.msra.mxu0 %v418
  %550 = vmatpush.bf16.msra.mxu0 %v414
  %551 = vmatpush.bf16.msra.mxu0 %v410
  %552 = vmatpush.bf16.msra.mxu0 %v406
  %553 = vmatpush.bf16.msra.mxu0 %v402
  %554 = vmatpush.bf16.msra.mxu0 %v398
  %555 = vmatpush.bf16.msra.mxu0 %v394
  %556 = vmatpush.bf16.msra.mxu0 %v390
  %557 = vmatmul.bf16.gmra.mxu0 %v88
  %v558 = vpop.f32.mrf.mxu0
  %v559 = vadd.f32 %v546, %v558
  %v560 = vpop.f32.mrf.mxu0
  %561 = vdwg.mxu0
  %562 = vmatpush.bf16.msra.mxu0 %v387
  %563 = vmatpush.bf16.msra.mxu0 %v383
  %564 = vmatpush.bf16.msra.mxu0 %v379
  %565 = vmatpush.bf16.msra.mxu0 %v375
  %566 = vmatpush.bf16.msra.mxu0 %v371
  %567 = vmatpush.bf16.msra.mxu0 %v367
  %568 = vmatpush.bf16.msra.mxu0 %v363
  %569 = vmatpush.bf16.msra.mxu0 %v359
  %570 = vmatmul.bf16.gmra.mxu0 %v86
  %v571 = vpop.f32.mrf.mxu0
  %v572 = vadd.f32 %v159, %v571
  %v573 = vpop.f32.mrf.mxu0
  %574 = vdwg.mxu0
  %575 = vmatpush.bf16.msra.mxu0 %v419
  %576 = vmatpush.bf16.msra.mxu0 %v415
  %577 = vmatpush.bf16.msra.mxu0 %v411
  %578 = vmatpush.bf16.msra.mxu0 %v407
  %579 = vmatpush.bf16.msra.mxu0 %v403
  %580 = vmatpush.bf16.msra.mxu0 %v399
  %581 = vmatpush.bf16.msra.mxu0 %v395
  %582 = vmatpush.bf16.msra.mxu0 %v391
  %583 = vmatmul.bf16.gmra.mxu0 %v88
  %v584 = vpop.f32.mrf.mxu0
  %v585 = vadd.f32 %v572, %v584
  %v586 = vpop.f32.mrf.mxu0
  %587 = vdwg.mxu0
  %v592 = vrot.slane %v533, 4
  %v593 = vrot.slane %v585, 4
  %vm594 = vcmask 1043456
  %v595 = vsel %vm594, %v507, %v592
  %v596 = vsel %vm594, %v559, %v593
  %599 = vst [vmem:[#allocation5] sm:$0xff] %v595
  %600 = vst [vmem:[#allocation5 + $0x8] sm:$0xff] %v596
  %601 = vmatpush.bf16.msra.mxu0 %v384
  %602 = vmatpush.bf16.msra.mxu0 %v380
  %603 = vmatpush.bf16.msra.mxu0 %v376
  %604 = vmatpush.bf16.msra.mxu0 %v372
  %605 = vmatpush.bf16.msra.mxu0 %v368
  %606 = vmatpush.bf16.msra.mxu0 %v364
  %607 = vmatpush.bf16.msra.mxu0 %v360
  %608 = vmatpush.bf16.msra.mxu0 %v356
  %609 = vmatmul.bf16.gmra.mxu0 %v87
  %v610 = vpop.f32.mrf.mxu0
  %v611 = vadd.f32 %v156, %v610
  %v612 = vpop.f32.mrf.mxu0
  %613 = vdwg.mxu0
  %614 = vmatpush.bf16.msra.mxu0 %v416
  %615 = vmatpush.bf16.msra.mxu0 %v412
  %616 = vmatpush.bf16.msra.mxu0 %v408
  %617 = vmatpush.bf16.msra.mxu0 %v404
  %618 = vmatpush.bf16.msra.mxu0 %v400
  %619 = vmatpush.bf16.msra.mxu0 %v396
  %620 = vmatpush.bf16.msra.mxu0 %v392
  %621 = vmatpush.bf16.msra.mxu0 %v388
  %622 = vmatmul.bf16.gmra.mxu0 %v89
  %v623 = vpop.f32.mrf.mxu0
  %v624 = vadd.f32 %v611, %v623
  %v625 = vpop.f32.mrf.mxu0
  %626 = vdwg.mxu0
  %627 = vmatpush.bf16.msra.mxu0 %v385
  %628 = vmatpush.bf16.msra.mxu0 %v381
  %629 = vmatpush.bf16.msra.mxu0 %v377
  %630 = vmatpush.bf16.msra.mxu0 %v373
  %631 = vmatpush.bf16.msra.mxu0 %v369
  %632 = vmatpush.bf16.msra.mxu0 %v365
  %633 = vmatpush.bf16.msra.mxu0 %v361
  %634 = vmatpush.bf16.msra.mxu0 %v357
  %635 = vmatmul.bf16.gmra.mxu0 %v87
  %v636 = vpop.f32.mrf.mxu0
  %v637 = vadd.f32 %v157, %v636
  %v638 = vpop.f32.mrf.mxu0
  %639 = vdwg.mxu0
  %640 = vmatpush.bf16.msra.mxu0 %v417
  %641 = vmatpush.bf16.msra.mxu0 %v413
  %642 = vmatpush.bf16.msra.mxu0 %v409
  %643 = vmatpush.bf16.msra.mxu0 %v405
  %644 = vmatpush.bf16.msra.mxu0 %v401
  %645 = vmatpush.bf16.msra.mxu0 %v397
  %646 = vmatpush.bf16.msra.mxu0 %v393
  %647 = vmatpush.bf16.msra.mxu0 %v389
  %648 = vmatmul.bf16.gmra.mxu0 %v89
  %v649 = vpop.f32.mrf.mxu0
  %v650 = vadd.f32 %v637, %v649
  %v651 = vpop.f32.mrf.mxu0
  %652 = vdwg.mxu0
  %653 = vmatpush.bf16.msra.mxu0 %v386
  %654 = vmatpush.bf16.msra.mxu0 %v382
  %655 = vmatpush.bf16.msra.mxu0 %v378
  %656 = vmatpush.bf16.msra.mxu0 %v374
  %657 = vmatpush.bf16.msra.mxu0 %v370
  %658 = vmatpush.bf16.msra.mxu0 %v366
  %659 = vmatpush.bf16.msra.mxu0 %v362
  %660 = vmatpush.bf16.msra.mxu0 %v358
  %661 = vmatmul.bf16.gmra.mxu0 %v87
  %v662 = vpop.f32.mrf.mxu0
  %v663 = vadd.f32 %v158, %v662
  %v664 = vpop.f32.mrf.mxu0
  %665 = vdwg.mxu0
  %666 = vmatpush.bf16.msra.mxu0 %v418
  %667 = vmatpush.bf16.msra.mxu0 %v414
  %668 = vmatpush.bf16.msra.mxu0 %v410
  %669 = vmatpush.bf16.msra.mxu0 %v406
  %670 = vmatpush.bf16.msra.mxu0 %v402
  %671 = vmatpush.bf16.msra.mxu0 %v398
  %672 = vmatpush.bf16.msra.mxu0 %v394
  %673 = vmatpush.bf16.msra.mxu0 %v390
  %674 = vmatmul.bf16.gmra.mxu0 %v89
  %v675 = vpop.f32.mrf.mxu0
  %v676 = vadd.f32 %v663, %v675
  %v677 = vpop.f32.mrf.mxu0
  %678 = vdwg.mxu0
  %679 = vmatpush.bf16.msra.mxu0 %v387
  %680 = vmatpush.bf16.msra.mxu0 %v383
  %681 = vmatpush.bf16.msra.mxu0 %v379
  %682 = vmatpush.bf16.msra.mxu0 %v375
  %683 = vmatpush.bf16.msra.mxu0 %v371
  %684 = vmatpush.bf16.msra.mxu0 %v367
  %685 = vmatpush.bf16.msra.mxu0 %v363
  %686 = vmatpush.bf16.msra.mxu0 %v359
  %687 = vmatmul.bf16.gmra.mxu0 %v87
  %v688 = vpop.f32.mrf.mxu0
  %v689 = vadd.f32 %v159, %v688
  %v690 = vpop.f32.mrf.mxu0
  %691 = vdwg.mxu0
  %692 = vmatpush.bf16.msra.mxu0 %v419
  %693 = vmatpush.bf16.msra.mxu0 %v415
  %694 = vmatpush.bf16.msra.mxu0 %v411
  %695 = vmatpush.bf16.msra.mxu0 %v407
  %696 = vmatpush.bf16.msra.mxu0 %v403
  %697 = vmatpush.bf16.msra.mxu0 %v399
  %698 = vmatpush.bf16.msra.mxu0 %v395
  %699 = vmatpush.bf16.msra.mxu0 %v391
  %700 = vmatmul.bf16.gmra.mxu0 %v89
  %v701 = vpop.f32.mrf.mxu0
  %v702 = vadd.f32 %v689, %v701
  %v703 = vpop.f32.mrf.mxu0
  %704 = vdwg.mxu0
  %v709 = vrot.slane %v650, 4
  %v710 = vrot.slane %v702, 4
  %v711 = vsel %vm594, %v624, %v709
  %v712 = vsel %vm594, %v676, %v710
  %s715 = scalar_lea.vmem [#allocation5], 16
  %716 = vst [vmem:[%s715] sm:$0xff] %v711
  %717 = vst [vmem:[%s715 + $0x8] sm:$0xff] %v712
  %v718 = vld [vmem:[%s65] sm:$0x3]
  %v719 = vld [vmem:[%s65 + $0x2] sm:$0x3]
  %v720 = vld [vmem:[%s71] sm:$0x3]
  %v721 = vld [vmem:[%s71 + $0x2] sm:$0x3]
  %v722 = vld [vmem:[%s5] sm:$0xff]
  %v723 = vld [vmem:[%s5 + $0x8] sm:$0xff]
  %v724 = vld [vmem:[%s5 + $0x10] sm:$0xff]
  %v725 = vld [vmem:[%s5 + $0x18] sm:$0xff]
  %v726 = vld [vmem:[%s5 + $0x20] sm:$0xff]
  %v727 = vld [vmem:[%s5 + $0x28] sm:$0xff]
  %v728 = vld [vmem:[%s5 + $0x30] sm:$0xff]
  %v729 = vld [vmem:[%s5 + $0x38] sm:$0xff]
  %v730 = vld [vmem:[%s5 + $0x40] sm:$0xff]
  %v731 = vld [vmem:[%s5 + $0x48] sm:$0xff]
  %v732 = vld [vmem:[%s5 + $0x50] sm:$0xff]
  %v733 = vld [vmem:[%s5 + $0x58] sm:$0xff]
  %v734 = vld [vmem:[%s5 + $0x60] sm:$0xff]
  %v735 = vld [vmem:[%s5 + $0x68] sm:$0xff]
  %v736 = vld [vmem:[%s5 + $0x70] sm:$0xff]
  %v737 = vld [vmem:[%s5 + $0x78] sm:$0xff]
  %v738 = vld [vmem:[%s5 + $0x80] sm:$0xff]
  %v739 = vld [vmem:[%s5 + $0x88] sm:$0xff]
  %v740 = vld [vmem:[%s5 + $0x90] sm:$0xff]
  %v741 = vld [vmem:[%s5 + $0x98] sm:$0xff]
  %v742 = vld [vmem:[%s5 + $0xa0] sm:$0xff]
  %v743 = vld [vmem:[%s5 + $0xa8] sm:$0xff]
  %v744 = vld [vmem:[%s5 + $0xb0] sm:$0xff]
  %v745 = vld [vmem:[%s5 + $0xb8] sm:$0xff]
  %v746 = vld [vmem:[%s5 + $0xc0] sm:$0xff]
  %v747 = vld [vmem:[%s5 + $0xc8] sm:$0xff]
  %v748 = vld [vmem:[%s5 + $0xd0] sm:$0xff]
  %v749 = vld [vmem:[%s5 + $0xd8] sm:$0xff]
  %v750 = vld [vmem:[%s5 + $0xe0] sm:$0xff]
  %v751 = vld [vmem:[%s5 + $0xe8] sm:$0xff]
  %v752 = vld [vmem:[%s5 + $0xf0] sm:$0xff]
  %v753 = vld [vmem:[%s5 + $0xf8] sm:$0xff]
  %v754 = vld [vmem:[%s5 + $0x100] sm:$0xff]
  %v755 = vld [vmem:[%s5 + $0x108] sm:$0xff]
  %v756 = vld [vmem:[%s5 + $0x110] sm:$0xff]
  %v757 = vld [vmem:[%s5 + $0x118] sm:$0xff]
  %v758 = vld [vmem:[%s5 + $0x120] sm:$0xff]
  %v759 = vld [vmem:[%s5 + $0x128] sm:$0xff]
  %v760 = vld [vmem:[%s5 + $0x130] sm:$0xff]
  %v761 = vld [vmem:[%s5 + $0x138] sm:$0xff]
  %v762 = vld [vmem:[%s5 + $0x140] sm:$0xff]
  %v763 = vld [vmem:[%s5 + $0x148] sm:$0xff]
  %v764 = vld [vmem:[%s5 + $0x150] sm:$0xff]
  %v765 = vld [vmem:[%s5 + $0x158] sm:$0xff]
  %v766 = vld [vmem:[%s5 + $0x160] sm:$0xff]
  %v767 = vld [vmem:[%s5 + $0x168] sm:$0xff]
  %v768 = vld [vmem:[%s5 + $0x170] sm:$0xff]
  %v769 = vld [vmem:[%s5 + $0x178] sm:$0xff]
  %v770 = vld [vmem:[%s5 + $0x180] sm:$0xff]
  %v771 = vld [vmem:[%s5 + $0x188] sm:$0xff]
  %v772 = vld [vmem:[%s5 + $0x190] sm:$0xff]
  %v773 = vld [vmem:[%s5 + $0x198] sm:$0xff]
  %v774 = vld [vmem:[%s5 + $0x1a0] sm:$0xff]
  %v775 = vld [vmem:[%s5 + $0x1a8] sm:$0xff]
  %v776 = vld [vmem:[%s5 + $0x1b0] sm:$0xff]
  %v777 = vld [vmem:[%s5 + $0x1b8] sm:$0xff]
  %v778 = vld [vmem:[%s5 + $0x1c0] sm:$0xff]
  %v779 = vld [vmem:[%s5 + $0x1c8] sm:$0xff]
  %v780 = vld [vmem:[%s5 + $0x1d0] sm:$0xff]
  %v781 = vld [vmem:[%s5 + $0x1d8] sm:$0xff]
  %v782 = vld [vmem:[%s5 + $0x1e0] sm:$0xff]
  %v783 = vld [vmem:[%s5 + $0x1e8] sm:$0xff]
  %v784 = vld [vmem:[%s5 + $0x1f0] sm:$0xff]
  %v785 = vld [vmem:[%s5 + $0x1f8] sm:$0xff]
  %v786 = vld [vmem:[%s8] sm:$0xf]
  %v788 = vperm.slane %v786, 0
  %v789 = vperm.slane %v786, 1
  %v790 = vperm.slane %v786, 2
  %v791 = vperm.slane %v786, 3
  %v860 = vunpack.c.l.b16 %v722
  %v861 = vunpack.c.h.b16 %v722
  %v862 = vunpack.c.l.b16 %v723
  %v863 = vunpack.c.h.b16 %v723
  %v864 = vunpack.c.l.b16 %v724
  %v865 = vunpack.c.h.b16 %v724
  %v866 = vunpack.c.l.b16 %v725
  %v867 = vunpack.c.h.b16 %v725
  %v868 = vunpack.c.l.b16 %v726
  %v869 = vunpack.c.h.b16 %v726
  %v870 = vunpack.c.l.b16 %v727
  %v871 = vunpack.c.h.b16 %v727
  %v872 = vunpack.c.l.b16 %v728
  %v873 = vunpack.c.h.b16 %v728
  %v874 = vunpack.c.l.b16 %v729
  %v875 = vunpack.c.h.b16 %v729
  %v876 = vunpack.c.l.b16 %v730
  %v877 = vunpack.c.h.b16 %v730
  %v878 = vunpack.c.l.b16 %v731
  %v879 = vunpack.c.h.b16 %v731
  %v880 = vunpack.c.l.b16 %v732
  %v881 = vunpack.c.h.b16 %v732
  %v882 = vunpack.c.l.b16 %v733
  %v883 = vunpack.c.h.b16 %v733
  %v884 = vunpack.c.l.b16 %v734
  %v885 = vunpack.c.h.b16 %v734
  %v886 = vunpack.c.l.b16 %v735
  %v887 = vunpack.c.h.b16 %v735
  %v888 = vunpack.c.l.b16 %v736
  %v889 = vunpack.c.h.b16 %v736
  %v890 = vunpack.c.l.b16 %v737
  %v891 = vunpack.c.h.b16 %v737
  %v892 = vunpack.c.l.b16 %v738
  %v893 = vunpack.c.h.b16 %v738
  %v894 = vunpack.c.l.b16 %v739
  %v895 = vunpack.c.h.b16 %v739
  %v896 = vunpack.c.l.b16 %v740
  %v897 = vunpack.c.h.b16 %v740
  %v898 = vunpack.c.l.b16 %v741
  %v899 = vunpack.c.h.b16 %v741
  %v900 = vunpack.c.l.b16 %v742
  %v901 = vunpack.c.h.b16 %v742
  %v902 = vunpack.c.l.b16 %v743
  %v903 = vunpack.c.h.b16 %v743
  %v904 = vunpack.c.l.b16 %v744
  %v905 = vunpack.c.h.b16 %v744
  %v906 = vunpack.c.l.b16 %v745
  %v907 = vunpack.c.h.b16 %v745
  %v908 = vunpack.c.l.b16 %v746
  %v909 = vunpack.c.h.b16 %v746
  %v910 = vunpack.c.l.b16 %v747
  %v911 = vunpack.c.h.b16 %v747
  %v912 = vunpack.c.l.b16 %v748
  %v913 = vunpack.c.h.b16 %v748
  %v914 = vunpack.c.l.b16 %v749
  %v915 = vunpack.c.h.b16 %v749
  %v916 = vunpack.c.l.b16 %v750
  %v917 = vunpack.c.h.b16 %v750
  %v918 = vunpack.c.l.b16 %v751
  %v919 = vunpack.c.h.b16 %v751
  %v920 = vunpack.c.l.b16 %v752
  %v921 = vunpack.c.h.b16 %v752
  %v922 = vunpack.c.l.b16 %v753
  %v923 = vunpack.c.h.b16 %v753
  %v924 = vunpack.c.l.b16 %v754
  %v925 = vunpack.c.h.b16 %v754
  %v926 = vunpack.c.l.b16 %v755
  %v927 = vunpack.c.h.b16 %v755
  %v928 = vunpack.c.l.b16 %v756
  %v929 = vunpack.c.h.b16 %v756
  %v930 = vunpack.c.l.b16 %v757
  %v931 = vunpack.c.h.b16 %v757
  %v932 = vunpack.c.l.b16 %v758
  %v933 = vunpack.c.h.b16 %v758
  %v934 = vunpack.c.l.b16 %v759
  %v935 = vunpack.c.h.b16 %v759
  %v936 = vunpack.c.l.b16 %v760
  %v937 = vunpack.c.h.b16 %v760
  %v938 = vunpack.c.l.b16 %v761
  %v939 = vunpack.c.h.b16 %v761
  %v940 = vunpack.c.l.b16 %v762
  %v941 = vunpack.c.h.b16 %v762
  %v942 = vunpack.c.l.b16 %v763
  %v943 = vunpack.c.h.b16 %v763
  %v944 = vunpack.c.l.b16 %v764
  %v945 = vunpack.c.h.b16 %v764
  %v946 = vunpack.c.l.b16 %v765
  %v947 = vunpack.c.h.b16 %v765
  %v948 = vunpack.c.l.b16 %v766
  %v949 = vunpack.c.h.b16 %v766
  %v950 = vunpack.c.l.b16 %v767
  %v951 = vunpack.c.h.b16 %v767
  %v952 = vunpack.c.l.b16 %v768
  %v953 = vunpack.c.h.b16 %v768
  %v954 = vunpack.c.l.b16 %v769
  %v955 = vunpack.c.h.b16 %v769
  %v956 = vunpack.c.l.b16 %v770
  %v957 = vunpack.c.h.b16 %v770
  %v958 = vunpack.c.l.b16 %v771
  %v959 = vunpack.c.h.b16 %v771
  %v960 = vunpack.c.l.b16 %v772
  %v961 = vunpack.c.h.b16 %v772
  %v962 = vunpack.c.l.b16 %v773
  %v963 = vunpack.c.h.b16 %v773
  %v964 = vunpack.c.l.b16 %v774
  %v965 = vunpack.c.h.b16 %v774
  %v966 = vunpack.c.l.b16 %v775
  %v967 = vunpack.c.h.b16 %v775
  %v968 = vunpack.c.l.b16 %v776
  %v969 = vunpack.c.h.b16 %v776
  %v970 = vunpack.c.l.b16 %v777
  %v971 = vunpack.c.h.b16 %v777
  %v972 = vunpack.c.l.b16 %v778
  %v973 = vunpack.c.h.b16 %v778
  %v974 = vunpack.c.l.b16 %v779
  %v975 = vunpack.c.h.b16 %v779
  %v976 = vunpack.c.l.b16 %v780
  %v977 = vunpack.c.h.b16 %v780
  %v978 = vunpack.c.l.b16 %v781
  %v979 = vunpack.c.h.b16 %v781
  %v980 = vunpack.c.l.b16 %v782
  %v981 = vunpack.c.h.b16 %v782
  %v982 = vunpack.c.l.b16 %v783
  %v983 = vunpack.c.h.b16 %v783
  %v984 = vunpack.c.l.b16 %v784
  %v985 = vunpack.c.h.b16 %v784
  %v986 = vunpack.c.l.b16 %v785
  %v987 = vunpack.c.h.b16 %v785
  %v988 = vpack.c.b16 %v864, %v860
  %v989 = vpack.c.b16 %v865, %v861
  %v990 = vpack.c.b16 %v866, %v862
  %v991 = vpack.c.b16 %v867, %v863
  %v992 = vpack.c.b16 %v872, %v868
  %v993 = vpack.c.b16 %v873, %v869
  %v994 = vpack.c.b16 %v874, %v870
  %v995 = vpack.c.b16 %v875, %v871
  %v996 = vpack.c.b16 %v880, %v876
  %v997 = vpack.c.b16 %v881, %v877
  %v998 = vpack.c.b16 %v882, %v878
  %v999 = vpack.c.b16 %v883, %v879
  %v1000 = vpack.c.b16 %v888, %v884
  %v1001 = vpack.c.b16 %v889, %v885
  %v1002 = vpack.c.b16 %v890, %v886
  %v1003 = vpack.c.b16 %v891, %v887
  %v1004 = vpack.c.b16 %v896, %v892
  %v1005 = vpack.c.b16 %v897, %v893
  %v1006 = vpack.c.b16 %v898, %v894
  %v1007 = vpack.c.b16 %v899, %v895
  %v1008 = vpack.c.b16 %v904, %v900
  %v1009 = vpack.c.b16 %v905, %v901
  %v1010 = vpack.c.b16 %v906, %v902
  %v1011 = vpack.c.b16 %v907, %v903
  %v1012 = vpack.c.b16 %v912, %v908
  %v1013 = vpack.c.b16 %v913, %v909
  %v1014 = vpack.c.b16 %v914, %v910
  %v1015 = vpack.c.b16 %v915, %v911
  %v1016 = vpack.c.b16 %v920, %v916
  %v1017 = vpack.c.b16 %v921, %v917
  %v1018 = vpack.c.b16 %v922, %v918
  %v1019 = vpack.c.b16 %v923, %v919
  %v1020 = vpack.c.b16 %v928, %v924
  %v1021 = vpack.c.b16 %v929, %v925
  %v1022 = vpack.c.b16 %v930, %v926
  %v1023 = vpack.c.b16 %v931, %v927
  %v1024 = vpack.c.b16 %v936, %v932
  %v1025 = vpack.c.b16 %v937, %v933
  %v1026 = vpack.c.b16 %v938, %v934
  %v1027 = vpack.c.b16 %v939, %v935
  %v1028 = vpack.c.b16 %v944, %v940
  %v1029 = vpack.c.b16 %v945, %v941
  %v1030 = vpack.c.b16 %v946, %v942
  %v1031 = vpack.c.b16 %v947, %v943
  %v1032 = vpack.c.b16 %v952, %v948
  %v1033 = vpack.c.b16 %v953, %v949
  %v1034 = vpack.c.b16 %v954, %v950
  %v1035 = vpack.c.b16 %v955, %v951
  %v1036 = vpack.c.b16 %v960, %v956
  %v1037 = vpack.c.b16 %v961, %v957
  %v1038 = vpack.c.b16 %v962, %v958
  %v1039 = vpack.c.b16 %v963, %v959
  %v1040 = vpack.c.b16 %v968, %v964
  %v1041 = vpack.c.b16 %v969, %v965
  %v1042 = vpack.c.b16 %v970, %v966
  %v1043 = vpack.c.b16 %v971, %v967
  %v1044 = vpack.c.b16 %v976, %v972
  %v1045 = vpack.c.b16 %v977, %v973
  %v1046 = vpack.c.b16 %v978, %v974
  %v1047 = vpack.c.b16 %v979, %v975
  %v1048 = vpack.c.b16 %v984, %v980
  %v1049 = vpack.c.b16 %v985, %v981
  %v1050 = vpack.c.b16 %v986, %v982
  %v1051 = vpack.c.b16 %v987, %v983
  %1116 = vmatpush.bf16.msra.mxu0 %v1016
  %1117 = vmatpush.bf16.msra.mxu0 %v1012
  %1118 = vmatpush.bf16.msra.mxu0 %v1008
  %1119 = vmatpush.bf16.msra.mxu0 %v1004
  %1120 = vmatpush.bf16.msra.mxu0 %v1000
  %1121 = vmatpush.bf16.msra.mxu0 %v996
  %1122 = vmatpush.bf16.msra.mxu0 %v992
  %1123 = vmatpush.bf16.msra.mxu0 %v988
  %1124 = vmatmul.bf16.gmra.mxu0 %v718
  %v1125 = vpop.f32.mrf.mxu0
  %v1126 = vadd.f32 %v788, %v1125
  %v1127 = vpop.f32.mrf.mxu0
  %1128 = vdwg.mxu0
  %1129 = vmatpush.bf16.msra.mxu0 %v1048
  %1130 = vmatpush.bf16.msra.mxu0 %v1044
  %1131 = vmatpush.bf16.msra.mxu0 %v1040
  %1132 = vmatpush.bf16.msra.mxu0 %v1036
  %1133 = vmatpush.bf16.msra.mxu0 %v1032
  %1134 = vmatpush.bf16.msra.mxu0 %v1028
  %1135 = vmatpush.bf16.msra.mxu0 %v1024
  %1136 = vmatpush.bf16.msra.mxu0 %v1020
  %1137 = vmatmul.bf16.gmra.mxu0 %v720
  %v1138 = vpop.f32.mrf.mxu0
  %v1139 = vadd.f32 %v1126, %v1138
  %v1140 = vpop.f32.mrf.mxu0
  %1141 = vdwg.mxu0
  %1142 = vmatpush.bf16.msra.mxu0 %v1017
  %1143 = vmatpush.bf16.msra.mxu0 %v1013
  %1144 = vmatpush.bf16.msra.mxu0 %v1009
  %1145 = vmatpush.bf16.msra.mxu0 %v1005
  %1146 = vmatpush.bf16.msra.mxu0 %v1001
  %1147 = vmatpush.bf16.msra.mxu0 %v997
  %1148 = vmatpush.bf16.msra.mxu0 %v993
  %1149 = vmatpush.bf16.msra.mxu0 %v989
  %1150 = vmatmul.bf16.gmra.mxu0 %v718
  %v1151 = vpop.f32.mrf.mxu0
  %v1152 = vadd.f32 %v789, %v1151
  %v1153 = vpop.f32.mrf.mxu0
  %1154 = vdwg.mxu0
  %1155 = vmatpush.bf16.msra.mxu0 %v1049
  %1156 = vmatpush.bf16.msra.mxu0 %v1045
  %1157 = vmatpush.bf16.msra.mxu0 %v1041
  %1158 = vmatpush.bf16.msra.mxu0 %v1037
  %1159 = vmatpush.bf16.msra.mxu0 %v1033
  %1160 = vmatpush.bf16.msra.mxu0 %v1029
  %1161 = vmatpush.bf16.msra.mxu0 %v1025
  %1162 = vmatpush.bf16.msra.mxu0 %v1021
  %1163 = vmatmul.bf16.gmra.mxu0 %v720
  %v1164 = vpop.f32.mrf.mxu0
  %v1165 = vadd.f32 %v1152, %v1164
  %v1166 = vpop.f32.mrf.mxu0
  %1167 = vdwg.mxu0
  %1168 = vmatpush.bf16.msra.mxu0 %v1018
  %1169 = vmatpush.bf16.msra.mxu0 %v1014
  %1170 = vmatpush.bf16.msra.mxu0 %v1010
  %1171 = vmatpush.bf16.msra.mxu0 %v1006
  %1172 = vmatpush.bf16.msra.mxu0 %v1002
  %1173 = vmatpush.bf16.msra.mxu0 %v998
  %1174 = vmatpush.bf16.msra.mxu0 %v994
  %1175 = vmatpush.bf16.msra.mxu0 %v990
  %1176 = vmatmul.bf16.gmra.mxu0 %v718
  %v1177 = vpop.f32.mrf.mxu0
  %v1178 = vadd.f32 %v790, %v1177
  %v1179 = vpop.f32.mrf.mxu0
  %1180 = vdwg.mxu0
  %1181 = vmatpush.bf16.msra.mxu0 %v1050
  %1182 = vmatpush.bf16.msra.mxu0 %v1046
  %1183 = vmatpush.bf16.msra.mxu0 %v1042
  %1184 = vmatpush.bf16.msra.mxu0 %v1038
  %1185 = vmatpush.bf16.msra.mxu0 %v1034
  %1186 = vmatpush.bf16.msra.mxu0 %v1030
  %1187 = vmatpush.bf16.msra.mxu0 %v1026
  %1188 = vmatpush.bf16.msra.mxu0 %v1022
  %1189 = vmatmul.bf16.gmra.mxu0 %v720
  %v1190 = vpop.f32.mrf.mxu0
  %v1191 = vadd.f32 %v1178, %v1190
  %v1192 = vpop.f32.mrf.mxu0
  %1193 = vdwg.mxu0
  %1194 = vmatpush.bf16.msra.mxu0 %v1019
  %1195 = vmatpush.bf16.msra.mxu0 %v1015
  %1196 = vmatpush.bf16.msra.mxu0 %v1011
  %1197 = vmatpush.bf16.msra.mxu0 %v1007
  %1198 = vmatpush.bf16.msra.mxu0 %v1003
  %1199 = vmatpush.bf16.msra.mxu0 %v999
  %1200 = vmatpush.bf16.msra.mxu0 %v995
  %1201 = vmatpush.bf16.msra.mxu0 %v991
  %1202 = vmatmul.bf16.gmra.mxu0 %v718
  %v1203 = vpop.f32.mrf.mxu0
  %v1204 = vadd.f32 %v791, %v1203
  %v1205 = vpop.f32.mrf.mxu0
  %1206 = vdwg.mxu0
  %1207 = vmatpush.bf16.msra.mxu0 %v1051
  %1208 = vmatpush.bf16.msra.mxu0 %v1047
  %1209 = vmatpush.bf16.msra.mxu0 %v1043
  %1210 = vmatpush.bf16.msra.mxu0 %v1039
  %1211 = vmatpush.bf16.msra.mxu0 %v1035
  %1212 = vmatpush.bf16.msra.mxu0 %v1031
  %1213 = vmatpush.bf16.msra.mxu0 %v1027
  %1214 = vmatpush.bf16.msra.mxu0 %v1023
  %1215 = vmatmul.bf16.gmra.mxu0 %v720
  %v1216 = vpop.f32.mrf.mxu0
  %v1217 = vadd.f32 %v1204, %v1216
  %v1218 = vpop.f32.mrf.mxu0
  %1219 = vdwg.mxu0
  %v1224 = vrot.slane %v1165, 4
  %v1225 = vrot.slane %v1217, 4
  %v1226 = vsel %vm594, %v1139, %v1224
  %v1227 = vsel %vm594, %v1191, %v1225
  %1230 = vst [vmem:[#allocation6] sm:$0xff] %v1226
  %1231 = vst [vmem:[#allocation6 + $0x8] sm:$0xff] %v1227
  %1232 = vmatpush.bf16.msra.mxu0 %v1016
  %1233 = vmatpush.bf16.msra.mxu0 %v1012
  %1234 = vmatpush.bf16.msra.mxu0 %v1008
  %1235 = vmatpush.bf16.msra.mxu0 %v1004
  %1236 = vmatpush.bf16.msra.mxu0 %v1000
  %1237 = vmatpush.bf16.msra.mxu0 %v996
  %1238 = vmatpush.bf16.msra.mxu0 %v992
  %1239 = vmatpush.bf16.msra.mxu0 %v988
  %1240 = vmatmul.bf16.gmra.mxu0 %v719
  %v1241 = vpop.f32.mrf.mxu0
  %v1242 = vadd.f32 %v788, %v1241
  %v1243 = vpop.f32.mrf.mxu0
  %1244 = vdwg.mxu0
  %1245 = vmatpush.bf16.msra.mxu0 %v1048
  %1246 = vmatpush.bf16.msra.mxu0 %v1044
  %1247 = vmatpush.bf16.msra.mxu0 %v1040
  %1248 = vmatpush.bf16.msra.mxu0 %v1036
  %1249 = vmatpush.bf16.msra.mxu0 %v1032
  %1250 = vmatpush.bf16.msra.mxu0 %v1028
  %1251 = vmatpush.bf16.msra.mxu0 %v1024
  %1252 = vmatpush.bf16.msra.mxu0 %v1020
  %1253 = vmatmul.bf16.gmra.mxu0 %v721
  %v1254 = vpop.f32.mrf.mxu0
  %v1255 = vadd.f32 %v1242, %v1254
  %v1256 = vpop.f32.mrf.mxu0
  %1257 = vdwg.mxu0
  %1258 = vmatpush.bf16.msra.mxu0 %v1017
  %1259 = vmatpush.bf16.msra.mxu0 %v1013
  %1260 = vmatpush.bf16.msra.mxu0 %v1009
  %1261 = vmatpush.bf16.msra.mxu0 %v1005
  %1262 = vmatpush.bf16.msra.mxu0 %v1001
  %1263 = vmatpush.bf16.msra.mxu0 %v997
  %1264 = vmatpush.bf16.msra.mxu0 %v993
  %1265 = vmatpush.bf16.msra.mxu0 %v989
  %1266 = vmatmul.bf16.gmra.mxu0 %v719
  %v1267 = vpop.f32.mrf.mxu0
  %v1268 = vadd.f32 %v789, %v1267
  %v1269 = vpop.f32.mrf.mxu0
  %1270 = vdwg.mxu0
  %1271 = vmatpush.bf16.msra.mxu0 %v1049
  %1272 = vmatpush.bf16.msra.mxu0 %v1045
  %1273 = vmatpush.bf16.msra.mxu0 %v1041
  %1274 = vmatpush.bf16.msra.mxu0 %v1037
  %1275 = vmatpush.bf16.msra.mxu0 %v1033
  %1276 = vmatpush.bf16.msra.mxu0 %v1029
  %1277 = vmatpush.bf16.msra.mxu0 %v1025
  %1278 = vmatpush.bf16.msra.mxu0 %v1021
  %1279 = vmatmul.bf16.gmra.mxu0 %v721
  %v1280 = vpop.f32.mrf.mxu0
  %v1281 = vadd.f32 %v1268, %v1280
  %v1282 = vpop.f32.mrf.mxu0
  %1283 = vdwg.mxu0
  %1284 = vmatpush.bf16.msra.mxu0 %v1018
  %1285 = vmatpush.bf16.msra.mxu0 %v1014
  %1286 = vmatpush.bf16.msra.mxu0 %v1010
  %1287 = vmatpush.bf16.msra.mxu0 %v1006
  %1288 = vmatpush.bf16.msra.mxu0 %v1002
  %1289 = vmatpush.bf16.msra.mxu0 %v998
  %1290 = vmatpush.bf16.msra.mxu0 %v994
  %1291 = vmatpush.bf16.msra.mxu0 %v990
  %1292 = vmatmul.bf16.gmra.mxu0 %v719
  %v1293 = vpop.f32.mrf.mxu0
  %v1294 = vadd.f32 %v790, %v1293
  %v1295 = vpop.f32.mrf.mxu0
  %1296 = vdwg.mxu0
  %1297 = vmatpush.bf16.msra.mxu0 %v1050
  %1298 = vmatpush.bf16.msra.mxu0 %v1046
  %1299 = vmatpush.bf16.msra.mxu0 %v1042
  %1300 = vmatpush.bf16.msra.mxu0 %v1038
  %1301 = vmatpush.bf16.msra.mxu0 %v1034
  %1302 = vmatpush.bf16.msra.mxu0 %v1030
  %1303 = vmatpush.bf16.msra.mxu0 %v1026
  %1304 = vmatpush.bf16.msra.mxu0 %v1022
  %1305 = vmatmul.bf16.gmra.mxu0 %v721
  %v1306 = vpop.f32.mrf.mxu0
  %v1307 = vadd.f32 %v1294, %v1306
  %v1308 = vpop.f32.mrf.mxu0
  %1309 = vdwg.mxu0
  %1310 = vmatpush.bf16.msra.mxu0 %v1019
  %1311 = vmatpush.bf16.msra.mxu0 %v1015
  %1312 = vmatpush.bf16.msra.mxu0 %v1011
  %1313 = vmatpush.bf16.msra.mxu0 %v1007
  %1314 = vmatpush.bf16.msra.mxu0 %v1003
  %1315 = vmatpush.bf16.msra.mxu0 %v999
  %1316 = vmatpush.bf16.msra.mxu0 %v995
  %1317 = vmatpush.bf16.msra.mxu0 %v991
  %1318 = vmatmul.bf16.gmra.mxu0 %v719
  %v1319 = vpop.f32.mrf.mxu0
  %v1320 = vadd.f32 %v791, %v1319
  %v1321 = vpop.f32.mrf.mxu0
  %1322 = vdwg.mxu0
  %1323 = vmatpush.bf16.msra.mxu0 %v1051
  %1324 = vmatpush.bf16.msra.mxu0 %v1047
  %1325 = vmatpush.bf16.msra.mxu0 %v1043
  %1326 = vmatpush.bf16.msra.mxu0 %v1039
  %1327 = vmatpush.bf16.msra.mxu0 %v1035
  %1328 = vmatpush.bf16.msra.mxu0 %v1031
  %1329 = vmatpush.bf16.msra.mxu0 %v1027
  %1330 = vmatpush.bf16.msra.mxu0 %v1023
  %1331 = vmatmul.bf16.gmra.mxu0 %v721
  %v1332 = vpop.f32.mrf.mxu0
  %v1333 = vadd.f32 %v1320, %v1332
  %v1334 = vpop.f32.mrf.mxu0
  %1335 = vdwg.mxu0
  %v1340 = vrot.slane %v1281, 4
  %v1341 = vrot.slane %v1333, 4
  %v1342 = vsel %vm594, %v1255, %v1340
  %v1343 = vsel %vm594, %v1307, %v1341
  %s1346 = scalar_lea.vmem [#allocation6], 16
  %1347 = vst [vmem:[%s1346] sm:$0xff] %v1342
  %1348 = vst [vmem:[%s1346 + $0x8] sm:$0xff] %v1343
  %v1349 = vld [vmem:[%s6] sm:$0xff]
  %v1350 = vld [vmem:[%s6 + $0x8] sm:$0xff]
  %v1351 = vld [vmem:[%s6 + $0x10] sm:$0xff]
  %v1352 = vld [vmem:[%s6 + $0x18] sm:$0xff]
  %v1353 = vld [vmem:[%s6 + $0x20] sm:$0xff]
  %v1354 = vld [vmem:[%s6 + $0x28] sm:$0xff]
  %v1355 = vld [vmem:[%s6 + $0x30] sm:$0xff]
  %v1356 = vld [vmem:[%s6 + $0x38] sm:$0xff]
  %v1357 = vld [vmem:[%s6 + $0x40] sm:$0xff]
  %v1358 = vld [vmem:[%s6 + $0x48] sm:$0xff]
  %v1359 = vld [vmem:[%s6 + $0x50] sm:$0xff]
  %v1360 = vld [vmem:[%s6 + $0x58] sm:$0xff]
  %v1361 = vld [vmem:[%s6 + $0x60] sm:$0xff]
  %v1362 = vld [vmem:[%s6 + $0x68] sm:$0xff]
  %v1363 = vld [vmem:[%s6 + $0x70] sm:$0xff]
  %v1364 = vld [vmem:[%s6 + $0x78] sm:$0xff]
  %v1365 = vld [vmem:[%s6 + $0x80] sm:$0xff]
  %v1366 = vld [vmem:[%s6 + $0x88] sm:$0xff]
  %v1367 = vld [vmem:[%s6 + $0x90] sm:$0xff]
  %v1368 = vld [vmem:[%s6 + $0x98] sm:$0xff]
  %v1369 = vld [vmem:[%s6 + $0xa0] sm:$0xff]
  %v1370 = vld [vmem:[%s6 + $0xa8] sm:$0xff]
  %v1371 = vld [vmem:[%s6 + $0xb0] sm:$0xff]
  %v1372 = vld [vmem:[%s6 + $0xb8] sm:$0xff]
  %v1373 = vld [vmem:[%s6 + $0xc0] sm:$0xff]
  %v1374 = vld [vmem:[%s6 + $0xc8] sm:$0xff]
  %v1375 = vld [vmem:[%s6 + $0xd0] sm:$0xff]
  %v1376 = vld [vmem:[%s6 + $0xd8] sm:$0xff]
  %v1377 = vld [vmem:[%s6 + $0xe0] sm:$0xff]
  %v1378 = vld [vmem:[%s6 + $0xe8] sm:$0xff]
  %v1379 = vld [vmem:[%s6 + $0xf0] sm:$0xff]
  %v1380 = vld [vmem:[%s6 + $0xf8] sm:$0xff]
  %v1381 = vld [vmem:[%s6 + $0x100] sm:$0xff]
  %v1382 = vld [vmem:[%s6 + $0x108] sm:$0xff]
  %v1383 = vld [vmem:[%s6 + $0x110] sm:$0xff]
  %v1384 = vld [vmem:[%s6 + $0x118] sm:$0xff]
  %v1385 = vld [vmem:[%s6 + $0x120] sm:$0xff]
  %v1386 = vld [vmem:[%s6 + $0x128] sm:$0xff]
  %v1387 = vld [vmem:[%s6 + $0x130] sm:$0xff]
  %v1388 = vld [vmem:[%s6 + $0x138] sm:$0xff]
  %v1389 = vld [vmem:[%s6 + $0x140] sm:$0xff]
  %v1390 = vld [vmem:[%s6 + $0x148] sm:$0xff]
  %v1391 = vld [vmem:[%s6 + $0x150] sm:$0xff]
  %v1392 = vld [vmem:[%s6 + $0x158] sm:$0xff]
  %v1393 = vld [vmem:[%s6 + $0x160] sm:$0xff]
  %v1394 = vld [vmem:[%s6 + $0x168] sm:$0xff]
  %v1395 = vld [vmem:[%s6 + $0x170] sm:$0xff]
  %v1396 = vld [vmem:[%s6 + $0x178] sm:$0xff]
  %v1397 = vld [vmem:[%s6 + $0x180] sm:$0xff]
  %v1398 = vld [vmem:[%s6 + $0x188] sm:$0xff]
  %v1399 = vld [vmem:[%s6 + $0x190] sm:$0xff]
  %v1400 = vld [vmem:[%s6 + $0x198] sm:$0xff]
  %v1401 = vld [vmem:[%s6 + $0x1a0] sm:$0xff]
  %v1402 = vld [vmem:[%s6 + $0x1a8] sm:$0xff]
  %v1403 = vld [vmem:[%s6 + $0x1b0] sm:$0xff]
  %v1404 = vld [vmem:[%s6 + $0x1b8] sm:$0xff]
  %v1405 = vld [vmem:[%s6 + $0x1c0] sm:$0xff]
  %v1406 = vld [vmem:[%s6 + $0x1c8] sm:$0xff]
  %v1407 = vld [vmem:[%s6 + $0x1d0] sm:$0xff]
  %v1408 = vld [vmem:[%s6 + $0x1d8] sm:$0xff]
  %v1409 = vld [vmem:[%s6 + $0x1e0] sm:$0xff]
  %v1410 = vld [vmem:[%s6 + $0x1e8] sm:$0xff]
  %v1411 = vld [vmem:[%s6 + $0x1f0] sm:$0xff]
  %v1412 = vld [vmem:[%s6 + $0x1f8] sm:$0xff]
  %v1413 = vld [vmem:[%s6 + $0x200] sm:$0xff]
  %v1414 = vld [vmem:[%s6 + $0x208] sm:$0xff]
  %v1415 = vld [vmem:[%s6 + $0x210] sm:$0xff]
  %v1416 = vld [vmem:[%s6 + $0x218] sm:$0xff]
  %v1417 = vld [vmem:[%s6 + $0x220] sm:$0xff]
  %v1418 = vld [vmem:[%s6 + $0x228] sm:$0xff]
  %v1419 = vld [vmem:[%s6 + $0x230] sm:$0xff]
  %v1420 = vld [vmem:[%s6 + $0x238] sm:$0xff]
  %v1421 = vld [vmem:[%s6 + $0x240] sm:$0xff]
  %v1422 = vld [vmem:[%s6 + $0x248] sm:$0xff]
  %v1423 = vld [vmem:[%s6 + $0x250] sm:$0xff]
  %v1424 = vld [vmem:[%s6 + $0x258] sm:$0xff]
  %v1425 = vld [vmem:[%s6 + $0x260] sm:$0xff]
  %v1426 = vld [vmem:[%s6 + $0x268] sm:$0xff]
  %v1427 = vld [vmem:[%s6 + $0x270] sm:$0xff]
  %v1428 = vld [vmem:[%s6 + $0x278] sm:$0xff]
  %v1429 = vld [vmem:[%s6 + $0x280] sm:$0xff]
  %v1430 = vld [vmem:[%s6 + $0x288] sm:$0xff]
  %v1431 = vld [vmem:[%s6 + $0x290] sm:$0xff]
  %v1432 = vld [vmem:[%s6 + $0x298] sm:$0xff]
  %v1433 = vld [vmem:[%s6 + $0x2a0] sm:$0xff]
  %v1434 = vld [vmem:[%s6 + $0x2a8] sm:$0xff]
  %v1435 = vld [vmem:[%s6 + $0x2b0] sm:$0xff]
  %v1436 = vld [vmem:[%s6 + $0x2b8] sm:$0xff]
  %v1437 = vld [vmem:[%s6 + $0x2c0] sm:$0xff]
  %v1438 = vld [vmem:[%s6 + $0x2c8] sm:$0xff]
  %v1439 = vld [vmem:[%s6 + $0x2d0] sm:$0xff]
  %v1440 = vld [vmem:[%s6 + $0x2d8] sm:$0xff]
  %v1441 = vld [vmem:[%s6 + $0x2e0] sm:$0xff]
  %v1442 = vld [vmem:[%s6 + $0x2e8] sm:$0xff]
  %v1443 = vld [vmem:[%s6 + $0x2f0] sm:$0xff]
  %v1444 = vld [vmem:[%s6 + $0x2f8] sm:$0xff]
  %v1445 = vld [vmem:[%s6 + $0x300] sm:$0xff]
  %v1446 = vld [vmem:[%s6 + $0x308] sm:$0xff]
  %v1447 = vld [vmem:[%s6 + $0x310] sm:$0xff]
  %v1448 = vld [vmem:[%s6 + $0x318] sm:$0xff]
  %v1449 = vld [vmem:[%s6 + $0x320] sm:$0xff]
  %v1450 = vld [vmem:[%s6 + $0x328] sm:$0xff]
  %v1451 = vld [vmem:[%s6 + $0x330] sm:$0xff]
  %v1452 = vld [vmem:[%s6 + $0x338] sm:$0xff]
  %v1453 = vld [vmem:[%s6 + $0x340] sm:$0xff]
  %v1454 = vld [vmem:[%s6 + $0x348] sm:$0xff]
  %v1455 = vld [vmem:[%s6 + $0x350] sm:$0xff]
  %v1456 = vld [vmem:[%s6 + $0x358] sm:$0xff]
  %v1457 = vld [vmem:[%s6 + $0x360] sm:$0xff]
  %v1458 = vld [vmem:[%s6 + $0x368] sm:$0xff]
  %v1459 = vld [vmem:[%s6 + $0x370] sm:$0xff]
  %v1460 = vld [vmem:[%s6 + $0x378] sm:$0xff]
  %v1461 = vld [vmem:[%s6 + $0x380] sm:$0xff]
  %v1462 = vld [vmem:[%s6 + $0x388] sm:$0xff]
  %v1463 = vld [vmem:[%s6 + $0x390] sm:$0xff]
  %v1464 = vld [vmem:[%s6 + $0x398] sm:$0xff]
  %v1465 = vld [vmem:[%s6 + $0x3a0] sm:$0xff]
  %v1466 = vld [vmem:[%s6 + $0x3a8] sm:$0xff]
  %v1467 = vld [vmem:[%s6 + $0x3b0] sm:$0xff]
  %v1468 = vld [vmem:[%s6 + $0x3b8] sm:$0xff]
  %v1469 = vld [vmem:[%s6 + $0x3c0] sm:$0xff]
  %v1470 = vld [vmem:[%s6 + $0x3c8] sm:$0xff]
  %v1471 = vld [vmem:[%s6 + $0x3d0] sm:$0xff]
  %v1472 = vld [vmem:[%s6 + $0x3d8] sm:$0xff]
  %v1473 = vld [vmem:[%s6 + $0x3e0] sm:$0xff]
  %v1474 = vld [vmem:[%s6 + $0x3e8] sm:$0xff]
  %v1475 = vld [vmem:[%s6 + $0x3f0] sm:$0xff]
  %v1476 = vld [vmem:[%s6 + $0x3f8] sm:$0xff]
  %v1477 = vld [vmem:[#allocation2] sm:$0xf]
  %v1478 = vld [vmem:[#allocation3] sm:$0x3]
  %v1479 = vld [vmem:[#allocation4] sm:$0x3]
  %1481 = vst [vmem:[#allocation1] ss:$4 sm:$0xff] %v1477
  %v1482 = vld.sshfl [vmem:[#allocation1] sm:$0xff pattern:$0x73625140]
  %v1483 = vld.sshfl [vmem:[#allocation1 + $0x8] sm:$0xff pattern:$0x73625140]
  %v1486 = vpack.c.bf16 %v1482, %v1482
  %v1487 = vpack.c.bf16 %v1483, %v1483
  %v1616 = vunpack.c.l.b16 %v1349
  %v1617 = vunpack.c.h.b16 %v1349
  %v1618 = vunpack.c.l.b16 %v1350
  %v1619 = vunpack.c.h.b16 %v1350
  %v1620 = vunpack.c.l.b16 %v1351
  %v1621 = vunpack.c.h.b16 %v1351
  %v1622 = vunpack.c.l.b16 %v1352
  %v1623 = vunpack.c.h.b16 %v1352
  %v1624 = vunpack.c.l.b16 %v1353
  %v1625 = vunpack.c.h.b16 %v1353
  %v1626 = vunpack.c.l.b16 %v1354
  %v1627 = vunpack.c.h.b16 %v1354
  %v1628 = vunpack.c.l.b16 %v1355
  %v1629 = vunpack.c.h.b16 %v1355
  %v1630 = vunpack.c.l.b16 %v1356
  %v1631 = vunpack.c.h.b16 %v1356
  %v1632 = vunpack.c.l.b16 %v1357
  %v1633 = vunpack.c.h.b16 %v1357
  %v1634 = vunpack.c.l.b16 %v1358
  %v1635 = vunpack.c.h.b16 %v1358
  %v1636 = vunpack.c.l.b16 %v1359
  %v1637 = vunpack.c.h.b16 %v1359
  %v1638 = vunpack.c.l.b16 %v1360
  %v1639 = vunpack.c.h.b16 %v1360
  %v1640 = vunpack.c.l.b16 %v1361
  %v1641 = vunpack.c.h.b16 %v1361
  %v1642 = vunpack.c.l.b16 %v1362
  %v1643 = vunpack.c.h.b16 %v1362
  %v1644 = vunpack.c.l.b16 %v1363
  %v1645 = vunpack.c.h.b16 %v1363
  %v1646 = vunpack.c.l.b16 %v1364
  %v1647 = vunpack.c.h.b16 %v1364
  %v1648 = vunpack.c.l.b16 %v1365
  %v1649 = vunpack.c.h.b16 %v1365
  %v1650 = vunpack.c.l.b16 %v1366
  %v1651 = vunpack.c.h.b16 %v1366
  %v1652 = vunpack.c.l.b16 %v1367
  %v1653 = vunpack.c.h.b16 %v1367
  %v1654 = vunpack.c.l.b16 %v1368
  %v1655 = vunpack.c.h.b16 %v1368
  %v1656 = vunpack.c.l.b16 %v1369
  %v1657 = vunpack.c.h.b16 %v1369
  %v1658 = vunpack.c.l.b16 %v1370
  %v1659 = vunpack.c.h.b16 %v1370
  %v1660 = vunpack.c.l.b16 %v1371
  %v1661 = vunpack.c.h.b16 %v1371
  %v1662 = vunpack.c.l.b16 %v1372
  %v1663 = vunpack.c.h.b16 %v1372
  %v1664 = vunpack.c.l.b16 %v1373
  %v1665 = vunpack.c.h.b16 %v1373
  %v1666 = vunpack.c.l.b16 %v1374
  %v1667 = vunpack.c.h.b16 %v1374
  %v1668 = vunpack.c.l.b16 %v1375
  %v1669 = vunpack.c.h.b16 %v1375
  %v1670 = vunpack.c.l.b16 %v1376
  %v1671 = vunpack.c.h.b16 %v1376
  %v1672 = vunpack.c.l.b16 %v1377
  %v1673 = vunpack.c.h.b16 %v1377
  %v1674 = vunpack.c.l.b16 %v1378
  %v1675 = vunpack.c.h.b16 %v1378
  %v1676 = vunpack.c.l.b16 %v1379
  %v1677 = vunpack.c.h.b16 %v1379
  %v1678 = vunpack.c.l.b16 %v1380
  %v1679 = vunpack.c.h.b16 %v1380
  %v1680 = vunpack.c.l.b16 %v1381
  %v1681 = vunpack.c.h.b16 %v1381
  %v1682 = vunpack.c.l.b16 %v1382
  %v1683 = vunpack.c.h.b16 %v1382
  %v1684 = vunpack.c.l.b16 %v1383
  %v1685 = vunpack.c.h.b16 %v1383
  %v1686 = vunpack.c.l.b16 %v1384
  %v1687 = vunpack.c.h.b16 %v1384
  %v1688 = vunpack.c.l.b16 %v1385
  %v1689 = vunpack.c.h.b16 %v1385
  %v1690 = vunpack.c.l.b16 %v1386
  %v1691 = vunpack.c.h.b16 %v1386
  %v1692 = vunpack.c.l.b16 %v1387
  %v1693 = vunpack.c.h.b16 %v1387
  %v1694 = vunpack.c.l.b16 %v1388
  %v1695 = vunpack.c.h.b16 %v1388
  %v1696 = vunpack.c.l.b16 %v1389
  %v1697 = vunpack.c.h.b16 %v1389
  %v1698 = vunpack.c.l.b16 %v1390
  %v1699 = vunpack.c.h.b16 %v1390
  %v1700 = vunpack.c.l.b16 %v1391
  %v1701 = vunpack.c.h.b16 %v1391
  %v1702 = vunpack.c.l.b16 %v1392
  %v1703 = vunpack.c.h.b16 %v1392
  %v1704 = vunpack.c.l.b16 %v1393
  %v1705 = vunpack.c.h.b16 %v1393
  %v1706 = vunpack.c.l.b16 %v1394
  %v1707 = vunpack.c.h.b16 %v1394
  %v1708 = vunpack.c.l.b16 %v1395
  %v1709 = vunpack.c.h.b16 %v1395
  %v1710 = vunpack.c.l.b16 %v1396
  %v1711 = vunpack.c.h.b16 %v1396
  %v1712 = vunpack.c.l.b16 %v1397
  %v1713 = vunpack.c.h.b16 %v1397
  %v1714 = vunpack.c.l.b16 %v1398
  %v1715 = vunpack.c.h.b16 %v1398
  %v1716 = vunpack.c.l.b16 %v1399
  %v1717 = vunpack.c.h.b16 %v1399
  %v1718 = vunpack.c.l.b16 %v1400
  %v1719 = vunpack.c.h.b16 %v1400
  %v1720 = vunpack.c.l.b16 %v1401
  %v1721 = vunpack.c.h.b16 %v1401
  %v1722 = vunpack.c.l.b16 %v1402
  %v1723 = vunpack.c.h.b16 %v1402
  %v1724 = vunpack.c.l.b16 %v1403
  %v1725 = vunpack.c.h.b16 %v1403
  %v1726 = vunpack.c.l.b16 %v1404
  %v1727 = vunpack.c.h.b16 %v1404
  %v1728 = vunpack.c.l.b16 %v1405
  %v1729 = vunpack.c.h.b16 %v1405
  %v1730 = vunpack.c.l.b16 %v1406
  %v1731 = vunpack.c.h.b16 %v1406
  %v1732 = vunpack.c.l.b16 %v1407
  %v1733 = vunpack.c.h.b16 %v1407
  %v1734 = vunpack.c.l.b16 %v1408
  %v1735 = vunpack.c.h.b16 %v1408
  %v1736 = vunpack.c.l.b16 %v1409
  %v1737 = vunpack.c.h.b16 %v1409
  %v1738 = vunpack.c.l.b16 %v1410
  %v1739 = vunpack.c.h.b16 %v1410
  %v1740 = vunpack.c.l.b16 %v1411
  %v1741 = vunpack.c.h.b16 %v1411
  %v1742 = vunpack.c.l.b16 %v1412
  %v1743 = vunpack.c.h.b16 %v1412
  %v1744 = vunpack.c.l.b16 %v1413
  %v1745 = vunpack.c.h.b16 %v1413
  %v1746 = vunpack.c.l.b16 %v1414
  %v1747 = vunpack.c.h.b16 %v1414
  %v1748 = vunpack.c.l.b16 %v1415
  %v1749 = vunpack.c.h.b16 %v1415
  %v1750 = vunpack.c.l.b16 %v1416
  %v1751 = vunpack.c.h.b16 %v1416
  %v1752 = vunpack.c.l.b16 %v1417
  %v1753 = vunpack.c.h.b16 %v1417
  %v1754 = vunpack.c.l.b16 %v1418
  %v1755 = vunpack.c.h.b16 %v1418
  %v1756 = vunpack.c.l.b16 %v1419
  %v1757 = vunpack.c.h.b16 %v1419
  %v1758 = vunpack.c.l.b16 %v1420
  %v1759 = vunpack.c.h.b16 %v1420
  %v1760 = vunpack.c.l.b16 %v1421
  %v1761 = vunpack.c.h.b16 %v1421
  %v1762 = vunpack.c.l.b16 %v1422
  %v1763 = vunpack.c.h.b16 %v1422
  %v1764 = vunpack.c.l.b16 %v1423
  %v1765 = vunpack.c.h.b16 %v1423
  %v1766 = vunpack.c.l.b16 %v1424
  %v1767 = vunpack.c.h.b16 %v1424
  %v1768 = vunpack.c.l.b16 %v1425
  %v1769 = vunpack.c.h.b16 %v1425
  %v1770 = vunpack.c.l.b16 %v1426
  %v1771 = vunpack.c.h.b16 %v1426
  %v1772 = vunpack.c.l.b16 %v1427
  %v1773 = vunpack.c.h.b16 %v1427
  %v1774 = vunpack.c.l.b16 %v1428
  %v1775 = vunpack.c.h.b16 %v1428
  %v1776 = vunpack.c.l.b16 %v1429
  %v1777 = vunpack.c.h.b16 %v1429
  %v1778 = vunpack.c.l.b16 %v1430
  %v1779 = vunpack.c.h.b16 %v1430
  %v1780 = vunpack.c.l.b16 %v1431
  %v1781 = vunpack.c.h.b16 %v1431
  %v1782 = vunpack.c.l.b16 %v1432
  %v1783 = vunpack.c.h.b16 %v1432
  %v1784 = vunpack.c.l.b16 %v1433
  %v1785 = vunpack.c.h.b16 %v1433
  %v1786 = vunpack.c.l.b16 %v1434
  %v1787 = vunpack.c.h.b16 %v1434
  %v1788 = vunpack.c.l.b16 %v1435
  %v1789 = vunpack.c.h.b16 %v1435
  %v1790 = vunpack.c.l.b16 %v1436
  %v1791 = vunpack.c.h.b16 %v1436
  %v1792 = vunpack.c.l.b16 %v1437
  %v1793 = vunpack.c.h.b16 %v1437
  %v1794 = vunpack.c.l.b16 %v1438
  %v1795 = vunpack.c.h.b16 %v1438
  %v1796 = vunpack.c.l.b16 %v1439
  %v1797 = vunpack.c.h.b16 %v1439
  %v1798 = vunpack.c.l.b16 %v1440
  %v1799 = vunpack.c.h.b16 %v1440
  %v1800 = vunpack.c.l.b16 %v1441
  %v1801 = vunpack.c.h.b16 %v1441
  %v1802 = vunpack.c.l.b16 %v1442
  %v1803 = vunpack.c.h.b16 %v1442
  %v1804 = vunpack.c.l.b16 %v1443
  %v1805 = vunpack.c.h.b16 %v1443
  %v1806 = vunpack.c.l.b16 %v1444
  %v1807 = vunpack.c.h.b16 %v1444
  %v1808 = vunpack.c.l.b16 %v1445
  %v1809 = vunpack.c.h.b16 %v1445
  %v1810 = vunpack.c.l.b16 %v1446
  %v1811 = vunpack.c.h.b16 %v1446
  %v1812 = vunpack.c.l.b16 %v1447
  %v1813 = vunpack.c.h.b16 %v1447
  %v1814 = vunpack.c.l.b16 %v1448
  %v1815 = vunpack.c.h.b16 %v1448
  %v1816 = vunpack.c.l.b16 %v1449
  %v1817 = vunpack.c.h.b16 %v1449
  %v1818 = vunpack.c.l.b16 %v1450
  %v1819 = vunpack.c.h.b16 %v1450
  %v1820 = vunpack.c.l.b16 %v1451
  %v1821 = vunpack.c.h.b16 %v1451
  %v1822 = vunpack.c.l.b16 %v1452
  %v1823 = vunpack.c.h.b16 %v1452
  %v1824 = vunpack.c.l.b16 %v1453
  %v1825 = vunpack.c.h.b16 %v1453
  %v1826 = vunpack.c.l.b16 %v1454
  %v1827 = vunpack.c.h.b16 %v1454
  %v1828 = vunpack.c.l.b16 %v1455
  %v1829 = vunpack.c.h.b16 %v1455
  %v1830 = vunpack.c.l.b16 %v1456
  %v1831 = vunpack.c.h.b16 %v1456
  %v1832 = vunpack.c.l.b16 %v1457
  %v1833 = vunpack.c.h.b16 %v1457
  %v1834 = vunpack.c.l.b16 %v1458
  %v1835 = vunpack.c.h.b16 %v1458
  %v1836 = vunpack.c.l.b16 %v1459
  %v1837 = vunpack.c.h.b16 %v1459
  %v1838 = vunpack.c.l.b16 %v1460
  %v1839 = vunpack.c.h.b16 %v1460
  %v1840 = vunpack.c.l.b16 %v1461
  %v1841 = vunpack.c.h.b16 %v1461
  %v1842 = vunpack.c.l.b16 %v1462
  %v1843 = vunpack.c.h.b16 %v1462
  %v1844 = vunpack.c.l.b16 %v1463
  %v1845 = vunpack.c.h.b16 %v1463
  %v1846 = vunpack.c.l.b16 %v1464
  %v1847 = vunpack.c.h.b16 %v1464
  %v1848 = vunpack.c.l.b16 %v1465
  %v1849 = vunpack.c.h.b16 %v1465
  %v1850 = vunpack.c.l.b16 %v1466
  %v1851 = vunpack.c.h.b16 %v1466
  %v1852 = vunpack.c.l.b16 %v1467
  %v1853 = vunpack.c.h.b16 %v1467
  %v1854 = vunpack.c.l.b16 %v1468
  %v1855 = vunpack.c.h.b16 %v1468
  %v1856 = vunpack.c.l.b16 %v1469
  %v1857 = vunpack.c.h.b16 %v1469
  %v1858 = vunpack.c.l.b16 %v1470
  %v1859 = vunpack.c.h.b16 %v1470
  %v1860 = vunpack.c.l.b16 %v1471
  %v1861 = vunpack.c.h.b16 %v1471
  %v1862 = vunpack.c.l.b16 %v1472
  %v1863 = vunpack.c.h.b16 %v1472
  %v1864 = vunpack.c.l.b16 %v1473
  %v1865 = vunpack.c.h.b16 %v1473
  %v1866 = vunpack.c.l.b16 %v1474
  %v1867 = vunpack.c.h.b16 %v1474
  %v1868 = vunpack.c.l.b16 %v1475
  %v1869 = vunpack.c.h.b16 %v1475
  %v1870 = vunpack.c.l.b16 %v1476
  %v1871 = vunpack.c.h.b16 %v1476
  %v1872 = vpack.c.b16 %v1624, %v1616
  %v1873 = vpack.c.b16 %v1625, %v1617
  %v1874 = vpack.c.b16 %v1626, %v1618
  %v1875 = vpack.c.b16 %v1627, %v1619
  %v1876 = vpack.c.b16 %v1628, %v1620
  %v1877 = vpack.c.b16 %v1629, %v1621
  %v1878 = vpack.c.b16 %v1630, %v1622
  %v1879 = vpack.c.b16 %v1631, %v1623
  %v1880 = vpack.c.b16 %v1640, %v1632
  %v1881 = vpack.c.b16 %v1641, %v1633
  %v1882 = vpack.c.b16 %v1642, %v1634
  %v1883 = vpack.c.b16 %v1643, %v1635
  %v1884 = vpack.c.b16 %v1644, %v1636
  %v1885 = vpack.c.b16 %v1645, %v1637
  %v1886 = vpack.c.b16 %v1646, %v1638
  %v1887 = vpack.c.b16 %v1647, %v1639
  %v1888 = vpack.c.b16 %v1656, %v1648
  %v1889 = vpack.c.b16 %v1657, %v1649
  %v1890 = vpack.c.b16 %v1658, %v1650
  %v1891 = vpack.c.b16 %v1659, %v1651
  %v1892 = vpack.c.b16 %v1660, %v1652
  %v1893 = vpack.c.b16 %v1661, %v1653
  %v1894 = vpack.c.b16 %v1662, %v1654
  %v1895 = vpack.c.b16 %v1663, %v1655
  %v1896 = vpack.c.b16 %v1672, %v1664
  %v1897 = vpack.c.b16 %v1673, %v1665
  %v1898 = vpack.c.b16 %v1674, %v1666
  %v1899 = vpack.c.b16 %v1675, %v1667
  %v1900 = vpack.c.b16 %v1676, %v1668
  %v1901 = vpack.c.b16 %v1677, %v1669
  %v1902 = vpack.c.b16 %v1678, %v1670
  %v1903 = vpack.c.b16 %v1679, %v1671
  %v1904 = vpack.c.b16 %v1688, %v1680
  %v1905 = vpack.c.b16 %v1689, %v1681
  %v1906 = vpack.c.b16 %v1690, %v1682
  %v1907 = vpack.c.b16 %v1691, %v1683
  %v1908 = vpack.c.b16 %v1692, %v1684
  %v1909 = vpack.c.b16 %v1693, %v1685
  %v1910 = vpack.c.b16 %v1694, %v1686
  %v1911 = vpack.c.b16 %v1695, %v1687
  %v1912 = vpack.c.b16 %v1704, %v1696
  %v1913 = vpack.c.b16 %v1705, %v1697
  %v1914 = vpack.c.b16 %v1706, %v1698
  %v1915 = vpack.c.b16 %v1707, %v1699
  %v1916 = vpack.c.b16 %v1708, %v1700
  %v1917 = vpack.c.b16 %v1709, %v1701
  %v1918 = vpack.c.b16 %v1710, %v1702
  %v1919 = vpack.c.b16 %v1711, %v1703
  %v1920 = vpack.c.b16 %v1720, %v1712
  %v1921 = vpack.c.b16 %v1721, %v1713
  %v1922 = vpack.c.b16 %v1722, %v1714
  %v1923 = vpack.c.b16 %v1723, %v1715
  %v1924 = vpack.c.b16 %v1724, %v1716
  %v1925 = vpack.c.b16 %v1725, %v1717
  %v1926 = vpack.c.b16 %v1726, %v1718
  %v1927 = vpack.c.b16 %v1727, %v1719
  %v1928 = vpack.c.b16 %v1736, %v1728
  %v1929 = vpack.c.b16 %v1737, %v1729
  %v1930 = vpack.c.b16 %v1738, %v1730
  %v1931 = vpack.c.b16 %v1739, %v1731
  %v1932 = vpack.c.b16 %v1740, %v1732
  %v1933 = vpack.c.b16 %v1741, %v1733
  %v1934 = vpack.c.b16 %v1742, %v1734
  %v1935 = vpack.c.b16 %v1743, %v1735
  %v1936 = vpack.c.b16 %v1752, %v1744
  %v1937 = vpack.c.b16 %v1753, %v1745
  %v1938 = vpack.c.b16 %v1754, %v1746
  %v1939 = vpack.c.b16 %v1755, %v1747
  %v1940 = vpack.c.b16 %v1756, %v1748
  %v1941 = vpack.c.b16 %v1757, %v1749
  %v1942 = vpack.c.b16 %v1758, %v1750
  %v1943 = vpack.c.b16 %v1759, %v1751
  %v1944 = vpack.c.b16 %v1768, %v1760
  %v1945 = vpack.c.b16 %v1769, %v1761
  %v1946 = vpack.c.b16 %v1770, %v1762
  %v1947 = vpack.c.b16 %v1771, %v1763
  %v1948 = vpack.c.b16 %v1772, %v1764
  %v1949 = vpack.c.b16 %v1773, %v1765
  %v1950 = vpack.c.b16 %v1774, %v1766
  %v1951 = vpack.c.b16 %v1775, %v1767
  %v1952 = vpack.c.b16 %v1784, %v1776
  %v1953 = vpack.c.b16 %v1785, %v1777
  %v1954 = vpack.c.b16 %v1786, %v1778
  %v1955 = vpack.c.b16 %v1787, %v1779
  %v1956 = vpack.c.b16 %v1788, %v1780
  %v1957 = vpack.c.b16 %v1789, %v1781
  %v1958 = vpack.c.b16 %v1790, %v1782
  %v1959 = vpack.c.b16 %v1791, %v1783
  %v1960 = vpack.c.b16 %v1800, %v1792
  %v1961 = vpack.c.b16 %v1801, %v1793
  %v1962 = vpack.c.b16 %v1802, %v1794
  %v1963 = vpack.c.b16 %v1803, %v1795
  %v1964 = vpack.c.b16 %v1804, %v1796
  %v1965 = vpack.c.b16 %v1805, %v1797
  %v1966 = vpack.c.b16 %v1806, %v1798
  %v1967 = vpack.c.b16 %v1807, %v1799
  %v1968 = vpack.c.b16 %v1816, %v1808
  %v1969 = vpack.c.b16 %v1817, %v1809
  %v1970 = vpack.c.b16 %v1818, %v1810
  %v1971 = vpack.c.b16 %v1819, %v1811
  %v1972 = vpack.c.b16 %v1820, %v1812
  %v1973 = vpack.c.b16 %v1821, %v1813
  %v1974 = vpack.c.b16 %v1822, %v1814
  %v1975 = vpack.c.b16 %v1823, %v1815
  %v1976 = vpack.c.b16 %v1832, %v1824
  %v1977 = vpack.c.b16 %v1833, %v1825
  %v1978 = vpack.c.b16 %v1834, %v1826
  %v1979 = vpack.c.b16 %v1835, %v1827
  %v1980 = vpack.c.b16 %v1836, %v1828
  %v1981 = vpack.c.b16 %v1837, %v1829
  %v1982 = vpack.c.b16 %v1838, %v1830
  %v1983 = vpack.c.b16 %v1839, %v1831
  %v1984 = vpack.c.b16 %v1848, %v1840
  %v1985 = vpack.c.b16 %v1849, %v1841
  %v1986 = vpack.c.b16 %v1850, %v1842
  %v1987 = vpack.c.b16 %v1851, %v1843
  %v1988 = vpack.c.b16 %v1852, %v1844
  %v1989 = vpack.c.b16 %v1853, %v1845
  %v1990 = vpack.c.b16 %v1854, %v1846
  %v1991 = vpack.c.b16 %v1855, %v1847
  %v1992 = vpack.c.b16 %v1864, %v1856
  %v1993 = vpack.c.b16 %v1865, %v1857
  %v1994 = vpack.c.b16 %v1866, %v1858
  %v1995 = vpack.c.b16 %v1867, %v1859
  %v1996 = vpack.c.b16 %v1868, %v1860
  %v1997 = vpack.c.b16 %v1869, %v1861
  %v1998 = vpack.c.b16 %v1870, %v1862
  %v1999 = vpack.c.b16 %v1871, %v1863
  %2128 = vmatpush.bf16.msra.mxu0 %v1928
  %2129 = vmatpush.bf16.msra.mxu0 %v1920
  %2130 = vmatpush.bf16.msra.mxu0 %v1912
  %2131 = vmatpush.bf16.msra.mxu0 %v1904
  %2132 = vmatpush.bf16.msra.mxu0 %v1896
  %2133 = vmatpush.bf16.msra.mxu0 %v1888
  %2134 = vmatpush.bf16.msra.mxu0 %v1880
  %2135 = vmatpush.bf16.msra.mxu0 %v1872
  %2136 = vmatmul.bf16.gmra.mxu0 %v1486
  %v2137 = vpop.f32.mrf.mxu0
  %v2138 = vadd.f32 0.0, %v2137
  %v2139 = vpop.f32.mrf.mxu0
  %2140 = vdwg.mxu0
  %2141 = vmatpush.bf16.msra.mxu0 %v1992
  %2142 = vmatpush.bf16.msra.mxu0 %v1984
  %2143 = vmatpush.bf16.msra.mxu0 %v1976
  %2144 = vmatpush.bf16.msra.mxu0 %v1968
  %2145 = vmatpush.bf16.msra.mxu0 %v1960
  %2146 = vmatpush.bf16.msra.mxu0 %v1952
  %2147 = vmatpush.bf16.msra.mxu0 %v1944
  %2148 = vmatpush.bf16.msra.mxu0 %v1936
  %2149 = vmatmul.bf16.gmra.mxu0 %v1487
  %v2150 = vpop.f32.mrf.mxu0
  %v2151 = vadd.f32 %v2138, %v2150
  %v2152 = vpop.f32.mrf.mxu0
  %2153 = vdwg.mxu0
  %2154 = vmatpush.bf16.msra.mxu0 %v1929
  %2155 = vmatpush.bf16.msra.mxu0 %v1921
  %2156 = vmatpush.bf16.msra.mxu0 %v1913
  %2157 = vmatpush.bf16.msra.mxu0 %v1905
  %2158 = vmatpush.bf16.msra.mxu0 %v1897
  %2159 = vmatpush.bf16.msra.mxu0 %v1889
  %2160 = vmatpush.bf16.msra.mxu0 %v1881
  %2161 = vmatpush.bf16.msra.mxu0 %v1873
  %2162 = vmatmul.bf16.gmra.mxu0 %v1486
  %v2163 = vpop.f32.mrf.mxu0
  %v2164 = vadd.f32 0.0, %v2163
  %v2165 = vpop.f32.mrf.mxu0
  %2166 = vdwg.mxu0
  %2167 = vmatpush.bf16.msra.mxu0 %v1993
  %2168 = vmatpush.bf16.msra.mxu0 %v1985
  %2169 = vmatpush.bf16.msra.mxu0 %v1977
  %2170 = vmatpush.bf16.msra.mxu0 %v1969
  %2171 = vmatpush.bf16.msra.mxu0 %v1961
  %2172 = vmatpush.bf16.msra.mxu0 %v1953
  %2173 = vmatpush.bf16.msra.mxu0 %v1945
  %2174 = vmatpush.bf16.msra.mxu0 %v1937
  %2175 = vmatmul.bf16.gmra.mxu0 %v1487
  %v2176 = vpop.f32.mrf.mxu0
  %v2177 = vadd.f32 %v2164, %v2176
  %v2178 = vpop.f32.mrf.mxu0
  %2179 = vdwg.mxu0
  %2180 = vmatpush.bf16.msra.mxu0 %v1930
  %2181 = vmatpush.bf16.msra.mxu0 %v1922
  %2182 = vmatpush.bf16.msra.mxu0 %v1914
  %2183 = vmatpush.bf16.msra.mxu0 %v1906
  %2184 = vmatpush.bf16.msra.mxu0 %v1898
  %2185 = vmatpush.bf16.msra.mxu0 %v1890
  %2186 = vmatpush.bf16.msra.mxu0 %v1882
  %2187 = vmatpush.bf16.msra.mxu0 %v1874
  %2188 = vmatmul.bf16.gmra.mxu0 %v1486
  %v2189 = vpop.f32.mrf.mxu0
  %v2190 = vadd.f32 0.0, %v2189
  %v2191 = vpop.f32.mrf.mxu0
  %2192 = vdwg.mxu0
  %2193 = vmatpush.bf16.msra.mxu0 %v1994
  %2194 = vmatpush.bf16.msra.mxu0 %v1986
  %2195 = vmatpush.bf16.msra.mxu0 %v1978
  %2196 = vmatpush.bf16.msra.mxu0 %v1970
  %2197 = vmatpush.bf16.msra.mxu0 %v1962
  %2198 = vmatpush.bf16.msra.mxu0 %v1954
  %2199 = vmatpush.bf16.msra.mxu0 %v1946
  %2200 = vmatpush.bf16.msra.mxu0 %v1938
  %2201 = vmatmul.bf16.gmra.mxu0 %v1487
  %v2202 = vpop.f32.mrf.mxu0
  %v2203 = vadd.f32 %v2190, %v2202
  %v2204 = vpop.f32.mrf.mxu0
  %2205 = vdwg.mxu0
  %2206 = vmatpush.bf16.msra.mxu0 %v1931
  %2207 = vmatpush.bf16.msra.mxu0 %v1923
  %2208 = vmatpush.bf16.msra.mxu0 %v1915
  %2209 = vmatpush.bf16.msra.mxu0 %v1907
  %2210 = vmatpush.bf16.msra.mxu0 %v1899
  %2211 = vmatpush.bf16.msra.mxu0 %v1891
  %2212 = vmatpush.bf16.msra.mxu0 %v1883
  %2213 = vmatpush.bf16.msra.mxu0 %v1875
  %2214 = vmatmul.bf16.gmra.mxu0 %v1486
  %v2215 = vpop.f32.mrf.mxu0
  %v2216 = vadd.f32 0.0, %v2215
  %v2217 = vpop.f32.mrf.mxu0
  %2218 = vdwg.mxu0
  %2219 = vmatpush.bf16.msra.mxu0 %v1995
  %2220 = vmatpush.bf16.msra.mxu0 %v1987
  %2221 = vmatpush.bf16.msra.mxu0 %v1979
  %2222 = vmatpush.bf16.msra.mxu0 %v1971
  %2223 = vmatpush.bf16.msra.mxu0 %v1963
  %2224 = vmatpush.bf16.msra.mxu0 %v1955
  %2225 = vmatpush.bf16.msra.mxu0 %v1947
  %2226 = vmatpush.bf16.msra.mxu0 %v1939
  %2227 = vmatmul.bf16.gmra.mxu0 %v1487
  %v2228 = vpop.f32.mrf.mxu0
  %v2229 = vadd.f32 %v2216, %v2228
  %v2230 = vpop.f32.mrf.mxu0
  %2231 = vdwg.mxu0
  %2232 = vmatpush.bf16.msra.mxu0 %v1932
  %2233 = vmatpush.bf16.msra.mxu0 %v1924
  %2234 = vmatpush.bf16.msra.mxu0 %v1916
  %2235 = vmatpush.bf16.msra.mxu0 %v1908
  %2236 = vmatpush.bf16.msra.mxu0 %v1900
  %2237 = vmatpush.bf16.msra.mxu0 %v1892
  %2238 = vmatpush.bf16.msra.mxu0 %v1884
  %2239 = vmatpush.bf16.msra.mxu0 %v1876
  %2240 = vmatmul.bf16.gmra.mxu0 %v1486
  %v2241 = vpop.f32.mrf.mxu0
  %v2242 = vadd.f32 0.0, %v2241
  %v2243 = vpop.f32.mrf.mxu0
  %2244 = vdwg.mxu0
  %2245 = vmatpush.bf16.msra.mxu0 %v1996
  %2246 = vmatpush.bf16.msra.mxu0 %v1988
  %2247 = vmatpush.bf16.msra.mxu0 %v1980
  %2248 = vmatpush.bf16.msra.mxu0 %v1972
  %2249 = vmatpush.bf16.msra.mxu0 %v1964
  %2250 = vmatpush.bf16.msra.mxu0 %v1956
  %2251 = vmatpush.bf16.msra.mxu0 %v1948
  %2252 = vmatpush.bf16.msra.mxu0 %v1940
  %2253 = vmatmul.bf16.gmra.mxu0 %v1487
  %v2254 = vpop.f32.mrf.mxu0
  %v2255 = vadd.f32 %v2242, %v2254
  %v2256 = vpop.f32.mrf.mxu0
  %2257 = vdwg.mxu0
  %2258 = vmatpush.bf16.msra.mxu0 %v1933
  %2259 = vmatpush.bf16.msra.mxu0 %v1925
  %2260 = vmatpush.bf16.msra.mxu0 %v1917
  %2261 = vmatpush.bf16.msra.mxu0 %v1909
  %2262 = vmatpush.bf16.msra.mxu0 %v1901
  %2263 = vmatpush.bf16.msra.mxu0 %v1893
  %2264 = vmatpush.bf16.msra.mxu0 %v1885
  %2265 = vmatpush.bf16.msra.mxu0 %v1877
  %2266 = vmatmul.bf16.gmra.mxu0 %v1486
  %v2267 = vpop.f32.mrf.mxu0
  %v2268 = vadd.f32 0.0, %v2267
  %v2269 = vpop.f32.mrf.mxu0
  %2270 = vdwg.mxu0
  %2271 = vmatpush.bf16.msra.mxu0 %v1997
  %2272 = vmatpush.bf16.msra.mxu0 %v1989
  %2273 = vmatpush.bf16.msra.mxu0 %v1981
  %2274 = vmatpush.bf16.msra.mxu0 %v1973
  %2275 = vmatpush.bf16.msra.mxu0 %v1965
  %2276 = vmatpush.bf16.msra.mxu0 %v1957
  %2277 = vmatpush.bf16.msra.mxu0 %v1949
  %2278 = vmatpush.bf16.msra.mxu0 %v1941
  %2279 = vmatmul.bf16.gmra.mxu0 %v1487
  %v2280 = vpop.f32.mrf.mxu0
  %v2281 = vadd.f32 %v2268, %v2280
  %v2282 = vpop.f32.mrf.mxu0
  %2283 = vdwg.mxu0
  %2284 = vmatpush.bf16.msra.mxu0 %v1934
  %2285 = vmatpush.bf16.msra.mxu0 %v1926
  %2286 = vmatpush.bf16.msra.mxu0 %v1918
  %2287 = vmatpush.bf16.msra.mxu0 %v1910
  %2288 = vmatpush.bf16.msra.mxu0 %v1902
  %2289 = vmatpush.bf16.msra.mxu0 %v1894
  %2290 = vmatpush.bf16.msra.mxu0 %v1886
  %2291 = vmatpush.bf16.msra.mxu0 %v1878
  %2292 = vmatmul.bf16.gmra.mxu0 %v1486
  %v2293 = vpop.f32.mrf.mxu0
  %v2294 = vadd.f32 0.0, %v2293
  %v2295 = vpop.f32.mrf.mxu0
  %2296 = vdwg.mxu0
  %2297 = vmatpush.bf16.msra.mxu0 %v1998
  %2298 = vmatpush.bf16.msra.mxu0 %v1990
  %2299 = vmatpush.bf16.msra.mxu0 %v1982
  %2300 = vmatpush.bf16.msra.mxu0 %v1974
  %2301 = vmatpush.bf16.msra.mxu0 %v1966
  %2302 = vmatpush.bf16.msra.mxu0 %v1958
  %2303 = vmatpush.bf16.msra.mxu0 %v1950
  %2304 = vmatpush.bf16.msra.mxu0 %v1942
  %2305 = vmatmul.bf16.gmra.mxu0 %v1487
  %v2306 = vpop.f32.mrf.mxu0
  %v2307 = vadd.f32 %v2294, %v2306
  %v2308 = vpop.f32.mrf.mxu0
  %2309 = vdwg.mxu0
  %2310 = vmatpush.bf16.msra.mxu0 %v1935
  %2311 = vmatpush.bf16.msra.mxu0 %v1927
  %2312 = vmatpush.bf16.msra.mxu0 %v1919
  %2313 = vmatpush.bf16.msra.mxu0 %v1911
  %2314 = vmatpush.bf16.msra.mxu0 %v1903
  %2315 = vmatpush.bf16.msra.mxu0 %v1895
  %2316 = vmatpush.bf16.msra.mxu0 %v1887
  %2317 = vmatpush.bf16.msra.mxu0 %v1879
  %2318 = vmatmul.bf16.gmra.mxu0 %v1486
  %v2319 = vpop.f32.mrf.mxu0
  %v2320 = vadd.f32 0.0, %v2319
  %v2321 = vpop.f32.mrf.mxu0
  %2322 = vdwg.mxu0
  %2323 = vmatpush.bf16.msra.mxu0 %v1999
  %2324 = vmatpush.bf16.msra.mxu0 %v1991
  %2325 = vmatpush.bf16.msra.mxu0 %v1983
  %2326 = vmatpush.bf16.msra.mxu0 %v1975
  %2327 = vmatpush.bf16.msra.mxu0 %v1967
  %2328 = vmatpush.bf16.msra.mxu0 %v1959
  %2329 = vmatpush.bf16.msra.mxu0 %v1951
  %2330 = vmatpush.bf16.msra.mxu0 %v1943
  %2331 = vmatmul.bf16.gmra.mxu0 %v1487
  %v2332 = vpop.f32.mrf.mxu0
  %v2333 = vadd.f32 %v2320, %v2332
  %v2334 = vpop.f32.mrf.mxu0
  %2335 = vdwg.mxu0
  %v2336 = vld [vmem:[#allocation5] ss:$4 sm:$0xf]
  %s2337 = scalar_lea.vmem [#allocation5], 16
  %v2338 = vld [vmem:[%s2337] ss:$4 sm:$0xf]
  %v2343 = vrot.slane %v2177, 7
  %v2344 = vrot.slane %v2203, 6
  %v2345 = vrot.slane %v2229, 5
  %vm2346 = vcmask 1040384
  %v2347 = vsel %vm2346, %v2151, %v2343
  %vm2348 = vcmask 1042434
  %v2349 = vsel %vm2348, %v2344, %v2345
  %vm2350 = vcmask 1041408
  %v2351 = vsel %vm2350, %v2347, %v2349
  %vm2352 = vcmask 1041409
  %v2353 = vsel %vm2352, %v2151, %v2343
  %vm2354 = vcmask 1043459
  %v2355 = vsel %vm2354, %v2344, %v2345
  %vm2356 = vcmask 1042433
  %v2357 = vsel %vm2356, %v2353, %v2355
  %v2358 = vrot.slane %v2357, 1
  %v2361 = vadd.f32 %v2336, %v2351
  %v2362 = vadd.f32 %v2338, %v2358
  %s2363 = scalar_lea.vmem [#allocation6], 3
  %v2364 = vld [vmem:[%s2363] ss:$4 sm:$0xf]
  %s2365 = scalar_lea.vmem [#allocation6], 19
  %v2366 = vld [vmem:[%s2365] ss:$4 sm:$0xf]
  %v2371 = vrot.slane %v2281, 7
  %v2372 = vrot.slane %v2307, 6
  %v2373 = vrot.slane %v2333, 5
  %v2374 = vsel %vm2346, %v2255, %v2371
  %v2375 = vsel %vm2348, %v2372, %v2373
  %v2376 = vsel %vm2350, %v2374, %v2375
  %v2377 = vsel %vm2352, %v2255, %v2371
  %v2378 = vsel %vm2354, %v2372, %v2373
  %v2379 = vsel %vm2356, %v2377, %v2378
  %v2380 = vrot.slane %v2379, 1
  %v2383 = vadd.f32 %v2364, %v2376
  %v2384 = vadd.f32 %v2366, %v2380
  %v2385 = vxor.u32 %v2361, 2147483648
  %v2386 = vxor.u32 %v2362, 2147483648
  %v2387 = vmul.f32 %v2385, 1.442695
  %v2388 = vpow.pop %v2387
  %v2389 = vmul.f32 %v2386, 1.442695
  %v2390 = vpow.pop %v2389
  %v2391 = vadd.f32 %v2388, 1.0
  %v2392 = vadd.f32 %v2390, 1.0
  %v2393 = vrcp.pop %v2391
  %v2394 = vmul.f32 %v2391, %v2393
  %v2395 = vsub.f32 1.0, %v2394
  %v2396 = vmul.f32 %v2393, %v2395
  %v2397 = vadd.f32 %v2393, %v2396
  %vm2398 = vweird.f32 %v2391
  %vm2399 = vweird.f32 %v2393
  %vm2400 = vmor %vm2398, %vm2399
  %v2401 = vsel %vm2400, %v2393, %v2397
  %v2402 = vand.u32 2147483647, %v2391
  %vm2403 = vcmp.eq.f32.partialorder %v2402, 8.507059e+37
  %v2404 = vand.u32 %v2391, 2147483648
  %v2405 = vor.u32 1.1754944e-38, %v2404
  %v2406 = vsel %vm2403, %v2405, %v2401
  %v2407 = vmul.f32 1.0, %v2406
  %v2408 = vrcp.pop %v2392
  %v2409 = vmul.f32 %v2392, %v2408
  %v2410 = vsub.f32 1.0, %v2409
  %v2411 = vmul.f32 %v2408, %v2410
  %v2412 = vadd.f32 %v2408, %v2411
  %vm2413 = vweird.f32 %v2392
  %vm2414 = vweird.f32 %v2408
  %vm2415 = vmor %vm2413, %vm2414
  %v2416 = vsel %vm2415, %v2408, %v2412
  %v2417 = vand.u32 2147483647, %v2392
  %vm2418 = vcmp.eq.f32.partialorder %v2417, 8.507059e+37
  %v2419 = vand.u32 %v2392, 2147483648
  %v2420 = vor.u32 1.1754944e-38, %v2419
  %v2421 = vsel %vm2418, %v2420, %v2416
  %v2422 = vmul.f32 1.0, %v2421
  %v2425 = vrot.slane %v2361, 1
  %v2426 = vrot.slane %v2362, 1
  %v2429 = vxor.u32 %v2425, 2147483648
  %v2430 = vxor.u32 %v2426, 2147483648
  %v2431 = vmul.f32 %v2429, 1.442695
  %v2432 = vpow.pop %v2431
  %v2433 = vmul.f32 %v2430, 1.442695
  %v2434 = vpow.pop %v2433
  %v2435 = vadd.f32 %v2432, 1.0
  %v2436 = vadd.f32 %v2434, 1.0
  %v2437 = vrcp.pop %v2435
  %v2438 = vmul.f32 %v2435, %v2437
  %v2439 = vsub.f32 1.0, %v2438
  %v2440 = vmul.f32 %v2437, %v2439
  %v2441 = vadd.f32 %v2437, %v2440
  %vm2442 = vweird.f32 %v2435
  %vm2443 = vweird.f32 %v2437
  %vm2444 = vmor %vm2442, %vm2443
  %v2445 = vsel %vm2444, %v2437, %v2441
  %v2446 = vand.u32 2147483647, %v2435
  %vm2447 = vcmp.eq.f32.partialorder %v2446, 8.507059e+37
  %v2448 = vand.u32 %v2435, 2147483648
  %v2449 = vor.u32 1.1754944e-38, %v2448
  %v2450 = vsel %vm2447, %v2449, %v2445
  %v2451 = vmul.f32 1.0, %v2450
  %v2452 = vrcp.pop %v2436
  %v2453 = vmul.f32 %v2436, %v2452
  %v2454 = vsub.f32 1.0, %v2453
  %v2455 = vmul.f32 %v2452, %v2454
  %v2456 = vadd.f32 %v2452, %v2455
  %vm2457 = vweird.f32 %v2436
  %vm2458 = vweird.f32 %v2452
  %vm2459 = vmor %vm2457, %vm2458
  %v2460 = vsel %vm2459, %v2452, %v2456
  %v2461 = vand.u32 2147483647, %v2436
  %vm2462 = vcmp.eq.f32.partialorder %v2461, 8.507059e+37
  %v2463 = vand.u32 %v2436, 2147483648
  %v2464 = vor.u32 1.1754944e-38, %v2463
  %v2465 = vsel %vm2462, %v2464, %v2460
  %v2466 = vmul.f32 1.0, %v2465
  %v2467 = vrot.slane %v2361, 2
  %v2468 = vrot.slane %v2362, 2
  %v2471 = vtanh.pop %v2467
  %v2472 = vtanh.pop %v2468
  %v2473 = vrot.slane %v2361, 3
  %v2474 = vrot.slane %v2362, 3
  %v2477 = vxor.u32 %v2473, 2147483648
  %v2478 = vxor.u32 %v2474, 2147483648
  %v2479 = vmul.f32 %v2477, 1.442695
  %v2480 = vpow.pop %v2479
  %v2481 = vmul.f32 %v2478, 1.442695
  %v2482 = vpow.pop %v2481
  %v2483 = vadd.f32 %v2480, 1.0
  %v2484 = vadd.f32 %v2482, 1.0
  %v2485 = vrcp.pop %v2483
  %v2486 = vmul.f32 %v2483, %v2485
  %v2487 = vsub.f32 1.0, %v2486
  %v2488 = vmul.f32 %v2485, %v2487
  %v2489 = vadd.f32 %v2485, %v2488
  %vm2490 = vweird.f32 %v2483
  %vm2491 = vweird.f32 %v2485
  %vm2492 = vmor %vm2490, %vm2491
  %v2493 = vsel %vm2492, %v2485, %v2489
  %v2494 = vand.u32 2147483647, %v2483
  %vm2495 = vcmp.eq.f32.partialorder %v2494, 8.507059e+37
  %v2496 = vand.u32 %v2483, 2147483648
  %v2497 = vor.u32 1.1754944e-38, %v2496
  %v2498 = vsel %vm2495, %v2497, %v2493
  %v2499 = vmul.f32 1.0, %v2498
  %v2500 = vrcp.pop %v2484
  %v2501 = vmul.f32 %v2484, %v2500
  %v2502 = vsub.f32 1.0, %v2501
  %v2503 = vmul.f32 %v2500, %v2502
  %v2504 = vadd.f32 %v2500, %v2503
  %vm2505 = vweird.f32 %v2484
  %vm2506 = vweird.f32 %v2500
  %vm2507 = vmor %vm2505, %vm2506
  %v2508 = vsel %vm2507, %v2500, %v2504
  %v2509 = vand.u32 2147483647, %v2484
  %vm2510 = vcmp.eq.f32.partialorder %v2509, 8.507059e+37
  %v2511 = vand.u32 %v2484, 2147483648
  %v2512 = vor.u32 1.1754944e-38, %v2511
  %v2513 = vsel %vm2510, %v2512, %v2508
  %v2514 = vmul.f32 1.0, %v2513
  %v2516 = vrot.slane %v1478, 1
  %v2518 = vmul.f32 %v2451, %v1478
  %v2519 = vmul.f32 %v2466, %v2516
  %v2520 = vmul.f32 %v2407, %v2471
  %v2521 = vmul.f32 %v2422, %v2472
  %v2522 = vadd.f32 %v2518, %v2520
  %v2523 = vadd.f32 %v2519, %v2521
  %v2524 = vtanh.pop %v2522
  %v2525 = vtanh.pop %v2523
  %v2526 = vmul.f32 %v2499, %v2524
  %v2527 = vmul.f32 %v2514, %v2525
  %v2528 = vxor.u32 %v2383, 2147483648
  %v2529 = vxor.u32 %v2384, 2147483648
  %v2530 = vmul.f32 %v2528, 1.442695
  %v2531 = vpow.pop %v2530
  %v2532 = vmul.f32 %v2529, 1.442695
  %v2533 = vpow.pop %v2532
  %v2534 = vadd.f32 %v2531, 1.0
  %v2535 = vadd.f32 %v2533, 1.0
  %v2536 = vrcp.pop %v2534
  %v2537 = vmul.f32 %v2534, %v2536
  %v2538 = vsub.f32 1.0, %v2537
  %v2539 = vmul.f32 %v2536, %v2538
  %v2540 = vadd.f32 %v2536, %v2539
  %vm2541 = vweird.f32 %v2534
  %vm2542 = vweird.f32 %v2536
  %vm2543 = vmor %vm2541, %vm2542
  %v2544 = vsel %vm2543, %v2536, %v2540
  %v2545 = vand.u32 2147483647, %v2534
  %vm2546 = vcmp.eq.f32.partialorder %v2545, 8.507059e+37
  %v2547 = vand.u32 %v2534, 2147483648
  %v2548 = vor.u32 1.1754944e-38, %v2547
  %v2549 = vsel %vm2546, %v2548, %v2544
  %v2550 = vmul.f32 1.0, %v2549
  %v2551 = vrcp.pop %v2535
  %v2552 = vmul.f32 %v2535, %v2551
  %v2553 = vsub.f32 1.0, %v2552
  %v2554 = vmul.f32 %v2551, %v2553
  %v2555 = vadd.f32 %v2551, %v2554
  %vm2556 = vweird.f32 %v2535
  %vm2557 = vweird.f32 %v2551
  %vm2558 = vmor %vm2556, %vm2557
  %v2559 = vsel %vm2558, %v2551, %v2555
  %v2560 = vand.u32 2147483647, %v2535
  %vm2561 = vcmp.eq.f32.partialorder %v2560, 8.507059e+37
  %v2562 = vand.u32 %v2535, 2147483648
  %v2563 = vor.u32 1.1754944e-38, %v2562
  %v2564 = vsel %vm2561, %v2563, %v2559
  %v2565 = vmul.f32 1.0, %v2564
  %v2568 = vrot.slane %v2383, 1
  %v2569 = vrot.slane %v2384, 1
  %v2572 = vxor.u32 %v2568, 2147483648
  %v2573 = vxor.u32 %v2569, 2147483648
  %v2574 = vmul.f32 %v2572, 1.442695
  %v2575 = vpow.pop %v2574
  %v2576 = vmul.f32 %v2573, 1.442695
  %v2577 = vpow.pop %v2576
  %v2578 = vadd.f32 %v2575, 1.0
  %v2579 = vadd.f32 %v2577, 1.0
  %v2580 = vrcp.pop %v2578
  %v2581 = vmul.f32 %v2578, %v2580
  %v2582 = vsub.f32 1.0, %v2581
  %v2583 = vmul.f32 %v2580, %v2582
  %v2584 = vadd.f32 %v2580, %v2583
  %vm2585 = vweird.f32 %v2578
  %vm2586 = vweird.f32 %v2580
  %vm2587 = vmor %vm2585, %vm2586
  %v2588 = vsel %vm2587, %v2580, %v2584
  %v2589 = vand.u32 2147483647, %v2578
  %vm2590 = vcmp.eq.f32.partialorder %v2589, 8.507059e+37
  %v2591 = vand.u32 %v2578, 2147483648
  %v2592 = vor.u32 1.1754944e-38, %v2591
  %v2593 = vsel %vm2590, %v2592, %v2588
  %v2594 = vmul.f32 1.0, %v2593
  %v2595 = vrcp.pop %v2579
  %v2596 = vmul.f32 %v2579, %v2595
  %v2597 = vsub.f32 1.0, %v2596
  %v2598 = vmul.f32 %v2595, %v2597
  %v2599 = vadd.f32 %v2595, %v2598
  %vm2600 = vweird.f32 %v2579
  %vm2601 = vweird.f32 %v2595
  %vm2602 = vmor %vm2600, %vm2601
  %v2603 = vsel %vm2602, %v2595, %v2599
  %v2604 = vand.u32 2147483647, %v2579
  %vm2605 = vcmp.eq.f32.partialorder %v2604, 8.507059e+37
  %v2606 = vand.u32 %v2579, 2147483648
  %v2607 = vor.u32 1.1754944e-38, %v2606
  %v2608 = vsel %vm2605, %v2607, %v2603
  %v2609 = vmul.f32 1.0, %v2608
  %v2610 = vrot.slane %v2383, 2
  %v2611 = vrot.slane %v2384, 2
  %v2614 = vtanh.pop %v2610
  %v2615 = vtanh.pop %v2611
  %v2616 = vrot.slane %v2383, 3
  %v2617 = vrot.slane %v2384, 3
  %v2620 = vxor.u32 %v2616, 2147483648
  %v2621 = vxor.u32 %v2617, 2147483648
  %v2622 = vmul.f32 %v2620, 1.442695
  %v2623 = vpow.pop %v2622
  %v2624 = vmul.f32 %v2621, 1.442695
  %v2625 = vpow.pop %v2624
  %v2626 = vadd.f32 %v2623, 1.0
  %v2627 = vadd.f32 %v2625, 1.0
  %v2628 = vrcp.pop %v2626
  %v2629 = vmul.f32 %v2626, %v2628
  %v2630 = vsub.f32 1.0, %v2629
  %v2631 = vmul.f32 %v2628, %v2630
  %v2632 = vadd.f32 %v2628, %v2631
  %vm2633 = vweird.f32 %v2626
  %vm2634 = vweird.f32 %v2628
  %vm2635 = vmor %vm2633, %vm2634
  %v2636 = vsel %vm2635, %v2628, %v2632
  %v2637 = vand.u32 2147483647, %v2626
  %vm2638 = vcmp.eq.f32.partialorder %v2637, 8.507059e+37
  %v2639 = vand.u32 %v2626, 2147483648
  %v2640 = vor.u32 1.1754944e-38, %v2639
  %v2641 = vsel %vm2638, %v2640, %v2636
  %v2642 = vmul.f32 1.0, %v2641
  %v2643 = vrcp.pop %v2627
  %v2644 = vmul.f32 %v2627, %v2643
  %v2645 = vsub.f32 1.0, %v2644
  %v2646 = vmul.f32 %v2643, %v2645
  %v2647 = vadd.f32 %v2643, %v2646
  %vm2648 = vweird.f32 %v2627
  %vm2649 = vweird.f32 %v2643
  %vm2650 = vmor %vm2648, %vm2649
  %v2651 = vsel %vm2650, %v2643, %v2647
  %v2652 = vand.u32 2147483647, %v2627
  %vm2653 = vcmp.eq.f32.partialorder %v2652, 8.507059e+37
  %v2654 = vand.u32 %v2627, 2147483648
  %v2655 = vor.u32 1.1754944e-38, %v2654
  %v2656 = vsel %vm2653, %v2655, %v2651
  %v2657 = vmul.f32 1.0, %v2656
  %v2659 = vrot.slane %v1479, 1
  %v2661 = vmul.f32 %v2594, %v1479
  %v2662 = vmul.f32 %v2609, %v2659
  %v2663 = vmul.f32 %v2550, %v2614
  %v2664 = vmul.f32 %v2565, %v2615
  %v2665 = vadd.f32 %v2661, %v2663
  %v2666 = vadd.f32 %v2662, %v2664
  %v2667 = vtanh.pop %v2665
  %v2668 = vtanh.pop %v2666
  %v2669 = vmul.f32 %v2642, %v2667
  %v2670 = vmul.f32 %v2657, %v2668
  %v2671 = vpack.c.bf16 %v2526, %v2526
  %v2672 = vpack.c.bf16 %v2527, %v2527
  %vm2673 = vcmask 1040384
  %vm2674 = vsmask.f32 256
  %vm2675 = vmand %vm2673, %vm2674
  %v2676 = vld [vmem:[%s9] sm:$0x1]
  %v2677 = vsel %vm2675, %v2671, %v2676
  %2678 = vst [vmem:[%s9] sm:$0x1] %v2677
  %v2679 = vld [vmem:[%s9 + $0x2] sm:$0x1]
  %v2680 = vsel %vm2675, %v2672, %v2679
  %2681 = vst [vmem:[%s9 + $0x2] sm:$0x1] %v2680
  %v2682 = vpack.c.bf16 %v2669, %v2669
  %v2683 = vpack.c.bf16 %v2670, %v2670
  %v2686 = vrot.slane %v2682, 2
  %v2687 = vrot.slane %v2683, 2
  %v2690 = vsel %vm2350, %v2682, %v2686
  %v2693 = vsel %vm2350, %v2683, %v2687
  %v2694 = vshll.u32 %v2690, 16
  %v2696 = vrot.slane %v2694, 7
  %v2697 = vshll.u32 %v2693, 16
  %v2699 = vrot.slane %v2697, 7
  %vm2702 = vcmask 1041409
  %vm2703 = vsmask.f32 7942
  %vm2704 = vmand %vm2702, %vm2703
  %v2705 = vld [vmem:[%s77] sm:$0x2]
  %v2706 = vsel %vm2704, %v2696, %v2705
  %2707 = vst [vmem:[%s77] sm:$0x2] %v2706
  %v2708 = vld [vmem:[%s77 + $0x2] sm:$0x2]
  %v2709 = vsel %vm2704, %v2699, %v2708
  %2710 = vst [vmem:[%s77 + $0x2] sm:$0x2] %v2709
  %2713 = vst [vmem:[#allocation1] ss:$9 sm:$0xff] %v2526
  %s2714 = scalar_lea.vmem [#allocation1], 1
  %2715 = vst [vmem:[%s2714] ss:$9 sm:$0xff] %v2527
  %v2716 = vld [vmem:[#allocation1] sm:$0xff]
  %2720 = vst [vmem:[#allocation1] ss:$9 sm:$0xff] %v2669
  %s2721 = scalar_lea.vmem [#allocation1], 1
  %2722 = vst [vmem:[%s2721] ss:$9 sm:$0xff] %v2670
  %v2723 = vld [vmem:[#allocation1] sm:$0xff]
  %v2725 = vpack.c.bf16 %v2716, %v2716
  %v2726 = vpack.c.bf16 %v2723, %v2723
  %2727 = vmatpush.bf16.msra.mxu0 %v1928
  %2728 = vmatpush.bf16.msra.mxu0 %v1920
  %2729 = vmatpush.bf16.msra.mxu0 %v1912
  %2730 = vmatpush.bf16.msra.mxu0 %v1904
  %2731 = vmatpush.bf16.msra.mxu0 %v1896
  %2732 = vmatpush.bf16.msra.mxu0 %v1888
  %2733 = vmatpush.bf16.msra.mxu0 %v1880
  %2734 = vmatpush.bf16.msra.mxu0 %v1872
  %2735 = vmatmul.bf16.gmra.mxu0 %v2725
  %v2736 = vpop.f32.mrf.mxu0
  %v2737 = vadd.f32 0.0, %v2736
  %v2738 = vpop.f32.mrf.mxu0
  %2739 = vdwg.mxu0
  %2740 = vmatpush.bf16.msra.mxu0 %v1992
  %2741 = vmatpush.bf16.msra.mxu0 %v1984
  %2742 = vmatpush.bf16.msra.mxu0 %v1976
  %2743 = vmatpush.bf16.msra.mxu0 %v1968
  %2744 = vmatpush.bf16.msra.mxu0 %v1960
  %2745 = vmatpush.bf16.msra.mxu0 %v1952
  %2746 = vmatpush.bf16.msra.mxu0 %v1944
  %2747 = vmatpush.bf16.msra.mxu0 %v1936
  %2748 = vmatmul.bf16.gmra.mxu0 %v2726
  %v2749 = vpop.f32.mrf.mxu0
  %v2750 = vadd.f32 %v2737, %v2749
  %v2751 = vpop.f32.mrf.mxu0
  %2752 = vdwg.mxu0
  %2753 = vmatpush.bf16.msra.mxu0 %v1929
  %2754 = vmatpush.bf16.msra.mxu0 %v1921
  %2755 = vmatpush.bf16.msra.mxu0 %v1913
  %2756 = vmatpush.bf16.msra.mxu0 %v1905
  %2757 = vmatpush.bf16.msra.mxu0 %v1897
  %2758 = vmatpush.bf16.msra.mxu0 %v1889
  %2759 = vmatpush.bf16.msra.mxu0 %v1881
  %2760 = vmatpush.bf16.msra.mxu0 %v1873
  %2761 = vmatmul.bf16.gmra.mxu0 %v2725
  %v2762 = vpop.f32.mrf.mxu0
  %v2763 = vadd.f32 0.0, %v2762
  %v2764 = vpop.f32.mrf.mxu0
  %2765 = vdwg.mxu0
  %2766 = vmatpush.bf16.msra.mxu0 %v1993
  %2767 = vmatpush.bf16.msra.mxu0 %v1985
  %2768 = vmatpush.bf16.msra.mxu0 %v1977
  %2769 = vmatpush.bf16.msra.mxu0 %v1969
  %2770 = vmatpush.bf16.msra.mxu0 %v1961
  %2771 = vmatpush.bf16.msra.mxu0 %v1953
  %2772 = vmatpush.bf16.msra.mxu0 %v1945
  %2773 = vmatpush.bf16.msra.mxu0 %v1937
  %2774 = vmatmul.bf16.gmra.mxu0 %v2726
  %v2775 = vpop.f32.mrf.mxu0
  %v2776 = vadd.f32 %v2763, %v2775
  %v2777 = vpop.f32.mrf.mxu0
  %2778 = vdwg.mxu0
  %2779 = vmatpush.bf16.msra.mxu0 %v1930
  %2780 = vmatpush.bf16.msra.mxu0 %v1922
  %2781 = vmatpush.bf16.msra.mxu0 %v1914
  %2782 = vmatpush.bf16.msra.mxu0 %v1906
  %2783 = vmatpush.bf16.msra.mxu0 %v1898
  %2784 = vmatpush.bf16.msra.mxu0 %v1890
  %2785 = vmatpush.bf16.msra.mxu0 %v1882
  %2786 = vmatpush.bf16.msra.mxu0 %v1874
  %2787 = vmatmul.bf16.gmra.mxu0 %v2725
  %v2788 = vpop.f32.mrf.mxu0
  %v2789 = vadd.f32 0.0, %v2788
  %v2790 = vpop.f32.mrf.mxu0
  %2791 = vdwg.mxu0
  %2792 = vmatpush.bf16.msra.mxu0 %v1994
  %2793 = vmatpush.bf16.msra.mxu0 %v1986
  %2794 = vmatpush.bf16.msra.mxu0 %v1978
  %2795 = vmatpush.bf16.msra.mxu0 %v1970
  %2796 = vmatpush.bf16.msra.mxu0 %v1962
  %2797 = vmatpush.bf16.msra.mxu0 %v1954
  %2798 = vmatpush.bf16.msra.mxu0 %v1946
  %2799 = vmatpush.bf16.msra.mxu0 %v1938
  %2800 = vmatmul.bf16.gmra.mxu0 %v2726
  %v2801 = vpop.f32.mrf.mxu0
  %v2802 = vadd.f32 %v2789, %v2801
  %v2803 = vpop.f32.mrf.mxu0
  %2804 = vdwg.mxu0
  %2805 = vmatpush.bf16.msra.mxu0 %v1931
  %2806 = vmatpush.bf16.msra.mxu0 %v1923
  %2807 = vmatpush.bf16.msra.mxu0 %v1915
  %2808 = vmatpush.bf16.msra.mxu0 %v1907
  %2809 = vmatpush.bf16.msra.mxu0 %v1899
  %2810 = vmatpush.bf16.msra.mxu0 %v1891
  %2811 = vmatpush.bf16.msra.mxu0 %v1883
  %2812 = vmatpush.bf16.msra.mxu0 %v1875
  %2813 = vmatmul.bf16.gmra.mxu0 %v2725
  %v2814 = vpop.f32.mrf.mxu0
  %v2815 = vadd.f32 0.0, %v2814
  %v2816 = vpop.f32.mrf.mxu0
  %2817 = vdwg.mxu0
  %2818 = vmatpush.bf16.msra.mxu0 %v1995
  %2819 = vmatpush.bf16.msra.mxu0 %v1987
  %2820 = vmatpush.bf16.msra.mxu0 %v1979
  %2821 = vmatpush.bf16.msra.mxu0 %v1971
  %2822 = vmatpush.bf16.msra.mxu0 %v1963
  %2823 = vmatpush.bf16.msra.mxu0 %v1955
  %2824 = vmatpush.bf16.msra.mxu0 %v1947
  %2825 = vmatpush.bf16.msra.mxu0 %v1939
  %2826 = vmatmul.bf16.gmra.mxu0 %v2726
  %v2827 = vpop.f32.mrf.mxu0
  %v2828 = vadd.f32 %v2815, %v2827
  %v2829 = vpop.f32.mrf.mxu0
  %2830 = vdwg.mxu0
  %2831 = vmatpush.bf16.msra.mxu0 %v1932
  %2832 = vmatpush.bf16.msra.mxu0 %v1924
  %2833 = vmatpush.bf16.msra.mxu0 %v1916
  %2834 = vmatpush.bf16.msra.mxu0 %v1908
  %2835 = vmatpush.bf16.msra.mxu0 %v1900
  %2836 = vmatpush.bf16.msra.mxu0 %v1892
  %2837 = vmatpush.bf16.msra.mxu0 %v1884
  %2838 = vmatpush.bf16.msra.mxu0 %v1876
  %2839 = vmatmul.bf16.gmra.mxu0 %v2725
  %v2840 = vpop.f32.mrf.mxu0
  %v2841 = vadd.f32 0.0, %v2840
  %v2842 = vpop.f32.mrf.mxu0
  %2843 = vdwg.mxu0
  %2844 = vmatpush.bf16.msra.mxu0 %v1996
  %2845 = vmatpush.bf16.msra.mxu0 %v1988
  %2846 = vmatpush.bf16.msra.mxu0 %v1980
  %2847 = vmatpush.bf16.msra.mxu0 %v1972
  %2848 = vmatpush.bf16.msra.mxu0 %v1964
  %2849 = vmatpush.bf16.msra.mxu0 %v1956
  %2850 = vmatpush.bf16.msra.mxu0 %v1948
  %2851 = vmatpush.bf16.msra.mxu0 %v1940
  %2852 = vmatmul.bf16.gmra.mxu0 %v2726
  %v2853 = vpop.f32.mrf.mxu0
  %v2854 = vadd.f32 %v2841, %v2853
  %v2855 = vpop.f32.mrf.mxu0
  %2856 = vdwg.mxu0
  %2857 = vmatpush.bf16.msra.mxu0 %v1933
  %2858 = vmatpush.bf16.msra.mxu0 %v1925
  %2859 = vmatpush.bf16.msra.mxu0 %v1917
  %2860 = vmatpush.bf16.msra.mxu0 %v1909
  %2861 = vmatpush.bf16.msra.mxu0 %v1901
  %2862 = vmatpush.bf16.msra.mxu0 %v1893
  %2863 = vmatpush.bf16.msra.mxu0 %v1885
  %2864 = vmatpush.bf16.msra.mxu0 %v1877
  %2865 = vmatmul.bf16.gmra.mxu0 %v2725
  %v2866 = vpop.f32.mrf.mxu0
  %v2867 = vadd.f32 0.0, %v2866
  %v2868 = vpop.f32.mrf.mxu0
  %2869 = vdwg.mxu0
  %2870 = vmatpush.bf16.msra.mxu0 %v1997
  %2871 = vmatpush.bf16.msra.mxu0 %v1989
  %2872 = vmatpush.bf16.msra.mxu0 %v1981
  %2873 = vmatpush.bf16.msra.mxu0 %v1973
  %2874 = vmatpush.bf16.msra.mxu0 %v1965
  %2875 = vmatpush.bf16.msra.mxu0 %v1957
  %2876 = vmatpush.bf16.msra.mxu0 %v1949
  %2877 = vmatpush.bf16.msra.mxu0 %v1941
  %2878 = vmatmul.bf16.gmra.mxu0 %v2726
  %v2879 = vpop.f32.mrf.mxu0
  %v2880 = vadd.f32 %v2867, %v2879
  %v2881 = vpop.f32.mrf.mxu0
  %2882 = vdwg.mxu0
  %2883 = vmatpush.bf16.msra.mxu0 %v1934
  %2884 = vmatpush.bf16.msra.mxu0 %v1926
  %2885 = vmatpush.bf16.msra.mxu0 %v1918
  %2886 = vmatpush.bf16.msra.mxu0 %v1910
  %2887 = vmatpush.bf16.msra.mxu0 %v1902
  %2888 = vmatpush.bf16.msra.mxu0 %v1894
  %2889 = vmatpush.bf16.msra.mxu0 %v1886
  %2890 = vmatpush.bf16.msra.mxu0 %v1878
  %2891 = vmatmul.bf16.gmra.mxu0 %v2725
  %v2892 = vpop.f32.mrf.mxu0
  %v2893 = vadd.f32 0.0, %v2892
  %v2894 = vpop.f32.mrf.mxu0
  %2895 = vdwg.mxu0
  %2896 = vmatpush.bf16.msra.mxu0 %v1998
  %2897 = vmatpush.bf16.msra.mxu0 %v1990
  %2898 = vmatpush.bf16.msra.mxu0 %v1982
  %2899 = vmatpush.bf16.msra.mxu0 %v1974
  %2900 = vmatpush.bf16.msra.mxu0 %v1966
  %2901 = vmatpush.bf16.msra.mxu0 %v1958
  %2902 = vmatpush.bf16.msra.mxu0 %v1950
  %2903 = vmatpush.bf16.msra.mxu0 %v1942
  %2904 = vmatmul.bf16.gmra.mxu0 %v2726
  %v2905 = vpop.f32.mrf.mxu0
  %v2906 = vadd.f32 %v2893, %v2905
  %v2907 = vpop.f32.mrf.mxu0
  %2908 = vdwg.mxu0
  %2909 = vmatpush.bf16.msra.mxu0 %v1935
  %2910 = vmatpush.bf16.msra.mxu0 %v1927
  %2911 = vmatpush.bf16.msra.mxu0 %v1919
  %2912 = vmatpush.bf16.msra.mxu0 %v1911
  %2913 = vmatpush.bf16.msra.mxu0 %v1903
  %2914 = vmatpush.bf16.msra.mxu0 %v1895
  %2915 = vmatpush.bf16.msra.mxu0 %v1887
  %2916 = vmatpush.bf16.msra.mxu0 %v1879
  %2917 = vmatmul.bf16.gmra.mxu0 %v2725
  %v2918 = vpop.f32.mrf.mxu0
  %v2919 = vadd.f32 0.0, %v2918
  %v2920 = vpop.f32.mrf.mxu0
  %2921 = vdwg.mxu0
  %2922 = vmatpush.bf16.msra.mxu0 %v1999
  %2923 = vmatpush.bf16.msra.mxu0 %v1991
  %2924 = vmatpush.bf16.msra.mxu0 %v1983
  %2925 = vmatpush.bf16.msra.mxu0 %v1975
  %2926 = vmatpush.bf16.msra.mxu0 %v1967
  %2927 = vmatpush.bf16.msra.mxu0 %v1959
  %2928 = vmatpush.bf16.msra.mxu0 %v1951
  %2929 = vmatpush.bf16.msra.mxu0 %v1943
  %2930 = vmatmul.bf16.gmra.mxu0 %v2726
  %v2931 = vpop.f32.mrf.mxu0
  %v2932 = vadd.f32 %v2919, %v2931
  %v2933 = vpop.f32.mrf.mxu0
  %2934 = vdwg.mxu0
  %s2935 = scalar_lea.vmem [#allocation5], 1
  %v2936 = vld [vmem:[%s2935] ss:$4 sm:$0xf]
  %s2937 = scalar_lea.vmem [#allocation5], 17
  %v2938 = vld [vmem:[%s2937] ss:$4 sm:$0xf]
  %v2943 = vrot.slane %v2776, 7
  %v2944 = vrot.slane %v2802, 6
  %v2945 = vrot.slane %v2828, 5
  %v2946 = vsel %vm2346, %v2750, %v2943
  %v2947 = vsel %vm2348, %v2944, %v2945
  %v2948 = vsel %vm2350, %v2946, %v2947
  %v2949 = vsel %vm2352, %v2750, %v2943
  %v2950 = vsel %vm2354, %v2944, %v2945
  %v2951 = vsel %vm2356, %v2949, %v2950
  %v2952 = vrot.slane %v2951, 1
  %v2955 = vadd.f32 %v2936, %v2948
  %v2956 = vadd.f32 %v2938, %v2952
  %s2957 = scalar_lea.vmem [#allocation6], 2
  %v2958 = vld [vmem:[%s2957] ss:$4 sm:$0xf]
  %s2959 = scalar_lea.vmem [#allocation6], 18
  %v2960 = vld [vmem:[%s2959] ss:$4 sm:$0xf]
  %v2965 = vrot.slane %v2880, 7
  %v2966 = vrot.slane %v2906, 6
  %v2967 = vrot.slane %v2932, 5
  %v2968 = vsel %vm2346, %v2854, %v2965
  %v2969 = vsel %vm2348, %v2966, %v2967
  %v2970 = vsel %vm2350, %v2968, %v2969
  %v2971 = vsel %vm2352, %v2854, %v2965
  %v2972 = vsel %vm2354, %v2966, %v2967
  %v2973 = vsel %vm2356, %v2971, %v2972
  %v2974 = vrot.slane %v2973, 1
  %v2977 = vadd.f32 %v2958, %v2970
  %v2978 = vadd.f32 %v2960, %v2974
  %v2979 = vxor.u32 %v2955, 2147483648
  %v2980 = vxor.u32 %v2956, 2147483648
  %v2981 = vmul.f32 %v2979, 1.442695
  %v2982 = vpow.pop %v2981
  %v2983 = vmul.f32 %v2980, 1.442695
  %v2984 = vpow.pop %v2983
  %v2985 = vadd.f32 %v2982, 1.0
  %v2986 = vadd.f32 %v2984, 1.0
  %v2987 = vrcp.pop %v2985
  %v2988 = vmul.f32 %v2985, %v2987
  %v2989 = vsub.f32 1.0, %v2988
  %v2990 = vmul.f32 %v2987, %v2989
  %v2991 = vadd.f32 %v2987, %v2990
  %vm2992 = vweird.f32 %v2985
  %vm2993 = vweird.f32 %v2987
  %vm2994 = vmor %vm2992, %vm2993
  %v2995 = vsel %vm2994, %v2987, %v2991
  %v2996 = vand.u32 2147483647, %v2985
  %vm2997 = vcmp.eq.f32.partialorder %v2996, 8.507059e+37
  %v2998 = vand.u32 %v2985, 2147483648
  %v2999 = vor.u32 1.1754944e-38, %v2998
  %v3000 = vsel %vm2997, %v2999, %v2995
  %v3001 = vmul.f32 1.0, %v3000
  %v3002 = vrcp.pop %v2986
  %v3003 = vmul.f32 %v2986, %v3002
  %v3004 = vsub.f32 1.0, %v3003
  %v3005 = vmul.f32 %v3002, %v3004
  %v3006 = vadd.f32 %v3002, %v3005
  %vm3007 = vweird.f32 %v2986
  %vm3008 = vweird.f32 %v3002
  %vm3009 = vmor %vm3007, %vm3008
  %v3010 = vsel %vm3009, %v3002, %v3006
  %v3011 = vand.u32 2147483647, %v2986
  %vm3012 = vcmp.eq.f32.partialorder %v3011, 8.507059e+37
  %v3013 = vand.u32 %v2986, 2147483648
  %v3014 = vor.u32 1.1754944e-38, %v3013
  %v3015 = vsel %vm3012, %v3014, %v3010
  %v3016 = vmul.f32 1.0, %v3015
  %v3019 = vrot.slane %v2955, 1
  %v3020 = vrot.slane %v2956, 1
  %v3023 = vxor.u32 %v3019, 2147483648
  %v3024 = vxor.u32 %v3020, 2147483648
  %v3025 = vmul.f32 %v3023, 1.442695
  %v3026 = vpow.pop %v3025
  %v3027 = vmul.f32 %v3024, 1.442695
  %v3028 = vpow.pop %v3027
  %v3029 = vadd.f32 %v3026, 1.0
  %v3030 = vadd.f32 %v3028, 1.0
  %v3031 = vrcp.pop %v3029
  %v3032 = vmul.f32 %v3029, %v3031
  %v3033 = vsub.f32 1.0, %v3032
  %v3034 = vmul.f32 %v3031, %v3033
  %v3035 = vadd.f32 %v3031, %v3034
  %vm3036 = vweird.f32 %v3029
  %vm3037 = vweird.f32 %v3031
  %vm3038 = vmor %vm3036, %vm3037
  %v3039 = vsel %vm3038, %v3031, %v3035
  %v3040 = vand.u32 2147483647, %v3029
  %vm3041 = vcmp.eq.f32.partialorder %v3040, 8.507059e+37
  %v3042 = vand.u32 %v3029, 2147483648
  %v3043 = vor.u32 1.1754944e-38, %v3042
  %v3044 = vsel %vm3041, %v3043, %v3039
  %v3045 = vmul.f32 1.0, %v3044
  %v3046 = vrcp.pop %v3030
  %v3047 = vmul.f32 %v3030, %v3046
  %v3048 = vsub.f32 1.0, %v3047
  %v3049 = vmul.f32 %v3046, %v3048
  %v3050 = vadd.f32 %v3046, %v3049
  %vm3051 = vweird.f32 %v3030
  %vm3052 = vweird.f32 %v3046
  %vm3053 = vmor %vm3051, %vm3052
  %v3054 = vsel %vm3053, %v3046, %v3050
  %v3055 = vand.u32 2147483647, %v3030
  %vm3056 = vcmp.eq.f32.partialorder %v3055, 8.507059e+37
  %v3057 = vand.u32 %v3030, 2147483648
  %v3058 = vor.u32 1.1754944e-38, %v3057
  %v3059 = vsel %vm3056, %v3058, %v3054
  %v3060 = vmul.f32 1.0, %v3059
  %v3061 = vrot.slane %v2955, 2
  %v3062 = vrot.slane %v2956, 2
  %v3065 = vtanh.pop %v3061
  %v3066 = vtanh.pop %v3062
  %v3067 = vrot.slane %v2955, 3
  %v3068 = vrot.slane %v2956, 3
  %v3071 = vxor.u32 %v3067, 2147483648
  %v3072 = vxor.u32 %v3068, 2147483648
  %v3073 = vmul.f32 %v3071, 1.442695
  %v3074 = vpow.pop %v3073
  %v3075 = vmul.f32 %v3072, 1.442695
  %v3076 = vpow.pop %v3075
  %v3077 = vadd.f32 %v3074, 1.0
  %v3078 = vadd.f32 %v3076, 1.0
  %v3079 = vrcp.pop %v3077
  %v3080 = vmul.f32 %v3077, %v3079
  %v3081 = vsub.f32 1.0, %v3080
  %v3082 = vmul.f32 %v3079, %v3081
  %v3083 = vadd.f32 %v3079, %v3082
  %vm3084 = vweird.f32 %v3077
  %vm3085 = vweird.f32 %v3079
  %vm3086 = vmor %vm3084, %vm3085
  %v3087 = vsel %vm3086, %v3079, %v3083
  %v3088 = vand.u32 2147483647, %v3077
  %vm3089 = vcmp.eq.f32.partialorder %v3088, 8.507059e+37
  %v3090 = vand.u32 %v3077, 2147483648
  %v3091 = vor.u32 1.1754944e-38, %v3090
  %v3092 = vsel %vm3089, %v3091, %v3087
  %v3093 = vmul.f32 1.0, %v3092
  %v3094 = vrcp.pop %v3078
  %v3095 = vmul.f32 %v3078, %v3094
  %v3096 = vsub.f32 1.0, %v3095
  %v3097 = vmul.f32 %v3094, %v3096
  %v3098 = vadd.f32 %v3094, %v3097
  %vm3099 = vweird.f32 %v3078
  %vm3100 = vweird.f32 %v3094
  %vm3101 = vmor %vm3099, %vm3100
  %v3102 = vsel %vm3101, %v3094, %v3098
  %v3103 = vand.u32 2147483647, %v3078
  %vm3104 = vcmp.eq.f32.partialorder %v3103, 8.507059e+37
  %v3105 = vand.u32 %v3078, 2147483648
  %v3106 = vor.u32 1.1754944e-38, %v3105
  %v3107 = vsel %vm3104, %v3106, %v3102
  %v3108 = vmul.f32 1.0, %v3107
  %v3109 = vmul.f32 %v3045, %v2522
  %v3110 = vmul.f32 %v3060, %v2523
  %v3111 = vmul.f32 %v3001, %v3065
  %v3112 = vmul.f32 %v3016, %v3066
  %v3113 = vadd.f32 %v3109, %v3111
  %v3114 = vadd.f32 %v3110, %v3112
  %v3115 = vtanh.pop %v3113
  %v3116 = vtanh.pop %v3114
  %v3117 = vmul.f32 %v3093, %v3115
  %v3118 = vmul.f32 %v3108, %v3116
  %v3119 = vxor.u32 %v2977, 2147483648
  %v3120 = vxor.u32 %v2978, 2147483648
  %v3121 = vmul.f32 %v3119, 1.442695
  %v3122 = vpow.pop %v3121
  %v3123 = vmul.f32 %v3120, 1.442695
  %v3124 = vpow.pop %v3123
  %v3125 = vadd.f32 %v3122, 1.0
  %v3126 = vadd.f32 %v3124, 1.0
  %v3127 = vrcp.pop %v3125
  %v3128 = vmul.f32 %v3125, %v3127
  %v3129 = vsub.f32 1.0, %v3128
  %v3130 = vmul.f32 %v3127, %v3129
  %v3131 = vadd.f32 %v3127, %v3130
  %vm3132 = vweird.f32 %v3125
  %vm3133 = vweird.f32 %v3127
  %vm3134 = vmor %vm3132, %vm3133
  %v3135 = vsel %vm3134, %v3127, %v3131
  %v3136 = vand.u32 2147483647, %v3125
  %vm3137 = vcmp.eq.f32.partialorder %v3136, 8.507059e+37
  %v3138 = vand.u32 %v3125, 2147483648
  %v3139 = vor.u32 1.1754944e-38, %v3138
  %v3140 = vsel %vm3137, %v3139, %v3135
  %v3141 = vmul.f32 1.0, %v3140
  %v3142 = vrcp.pop %v3126
  %v3143 = vmul.f32 %v3126, %v3142
  %v3144 = vsub.f32 1.0, %v3143
  %v3145 = vmul.f32 %v3142, %v3144
  %v3146 = vadd.f32 %v3142, %v3145
  %vm3147 = vweird.f32 %v3126
  %vm3148 = vweird.f32 %v3142
  %vm3149 = vmor %vm3147, %vm3148
  %v3150 = vsel %vm3149, %v3142, %v3146
  %v3151 = vand.u32 2147483647, %v3126
  %vm3152 = vcmp.eq.f32.partialorder %v3151, 8.507059e+37
  %v3153 = vand.u32 %v3126, 2147483648
  %v3154 = vor.u32 1.1754944e-38, %v3153
  %v3155 = vsel %vm3152, %v3154, %v3150
  %v3156 = vmul.f32 1.0, %v3155
  %v3159 = vrot.slane %v2977, 1
  %v3160 = vrot.slane %v2978, 1
  %v3163 = vxor.u32 %v3159, 2147483648
  %v3164 = vxor.u32 %v3160, 2147483648
  %v3165 = vmul.f32 %v3163, 1.442695
  %v3166 = vpow.pop %v3165
  %v3167 = vmul.f32 %v3164, 1.442695
  %v3168 = vpow.pop %v3167
  %v3169 = vadd.f32 %v3166, 1.0
  %v3170 = vadd.f32 %v3168, 1.0
  %v3171 = vrcp.pop %v3169
  %v3172 = vmul.f32 %v3169, %v3171
  %v3173 = vsub.f32 1.0, %v3172
  %v3174 = vmul.f32 %v3171, %v3173
  %v3175 = vadd.f32 %v3171, %v3174
  %vm3176 = vweird.f32 %v3169
  %vm3177 = vweird.f32 %v3171
  %vm3178 = vmor %vm3176, %vm3177
  %v3179 = vsel %vm3178, %v3171, %v3175
  %v3180 = vand.u32 2147483647, %v3169
  %vm3181 = vcmp.eq.f32.partialorder %v3180, 8.507059e+37
  %v3182 = vand.u32 %v3169, 2147483648
  %v3183 = vor.u32 1.1754944e-38, %v3182
  %v3184 = vsel %vm3181, %v3183, %v3179
  %v3185 = vmul.f32 1.0, %v3184
  %v3186 = vrcp.pop %v3170
  %v3187 = vmul.f32 %v3170, %v3186
  %v3188 = vsub.f32 1.0, %v3187
  %v3189 = vmul.f32 %v3186, %v3188
  %v3190 = vadd.f32 %v3186, %v3189
  %vm3191 = vweird.f32 %v3170
  %vm3192 = vweird.f32 %v3186
  %vm3193 = vmor %vm3191, %vm3192
  %v3194 = vsel %vm3193, %v3186, %v3190
  %v3195 = vand.u32 2147483647, %v3170
  %vm3196 = vcmp.eq.f32.partialorder %v3195, 8.507059e+37
  %v3197 = vand.u32 %v3170, 2147483648
  %v3198 = vor.u32 1.1754944e-38, %v3197
  %v3199 = vsel %vm3196, %v3198, %v3194
  %v3200 = vmul.f32 1.0, %v3199
  %v3201 = vrot.slane %v2977, 2
  %v3202 = vrot.slane %v2978, 2
  %v3205 = vtanh.pop %v3201
  %v3206 = vtanh.pop %v3202
  %v3207 = vrot.slane %v2977, 3
  %v3208 = vrot.slane %v2978, 3
  %v3211 = vxor.u32 %v3207, 2147483648
  %v3212 = vxor.u32 %v3208, 2147483648
  %v3213 = vmul.f32 %v3211, 1.442695
  %v3214 = vpow.pop %v3213
  %v3215 = vmul.f32 %v3212, 1.442695
  %v3216 = vpow.pop %v3215
  %v3217 = vadd.f32 %v3214, 1.0
  %v3218 = vadd.f32 %v3216, 1.0
  %v3219 = vrcp.pop %v3217
  %v3220 = vmul.f32 %v3217, %v3219
  %v3221 = vsub.f32 1.0, %v3220
  %v3222 = vmul.f32 %v3219, %v3221
  %v3223 = vadd.f32 %v3219, %v3222
  %vm3224 = vweird.f32 %v3217
  %vm3225 = vweird.f32 %v3219
  %vm3226 = vmor %vm3224, %vm3225
  %v3227 = vsel %vm3226, %v3219, %v3223
  %v3228 = vand.u32 2147483647, %v3217
  %vm3229 = vcmp.eq.f32.partialorder %v3228, 8.507059e+37
  %v3230 = vand.u32 %v3217, 2147483648
  %v3231 = vor.u32 1.1754944e-38, %v3230
  %v3232 = vsel %vm3229, %v3231, %v3227
  %v3233 = vmul.f32 1.0, %v3232
  %v3234 = vrcp.pop %v3218
  %v3235 = vmul.f32 %v3218, %v3234
  %v3236 = vsub.f32 1.0, %v3235
  %v3237 = vmul.f32 %v3234, %v3236
  %v3238 = vadd.f32 %v3234, %v3237
  %vm3239 = vweird.f32 %v3218
  %vm3240 = vweird.f32 %v3234
  %vm3241 = vmor %vm3239, %vm3240
  %v3242 = vsel %vm3241, %v3234, %v3238
  %v3243 = vand.u32 2147483647, %v3218
  %vm3244 = vcmp.eq.f32.partialorder %v3243, 8.507059e+37
  %v3245 = vand.u32 %v3218, 2147483648
  %v3246 = vor.u32 1.1754944e-38, %v3245
  %v3247 = vsel %vm3244, %v3246, %v3242
  %v3248 = vmul.f32 1.0, %v3247
  %v3249 = vmul.f32 %v3185, %v2665
  %v3250 = vmul.f32 %v3200, %v2666
  %v3251 = vmul.f32 %v3141, %v3205
  %v3252 = vmul.f32 %v3156, %v3206
  %v3253 = vadd.f32 %v3249, %v3251
  %v3254 = vadd.f32 %v3250, %v3252
  %v3255 = vtanh.pop %v3253
  %v3256 = vtanh.pop %v3254
  %v3257 = vmul.f32 %v3233, %v3255
  %v3258 = vmul.f32 %v3248, %v3256
  %v3259 = vpack.c.bf16 %v3117, %v3117
  %v3260 = vpack.c.bf16 %v3118, %v3118
  %v3263 = vrot.slane %v3259, 2
  %v3264 = vrot.slane %v3260, 2
  %v3267 = vsel %vm2350, %v3259, %v3263
  %v3270 = vsel %vm2350, %v3260, %v3264
  %v3271 = vshll.u32 %v3267, 16
  %v3273 = vshll.u32 %v3270, 16
  %vm3277 = vsmask.f32 7938
  %vm3278 = vmand %vm2673, %vm3277
  %v3279 = vld [vmem:[%s9] sm:$0x1]
  %v3280 = vsel %vm3278, %v3271, %v3279
  %3281 = vst [vmem:[%s9] sm:$0x1] %v3280
  %v3282 = vld [vmem:[%s9 + $0x2] sm:$0x1]
  %v3283 = vsel %vm3278, %v3273, %v3282
  %3284 = vst [vmem:[%s9 + $0x2] sm:$0x1] %v3283
  %v3285 = vpack.c.bf16 %v3257, %v3257
  %v3286 = vpack.c.bf16 %v3258, %v3258
  %v3289 = vrot.slane %v3285, 2
  %v3290 = vrot.slane %v3286, 2
  %v3293 = vsel %vm2350, %v3285, %v3289
  %v3297 = vsel %vm2350, %v3286, %v3290
  %v3299 = vrot.slane %v3293, 7
  %v3300 = vrot.slane %v3297, 7
  %vm3303 = vsmask.f32 1280
  %vm3304 = vmand %vm2702, %vm3303
  %v3305 = vld [vmem:[%s77] sm:$0x2]
  %v3306 = vsel %vm3304, %v3299, %v3305
  %3307 = vst [vmem:[%s77] sm:$0x2] %v3306
  %v3308 = vld [vmem:[%s77 + $0x2] sm:$0x2]
  %v3309 = vsel %vm3304, %v3300, %v3308
  %3310 = vst [vmem:[%s77 + $0x2] sm:$0x2] %v3309
  %3313 = vst [vmem:[#allocation1] ss:$9 sm:$0xff] %v3117
  %s3314 = scalar_lea.vmem [#allocation1], 1
  %3315 = vst [vmem:[%s3314] ss:$9 sm:$0xff] %v3118
  %v3316 = vld [vmem:[#allocation1] sm:$0xff]
  %3320 = vst [vmem:[#allocation1] ss:$9 sm:$0xff] %v3257
  %s3321 = scalar_lea.vmem [#allocation1], 1
  %3322 = vst [vmem:[%s3321] ss:$9 sm:$0xff] %v3258
  %v3323 = vld [vmem:[#allocation1] sm:$0xff]
  %v3325 = vpack.c.bf16 %v3316, %v3316
  %v3326 = vpack.c.bf16 %v3323, %v3323
  %3327 = vmatpush.bf16.msra.mxu0 %v1928
  %3328 = vmatpush.bf16.msra.mxu0 %v1920
  %3329 = vmatpush.bf16.msra.mxu0 %v1912
  %3330 = vmatpush.bf16.msra.mxu0 %v1904
  %3331 = vmatpush.bf16.msra.mxu0 %v1896
  %3332 = vmatpush.bf16.msra.mxu0 %v1888
  %3333 = vmatpush.bf16.msra.mxu0 %v1880
  %3334 = vmatpush.bf16.msra.mxu0 %v1872
  %3335 = vmatmul.bf16.gmra.mxu0 %v3325
  %v3336 = vpop.f32.mrf.mxu0
  %v3337 = vadd.f32 0.0, %v3336
  %v3338 = vpop.f32.mrf.mxu0
  %3339 = vdwg.mxu0
  %3340 = vmatpush.bf16.msra.mxu0 %v1992
  %3341 = vmatpush.bf16.msra.mxu0 %v1984
  %3342 = vmatpush.bf16.msra.mxu0 %v1976
  %3343 = vmatpush.bf16.msra.mxu0 %v1968
  %3344 = vmatpush.bf16.msra.mxu0 %v1960
  %3345 = vmatpush.bf16.msra.mxu0 %v1952
  %3346 = vmatpush.bf16.msra.mxu0 %v1944
  %3347 = vmatpush.bf16.msra.mxu0 %v1936
  %3348 = vmatmul.bf16.gmra.mxu0 %v3326
  %v3349 = vpop.f32.mrf.mxu0
  %v3350 = vadd.f32 %v3337, %v3349
  %v3351 = vpop.f32.mrf.mxu0
  %3352 = vdwg.mxu0
  %3353 = vmatpush.bf16.msra.mxu0 %v1929
  %3354 = vmatpush.bf16.msra.mxu0 %v1921
  %3355 = vmatpush.bf16.msra.mxu0 %v1913
  %3356 = vmatpush.bf16.msra.mxu0 %v1905
  %3357 = vmatpush.bf16.msra.mxu0 %v1897
  %3358 = vmatpush.bf16.msra.mxu0 %v1889
  %3359 = vmatpush.bf16.msra.mxu0 %v1881
  %3360 = vmatpush.bf16.msra.mxu0 %v1873
  %3361 = vmatmul.bf16.gmra.mxu0 %v3325
  %v3362 = vpop.f32.mrf.mxu0
  %v3363 = vadd.f32 0.0, %v3362
  %v3364 = vpop.f32.mrf.mxu0
  %3365 = vdwg.mxu0
  %3366 = vmatpush.bf16.msra.mxu0 %v1993
  %3367 = vmatpush.bf16.msra.mxu0 %v1985
  %3368 = vmatpush.bf16.msra.mxu0 %v1977
  %3369 = vmatpush.bf16.msra.mxu0 %v1969
  %3370 = vmatpush.bf16.msra.mxu0 %v1961
  %3371 = vmatpush.bf16.msra.mxu0 %v1953
  %3372 = vmatpush.bf16.msra.mxu0 %v1945
  %3373 = vmatpush.bf16.msra.mxu0 %v1937
  %3374 = vmatmul.bf16.gmra.mxu0 %v3326
  %v3375 = vpop.f32.mrf.mxu0
  %v3376 = vadd.f32 %v3363, %v3375
  %v3377 = vpop.f32.mrf.mxu0
  %3378 = vdwg.mxu0
  %3379 = vmatpush.bf16.msra.mxu0 %v1930
  %3380 = vmatpush.bf16.msra.mxu0 %v1922
  %3381 = vmatpush.bf16.msra.mxu0 %v1914
  %3382 = vmatpush.bf16.msra.mxu0 %v1906
  %3383 = vmatpush.bf16.msra.mxu0 %v1898
  %3384 = vmatpush.bf16.msra.mxu0 %v1890
  %3385 = vmatpush.bf16.msra.mxu0 %v1882
  %3386 = vmatpush.bf16.msra.mxu0 %v1874
  %3387 = vmatmul.bf16.gmra.mxu0 %v3325
  %v3388 = vpop.f32.mrf.mxu0
  %v3389 = vadd.f32 0.0, %v3388
  %v3390 = vpop.f32.mrf.mxu0
  %3391 = vdwg.mxu0
  %3392 = vmatpush.bf16.msra.mxu0 %v1994
  %3393 = vmatpush.bf16.msra.mxu0 %v1986
  %3394 = vmatpush.bf16.msra.mxu0 %v1978
  %3395 = vmatpush.bf16.msra.mxu0 %v1970
  %3396 = vmatpush.bf16.msra.mxu0 %v1962
  %3397 = vmatpush.bf16.msra.mxu0 %v1954
  %3398 = vmatpush.bf16.msra.mxu0 %v1946
  %3399 = vmatpush.bf16.msra.mxu0 %v1938
  %3400 = vmatmul.bf16.gmra.mxu0 %v3326
  %v3401 = vpop.f32.mrf.mxu0
  %v3402 = vadd.f32 %v3389, %v3401
  %v3403 = vpop.f32.mrf.mxu0
  %3404 = vdwg.mxu0
  %3405 = vmatpush.bf16.msra.mxu0 %v1931
  %3406 = vmatpush.bf16.msra.mxu0 %v1923
  %3407 = vmatpush.bf16.msra.mxu0 %v1915
  %3408 = vmatpush.bf16.msra.mxu0 %v1907
  %3409 = vmatpush.bf16.msra.mxu0 %v1899
  %3410 = vmatpush.bf16.msra.mxu0 %v1891
  %3411 = vmatpush.bf16.msra.mxu0 %v1883
  %3412 = vmatpush.bf16.msra.mxu0 %v1875
  %3413 = vmatmul.bf16.gmra.mxu0 %v3325
  %v3414 = vpop.f32.mrf.mxu0
  %v3415 = vadd.f32 0.0, %v3414
  %v3416 = vpop.f32.mrf.mxu0
  %3417 = vdwg.mxu0
  %3418 = vmatpush.bf16.msra.mxu0 %v1995
  %3419 = vmatpush.bf16.msra.mxu0 %v1987
  %3420 = vmatpush.bf16.msra.mxu0 %v1979
  %3421 = vmatpush.bf16.msra.mxu0 %v1971
  %3422 = vmatpush.bf16.msra.mxu0 %v1963
  %3423 = vmatpush.bf16.msra.mxu0 %v1955
  %3424 = vmatpush.bf16.msra.mxu0 %v1947
  %3425 = vmatpush.bf16.msra.mxu0 %v1939
  %3426 = vmatmul.bf16.gmra.mxu0 %v3326
  %v3427 = vpop.f32.mrf.mxu0
  %v3428 = vadd.f32 %v3415, %v3427
  %v3429 = vpop.f32.mrf.mxu0
  %3430 = vdwg.mxu0
  %3431 = vmatpush.bf16.msra.mxu0 %v1932
  %3432 = vmatpush.bf16.msra.mxu0 %v1924
  %3433 = vmatpush.bf16.msra.mxu0 %v1916
  %3434 = vmatpush.bf16.msra.mxu0 %v1908
  %3435 = vmatpush.bf16.msra.mxu0 %v1900
  %3436 = vmatpush.bf16.msra.mxu0 %v1892
  %3437 = vmatpush.bf16.msra.mxu0 %v1884
  %3438 = vmatpush.bf16.msra.mxu0 %v1876
  %3439 = vmatmul.bf16.gmra.mxu0 %v3325
  %v3440 = vpop.f32.mrf.mxu0
  %v3441 = vadd.f32 0.0, %v3440
  %v3442 = vpop.f32.mrf.mxu0
  %3443 = vdwg.mxu0
  %3444 = vmatpush.bf16.msra.mxu0 %v1996
  %3445 = vmatpush.bf16.msra.mxu0 %v1988
  %3446 = vmatpush.bf16.msra.mxu0 %v1980
  %3447 = vmatpush.bf16.msra.mxu0 %v1972
  %3448 = vmatpush.bf16.msra.mxu0 %v1964
  %3449 = vmatpush.bf16.msra.mxu0 %v1956
  %3450 = vmatpush.bf16.msra.mxu0 %v1948
  %3451 = vmatpush.bf16.msra.mxu0 %v1940
  %3452 = vmatmul.bf16.gmra.mxu0 %v3326
  %v3453 = vpop.f32.mrf.mxu0
  %v3454 = vadd.f32 %v3441, %v3453
  %v3455 = vpop.f32.mrf.mxu0
  %3456 = vdwg.mxu0
  %3457 = vmatpush.bf16.msra.mxu0 %v1933
  %3458 = vmatpush.bf16.msra.mxu0 %v1925
  %3459 = vmatpush.bf16.msra.mxu0 %v1917
  %3460 = vmatpush.bf16.msra.mxu0 %v1909
  %3461 = vmatpush.bf16.msra.mxu0 %v1901
  %3462 = vmatpush.bf16.msra.mxu0 %v1893
  %3463 = vmatpush.bf16.msra.mxu0 %v1885
  %3464 = vmatpush.bf16.msra.mxu0 %v1877
  %3465 = vmatmul.bf16.gmra.mxu0 %v3325
  %v3466 = vpop.f32.mrf.mxu0
  %v3467 = vadd.f32 0.0, %v3466
  %v3468 = vpop.f32.mrf.mxu0
  %3469 = vdwg.mxu0
  %3470 = vmatpush.bf16.msra.mxu0 %v1997
  %3471 = vmatpush.bf16.msra.mxu0 %v1989
  %3472 = vmatpush.bf16.msra.mxu0 %v1981
  %3473 = vmatpush.bf16.msra.mxu0 %v1973
  %3474 = vmatpush.bf16.msra.mxu0 %v1965
  %3475 = vmatpush.bf16.msra.mxu0 %v1957
  %3476 = vmatpush.bf16.msra.mxu0 %v1949
  %3477 = vmatpush.bf16.msra.mxu0 %v1941
  %3478 = vmatmul.bf16.gmra.mxu0 %v3326
  %v3479 = vpop.f32.mrf.mxu0
  %v3480 = vadd.f32 %v3467, %v3479
  %v3481 = vpop.f32.mrf.mxu0
  %3482 = vdwg.mxu0
  %3483 = vmatpush.bf16.msra.mxu0 %v1934
  %3484 = vmatpush.bf16.msra.mxu0 %v1926
  %3485 = vmatpush.bf16.msra.mxu0 %v1918
  %3486 = vmatpush.bf16.msra.mxu0 %v1910
  %3487 = vmatpush.bf16.msra.mxu0 %v1902
  %3488 = vmatpush.bf16.msra.mxu0 %v1894
  %3489 = vmatpush.bf16.msra.mxu0 %v1886
  %3490 = vmatpush.bf16.msra.mxu0 %v1878
  %3491 = vmatmul.bf16.gmra.mxu0 %v3325
  %v3492 = vpop.f32.mrf.mxu0
  %v3493 = vadd.f32 0.0, %v3492
  %v3494 = vpop.f32.mrf.mxu0
  %3495 = vdwg.mxu0
  %3496 = vmatpush.bf16.msra.mxu0 %v1998
  %3497 = vmatpush.bf16.msra.mxu0 %v1990
  %3498 = vmatpush.bf16.msra.mxu0 %v1982
  %3499 = vmatpush.bf16.msra.mxu0 %v1974
  %3500 = vmatpush.bf16.msra.mxu0 %v1966
  %3501 = vmatpush.bf16.msra.mxu0 %v1958
  %3502 = vmatpush.bf16.msra.mxu0 %v1950
  %3503 = vmatpush.bf16.msra.mxu0 %v1942
  %3504 = vmatmul.bf16.gmra.mxu0 %v3326
  %v3505 = vpop.f32.mrf.mxu0
  %v3506 = vadd.f32 %v3493, %v3505
  %v3507 = vpop.f32.mrf.mxu0
  %3508 = vdwg.mxu0
  %3509 = vmatpush.bf16.msra.mxu0 %v1935
  %3510 = vmatpush.bf16.msra.mxu0 %v1927
  %3511 = vmatpush.bf16.msra.mxu0 %v1919
  %3512 = vmatpush.bf16.msra.mxu0 %v1911
  %3513 = vmatpush.bf16.msra.mxu0 %v1903
  %3514 = vmatpush.bf16.msra.mxu0 %v1895
  %3515 = vmatpush.bf16.msra.mxu0 %v1887
  %3516 = vmatpush.bf16.msra.mxu0 %v1879
  %3517 = vmatmul.bf16.gmra.mxu0 %v3325
  %v3518 = vpop.f32.mrf.mxu0
  %v3519 = vadd.f32 0.0, %v3518
  %v3520 = vpop.f32.mrf.mxu0
  %3521 = vdwg.mxu0
  %3522 = vmatpush.bf16.msra.mxu0 %v1999
  %3523 = vmatpush.bf16.msra.mxu0 %v1991
  %3524 = vmatpush.bf16.msra.mxu0 %v1983
  %3525 = vmatpush.bf16.msra.mxu0 %v1975
  %3526 = vmatpush.bf16.msra.mxu0 %v1967
  %3527 = vmatpush.bf16.msra.mxu0 %v1959
  %3528 = vmatpush.bf16.msra.mxu0 %v1951
  %3529 = vmatpush.bf16.msra.mxu0 %v1943
  %3530 = vmatmul.bf16.gmra.mxu0 %v3326
  %v3531 = vpop.f32.mrf.mxu0
  %v3532 = vadd.f32 %v3519, %v3531
  %v3533 = vpop.f32.mrf.mxu0
  %3534 = vdwg.mxu0
  %s3535 = scalar_lea.vmem [#allocation5], 2
  %v3536 = vld [vmem:[%s3535] ss:$4 sm:$0xf]
  %s3537 = scalar_lea.vmem [#allocation5], 18
  %v3538 = vld [vmem:[%s3537] ss:$4 sm:$0xf]
  %v3543 = vrot.slane %v3376, 7
  %v3544 = vrot.slane %v3402, 6
  %v3545 = vrot.slane %v3428, 5
  %v3546 = vsel %vm2346, %v3350, %v3543
  %v3547 = vsel %vm2348, %v3544, %v3545
  %v3548 = vsel %vm2350, %v3546, %v3547
  %v3549 = vsel %vm2352, %v3350, %v3543
  %v3550 = vsel %vm2354, %v3544, %v3545
  %v3551 = vsel %vm2356, %v3549, %v3550
  %v3552 = vrot.slane %v3551, 1
  %v3555 = vadd.f32 %v3536, %v3548
  %v3556 = vadd.f32 %v3538, %v3552
  %s3557 = scalar_lea.vmem [#allocation6], 1
  %v3558 = vld [vmem:[%s3557] ss:$4 sm:$0xf]
  %s3559 = scalar_lea.vmem [#allocation6], 17
  %v3560 = vld [vmem:[%s3559] ss:$4 sm:$0xf]
  %v3565 = vrot.slane %v3480, 7
  %v3566 = vrot.slane %v3506, 6
  %v3567 = vrot.slane %v3532, 5
  %v3568 = vsel %vm2346, %v3454, %v3565
  %v3569 = vsel %vm2348, %v3566, %v3567
  %v3570 = vsel %vm2350, %v3568, %v3569
  %v3571 = vsel %vm2352, %v3454, %v3565
  %v3572 = vsel %vm2354, %v3566, %v3567
  %v3573 = vsel %vm2356, %v3571, %v3572
  %v3574 = vrot.slane %v3573, 1
  %v3577 = vadd.f32 %v3558, %v3570
  %v3578 = vadd.f32 %v3560, %v3574
  %v3579 = vxor.u32 %v3555, 2147483648
  %v3580 = vxor.u32 %v3556, 2147483648
  %v3581 = vmul.f32 %v3579, 1.442695
  %v3582 = vpow.pop %v3581
  %v3583 = vmul.f32 %v3580, 1.442695
  %v3584 = vpow.pop %v3583
  %v3585 = vadd.f32 %v3582, 1.0
  %v3586 = vadd.f32 %v3584, 1.0
  %v3587 = vrcp.pop %v3585
  %v3588 = vmul.f32 %v3585, %v3587
  %v3589 = vsub.f32 1.0, %v3588
  %v3590 = vmul.f32 %v3587, %v3589
  %v3591 = vadd.f32 %v3587, %v3590
  %vm3592 = vweird.f32 %v3585
  %vm3593 = vweird.f32 %v3587
  %vm3594 = vmor %vm3592, %vm3593
  %v3595 = vsel %vm3594, %v3587, %v3591
  %v3596 = vand.u32 2147483647, %v3585
  %vm3597 = vcmp.eq.f32.partialorder %v3596, 8.507059e+37
  %v3598 = vand.u32 %v3585, 2147483648
  %v3599 = vor.u32 1.1754944e-38, %v3598
  %v3600 = vsel %vm3597, %v3599, %v3595
  %v3601 = vmul.f32 1.0, %v3600
  %v3602 = vrcp.pop %v3586
  %v3603 = vmul.f32 %v3586, %v3602
  %v3604 = vsub.f32 1.0, %v3603
  %v3605 = vmul.f32 %v3602, %v3604
  %v3606 = vadd.f32 %v3602, %v3605
  %vm3607 = vweird.f32 %v3586
  %vm3608 = vweird.f32 %v3602
  %vm3609 = vmor %vm3607, %vm3608
  %v3610 = vsel %vm3609, %v3602, %v3606
  %v3611 = vand.u32 2147483647, %v3586
  %vm3612 = vcmp.eq.f32.partialorder %v3611, 8.507059e+37
  %v3613 = vand.u32 %v3586, 2147483648
  %v3614 = vor.u32 1.1754944e-38, %v3613
  %v3615 = vsel %vm3612, %v3614, %v3610
  %v3616 = vmul.f32 1.0, %v3615
  %v3619 = vrot.slane %v3555, 1
  %v3620 = vrot.slane %v3556, 1
  %v3623 = vxor.u32 %v3619, 2147483648
  %v3624 = vxor.u32 %v3620, 2147483648
  %v3625 = vmul.f32 %v3623, 1.442695
  %v3626 = vpow.pop %v3625
  %v3627 = vmul.f32 %v3624, 1.442695
  %v3628 = vpow.pop %v3627
  %v3629 = vadd.f32 %v3626, 1.0
  %v3630 = vadd.f32 %v3628, 1.0
  %v3631 = vrcp.pop %v3629
  %v3632 = vmul.f32 %v3629, %v3631
  %v3633 = vsub.f32 1.0, %v3632
  %v3634 = vmul.f32 %v3631, %v3633
  %v3635 = vadd.f32 %v3631, %v3634
  %vm3636 = vweird.f32 %v3629
  %vm3637 = vweird.f32 %v3631
  %vm3638 = vmor %vm3636, %vm3637
  %v3639 = vsel %vm3638, %v3631, %v3635
  %v3640 = vand.u32 2147483647, %v3629
  %vm3641 = vcmp.eq.f32.partialorder %v3640, 8.507059e+37
  %v3642 = vand.u32 %v3629, 2147483648
  %v3643 = vor.u32 1.1754944e-38, %v3642
  %v3644 = vsel %vm3641, %v3643, %v3639
  %v3645 = vmul.f32 1.0, %v3644
  %v3646 = vrcp.pop %v3630
  %v3647 = vmul.f32 %v3630, %v3646
  %v3648 = vsub.f32 1.0, %v3647
  %v3649 = vmul.f32 %v3646, %v3648
  %v3650 = vadd.f32 %v3646, %v3649
  %vm3651 = vweird.f32 %v3630
  %vm3652 = vweird.f32 %v3646
  %vm3653 = vmor %vm3651, %vm3652
  %v3654 = vsel %vm3653, %v3646, %v3650
  %v3655 = vand.u32 2147483647, %v3630
  %vm3656 = vcmp.eq.f32.partialorder %v3655, 8.507059e+37
  %v3657 = vand.u32 %v3630, 2147483648
  %v3658 = vor.u32 1.1754944e-38, %v3657
  %v3659 = vsel %vm3656, %v3658, %v3654
  %v3660 = vmul.f32 1.0, %v3659
  %v3661 = vrot.slane %v3555, 2
  %v3662 = vrot.slane %v3556, 2
  %v3665 = vtanh.pop %v3661
  %v3666 = vtanh.pop %v3662
  %v3667 = vrot.slane %v3555, 3
  %v3668 = vrot.slane %v3556, 3
  %v3671 = vxor.u32 %v3667, 2147483648
  %v3672 = vxor.u32 %v3668, 2147483648
  %v3673 = vmul.f32 %v3671, 1.442695
  %v3674 = vpow.pop %v3673
  %v3675 = vmul.f32 %v3672, 1.442695
  %v3676 = vpow.pop %v3675
  %v3677 = vadd.f32 %v3674, 1.0
  %v3678 = vadd.f32 %v3676, 1.0
  %v3679 = vrcp.pop %v3677
  %v3680 = vmul.f32 %v3677, %v3679
  %v3681 = vsub.f32 1.0, %v3680
  %v3682 = vmul.f32 %v3679, %v3681
  %v3683 = vadd.f32 %v3679, %v3682
  %vm3684 = vweird.f32 %v3677
  %vm3685 = vweird.f32 %v3679
  %vm3686 = vmor %vm3684, %vm3685
  %v3687 = vsel %vm3686, %v3679, %v3683
  %v3688 = vand.u32 2147483647, %v3677
  %vm3689 = vcmp.eq.f32.partialorder %v3688, 8.507059e+37
  %v3690 = vand.u32 %v3677, 2147483648
  %v3691 = vor.u32 1.1754944e-38, %v3690
  %v3692 = vsel %vm3689, %v3691, %v3687
  %v3693 = vmul.f32 1.0, %v3692
  %v3694 = vrcp.pop %v3678
  %v3695 = vmul.f32 %v3678, %v3694
  %v3696 = vsub.f32 1.0, %v3695
  %v3697 = vmul.f32 %v3694, %v3696
  %v3698 = vadd.f32 %v3694, %v3697
  %vm3699 = vweird.f32 %v3678
  %vm3700 = vweird.f32 %v3694
  %vm3701 = vmor %vm3699, %vm3700
  %v3702 = vsel %vm3701, %v3694, %v3698
  %v3703 = vand.u32 2147483647, %v3678
  %vm3704 = vcmp.eq.f32.partialorder %v3703, 8.507059e+37
  %v3705 = vand.u32 %v3678, 2147483648
  %v3706 = vor.u32 1.1754944e-38, %v3705
  %v3707 = vsel %vm3704, %v3706, %v3702
  %v3708 = vmul.f32 1.0, %v3707
  %v3709 = vmul.f32 %v3645, %v3113
  %v3710 = vmul.f32 %v3660, %v3114
  %v3711 = vmul.f32 %v3601, %v3665
  %v3712 = vmul.f32 %v3616, %v3666
  %v3713 = vadd.f32 %v3709, %v3711
  %v3714 = vadd.f32 %v3710, %v3712
  %v3715 = vtanh.pop %v3713
  %v3716 = vtanh.pop %v3714
  %v3717 = vmul.f32 %v3693, %v3715
  %v3718 = vmul.f32 %v3708, %v3716
  %v3719 = vxor.u32 %v3577, 2147483648
  %v3720 = vxor.u32 %v3578, 2147483648
  %v3721 = vmul.f32 %v3719, 1.442695
  %v3722 = vpow.pop %v3721
  %v3723 = vmul.f32 %v3720, 1.442695
  %v3724 = vpow.pop %v3723
  %v3725 = vadd.f32 %v3722, 1.0
  %v3726 = vadd.f32 %v3724, 1.0
  %v3727 = vrcp.pop %v3725
  %v3728 = vmul.f32 %v3725, %v3727
  %v3729 = vsub.f32 1.0, %v3728
  %v3730 = vmul.f32 %v3727, %v3729
  %v3731 = vadd.f32 %v3727, %v3730
  %vm3732 = vweird.f32 %v3725
  %vm3733 = vweird.f32 %v3727
  %vm3734 = vmor %vm3732, %vm3733
  %v3735 = vsel %vm3734, %v3727, %v3731
  %v3736 = vand.u32 2147483647, %v3725
  %vm3737 = vcmp.eq.f32.partialorder %v3736, 8.507059e+37
  %v3738 = vand.u32 %v3725, 2147483648
  %v3739 = vor.u32 1.1754944e-38, %v3738
  %v3740 = vsel %vm3737, %v3739, %v3735
  %v3741 = vmul.f32 1.0, %v3740
  %v3742 = vrcp.pop %v3726
  %v3743 = vmul.f32 %v3726, %v3742
  %v3744 = vsub.f32 1.0, %v3743
  %v3745 = vmul.f32 %v3742, %v3744
  %v3746 = vadd.f32 %v3742, %v3745
  %vm3747 = vweird.f32 %v3726
  %vm3748 = vweird.f32 %v3742
  %vm3749 = vmor %vm3747, %vm3748
  %v3750 = vsel %vm3749, %v3742, %v3746
  %v3751 = vand.u32 2147483647, %v3726
  %vm3752 = vcmp.eq.f32.partialorder %v3751, 8.507059e+37
  %v3753 = vand.u32 %v3726, 2147483648
  %v3754 = vor.u32 1.1754944e-38, %v3753
  %v3755 = vsel %vm3752, %v3754, %v3750
  %v3756 = vmul.f32 1.0, %v3755
  %v3759 = vrot.slane %v3577, 1
  %v3760 = vrot.slane %v3578, 1
  %v3763 = vxor.u32 %v3759, 2147483648
  %v3764 = vxor.u32 %v3760, 2147483648
  %v3765 = vmul.f32 %v3763, 1.442695
  %v3766 = vpow.pop %v3765
  %v3767 = vmul.f32 %v3764, 1.442695
  %v3768 = vpow.pop %v3767
  %v3769 = vadd.f32 %v3766, 1.0
  %v3770 = vadd.f32 %v3768, 1.0
  %v3771 = vrcp.pop %v3769
  %v3772 = vmul.f32 %v3769, %v3771
  %v3773 = vsub.f32 1.0, %v3772
  %v3774 = vmul.f32 %v3771, %v3773
  %v3775 = vadd.f32 %v3771, %v3774
  %vm3776 = vweird.f32 %v3769
  %vm3777 = vweird.f32 %v3771
  %vm3778 = vmor %vm3776, %vm3777
  %v3779 = vsel %vm3778, %v3771, %v3775
  %v3780 = vand.u32 2147483647, %v3769
  %vm3781 = vcmp.eq.f32.partialorder %v3780, 8.507059e+37
  %v3782 = vand.u32 %v3769, 2147483648
  %v3783 = vor.u32 1.1754944e-38, %v3782
  %v3784 = vsel %vm3781, %v3783, %v3779
  %v3785 = vmul.f32 1.0, %v3784
  %v3786 = vrcp.pop %v3770
  %v3787 = vmul.f32 %v3770, %v3786
  %v3788 = vsub.f32 1.0, %v3787
  %v3789 = vmul.f32 %v3786, %v3788
  %v3790 = vadd.f32 %v3786, %v3789
  %vm3791 = vweird.f32 %v3770
  %vm3792 = vweird.f32 %v3786
  %vm3793 = vmor %vm3791, %vm3792
  %v3794 = vsel %vm3793, %v3786, %v3790
  %v3795 = vand.u32 2147483647, %v3770
  %vm3796 = vcmp.eq.f32.partialorder %v3795, 8.507059e+37
  %v3797 = vand.u32 %v3770, 2147483648
  %v3798 = vor.u32 1.1754944e-38, %v3797
  %v3799 = vsel %vm3796, %v3798, %v3794
  %v3800 = vmul.f32 1.0, %v3799
  %v3801 = vrot.slane %v3577, 2
  %v3802 = vrot.slane %v3578, 2
  %v3805 = vtanh.pop %v3801
  %v3806 = vtanh.pop %v3802
  %v3807 = vrot.slane %v3577, 3
  %v3808 = vrot.slane %v3578, 3
  %v3811 = vxor.u32 %v3807, 2147483648
  %v3812 = vxor.u32 %v3808, 2147483648
  %v3813 = vmul.f32 %v3811, 1.442695
  %v3814 = vpow.pop %v3813
  %v3815 = vmul.f32 %v3812, 1.442695
  %v3816 = vpow.pop %v3815
  %v3817 = vadd.f32 %v3814, 1.0
  %v3818 = vadd.f32 %v3816, 1.0
  %v3819 = vrcp.pop %v3817
  %v3820 = vmul.f32 %v3817, %v3819
  %v3821 = vsub.f32 1.0, %v3820
  %v3822 = vmul.f32 %v3819, %v3821
  %v3823 = vadd.f32 %v3819, %v3822
  %vm3824 = vweird.f32 %v3817
  %vm3825 = vweird.f32 %v3819
  %vm3826 = vmor %vm3824, %vm3825
  %v3827 = vsel %vm3826, %v3819, %v3823
  %v3828 = vand.u32 2147483647, %v3817
  %vm3829 = vcmp.eq.f32.partialorder %v3828, 8.507059e+37
  %v3830 = vand.u32 %v3817, 2147483648
  %v3831 = vor.u32 1.1754944e-38, %v3830
  %v3832 = vsel %vm3829, %v3831, %v3827
  %v3833 = vmul.f32 1.0, %v3832
  %v3834 = vrcp.pop %v3818
  %v3835 = vmul.f32 %v3818, %v3834
  %v3836 = vsub.f32 1.0, %v3835
  %v3837 = vmul.f32 %v3834, %v3836
  %v3838 = vadd.f32 %v3834, %v3837
  %vm3839 = vweird.f32 %v3818
  %vm3840 = vweird.f32 %v3834
  %vm3841 = vmor %vm3839, %vm3840
  %v3842 = vsel %vm3841, %v3834, %v3838
  %v3843 = vand.u32 2147483647, %v3818
  %vm3844 = vcmp.eq.f32.partialorder %v3843, 8.507059e+37
  %v3845 = vand.u32 %v3818, 2147483648
  %v3846 = vor.u32 1.1754944e-38, %v3845
  %v3847 = vsel %vm3844, %v3846, %v3842
  %v3848 = vmul.f32 1.0, %v3847
  %v3849 = vmul.f32 %v3785, %v3253
  %v3850 = vmul.f32 %v3800, %v3254
  %v3851 = vmul.f32 %v3741, %v3805
  %v3852 = vmul.f32 %v3756, %v3806
  %v3853 = vadd.f32 %v3849, %v3851
  %v3854 = vadd.f32 %v3850, %v3852
  %v3855 = vtanh.pop %v3853
  %v3856 = vtanh.pop %v3854
  %v3857 = vmul.f32 %v3833, %v3855
  %v3858 = vmul.f32 %v3848, %v3856
  %v3859 = vpack.c.bf16 %v3717, %v3717
  %v3860 = vpack.c.bf16 %v3718, %v3718
  %v3863 = vrot.slane %v3859, 2
  %v3864 = vrot.slane %v3860, 2
  %v3867 = vsel %vm2350, %v3859, %v3863
  %v3871 = vsel %vm2350, %v3860, %v3864
  %v3873 = vrot.slane %v3867, 7
  %v3874 = vrot.slane %v3871, 7
  %v3877 = vld [vmem:[%s9] sm:$0x2]
  %v3878 = vsel %vm3304, %v3873, %v3877
  %3879 = vst [vmem:[%s9] sm:$0x2] %v3878
  %v3880 = vld [vmem:[%s9 + $0x2] sm:$0x2]
  %v3881 = vsel %vm3304, %v3874, %v3880
  %3882 = vst [vmem:[%s9 + $0x2] sm:$0x2] %v3881
  %v3883 = vpack.c.bf16 %v3857, %v3857
  %v3884 = vpack.c.bf16 %v3858, %v3858
  %v3887 = vrot.slane %v3883, 2
  %v3888 = vrot.slane %v3884, 2
  %v3891 = vsel %vm2350, %v3883, %v3887
  %v3894 = vsel %vm2350, %v3884, %v3888
  %v3895 = vshll.u32 %v3891, 16
  %v3897 = vshll.u32 %v3894, 16
  %v3901 = vld [vmem:[%s77] sm:$0x1]
  %v3902 = vsel %vm3278, %v3895, %v3901
  %3903 = vst [vmem:[%s77] sm:$0x1] %v3902
  %v3904 = vld [vmem:[%s77 + $0x2] sm:$0x1]
  %v3905 = vsel %vm3278, %v3897, %v3904
  %3906 = vst [vmem:[%s77 + $0x2] sm:$0x1] %v3905
  %3909 = vst [vmem:[#allocation1] ss:$9 sm:$0xff] %v3717
  %s3910 = scalar_lea.vmem [#allocation1], 1
  %3911 = vst [vmem:[%s3910] ss:$9 sm:$0xff] %v3718
  %v3912 = vld [vmem:[#allocation1] sm:$0xff]
  %3916 = vst [vmem:[#allocation1] ss:$9 sm:$0xff] %v3857
  %s3917 = scalar_lea.vmem [#allocation1], 1
  %3918 = vst [vmem:[%s3917] ss:$9 sm:$0xff] %v3858
  %v3919 = vld [vmem:[#allocation1] sm:$0xff]
  %v3921 = vpack.c.bf16 %v3912, %v3912
  %v3922 = vpack.c.bf16 %v3919, %v3919
  %3923 = vmatpush.bf16.msra.mxu0 %v1928
  %3924 = vmatpush.bf16.msra.mxu0 %v1920
  %3925 = vmatpush.bf16.msra.mxu0 %v1912
  %3926 = vmatpush.bf16.msra.mxu0 %v1904
  %3927 = vmatpush.bf16.msra.mxu0 %v1896
  %3928 = vmatpush.bf16.msra.mxu0 %v1888
  %3929 = vmatpush.bf16.msra.mxu0 %v1880
  %3930 = vmatpush.bf16.msra.mxu0 %v1872
  %3931 = vmatmul.bf16.gmra.mxu0 %v3921
  %v3932 = vpop.f32.mrf.mxu0
  %v3933 = vadd.f32 0.0, %v3932
  %v3934 = vpop.f32.mrf.mxu0
  %3935 = vdwg.mxu0
  %3936 = vmatpush.bf16.msra.mxu0 %v1992
  %3937 = vmatpush.bf16.msra.mxu0 %v1984
  %3938 = vmatpush.bf16.msra.mxu0 %v1976
  %3939 = vmatpush.bf16.msra.mxu0 %v1968
  %3940 = vmatpush.bf16.msra.mxu0 %v1960
  %3941 = vmatpush.bf16.msra.mxu0 %v1952
  %3942 = vmatpush.bf16.msra.mxu0 %v1944
  %3943 = vmatpush.bf16.msra.mxu0 %v1936
  %3944 = vmatmul.bf16.gmra.mxu0 %v3922
  %v3945 = vpop.f32.mrf.mxu0
  %v3946 = vadd.f32 %v3933, %v3945
  %v3947 = vpop.f32.mrf.mxu0
  %3948 = vdwg.mxu0
  %3949 = vmatpush.bf16.msra.mxu0 %v1929
  %3950 = vmatpush.bf16.msra.mxu0 %v1921
  %3951 = vmatpush.bf16.msra.mxu0 %v1913
  %3952 = vmatpush.bf16.msra.mxu0 %v1905
  %3953 = vmatpush.bf16.msra.mxu0 %v1897
  %3954 = vmatpush.bf16.msra.mxu0 %v1889
  %3955 = vmatpush.bf16.msra.mxu0 %v1881
  %3956 = vmatpush.bf16.msra.mxu0 %v1873
  %3957 = vmatmul.bf16.gmra.mxu0 %v3921
  %v3958 = vpop.f32.mrf.mxu0
  %v3959 = vadd.f32 0.0, %v3958
  %v3960 = vpop.f32.mrf.mxu0
  %3961 = vdwg.mxu0
  %3962 = vmatpush.bf16.msra.mxu0 %v1993
  %3963 = vmatpush.bf16.msra.mxu0 %v1985
  %3964 = vmatpush.bf16.msra.mxu0 %v1977
  %3965 = vmatpush.bf16.msra.mxu0 %v1969
  %3966 = vmatpush.bf16.msra.mxu0 %v1961
  %3967 = vmatpush.bf16.msra.mxu0 %v1953
  %3968 = vmatpush.bf16.msra.mxu0 %v1945
  %3969 = vmatpush.bf16.msra.mxu0 %v1937
  %3970 = vmatmul.bf16.gmra.mxu0 %v3922
  %v3971 = vpop.f32.mrf.mxu0
  %v3972 = vadd.f32 %v3959, %v3971
  %v3973 = vpop.f32.mrf.mxu0
  %3974 = vdwg.mxu0
  %3975 = vmatpush.bf16.msra.mxu0 %v1930
  %3976 = vmatpush.bf16.msra.mxu0 %v1922
  %3977 = vmatpush.bf16.msra.mxu0 %v1914
  %3978 = vmatpush.bf16.msra.mxu0 %v1906
  %3979 = vmatpush.bf16.msra.mxu0 %v1898
  %3980 = vmatpush.bf16.msra.mxu0 %v1890
  %3981 = vmatpush.bf16.msra.mxu0 %v1882
  %3982 = vmatpush.bf16.msra.mxu0 %v1874
  %3983 = vmatmul.bf16.gmra.mxu0 %v3921
  %v3984 = vpop.f32.mrf.mxu0
  %v3985 = vadd.f32 0.0, %v3984
  %v3986 = vpop.f32.mrf.mxu0
  %3987 = vdwg.mxu0
  %3988 = vmatpush.bf16.msra.mxu0 %v1994
  %3989 = vmatpush.bf16.msra.mxu0 %v1986
  %3990 = vmatpush.bf16.msra.mxu0 %v1978
  %3991 = vmatpush.bf16.msra.mxu0 %v1970
  %3992 = vmatpush.bf16.msra.mxu0 %v1962
  %3993 = vmatpush.bf16.msra.mxu0 %v1954
  %3994 = vmatpush.bf16.msra.mxu0 %v1946
  %3995 = vmatpush.bf16.msra.mxu0 %v1938
  %3996 = vmatmul.bf16.gmra.mxu0 %v3922
  %v3997 = vpop.f32.mrf.mxu0
  %v3998 = vadd.f32 %v3985, %v3997
  %v3999 = vpop.f32.mrf.mxu0
  %4000 = vdwg.mxu0
  %4001 = vmatpush.bf16.msra.mxu0 %v1931
  %4002 = vmatpush.bf16.msra.mxu0 %v1923
  %4003 = vmatpush.bf16.msra.mxu0 %v1915
  %4004 = vmatpush.bf16.msra.mxu0 %v1907
  %4005 = vmatpush.bf16.msra.mxu0 %v1899
  %4006 = vmatpush.bf16.msra.mxu0 %v1891
  %4007 = vmatpush.bf16.msra.mxu0 %v1883
  %4008 = vmatpush.bf16.msra.mxu0 %v1875
  %4009 = vmatmul.bf16.gmra.mxu0 %v3921
  %v4010 = vpop.f32.mrf.mxu0
  %v4011 = vadd.f32 0.0, %v4010
  %v4012 = vpop.f32.mrf.mxu0
  %4013 = vdwg.mxu0
  %4014 = vmatpush.bf16.msra.mxu0 %v1995
  %4015 = vmatpush.bf16.msra.mxu0 %v1987
  %4016 = vmatpush.bf16.msra.mxu0 %v1979
  %4017 = vmatpush.bf16.msra.mxu0 %v1971
  %4018 = vmatpush.bf16.msra.mxu0 %v1963
  %4019 = vmatpush.bf16.msra.mxu0 %v1955
  %4020 = vmatpush.bf16.msra.mxu0 %v1947
  %4021 = vmatpush.bf16.msra.mxu0 %v1939
  %4022 = vmatmul.bf16.gmra.mxu0 %v3922
  %v4023 = vpop.f32.mrf.mxu0
  %v4024 = vadd.f32 %v4011, %v4023
  %v4025 = vpop.f32.mrf.mxu0
  %4026 = vdwg.mxu0
  %4027 = vmatpush.bf16.msra.mxu0 %v1932
  %4028 = vmatpush.bf16.msra.mxu0 %v1924
  %4029 = vmatpush.bf16.msra.mxu0 %v1916
  %4030 = vmatpush.bf16.msra.mxu0 %v1908
  %4031 = vmatpush.bf16.msra.mxu0 %v1900
  %4032 = vmatpush.bf16.msra.mxu0 %v1892
  %4033 = vmatpush.bf16.msra.mxu0 %v1884
  %4034 = vmatpush.bf16.msra.mxu0 %v1876
  %4035 = vmatmul.bf16.gmra.mxu0 %v3921
  %v4036 = vpop.f32.mrf.mxu0
  %v4037 = vadd.f32 0.0, %v4036
  %v4038 = vpop.f32.mrf.mxu0
  %4039 = vdwg.mxu0
  %4040 = vmatpush.bf16.msra.mxu0 %v1996
  %4041 = vmatpush.bf16.msra.mxu0 %v1988
  %4042 = vmatpush.bf16.msra.mxu0 %v1980
  %4043 = vmatpush.bf16.msra.mxu0 %v1972
  %4044 = vmatpush.bf16.msra.mxu0 %v1964
  %4045 = vmatpush.bf16.msra.mxu0 %v1956
  %4046 = vmatpush.bf16.msra.mxu0 %v1948
  %4047 = vmatpush.bf16.msra.mxu0 %v1940
  %4048 = vmatmul.bf16.gmra.mxu0 %v3922
  %v4049 = vpop.f32.mrf.mxu0
  %v4050 = vadd.f32 %v4037, %v4049
  %v4051 = vpop.f32.mrf.mxu0
  %4052 = vdwg.mxu0
  %4053 = vmatpush.bf16.msra.mxu0 %v1933
  %4054 = vmatpush.bf16.msra.mxu0 %v1925
  %4055 = vmatpush.bf16.msra.mxu0 %v1917
  %4056 = vmatpush.bf16.msra.mxu0 %v1909
  %4057 = vmatpush.bf16.msra.mxu0 %v1901
  %4058 = vmatpush.bf16.msra.mxu0 %v1893
  %4059 = vmatpush.bf16.msra.mxu0 %v1885
  %4060 = vmatpush.bf16.msra.mxu0 %v1877
  %4061 = vmatmul.bf16.gmra.mxu0 %v3921
  %v4062 = vpop.f32.mrf.mxu0
  %v4063 = vadd.f32 0.0, %v4062
  %v4064 = vpop.f32.mrf.mxu0
  %4065 = vdwg.mxu0
  %4066 = vmatpush.bf16.msra.mxu0 %v1997
  %4067 = vmatpush.bf16.msra.mxu0 %v1989
  %4068 = vmatpush.bf16.msra.mxu0 %v1981
  %4069 = vmatpush.bf16.msra.mxu0 %v1973
  %4070 = vmatpush.bf16.msra.mxu0 %v1965
  %4071 = vmatpush.bf16.msra.mxu0 %v1957
  %4072 = vmatpush.bf16.msra.mxu0 %v1949
  %4073 = vmatpush.bf16.msra.mxu0 %v1941
  %4074 = vmatmul.bf16.gmra.mxu0 %v3922
  %v4075 = vpop.f32.mrf.mxu0
  %v4076 = vadd.f32 %v4063, %v4075
  %v4077 = vpop.f32.mrf.mxu0
  %4078 = vdwg.mxu0
  %4079 = vmatpush.bf16.msra.mxu0 %v1934
  %4080 = vmatpush.bf16.msra.mxu0 %v1926
  %4081 = vmatpush.bf16.msra.mxu0 %v1918
  %4082 = vmatpush.bf16.msra.mxu0 %v1910
  %4083 = vmatpush.bf16.msra.mxu0 %v1902
  %4084 = vmatpush.bf16.msra.mxu0 %v1894
  %4085 = vmatpush.bf16.msra.mxu0 %v1886
  %4086 = vmatpush.bf16.msra.mxu0 %v1878
  %4087 = vmatmul.bf16.gmra.mxu0 %v3921
  %v4088 = vpop.f32.mrf.mxu0
  %v4089 = vadd.f32 0.0, %v4088
  %v4090 = vpop.f32.mrf.mxu0
  %4091 = vdwg.mxu0
  %4092 = vmatpush.bf16.msra.mxu0 %v1998
  %4093 = vmatpush.bf16.msra.mxu0 %v1990
  %4094 = vmatpush.bf16.msra.mxu0 %v1982
  %4095 = vmatpush.bf16.msra.mxu0 %v1974
  %4096 = vmatpush.bf16.msra.mxu0 %v1966
  %4097 = vmatpush.bf16.msra.mxu0 %v1958
  %4098 = vmatpush.bf16.msra.mxu0 %v1950
  %4099 = vmatpush.bf16.msra.mxu0 %v1942
  %4100 = vmatmul.bf16.gmra.mxu0 %v3922
  %v4101 = vpop.f32.mrf.mxu0
  %v4102 = vadd.f32 %v4089, %v4101
  %v4103 = vpop.f32.mrf.mxu0
  %4104 = vdwg.mxu0
  %4105 = vmatpush.bf16.msra.mxu0 %v1935
  %4106 = vmatpush.bf16.msra.mxu0 %v1927
  %4107 = vmatpush.bf16.msra.mxu0 %v1919
  %4108 = vmatpush.bf16.msra.mxu0 %v1911
  %4109 = vmatpush.bf16.msra.mxu0 %v1903
  %4110 = vmatpush.bf16.msra.mxu0 %v1895
  %4111 = vmatpush.bf16.msra.mxu0 %v1887
  %4112 = vmatpush.bf16.msra.mxu0 %v1879
  %4113 = vmatmul.bf16.gmra.mxu0 %v3921
  %v4114 = vpop.f32.mrf.mxu0
  %v4115 = vadd.f32 0.0, %v4114
  %v4116 = vpop.f32.mrf.mxu0
  %4117 = vdwg.mxu0
  %4118 = vmatpush.bf16.msra.mxu0 %v1999
  %4119 = vmatpush.bf16.msra.mxu0 %v1991
  %4120 = vmatpush.bf16.msra.mxu0 %v1983
  %4121 = vmatpush.bf16.msra.mxu0 %v1975
  %4122 = vmatpush.bf16.msra.mxu0 %v1967
  %4123 = vmatpush.bf16.msra.mxu0 %v1959
  %4124 = vmatpush.bf16.msra.mxu0 %v1951
  %4125 = vmatpush.bf16.msra.mxu0 %v1943
  %4126 = vmatmul.bf16.gmra.mxu0 %v3922
  %v4127 = vpop.f32.mrf.mxu0
  %v4128 = vadd.f32 %v4115, %v4127
  %v4129 = vpop.f32.mrf.mxu0
  %4130 = vdwg.mxu0
  %s4131 = scalar_lea.vmem [#allocation5], 3
  %v4132 = vld [vmem:[%s4131] ss:$4 sm:$0xf]
  %s4133 = scalar_lea.vmem [#allocation5], 19
  %v4134 = vld [vmem:[%s4133] ss:$4 sm:$0xf]
  %v4139 = vrot.slane %v3972, 7
  %v4140 = vrot.slane %v3998, 6
  %v4141 = vrot.slane %v4024, 5
  %v4142 = vsel %vm2346, %v3946, %v4139
  %v4143 = vsel %vm2348, %v4140, %v4141
  %v4144 = vsel %vm2350, %v4142, %v4143
  %v4145 = vsel %vm2352, %v3946, %v4139
  %v4146 = vsel %vm2354, %v4140, %v4141
  %v4147 = vsel %vm2356, %v4145, %v4146
  %v4148 = vrot.slane %v4147, 1
  %v4151 = vadd.f32 %v4132, %v4144
  %v4152 = vadd.f32 %v4134, %v4148
  %v4153 = vld [vmem:[#allocation6] ss:$4 sm:$0xf]
  %s4154 = scalar_lea.vmem [#allocation6], 16
  %v4155 = vld [vmem:[%s4154] ss:$4 sm:$0xf]
  %v4160 = vrot.slane %v4076, 7
  %v4161 = vrot.slane %v4102, 6
  %v4162 = vrot.slane %v4128, 5
  %v4163 = vsel %vm2346, %v4050, %v4160
  %v4164 = vsel %vm2348, %v4161, %v4162
  %v4165 = vsel %vm2350, %v4163, %v4164
  %v4166 = vsel %vm2352, %v4050, %v4160
  %v4167 = vsel %vm2354, %v4161, %v4162
  %v4168 = vsel %vm2356, %v4166, %v4167
  %v4169 = vrot.slane %v4168, 1
  %v4172 = vadd.f32 %v4153, %v4165
  %v4173 = vadd.f32 %v4155, %v4169
  %v4174 = vxor.u32 %v4151, 2147483648
  %v4175 = vxor.u32 %v4152, 2147483648
  %v4176 = vmul.f32 %v4174, 1.442695
  %v4177 = vpow.pop %v4176
  %v4178 = vmul.f32 %v4175, 1.442695
  %v4179 = vpow.pop %v4178
  %v4180 = vadd.f32 %v4177, 1.0
  %v4181 = vadd.f32 %v4179, 1.0
  %v4182 = vrcp.pop %v4180
  %v4183 = vmul.f32 %v4180, %v4182
  %v4184 = vsub.f32 1.0, %v4183
  %v4185 = vmul.f32 %v4182, %v4184
  %v4186 = vadd.f32 %v4182, %v4185
  %vm4187 = vweird.f32 %v4180
  %vm4188 = vweird.f32 %v4182
  %vm4189 = vmor %vm4187, %vm4188
  %v4190 = vsel %vm4189, %v4182, %v4186
  %v4191 = vand.u32 2147483647, %v4180
  %vm4192 = vcmp.eq.f32.partialorder %v4191, 8.507059e+37
  %v4193 = vand.u32 %v4180, 2147483648
  %v4194 = vor.u32 1.1754944e-38, %v4193
  %v4195 = vsel %vm4192, %v4194, %v4190
  %v4196 = vmul.f32 1.0, %v4195
  %v4197 = vrcp.pop %v4181
  %v4198 = vmul.f32 %v4181, %v4197
  %v4199 = vsub.f32 1.0, %v4198
  %v4200 = vmul.f32 %v4197, %v4199
  %v4201 = vadd.f32 %v4197, %v4200
  %vm4202 = vweird.f32 %v4181
  %vm4203 = vweird.f32 %v4197
  %vm4204 = vmor %vm4202, %vm4203
  %v4205 = vsel %vm4204, %v4197, %v4201
  %v4206 = vand.u32 2147483647, %v4181
  %vm4207 = vcmp.eq.f32.partialorder %v4206, 8.507059e+37
  %v4208 = vand.u32 %v4181, 2147483648
  %v4209 = vor.u32 1.1754944e-38, %v4208
  %v4210 = vsel %vm4207, %v4209, %v4205
  %v4211 = vmul.f32 1.0, %v4210
  %v4214 = vrot.slane %v4151, 1
  %v4215 = vrot.slane %v4152, 1
  %v4218 = vxor.u32 %v4214, 2147483648
  %v4219 = vxor.u32 %v4215, 2147483648
  %v4220 = vmul.f32 %v4218, 1.442695
  %v4221 = vpow.pop %v4220
  %v4222 = vmul.f32 %v4219, 1.442695
  %v4223 = vpow.pop %v4222
  %v4224 = vadd.f32 %v4221, 1.0
  %v4225 = vadd.f32 %v4223, 1.0
  %v4226 = vrcp.pop %v4224
  %v4227 = vmul.f32 %v4224, %v4226
  %v4228 = vsub.f32 1.0, %v4227
  %v4229 = vmul.f32 %v4226, %v4228
  %v4230 = vadd.f32 %v4226, %v4229
  %vm4231 = vweird.f32 %v4224
  %vm4232 = vweird.f32 %v4226
  %vm4233 = vmor %vm4231, %vm4232
  %v4234 = vsel %vm4233, %v4226, %v4230
  %v4235 = vand.u32 2147483647, %v4224
  %vm4236 = vcmp.eq.f32.partialorder %v4235, 8.507059e+37
  %v4237 = vand.u32 %v4224, 2147483648
  %v4238 = vor.u32 1.1754944e-38, %v4237
  %v4239 = vsel %vm4236, %v4238, %v4234
  %v4240 = vmul.f32 1.0, %v4239
  %v4241 = vrcp.pop %v4225
  %v4242 = vmul.f32 %v4225, %v4241
  %v4243 = vsub.f32 1.0, %v4242
  %v4244 = vmul.f32 %v4241, %v4243
  %v4245 = vadd.f32 %v4241, %v4244
  %vm4246 = vweird.f32 %v4225
  %vm4247 = vweird.f32 %v4241
  %vm4248 = vmor %vm4246, %vm4247
  %v4249 = vsel %vm4248, %v4241, %v4245
  %v4250 = vand.u32 2147483647, %v4225
  %vm4251 = vcmp.eq.f32.partialorder %v4250, 8.507059e+37
  %v4252 = vand.u32 %v4225, 2147483648
  %v4253 = vor.u32 1.1754944e-38, %v4252
  %v4254 = vsel %vm4251, %v4253, %v4249
  %v4255 = vmul.f32 1.0, %v4254
  %v4256 = vrot.slane %v4151, 2
  %v4257 = vrot.slane %v4152, 2
  %v4260 = vtanh.pop %v4256
  %v4261 = vtanh.pop %v4257
  %v4262 = vrot.slane %v4151, 3
  %v4263 = vrot.slane %v4152, 3
  %v4266 = vxor.u32 %v4262, 2147483648
  %v4267 = vxor.u32 %v4263, 2147483648
  %v4268 = vmul.f32 %v4266, 1.442695
  %v4269 = vpow.pop %v4268
  %v4270 = vmul.f32 %v4267, 1.442695
  %v4271 = vpow.pop %v4270
  %v4272 = vadd.f32 %v4269, 1.0
  %v4273 = vadd.f32 %v4271, 1.0
  %v4274 = vrcp.pop %v4272
  %v4275 = vmul.f32 %v4272, %v4274
  %v4276 = vsub.f32 1.0, %v4275
  %v4277 = vmul.f32 %v4274, %v4276
  %v4278 = vadd.f32 %v4274, %v4277
  %vm4279 = vweird.f32 %v4272
  %vm4280 = vweird.f32 %v4274
  %vm4281 = vmor %vm4279, %vm4280
  %v4282 = vsel %vm4281, %v4274, %v4278
  %v4283 = vand.u32 2147483647, %v4272
  %vm4284 = vcmp.eq.f32.partialorder %v4283, 8.507059e+37
  %v4285 = vand.u32 %v4272, 2147483648
  %v4286 = vor.u32 1.1754944e-38, %v4285
  %v4287 = vsel %vm4284, %v4286, %v4282
  %v4288 = vmul.f32 1.0, %v4287
  %v4289 = vrcp.pop %v4273
  %v4290 = vmul.f32 %v4273, %v4289
  %v4291 = vsub.f32 1.0, %v4290
  %v4292 = vmul.f32 %v4289, %v4291
  %v4293 = vadd.f32 %v4289, %v4292
  %vm4294 = vweird.f32 %v4273
  %vm4295 = vweird.f32 %v4289
  %vm4296 = vmor %vm4294, %vm4295
  %v4297 = vsel %vm4296, %v4289, %v4293
  %v4298 = vand.u32 2147483647, %v4273
  %vm4299 = vcmp.eq.f32.partialorder %v4298, 8.507059e+37
  %v4300 = vand.u32 %v4273, 2147483648
  %v4301 = vor.u32 1.1754944e-38, %v4300
  %v4302 = vsel %vm4299, %v4301, %v4297
  %v4303 = vmul.f32 1.0, %v4302
  %v4304 = vmul.f32 %v4240, %v3713
  %v4305 = vmul.f32 %v4255, %v3714
  %v4306 = vmul.f32 %v4196, %v4260
  %v4307 = vmul.f32 %v4211, %v4261
  %v4308 = vadd.f32 %v4304, %v4306
  %v4309 = vadd.f32 %v4305, %v4307
  %v4310 = vtanh.pop %v4308
  %v4311 = vtanh.pop %v4309
  %v4312 = vmul.f32 %v4288, %v4310
  %v4313 = vmul.f32 %v4303, %v4311
  %v4314 = vxor.u32 %v4172, 2147483648
  %v4315 = vxor.u32 %v4173, 2147483648
  %v4316 = vmul.f32 %v4314, 1.442695
  %v4317 = vpow.pop %v4316
  %v4318 = vmul.f32 %v4315, 1.442695
  %v4319 = vpow.pop %v4318
  %v4320 = vadd.f32 %v4317, 1.0
  %v4321 = vadd.f32 %v4319, 1.0
  %v4322 = vrcp.pop %v4320
  %v4323 = vmul.f32 %v4320, %v4322
  %v4324 = vsub.f32 1.0, %v4323
  %v4325 = vmul.f32 %v4322, %v4324
  %v4326 = vadd.f32 %v4322, %v4325
  %vm4327 = vweird.f32 %v4320
  %vm4328 = vweird.f32 %v4322
  %vm4329 = vmor %vm4327, %vm4328
  %v4330 = vsel %vm4329, %v4322, %v4326
  %v4331 = vand.u32 2147483647, %v4320
  %vm4332 = vcmp.eq.f32.partialorder %v4331, 8.507059e+37
  %v4333 = vand.u32 %v4320, 2147483648
  %v4334 = vor.u32 1.1754944e-38, %v4333
  %v4335 = vsel %vm4332, %v4334, %v4330
  %v4336 = vmul.f32 1.0, %v4335
  %v4337 = vrcp.pop %v4321
  %v4338 = vmul.f32 %v4321, %v4337
  %v4339 = vsub.f32 1.0, %v4338
  %v4340 = vmul.f32 %v4337, %v4339
  %v4341 = vadd.f32 %v4337, %v4340
  %vm4342 = vweird.f32 %v4321
  %vm4343 = vweird.f32 %v4337
  %vm4344 = vmor %vm4342, %vm4343
  %v4345 = vsel %vm4344, %v4337, %v4341
  %v4346 = vand.u32 2147483647, %v4321
  %vm4347 = vcmp.eq.f32.partialorder %v4346, 8.507059e+37
  %v4348 = vand.u32 %v4321, 2147483648
  %v4349 = vor.u32 1.1754944e-38, %v4348
  %v4350 = vsel %vm4347, %v4349, %v4345
  %v4351 = vmul.f32 1.0, %v4350
  %v4354 = vrot.slane %v4172, 1
  %v4355 = vrot.slane %v4173, 1
  %v4358 = vxor.u32 %v4354, 2147483648
  %v4359 = vxor.u32 %v4355, 2147483648
  %v4360 = vmul.f32 %v4358, 1.442695
  %v4361 = vpow.pop %v4360
  %v4362 = vmul.f32 %v4359, 1.442695
  %v4363 = vpow.pop %v4362
  %v4364 = vadd.f32 %v4361, 1.0
  %v4365 = vadd.f32 %v4363, 1.0
  %v4366 = vrcp.pop %v4364
  %v4367 = vmul.f32 %v4364, %v4366
  %v4368 = vsub.f32 1.0, %v4367
  %v4369 = vmul.f32 %v4366, %v4368
  %v4370 = vadd.f32 %v4366, %v4369
  %vm4371 = vweird.f32 %v4364
  %vm4372 = vweird.f32 %v4366
  %vm4373 = vmor %vm4371, %vm4372
  %v4374 = vsel %vm4373, %v4366, %v4370
  %v4375 = vand.u32 2147483647, %v4364
  %vm4376 = vcmp.eq.f32.partialorder %v4375, 8.507059e+37
  %v4377 = vand.u32 %v4364, 2147483648
  %v4378 = vor.u32 1.1754944e-38, %v4377
  %v4379 = vsel %vm4376, %v4378, %v4374
  %v4380 = vmul.f32 1.0, %v4379
  %v4381 = vrcp.pop %v4365
  %v4382 = vmul.f32 %v4365, %v4381
  %v4383 = vsub.f32 1.0, %v4382
  %v4384 = vmul.f32 %v4381, %v4383
  %v4385 = vadd.f32 %v4381, %v4384
  %vm4386 = vweird.f32 %v4365
  %vm4387 = vweird.f32 %v4381
  %vm4388 = vmor %vm4386, %vm4387
  %v4389 = vsel %vm4388, %v4381, %v4385
  %v4390 = vand.u32 2147483647, %v4365
  %vm4391 = vcmp.eq.f32.partialorder %v4390, 8.507059e+37
  %v4392 = vand.u32 %v4365, 2147483648
  %v4393 = vor.u32 1.1754944e-38, %v4392
  %v4394 = vsel %vm4391, %v4393, %v4389
  %v4395 = vmul.f32 1.0, %v4394
  %v4396 = vrot.slane %v4172, 2
  %v4397 = vrot.slane %v4173, 2
  %v4400 = vtanh.pop %v4396
  %v4401 = vtanh.pop %v4397
  %v4402 = vrot.slane %v4172, 3
  %v4403 = vrot.slane %v4173, 3
  %v4406 = vxor.u32 %v4402, 2147483648
  %v4407 = vxor.u32 %v4403, 2147483648
  %v4408 = vmul.f32 %v4406, 1.442695
  %v4409 = vpow.pop %v4408
  %v4410 = vmul.f32 %v4407, 1.442695
  %v4411 = vpow.pop %v4410
  %v4412 = vadd.f32 %v4409, 1.0
  %v4413 = vadd.f32 %v4411, 1.0
  %v4414 = vrcp.pop %v4412
  %v4415 = vmul.f32 %v4412, %v4414
  %v4416 = vsub.f32 1.0, %v4415
  %v4417 = vmul.f32 %v4414, %v4416
  %v4418 = vadd.f32 %v4414, %v4417
  %vm4419 = vweird.f32 %v4412
  %vm4420 = vweird.f32 %v4414
  %vm4421 = vmor %vm4419, %vm4420
  %v4422 = vsel %vm4421, %v4414, %v4418
  %v4423 = vand.u32 2147483647, %v4412
  %vm4424 = vcmp.eq.f32.partialorder %v4423, 8.507059e+37
  %v4425 = vand.u32 %v4412, 2147483648
  %v4426 = vor.u32 1.1754944e-38, %v4425
  %v4427 = vsel %vm4424, %v4426, %v4422
  %v4428 = vmul.f32 1.0, %v4427
  %v4429 = vrcp.pop %v4413
  %v4430 = vmul.f32 %v4413, %v4429
  %v4431 = vsub.f32 1.0, %v4430
  %v4432 = vmul.f32 %v4429, %v4431
  %v4433 = vadd.f32 %v4429, %v4432
  %vm4434 = vweird.f32 %v4413
  %vm4435 = vweird.f32 %v4429
  %vm4436 = vmor %vm4434, %vm4435
  %v4437 = vsel %vm4436, %v4429, %v4433
  %v4438 = vand.u32 2147483647, %v4413
  %vm4439 = vcmp.eq.f32.partialorder %v4438, 8.507059e+37
  %v4440 = vand.u32 %v4413, 2147483648
  %v4441 = vor.u32 1.1754944e-38, %v4440
  %v4442 = vsel %vm4439, %v4441, %v4437
  %v4443 = vmul.f32 1.0, %v4442
  %v4444 = vmul.f32 %v4380, %v3853
  %v4445 = vmul.f32 %v4395, %v3854
  %v4446 = vmul.f32 %v4336, %v4400
  %v4447 = vmul.f32 %v4351, %v4401
  %v4448 = vadd.f32 %v4444, %v4446
  %v4449 = vadd.f32 %v4445, %v4447
  %v4450 = vtanh.pop %v4448
  %v4451 = vtanh.pop %v4449
  %v4452 = vmul.f32 %v4428, %v4450
  %v4453 = vmul.f32 %v4443, %v4451
  %v4454 = vpack.c.bf16 %v4312, %v4312
  %v4455 = vpack.c.bf16 %v4313, %v4313
  %v4458 = vrot.slane %v4454, 2
  %v4459 = vrot.slane %v4455, 2
  %v4462 = vsel %vm2350, %v4454, %v4458
  %v4465 = vsel %vm2350, %v4455, %v4459
  %v4466 = vshll.u32 %v4462, 16
  %v4468 = vrot.slane %v4466, 7
  %v4469 = vshll.u32 %v4465, 16
  %v4471 = vrot.slane %v4469, 7
  %v4474 = vld [vmem:[%s9] sm:$0x2]
  %v4475 = vsel %vm2704, %v4468, %v4474
  %4476 = vst [vmem:[%s9] sm:$0x2] %v4475
  %v4477 = vld [vmem:[%s9 + $0x2] sm:$0x2]
  %v4478 = vsel %vm2704, %v4471, %v4477
  %4479 = vst [vmem:[%s9 + $0x2] sm:$0x2] %v4478
  %v4480 = vpack.c.bf16 %v4452, %v4452
  %v4481 = vpack.c.bf16 %v4453, %v4453
  %v4482 = vld [vmem:[%s77] sm:$0x1]
  %v4483 = vsel %vm2675, %v4480, %v4482
  %4484 = vst [vmem:[%s77] sm:$0x1] %v4483
  %v4485 = vld [vmem:[%s77 + $0x2] sm:$0x1]
  %v4486 = vsel %vm2675, %v4481, %v4485
  %4487 = vst [vmem:[%s77 + $0x2] sm:$0x1] %v4486
  %4490 = vst [vmem:[#allocation1] ss:$9 sm:$0xff] %v4312
  %s4491 = scalar_lea.vmem [#allocation1], 1
  %4492 = vst [vmem:[%s4491] ss:$9 sm:$0xff] %v4313
  %v4493 = vld [vmem:[#allocation1] sm:$0xff]
  %4496 = vst [vmem:[#allocation1] ss:$9 sm:$0xff] %v4452
  %s4497 = scalar_lea.vmem [#allocation1], 1
  %4498 = vst [vmem:[%s4497] ss:$9 sm:$0xff] %v4453
  %v4499 = vld [vmem:[#allocation1] sm:$0xff]
  %v4500 = vrot.slane %v4499, 6
  %v4501 = vsel %vm2350, %v4493, %v4500
  %4503 = vst [vmem:[#allocation2] sm:$0xf] %v4501
  %4506 = vst [vmem:[#allocation1] ss:$9 sm:$0xff] %v4308
  %s4507 = scalar_lea.vmem [#allocation1], 1
  %4508 = vst [vmem:[%s4507] ss:$9 sm:$0xff] %v4309
  %v4509 = vld [vmem:[#allocation1] sm:$0xff]
  %4511 = vst [vmem:[#allocation3] sm:$0x3] %v4509
  %4514 = vst [vmem:[#allocation1] ss:$9 sm:$0xff] %v4448
  %s4515 = scalar_lea.vmem [#allocation1], 1
  %4516 = vst [vmem:[%s4515] ss:$9 sm:$0xff] %v4449
  %v4517 = vld [vmem:[#allocation1] sm:$0xff]
  %4519 = vst [vmem:[#allocation4] sm:$0x3] %v4517
  %s4520 = ssub.s32 0, 0
  %p4521 = scmp.lt.s32.totalorder %s4520, 0
  %s4522 = scalar_select %p4521, %s4520, 0
  %s4523 = smul.addr %s4522, 2
  %s4524 = scalar_lea.vmem %s10, %s4523
  // Predicated region
  $region42: #{crnn_forward.10} parent=0 // pred_check
    _
  $region43: #{crnn_forward.10} parent=0 // pred_check_branch
    %4526 = sbr.rel (0) target = $region45
  $region44: #{crnn_forward.10} parent=0 // pred_region
    _
  $region45: #{crnn_forward.10} parent=0 // pred_fallthru
    _
  // Predicated region
  $region46: #{crnn_forward.10} parent=0 // pred_check
    _
  $region47: #{crnn_forward.10} parent=0 // pred_check_branch
    %4528 = sbr.rel (0) target = $region49
  $region48: #{crnn_forward.10} parent=0 // pred_region
    %s4529 = ssub.s32 0, 0
  $region49: #{crnn_forward.10} parent=0 // pred_fallthru
    _
  // Predicated region
  $region50: #{crnn_forward.10} parent=0 // pred_check
    _
  $region51: #{crnn_forward.10} parent=0 // pred_check_branch
    %4531 = sbr.rel (0) target = $region53
  $region52: #{crnn_forward.10} parent=0 // pred_region
    _
  $region53: #{crnn_forward.10} parent=0 // pred_fallthru
    _
  // Predicated region
  $region54: #{crnn_forward.10} parent=0 // pred_check
    _
  $region55: #{crnn_forward.10} parent=0 // pred_check_branch
    %4533 = sbr.rel (0) target = $region57
  $region56: #{crnn_forward.10} parent=0 // pred_region
    %s4534 = ssub.s32 0, 0
    %p4535 = scmp.lt.s32.totalorder %s4534, 0
    %s4536 = scalar_select %p4535, %s4534, 0
    %s4537 = smul.addr %s4536, 2
    %s4538 = scalar_lea.vmem %s10, %s4537
  $region57: #{crnn_forward.10} parent=0 // pred_fallthru
    _

</llo_original>
